<compile_context>
chip_gen: v5e
topology: v5e:2x2
jax: 0.10.0
libtpu: 0.0.40
codegen_flags: <defaults>
</compile_context>

<pallas_src>
import functools

import jax
import jax.numpy as jnp
from jax import lax
from jax.experimental import pallas as pl
from jax.experimental.pallas import tpu as pltpu

# ----------------------------- config (small demo) ---------------------------
VOCAB_SIZE = 65          # stand-in for len(sorted(set(text)))
VOCAB_PAD = 128          # LM head padded to a lane-dense 128-wide output
N_EMBD = 128
NUM_HEADS = 4
HEAD_SIZE = N_EMBD // NUM_HEADS
MAX_SEQ_LEN = 64         # block_size (shrunk for the demo; reference uses 256)
NUM_BLOCKS = 2           # shrunk from 4 for a fast demo
EPS = 1e-5
NEG_INF = -1e30          # finite mask value (safer than -inf)


# ----------------------------- in-kernel helpers ------------------------------
def _ln_time(x, g, b, eps):
    # x: (Bt, T, C) f32.  Reduce over the TIME axis (axis=1) with torch.var's
    # unbiased estimator -- faithful to the reference LayerNorm (x.mean(1)).
    t = x.shape[1]
    mean = jnp.mean(x, axis=1, keepdims=True)
    d = x - mean
    var = jnp.sum(d * d, axis=1, keepdims=True) * (1.0 / (t - 1))
    return g * (d * lax.rsqrt(var + eps)) + b


# ----------------------------- fused Pallas kernel ----------------------------
def _gpt2_kernel(x_ref, vec_ref, bfc1_ref, wqkv_ref, wp_ref, w1_ref, w2_ref,
                 lnf_ref, wlm_ref, blm_ref, o_ref, *,
                 num_layers, num_heads, head_size, eps):
    f32, bf16 = jnp.float32, jnp.bfloat16
    x = x_ref[...]                                     # (Bt, T, C) f32
    bt, t, c = x.shape
    m = bt * t                                         # MXU M dimension

    # Causal mask, hoisted out of the layer loop.
    row = lax.broadcasted_iota(jnp.int32, (t, t), 0)
    col = lax.broadcasted_iota(jnp.int32, (t, t), 1)
    causal = (col <= row)[None, :, :]                  # (1, T, T)

    for l in range(num_layers):                        # static unroll (L small)
        vl = vec_ref[l]                                # (8, C) f32 packed vectors
        g1, b1 = vl[0:1], vl[1:2]
        g2, b2 = vl[2:3], vl[3:4]
        bp, bfc2 = vl[4:5], vl[5:6]
        wqkv_l = wqkv_ref[l]                           # (C, 3C) bf16
        wp_l = wp_ref[l]                               # (C, C)  bf16
        w1_l = w1_ref[l]                               # (C, 4C) bf16
        w2_l = w2_ref[l]                               # (4C, C) bf16

        # ----- attention sub-block: x = x + proj(MHA(ln1(x)))
        h = _ln_time(x, g1, b1, eps)                   # (Bt, T, C) f32
        qkv = jnp.dot(h.reshape(m, c).astype(bf16), wqkv_l,
                      preferred_element_type=f32)      # (M, 3C); scale folded in Q
        qkv = qkv.reshape(bt, t, 3 * c)

        att = jnp.zeros((m, c), f32)
        for hh in range(num_heads):                    # static unroll (H=4)
            q0 = hh * head_size
            qh = qkv[:, :, q0:q0 + head_size].astype(bf16)               # (Bt,T,hs)
            kh = qkv[:, :, c + q0:c + q0 + head_size].astype(bf16)
            vh = qkv[:, :, 2 * c + q0:2 * c + q0 + head_size].astype(bf16)
            s = jnp.einsum('bqd,bkd->bqk', qh, kh,
                           preferred_element_type=f32)                   # (Bt,T,T)
            s = jnp.where(causal, s, NEG_INF)
            s = s - jnp.max(s, axis=-1, keepdims=True)
            p = jnp.exp(s)
            p = p * pl.reciprocal(jnp.sum(p, axis=-1, keepdims=True),
                                  approx=True)
            ho = jnp.einsum('bqk,bkd->bqd', p.astype(bf16), vh,
                            preferred_element_type=f32)                  # (Bt,T,hs)
            # Accumulate the out-projection per head (no lane-axis concat).
            att = att + jnp.dot(ho.reshape(m, head_size).astype(bf16),
                                wp_l[q0:q0 + head_size, :],
                                preferred_element_type=f32)              # (M, C)
        x = x + (att + bp).reshape(bt, t, c)           # residual (f32)

        # ----- feed-forward sub-block: x = x + fc2(relu(fc1(ln2(x))))
        h2 = _ln_time(x, g2, b2, eps).reshape(m, c).astype(bf16)
        ff = jnp.dot(h2, w1_l, preferred_element_type=f32) + bfc1_ref[l]  # (M,4C)
        ff = jnp.maximum(ff, 0.0).astype(bf16)
        ff = jnp.dot(ff, w2_l, preferred_element_type=f32) + bfc2         # (M, C)
        x = x + ff.reshape(bt, t, c)

    # ----- final LayerNorm + LM head (vocab padded to lane-dense 128) -----
    lnf = lnf_ref[...]                                 # (8, C): row0=gamma, row1=beta
    h = _ln_time(x, lnf[0:1], lnf[1:2], eps).reshape(m, c).astype(bf16)
    logits = jnp.dot(h, wlm_ref[...], preferred_element_type=f32) + blm_ref[...]
    o_ref[...] = logits.reshape(bt, t, logits.shape[-1]).astype(o_ref.dtype)


def gpt2_fused(x, params, *, bt):
    B, T, C = x.shape
    L = NUM_BLOCKS
    VP = VOCAB_PAD
    kernel = functools.partial(_gpt2_kernel, num_layers=L, num_heads=NUM_HEADS,
                               head_size=HEAD_SIZE, eps=EPS)
    rep3 = lambda i: (0, 0, 0)
    rep2 = lambda i: (0, 0)
    return pl.pallas_call(
        kernel,
        out_shape=jax.ShapeDtypeStruct((B, T, VP), jnp.float32),
        grid=(B // bt,),
        in_specs=[
            pl.BlockSpec((bt, T, C), lambda i: (i, 0, 0)),   # activations
            pl.BlockSpec((L, 8, C), rep3),                   # packed per-layer vecs
            pl.BlockSpec((L, 1, 4 * C), rep3),               # b_fc1
            pl.BlockSpec((L, C, 3 * C), rep3),               # wqkv (bf16, Q prescaled)
            pl.BlockSpec((L, C, C), rep3),                   # w_proj (bf16)
            pl.BlockSpec((L, C, 4 * C), rep3),               # w_fc1 (bf16)
            pl.BlockSpec((L, 4 * C, C), rep3),               # w_fc2 (bf16)
            pl.BlockSpec((8, C), rep2),                      # final LN gamma/beta
            pl.BlockSpec((C, VP), rep2),                     # w_lm (bf16)
            pl.BlockSpec((1, VP), rep2),                     # b_lm
        ],
        out_specs=pl.BlockSpec((bt, T, VP), lambda i: (i, 0, 0)),
        compiler_params=pltpu.CompilerParams(
            dimension_semantics=("parallel",)),              # even extent -> v7x megacore
    )(x, params["vecs"], params["b_fc1"], params["wqkv"], params["w_proj"],
      params["w_fc1"], params["w_fc2"], params["lnf"], params["w_lm"],
      params["b_lm"])


# ----------------------------- model glue ------------------------------------
def init_params(key):
    def nrm(k, shape, scale=0.02):
        return scale * jax.random.normal(k, shape, dtype=jnp.float32)

    C = N_EMBD
    keys = iter(jax.random.split(key, 3 + NUM_BLOCKS * 4))

    # LM head weights zero-padded from VOCAB_SIZE to VOCAB_PAD columns.
    w_lm = nrm(next(keys), (C, VOCAB_SIZE))
    w_lm = jnp.pad(w_lm, ((0, 0), (0, VOCAB_PAD - VOCAB_SIZE))).astype(jnp.bfloat16)

    scale = float(C) ** -0.5
    wqkv, wp, w1, w2, vecs, bfc1 = [], [], [], [], [], []
    for _ in range(NUM_BLOCKS):
        w = nrm(next(keys), (C, 3 * C))
        w = w.at[:, :C].multiply(scale)     # fold C**-0.5 score scale into Q columns
        wqkv.append(w.astype(jnp.bfloat16))
        wp.append(nrm(next(keys), (C, C)).astype(jnp.bfloat16))
        w1.append(nrm(next(keys), (C, 4 * C)).astype(jnp.bfloat16))
        w2.append(nrm(next(keys), (4 * C, C)).astype(jnp.bfloat16))
        # Packed small vectors: rows 0=ln1_g 1=ln1_b 2=ln2_g 3=ln2_b 4=b_proj 5=b_fc2.
        v = jnp.zeros((8, C), jnp.float32).at[0].set(1.0).at[2].set(1.0)
        vecs.append(v)
        bfc1.append(jnp.zeros((1, 4 * C), jnp.float32))

    return {
        "tok_emb": nrm(next(keys), (VOCAB_SIZE, C), 1.0),
        "pos_emb": nrm(next(keys), (MAX_SEQ_LEN, C), 1.0),
        "wqkv": jnp.stack(wqkv),            # (L, C, 3C) bf16
        "w_proj": jnp.stack(wp),            # (L, C, C)  bf16
        "w_fc1": jnp.stack(w1),             # (L, C, 4C) bf16
        "w_fc2": jnp.stack(w2),             # (L, 4C, C) bf16
        "vecs": jnp.stack(vecs),            # (L, 8, C)  f32
        "b_fc1": jnp.stack(bfc1),           # (L, 1, 4C) f32
        "lnf": jnp.zeros((8, C), jnp.float32).at[0].set(1.0),  # row0=gamma, row1=beta
        "w_lm": w_lm,                       # (C, 128) bf16
        "b_lm": jnp.zeros((1, VOCAB_PAD), jnp.float32),
    }


def gpt2_forward(params, idx, *, batch_tile=2):
    B, T = idx.shape
    tok = jnp.take(params["tok_emb"], idx, axis=0)    # (B, T, C) embedding gather (XLA)
    pos = params["pos_emb"][:T]                       # (T, C)
    x = tok + pos

    bt = min(batch_tile, B)
    assert B % bt == 0, "batch must divide evenly into batch tiles"
    logits_padded = gpt2_fused(x, params, bt=bt)      # single fused kernel
    logits = logits_padded[:, :, :VOCAB_SIZE]         # drop vocab padding
    # targets=None path: loss is None
    return logits, None


# ----------------------------- demo -------------------------------------------
if __name__ == "__main__":
    key = jax.random.PRNGKey(0)
    pkey, dkey = jax.random.split(key)
    params = init_params(pkey)

    # B=4, T=64 -> 2 batch tiles of Bt=2 (M = Bt*T = 128 rows per MXU matmul;
    # grid extent 2 keeps both v7x TensorCores busy).
    B, T = 4, MAX_SEQ_LEN
    idx = jax.random.randint(dkey, (B, T), 0, VOCAB_SIZE, dtype=jnp.int32)

    logits, loss = jax.jit(gpt2_forward)(params, idx)
    jax.block_until_ready(logits)
    assert logits.shape == (B, T, VOCAB_SIZE)
    assert bool(jnp.all(jnp.isfinite(logits)))
    assert loss is None
    print("KERNEL_OK")
</pallas_src>

<mosaic_0001>
module attributes {stable_mosaic.version = 11 : i64} {
  func.func @_gpt2_kernel(%arg0: i32, %arg1: memref<2x64x128xf32, #tpu.memory_space<vmem>>, %arg2: memref<2x8x128xf32, #tpu.memory_space<vmem>>, %arg3: memref<2x1x512xf32, #tpu.memory_space<vmem>>, %arg4: memref<2x128x384xbf16, #tpu.memory_space<vmem>>, %arg5: memref<2x128x128xbf16, #tpu.memory_space<vmem>>, %arg6: memref<2x128x512xbf16, #tpu.memory_space<vmem>>, %arg7: memref<2x512x128xbf16, #tpu.memory_space<vmem>>, %arg8: memref<8x128xf32, #tpu.memory_space<vmem>>, %arg9: memref<128x128xbf16, #tpu.memory_space<vmem>>, %arg10: memref<1x128xf32, #tpu.memory_space<vmem>>, %arg11: memref<2x64x128xf32, #tpu.memory_space<vmem>>) attributes {dimension_semantics = [#tpu.dimension_semantics<parallel>], iteration_bounds = array<i64: 2>, scalar_prefetch = 0 : i64, scratch_operands = 0 : i64, tpu.core_type = #tpu.core_type<tc>, window_params = [{transform_indices = @transform_0, window_bounds = array<i64: 2, 64, 128>}, {pipeline_mode = #tpu.pipeline_mode<synchronous>, transform_indices = @transform_1, window_bounds = array<i64: 2, 8, 128>}, {pipeline_mode = #tpu.pipeline_mode<synchronous>, transform_indices = @transform_2, window_bounds = array<i64: 2, 1, 512>}, {pipeline_mode = #tpu.pipeline_mode<synchronous>, transform_indices = @transform_3, window_bounds = array<i64: 2, 128, 384>}, {pipeline_mode = #tpu.pipeline_mode<synchronous>, transform_indices = @transform_4, window_bounds = array<i64: 2, 128, 128>}, {pipeline_mode = #tpu.pipeline_mode<synchronous>, transform_indices = @transform_5, window_bounds = array<i64: 2, 128, 512>}, {pipeline_mode = #tpu.pipeline_mode<synchronous>, transform_indices = @transform_6, window_bounds = array<i64: 2, 512, 128>}, {pipeline_mode = #tpu.pipeline_mode<synchronous>, transform_indices = @transform_7, window_bounds = array<i64: 8, 128>}, {pipeline_mode = #tpu.pipeline_mode<synchronous>, transform_indices = @transform_8, window_bounds = array<i64: 128, 128>}, {pipeline_mode = #tpu.pipeline_mode<synchronous>, transform_indices = @transform_9, window_bounds = array<i64: 1, 128>}, {transform_indices = @transform_10, window_bounds = array<i64: 2, 64, 128>}]} {
    %c0 = arith.constant 0 : index
    %c0_0 = arith.constant 0 : index
    %c0_1 = arith.constant 0 : index
    %0 = vector.load %arg1[%c0, %c0_0, %c0_1] : memref<2x64x128xf32, #tpu.memory_space<vmem>>, vector<2x64x128xf32>
    %1 = tpu.iota {dimensions = array<i32: 0>} : vector<64x64xi32>
    %2 = tpu.iota {dimensions = array<i32: 1>} : vector<64x64xi32>
    %3 = arith.cmpi sle, %2, %1 : vector<64x64xi32>
    %4 = vector.shape_cast %3 : vector<64x64xi1> to vector<1x64x64xi1>
    %c0_2 = arith.constant 0 : index
    %c0_3 = arith.constant 0 : index
    %c0_4 = arith.constant 0 : index
    %5 = vector.load %arg2[%c0_2, %c0_3, %c0_4] : memref<2x8x128xf32, #tpu.memory_space<vmem>>, vector<1x8x128xf32>
    %6 = vector.shape_cast %5 : vector<1x8x128xf32> to vector<8x128xf32>
    %7 = vector.extract_strided_slice %6 {offsets = [0, 0], sizes = [1, 128], strides = [1, 1]} : vector<8x128xf32> to vector<1x128xf32>
    %8 = vector.extract_strided_slice %6 {offsets = [1, 0], sizes = [1, 128], strides = [1, 1]} : vector<8x128xf32> to vector<1x128xf32>
    %9 = vector.extract_strided_slice %6 {offsets = [2, 0], sizes = [1, 128], strides = [1, 1]} : vector<8x128xf32> to vector<1x128xf32>
    %10 = vector.extract_strided_slice %6 {offsets = [3, 0], sizes = [1, 128], strides = [1, 1]} : vector<8x128xf32> to vector<1x128xf32>
    %11 = vector.extract_strided_slice %6 {offsets = [4, 0], sizes = [1, 128], strides = [1, 1]} : vector<8x128xf32> to vector<1x128xf32>
    %12 = vector.extract_strided_slice %6 {offsets = [5, 0], sizes = [1, 128], strides = [1, 1]} : vector<8x128xf32> to vector<1x128xf32>
    %c0_5 = arith.constant 0 : index
    %c0_6 = arith.constant 0 : index
    %c0_7 = arith.constant 0 : index
    %13 = vector.load %arg4[%c0_5, %c0_6, %c0_7] : memref<2x128x384xbf16, #tpu.memory_space<vmem>>, vector<1x128x384xbf16>
    %14 = vector.shape_cast %13 : vector<1x128x384xbf16> to vector<128x384xbf16>
    %c0_8 = arith.constant 0 : index
    %c0_9 = arith.constant 0 : index
    %c0_10 = arith.constant 0 : index
    %15 = vector.load %arg5[%c0_8, %c0_9, %c0_10] : memref<2x128x128xbf16, #tpu.memory_space<vmem>>, vector<1x128x128xbf16>
    %16 = vector.shape_cast %15 : vector<1x128x128xbf16> to vector<128x128xbf16>
    %c0_11 = arith.constant 0 : index
    %c0_12 = arith.constant 0 : index
    %c0_13 = arith.constant 0 : index
    %17 = vector.load %arg6[%c0_11, %c0_12, %c0_13] : memref<2x128x512xbf16, #tpu.memory_space<vmem>>, vector<1x128x512xbf16>
    %18 = vector.shape_cast %17 : vector<1x128x512xbf16> to vector<128x512xbf16>
    %c0_14 = arith.constant 0 : index
    %c0_15 = arith.constant 0 : index
    %c0_16 = arith.constant 0 : index
    %19 = vector.load %arg7[%c0_14, %c0_15, %c0_16] : memref<2x512x128xbf16, #tpu.memory_space<vmem>>, vector<1x512x128xbf16>
    %20 = vector.shape_cast %19 : vector<1x512x128xbf16> to vector<512x128xbf16>
    %cst = arith.constant dense<0.000000e+00> : vector<2x128xf32>
    %21 = vector.multi_reduction <add>, %0, %cst [1] : vector<2x64x128xf32> to vector<2x128xf32>
    %22 = vector.shape_cast %21 : vector<2x128xf32> to vector<2x1x128xf32>
    %cst_17 = arith.constant 6.400000e+01 : f32
    %23 = vector.broadcast %cst_17 : f32 to vector<2x1x128xf32>
    %24 = arith.divf %22, %23 : vector<2x1x128xf32>
    %25 = vector.broadcast %24 : vector<2x1x128xf32> to vector<2x64x128xf32>
    %26 = arith.subf %0, %25 : vector<2x64x128xf32>
    %27 = arith.mulf %26, %26 : vector<2x64x128xf32>
    %cst_18 = arith.constant dense<0.000000e+00> : vector<2x128xf32>
    %28 = vector.multi_reduction <add>, %27, %cst_18 [1] : vector<2x64x128xf32> to vector<2x128xf32>
    %29 = vector.shape_cast %28 : vector<2x128xf32> to vector<2x1x128xf32>
    %cst_19 = arith.constant 0.0158730168 : f32
    %30 = vector.broadcast %cst_19 : f32 to vector<2x1x128xf32>
    %31 = arith.mulf %29, %30 : vector<2x1x128xf32>
    %cst_20 = arith.constant 9.99999974E-6 : f32
    %32 = vector.broadcast %cst_20 : f32 to vector<2x1x128xf32>
    %33 = arith.addf %31, %32 : vector<2x1x128xf32>
    %34 = math.rsqrt %33 : vector<2x1x128xf32>
    %35 = vector.broadcast %34 : vector<2x1x128xf32> to vector<2x64x128xf32>
    %36 = arith.mulf %26, %35 : vector<2x64x128xf32>
    %37 = vector.shape_cast %7 : vector<1x128xf32> to vector<1x1x128xf32>
    %38 = vector.broadcast %37 : vector<1x1x128xf32> to vector<2x64x128xf32>
    %39 = arith.mulf %38, %36 : vector<2x64x128xf32>
    %40 = vector.shape_cast %8 : vector<1x128xf32> to vector<1x1x128xf32>
    %41 = vector.broadcast %40 : vector<1x1x128xf32> to vector<2x64x128xf32>
    %42 = arith.addf %39, %41 : vector<2x64x128xf32>
    %43 = vector.shape_cast %42 : vector<2x64x128xf32> to vector<128x128xf32>
    %44 = arith.truncf %43 : vector<128x128xf32> to vector<128x128xbf16>
    %cst_21 = arith.constant dense<0.000000e+00> : vector<128x384xf32>
    %45 = tpu.matmul %44, %14, %cst_21 {dimension_numbers = #tpu.dot_dimension_numbers<[1], [0], [0], [1], [0, 0, 1, 1], [], []>} : vector<128x128xbf16>, vector<128x384xbf16>, vector<128x384xf32> -> vector<128x384xf32>
    %46 = vector.shape_cast %45 : vector<128x384xf32> to vector<2x64x384xf32>
    %cst_22 = arith.constant 0.000000e+00 : f32
    %47 = vector.broadcast %cst_22 : f32 to vector<128x128xf32>
    %48 = vector.extract_strided_slice %46 {offsets = [0, 0, 0], sizes = [2, 64, 32], strides = [1, 1, 1]} : vector<2x64x384xf32> to vector<2x64x32xf32>
    %49 = arith.truncf %48 : vector<2x64x32xf32> to vector<2x64x32xbf16>
    %50 = vector.extract_strided_slice %46 {offsets = [0, 0, 128], sizes = [2, 64, 32], strides = [1, 1, 1]} : vector<2x64x384xf32> to vector<2x64x32xf32>
    %51 = arith.truncf %50 : vector<2x64x32xf32> to vector<2x64x32xbf16>
    %52 = vector.extract_strided_slice %46 {offsets = [0, 0, 256], sizes = [2, 64, 32], strides = [1, 1, 1]} : vector<2x64x384xf32> to vector<2x64x32xf32>
    %53 = arith.truncf %52 : vector<2x64x32xf32> to vector<2x64x32xbf16>
    "tpu.trace_start"() <{level = 10 : i32, message = "bqd,bkd->bqk"}> : () -> ()
    %cst_23 = arith.constant dense<0.000000e+00> : vector<2x64x64xf32>
    %54 = tpu.matmul %49, %51, %cst_23 {dimension_numbers = #tpu.dot_dimension_numbers<[2], [2], [1], [1], [0, 0, 0, 1, 1, 1], [0], [0]>} : vector<2x64x32xbf16>, vector<2x64x32xbf16>, vector<2x64x64xf32> -> vector<2x64x64xf32>
    %cst_24 = arith.constant -1.000000e+30 : f32
    "tpu.trace_stop"() : () -> ()
    %55 = vector.shape_cast %4 : vector<1x64x64xi1> to vector<1x64x64xi1>
    %56 = vector.broadcast %55 : vector<1x64x64xi1> to vector<2x64x64xi1>
    %57 = vector.broadcast %cst_24 : f32 to vector<2x64x64xf32>
    %58 = arith.select %56, %54, %57 : vector<2x64x64xi1>, vector<2x64x64xf32>
    %cst_25 = arith.constant dense<0xFF800000> : vector<2x64xf32>
    %59 = vector.multi_reduction <maximumf>, %58, %cst_25 [2] : vector<2x64x64xf32> to vector<2x64xf32>
    %60 = vector.shape_cast %59 : vector<2x64xf32> to vector<2x64x1xf32>
    %61 = vector.broadcast %60 : vector<2x64x1xf32> to vector<2x64x64xf32>
    %62 = arith.subf %58, %61 : vector<2x64x64xf32>
    %63 = math.exp %62 : vector<2x64x64xf32>
    %cst_26 = arith.constant dense<0.000000e+00> : vector<2x64xf32>
    %64 = vector.multi_reduction <add>, %63, %cst_26 [2] : vector<2x64x64xf32> to vector<2x64xf32>
    %65 = vector.shape_cast %64 : vector<2x64xf32> to vector<2x64x1xf32>
    %66 = tpu.reciprocal %65 {approx = true} : vector<2x64x1xf32> -> vector<2x64x1xf32>
    %67 = vector.broadcast %66 : vector<2x64x1xf32> to vector<2x64x64xf32>
    %68 = arith.mulf %63, %67 : vector<2x64x64xf32>
    %69 = arith.truncf %68 : vector<2x64x64xf32> to vector<2x64x64xbf16>
    "tpu.trace_start"() <{level = 10 : i32, message = "bqk,bkd->bqd"}> : () -> ()
    %cst_27 = arith.constant dense<0.000000e+00> : vector<2x64x32xf32>
    %70 = tpu.matmul %69, %53, %cst_27 {dimension_numbers = #tpu.dot_dimension_numbers<[2], [1], [1], [2], [0, 0, 0, 1, 1, 2], [0], [0]>} : vector<2x64x64xbf16>, vector<2x64x32xbf16>, vector<2x64x32xf32> -> vector<2x64x32xf32>
    "tpu.trace_stop"() : () -> ()
    %71 = vector.shape_cast %70 : vector<2x64x32xf32> to vector<128x32xf32>
    %72 = arith.truncf %71 : vector<128x32xf32> to vector<128x32xbf16>
    %73 = vector.extract_strided_slice %16 {offsets = [0, 0], sizes = [32, 128], strides = [1, 1]} : vector<128x128xbf16> to vector<32x128xbf16>
    %cst_28 = arith.constant dense<0.000000e+00> : vector<128x128xf32>
    %74 = tpu.matmul %72, %73, %cst_28 {dimension_numbers = #tpu.dot_dimension_numbers<[1], [0], [0], [1], [0, 0, 1, 1], [], []>} : vector<128x32xbf16>, vector<32x128xbf16>, vector<128x128xf32> -> vector<128x128xf32>
    %75 = arith.addf %47, %74 : vector<128x128xf32>
    %76 = vector.extract_strided_slice %46 {offsets = [0, 0, 32], sizes = [2, 64, 32], strides = [1, 1, 1]} : vector<2x64x384xf32> to vector<2x64x32xf32>
    %77 = arith.truncf %76 : vector<2x64x32xf32> to vector<2x64x32xbf16>
    %78 = vector.extract_strided_slice %46 {offsets = [0, 0, 160], sizes = [2, 64, 32], strides = [1, 1, 1]} : vector<2x64x384xf32> to vector<2x64x32xf32>
    %79 = arith.truncf %78 : vector<2x64x32xf32> to vector<2x64x32xbf16>
    %80 = vector.extract_strided_slice %46 {offsets = [0, 0, 288], sizes = [2, 64, 32], strides = [1, 1, 1]} : vector<2x64x384xf32> to vector<2x64x32xf32>
    %81 = arith.truncf %80 : vector<2x64x32xf32> to vector<2x64x32xbf16>
    "tpu.trace_start"() <{level = 10 : i32, message = "bqd,bkd->bqk"}> : () -> ()
    %cst_29 = arith.constant dense<0.000000e+00> : vector<2x64x64xf32>
    %82 = tpu.matmul %77, %79, %cst_29 {dimension_numbers = #tpu.dot_dimension_numbers<[2], [2], [1], [1], [0, 0, 0, 1, 1, 1], [0], [0]>} : vector<2x64x32xbf16>, vector<2x64x32xbf16>, vector<2x64x64xf32> -> vector<2x64x64xf32>
    %cst_30 = arith.constant -1.000000e+30 : f32
    "tpu.trace_stop"() : () -> ()
    %83 = vector.shape_cast %4 : vector<1x64x64xi1> to vector<1x64x64xi1>
    %84 = vector.broadcast %83 : vector<1x64x64xi1> to vector<2x64x64xi1>
    %85 = vector.broadcast %cst_30 : f32 to vector<2x64x64xf32>
    %86 = arith.select %84, %82, %85 : vector<2x64x64xi1>, vector<2x64x64xf32>
    %cst_31 = arith.constant dense<0xFF800000> : vector<2x64xf32>
    %87 = vector.multi_reduction <maximumf>, %86, %cst_31 [2] : vector<2x64x64xf32> to vector<2x64xf32>
    %88 = vector.shape_cast %87 : vector<2x64xf32> to vector<2x64x1xf32>
    %89 = vector.broadcast %88 : vector<2x64x1xf32> to vector<2x64x64xf32>
    %90 = arith.subf %86, %89 : vector<2x64x64xf32>
    %91 = math.exp %90 : vector<2x64x64xf32>
    %cst_32 = arith.constant dense<0.000000e+00> : vector<2x64xf32>
    %92 = vector.multi_reduction <add>, %91, %cst_32 [2] : vector<2x64x64xf32> to vector<2x64xf32>
    %93 = vector.shape_cast %92 : vector<2x64xf32> to vector<2x64x1xf32>
    %94 = tpu.reciprocal %93 {approx = true} : vector<2x64x1xf32> -> vector<2x64x1xf32>
    %95 = vector.broadcast %94 : vector<2x64x1xf32> to vector<2x64x64xf32>
    %96 = arith.mulf %91, %95 : vector<2x64x64xf32>
    %97 = arith.truncf %96 : vector<2x64x64xf32> to vector<2x64x64xbf16>
    "tpu.trace_start"() <{level = 10 : i32, message = "bqk,bkd->bqd"}> : () -> ()
    %cst_33 = arith.constant dense<0.000000e+00> : vector<2x64x32xf32>
    %98 = tpu.matmul %97, %81, %cst_33 {dimension_numbers = #tpu.dot_dimension_numbers<[2], [1], [1], [2], [0, 0, 0, 1, 1, 2], [0], [0]>} : vector<2x64x64xbf16>, vector<2x64x32xbf16>, vector<2x64x32xf32> -> vector<2x64x32xf32>
    "tpu.trace_stop"() : () -> ()
    %99 = vector.shape_cast %98 : vector<2x64x32xf32> to vector<128x32xf32>
    %100 = arith.truncf %99 : vector<128x32xf32> to vector<128x32xbf16>
    %101 = vector.extract_strided_slice %16 {offsets = [32, 0], sizes = [32, 128], strides = [1, 1]} : vector<128x128xbf16> to vector<32x128xbf16>
    %cst_34 = arith.constant dense<0.000000e+00> : vector<128x128xf32>
    %102 = tpu.matmul %100, %101, %cst_34 {dimension_numbers = #tpu.dot_dimension_numbers<[1], [0], [0], [1], [0, 0, 1, 1], [], []>} : vector<128x32xbf16>, vector<32x128xbf16>, vector<128x128xf32> -> vector<128x128xf32>
    %103 = arith.addf %75, %102 : vector<128x128xf32>
    %104 = vector.extract_strided_slice %46 {offsets = [0, 0, 64], sizes = [2, 64, 32], strides = [1, 1, 1]} : vector<2x64x384xf32> to vector<2x64x32xf32>
    %105 = arith.truncf %104 : vector<2x64x32xf32> to vector<2x64x32xbf16>
    %106 = vector.extract_strided_slice %46 {offsets = [0, 0, 192], sizes = [2, 64, 32], strides = [1, 1, 1]} : vector<2x64x384xf32> to vector<2x64x32xf32>
    %107 = arith.truncf %106 : vector<2x64x32xf32> to vector<2x64x32xbf16>
    %108 = vector.extract_strided_slice %46 {offsets = [0, 0, 320], sizes = [2, 64, 32], strides = [1, 1, 1]} : vector<2x64x384xf32> to vector<2x64x32xf32>
    %109 = arith.truncf %108 : vector<2x64x32xf32> to vector<2x64x32xbf16>
    "tpu.trace_start"() <{level = 10 : i32, message = "bqd,bkd->bqk"}> : () -> ()
    %cst_35 = arith.constant dense<0.000000e+00> : vector<2x64x64xf32>
    %110 = tpu.matmul %105, %107, %cst_35 {dimension_numbers = #tpu.dot_dimension_numbers<[2], [2], [1], [1], [0, 0, 0, 1, 1, 1], [0], [0]>} : vector<2x64x32xbf16>, vector<2x64x32xbf16>, vector<2x64x64xf32> -> vector<2x64x64xf32>
    %cst_36 = arith.constant -1.000000e+30 : f32
    "tpu.trace_stop"() : () -> ()
    %111 = vector.shape_cast %4 : vector<1x64x64xi1> to vector<1x64x64xi1>
    %112 = vector.broadcast %111 : vector<1x64x64xi1> to vector<2x64x64xi1>
    %113 = vector.broadcast %cst_36 : f32 to vector<2x64x64xf32>
    %114 = arith.select %112, %110, %113 : vector<2x64x64xi1>, vector<2x64x64xf32>
    %cst_37 = arith.constant dense<0xFF800000> : vector<2x64xf32>
    %115 = vector.multi_reduction <maximumf>, %114, %cst_37 [2] : vector<2x64x64xf32> to vector<2x64xf32>
    %116 = vector.shape_cast %115 : vector<2x64xf32> to vector<2x64x1xf32>
    %117 = vector.broadcast %116 : vector<2x64x1xf32> to vector<2x64x64xf32>
    %118 = arith.subf %114, %117 : vector<2x64x64xf32>
    %119 = math.exp %118 : vector<2x64x64xf32>
    %cst_38 = arith.constant dense<0.000000e+00> : vector<2x64xf32>
    %120 = vector.multi_reduction <add>, %119, %cst_38 [2] : vector<2x64x64xf32> to vector<2x64xf32>
    %121 = vector.shape_cast %120 : vector<2x64xf32> to vector<2x64x1xf32>
    %122 = tpu.reciprocal %121 {approx = true} : vector<2x64x1xf32> -> vector<2x64x1xf32>
    %123 = vector.broadcast %122 : vector<2x64x1xf32> to vector<2x64x64xf32>
    %124 = arith.mulf %119, %123 : vector<2x64x64xf32>
    %125 = arith.truncf %124 : vector<2x64x64xf32> to vector<2x64x64xbf16>
    "tpu.trace_start"() <{level = 10 : i32, message = "bqk,bkd->bqd"}> : () -> ()
    %cst_39 = arith.constant dense<0.000000e+00> : vector<2x64x32xf32>
    %126 = tpu.matmul %125, %109, %cst_39 {dimension_numbers = #tpu.dot_dimension_numbers<[2], [1], [1], [2], [0, 0, 0, 1, 1, 2], [0], [0]>} : vector<2x64x64xbf16>, vector<2x64x32xbf16>, vector<2x64x32xf32> -> vector<2x64x32xf32>
    "tpu.trace_stop"() : () -> ()
    %127 = vector.shape_cast %126 : vector<2x64x32xf32> to vector<128x32xf32>
    %128 = arith.truncf %127 : vector<128x32xf32> to vector<128x32xbf16>
    %129 = vector.extract_strided_slice %16 {offsets = [64, 0], sizes = [32, 128], strides = [1, 1]} : vector<128x128xbf16> to vector<32x128xbf16>
    %cst_40 = arith.constant dense<0.000000e+00> : vector<128x128xf32>
    %130 = tpu.matmul %128, %129, %cst_40 {dimension_numbers = #tpu.dot_dimension_numbers<[1], [0], [0], [1], [0, 0, 1, 1], [], []>} : vector<128x32xbf16>, vector<32x128xbf16>, vector<128x128xf32> -> vector<128x128xf32>
    %131 = arith.addf %103, %130 : vector<128x128xf32>
    %132 = vector.extract_strided_slice %46 {offsets = [0, 0, 96], sizes = [2, 64, 32], strides = [1, 1, 1]} : vector<2x64x384xf32> to vector<2x64x32xf32>
    %133 = arith.truncf %132 : vector<2x64x32xf32> to vector<2x64x32xbf16>
    %134 = vector.extract_strided_slice %46 {offsets = [0, 0, 224], sizes = [2, 64, 32], strides = [1, 1, 1]} : vector<2x64x384xf32> to vector<2x64x32xf32>
    %135 = arith.truncf %134 : vector<2x64x32xf32> to vector<2x64x32xbf16>
    %136 = vector.extract_strided_slice %46 {offsets = [0, 0, 352], sizes = [2, 64, 32], strides = [1, 1, 1]} : vector<2x64x384xf32> to vector<2x64x32xf32>
    %137 = arith.truncf %136 : vector<2x64x32xf32> to vector<2x64x32xbf16>
    "tpu.trace_start"() <{level = 10 : i32, message = "bqd,bkd->bqk"}> : () -> ()
    %cst_41 = arith.constant dense<0.000000e+00> : vector<2x64x64xf32>
    %138 = tpu.matmul %133, %135, %cst_41 {dimension_numbers = #tpu.dot_dimension_numbers<[2], [2], [1], [1], [0, 0, 0, 1, 1, 1], [0], [0]>} : vector<2x64x32xbf16>, vector<2x64x32xbf16>, vector<2x64x64xf32> -> vector<2x64x64xf32>
    %cst_42 = arith.constant -1.000000e+30 : f32
    "tpu.trace_stop"() : () -> ()
    %139 = vector.shape_cast %4 : vector<1x64x64xi1> to vector<1x64x64xi1>
    %140 = vector.broadcast %139 : vector<1x64x64xi1> to vector<2x64x64xi1>
    %141 = vector.broadcast %cst_42 : f32 to vector<2x64x64xf32>
    %142 = arith.select %140, %138, %141 : vector<2x64x64xi1>, vector<2x64x64xf32>
    %cst_43 = arith.constant dense<0xFF800000> : vector<2x64xf32>
    %143 = vector.multi_reduction <maximumf>, %142, %cst_43 [2] : vector<2x64x64xf32> to vector<2x64xf32>
    %144 = vector.shape_cast %143 : vector<2x64xf32> to vector<2x64x1xf32>
    %145 = vector.broadcast %144 : vector<2x64x1xf32> to vector<2x64x64xf32>
    %146 = arith.subf %142, %145 : vector<2x64x64xf32>
    %147 = math.exp %146 : vector<2x64x64xf32>
    %cst_44 = arith.constant dense<0.000000e+00> : vector<2x64xf32>
    %148 = vector.multi_reduction <add>, %147, %cst_44 [2] : vector<2x64x64xf32> to vector<2x64xf32>
    %149 = vector.shape_cast %148 : vector<2x64xf32> to vector<2x64x1xf32>
    %150 = tpu.reciprocal %149 {approx = true} : vector<2x64x1xf32> -> vector<2x64x1xf32>
    %151 = vector.broadcast %150 : vector<2x64x1xf32> to vector<2x64x64xf32>
    %152 = arith.mulf %147, %151 : vector<2x64x64xf32>
    %153 = arith.truncf %152 : vector<2x64x64xf32> to vector<2x64x64xbf16>
    "tpu.trace_start"() <{level = 10 : i32, message = "bqk,bkd->bqd"}> : () -> ()
    %cst_45 = arith.constant dense<0.000000e+00> : vector<2x64x32xf32>
    %154 = tpu.matmul %153, %137, %cst_45 {dimension_numbers = #tpu.dot_dimension_numbers<[2], [1], [1], [2], [0, 0, 0, 1, 1, 2], [0], [0]>} : vector<2x64x64xbf16>, vector<2x64x32xbf16>, vector<2x64x32xf32> -> vector<2x64x32xf32>
    "tpu.trace_stop"() : () -> ()
    %155 = vector.shape_cast %154 : vector<2x64x32xf32> to vector<128x32xf32>
    %156 = arith.truncf %155 : vector<128x32xf32> to vector<128x32xbf16>
    %157 = vector.extract_strided_slice %16 {offsets = [96, 0], sizes = [32, 128], strides = [1, 1]} : vector<128x128xbf16> to vector<32x128xbf16>
    %cst_46 = arith.constant dense<0.000000e+00> : vector<128x128xf32>
    %158 = tpu.matmul %156, %157, %cst_46 {dimension_numbers = #tpu.dot_dimension_numbers<[1], [0], [0], [1], [0, 0, 1, 1], [], []>} : vector<128x32xbf16>, vector<32x128xbf16>, vector<128x128xf32> -> vector<128x128xf32>
    %159 = arith.addf %131, %158 : vector<128x128xf32>
    %160 = vector.broadcast %11 : vector<1x128xf32> to vector<128x128xf32>
    %161 = arith.addf %159, %160 : vector<128x128xf32>
    %162 = vector.shape_cast %161 : vector<128x128xf32> to vector<2x64x128xf32>
    %163 = arith.addf %0, %162 : vector<2x64x128xf32>
    %cst_47 = arith.constant dense<0.000000e+00> : vector<2x128xf32>
    %164 = vector.multi_reduction <add>, %163, %cst_47 [1] : vector<2x64x128xf32> to vector<2x128xf32>
    %165 = vector.shape_cast %164 : vector<2x128xf32> to vector<2x1x128xf32>
    %cst_48 = arith.constant 6.400000e+01 : f32
    %166 = vector.broadcast %cst_48 : f32 to vector<2x1x128xf32>
    %167 = arith.divf %165, %166 : vector<2x1x128xf32>
    %168 = vector.broadcast %167 : vector<2x1x128xf32> to vector<2x64x128xf32>
    %169 = arith.subf %163, %168 : vector<2x64x128xf32>
    %170 = arith.mulf %169, %169 : vector<2x64x128xf32>
    %cst_49 = arith.constant dense<0.000000e+00> : vector<2x128xf32>
    %171 = vector.multi_reduction <add>, %170, %cst_49 [1] : vector<2x64x128xf32> to vector<2x128xf32>
    %172 = vector.shape_cast %171 : vector<2x128xf32> to vector<2x1x128xf32>
    %cst_50 = arith.constant 0.0158730168 : f32
    %173 = vector.broadcast %cst_50 : f32 to vector<2x1x128xf32>
    %174 = arith.mulf %172, %173 : vector<2x1x128xf32>
    %cst_51 = arith.constant 9.99999974E-6 : f32
    %175 = vector.broadcast %cst_51 : f32 to vector<2x1x128xf32>
    %176 = arith.addf %174, %175 : vector<2x1x128xf32>
    %177 = math.rsqrt %176 : vector<2x1x128xf32>
    %178 = vector.broadcast %177 : vector<2x1x128xf32> to vector<2x64x128xf32>
    %179 = arith.mulf %169, %178 : vector<2x64x128xf32>
    %180 = vector.shape_cast %9 : vector<1x128xf32> to vector<1x1x128xf32>
    %181 = vector.broadcast %180 : vector<1x1x128xf32> to vector<2x64x128xf32>
    %182 = arith.mulf %181, %179 : vector<2x64x128xf32>
    %183 = vector.shape_cast %10 : vector<1x128xf32> to vector<1x1x128xf32>
    %184 = vector.broadcast %183 : vector<1x1x128xf32> to vector<2x64x128xf32>
    %185 = arith.addf %182, %184 : vector<2x64x128xf32>
    %186 = vector.shape_cast %185 : vector<2x64x128xf32> to vector<128x128xf32>
    %187 = arith.truncf %186 : vector<128x128xf32> to vector<128x128xbf16>
    %cst_52 = arith.constant dense<0.000000e+00> : vector<128x512xf32>
    %188 = tpu.matmul %187, %18, %cst_52 {dimension_numbers = #tpu.dot_dimension_numbers<[1], [0], [0], [1], [0, 0, 1, 1], [], []>} : vector<128x128xbf16>, vector<128x512xbf16>, vector<128x512xf32> -> vector<128x512xf32>
    %c0_53 = arith.constant 0 : index
    %c0_54 = arith.constant 0 : index
    %c0_55 = arith.constant 0 : index
    %189 = vector.load %arg3[%c0_53, %c0_54, %c0_55] : memref<2x1x512xf32, #tpu.memory_space<vmem>>, vector<1x1x512xf32>
    %190 = vector.shape_cast %189 : vector<1x1x512xf32> to vector<1x512xf32>
    %191 = vector.broadcast %190 : vector<1x512xf32> to vector<128x512xf32>
    %192 = arith.addf %188, %191 : vector<128x512xf32>
    %cst_56 = arith.constant 0.000000e+00 : f32
    %193 = vector.broadcast %cst_56 : f32 to vector<128x512xf32>
    %194 = arith.maximumf %192, %193 : vector<128x512xf32>
    %195 = arith.truncf %194 : vector<128x512xf32> to vector<128x512xbf16>
    %cst_57 = arith.constant dense<0.000000e+00> : vector<128x128xf32>
    %196 = tpu.matmul %195, %20, %cst_57 {dimension_numbers = #tpu.dot_dimension_numbers<[1], [0], [0], [1], [0, 0, 1, 1], [], []>} : vector<128x512xbf16>, vector<512x128xbf16>, vector<128x128xf32> -> vector<128x128xf32>
    %197 = vector.broadcast %12 : vector<1x128xf32> to vector<128x128xf32>
    %198 = arith.addf %196, %197 : vector<128x128xf32>
    %199 = vector.shape_cast %198 : vector<128x128xf32> to vector<2x64x128xf32>
    %200 = arith.addf %163, %199 : vector<2x64x128xf32>
    %c1 = arith.constant 1 : index
    %c0_58 = arith.constant 0 : index
    %c0_59 = arith.constant 0 : index
    %201 = vector.load %arg2[%c1, %c0_58, %c0_59] : memref<2x8x128xf32, #tpu.memory_space<vmem>>, vector<1x8x128xf32>
    %202 = vector.shape_cast %201 : vector<1x8x128xf32> to vector<8x128xf32>
    %203 = vector.extract_strided_slice %202 {offsets = [0, 0], sizes = [1, 128], strides = [1, 1]} : vector<8x128xf32> to vector<1x128xf32>
    %204 = vector.extract_strided_slice %202 {offsets = [1, 0], sizes = [1, 128], strides = [1, 1]} : vector<8x128xf32> to vector<1x128xf32>
    %205 = vector.extract_strided_slice %202 {offsets = [2, 0], sizes = [1, 128], strides = [1, 1]} : vector<8x128xf32> to vector<1x128xf32>
    %206 = vector.extract_strided_slice %202 {offsets = [3, 0], sizes = [1, 128], strides = [1, 1]} : vector<8x128xf32> to vector<1x128xf32>
    %207 = vector.extract_strided_slice %202 {offsets = [4, 0], sizes = [1, 128], strides = [1, 1]} : vector<8x128xf32> to vector<1x128xf32>
    %208 = vector.extract_strided_slice %202 {offsets = [5, 0], sizes = [1, 128], strides = [1, 1]} : vector<8x128xf32> to vector<1x128xf32>
    %c1_60 = arith.constant 1 : index
    %c0_61 = arith.constant 0 : index
    %c0_62 = arith.constant 0 : index
    %209 = vector.load %arg4[%c1_60, %c0_61, %c0_62] : memref<2x128x384xbf16, #tpu.memory_space<vmem>>, vector<1x128x384xbf16>
    %210 = vector.shape_cast %209 : vector<1x128x384xbf16> to vector<128x384xbf16>
    %c1_63 = arith.constant 1 : index
    %c0_64 = arith.constant 0 : index
    %c0_65 = arith.constant 0 : index
    %211 = vector.load %arg5[%c1_63, %c0_64, %c0_65] : memref<2x128x128xbf16, #tpu.memory_space<vmem>>, vector<1x128x128xbf16>
    %212 = vector.shape_cast %211 : vector<1x128x128xbf16> to vector<128x128xbf16>
    %c1_66 = arith.constant 1 : index
    %c0_67 = arith.constant 0 : index
    %c0_68 = arith.constant 0 : index
    %213 = vector.load %arg6[%c1_66, %c0_67, %c0_68] : memref<2x128x512xbf16, #tpu.memory_space<vmem>>, vector<1x128x512xbf16>
    %214 = vector.shape_cast %213 : vector<1x128x512xbf16> to vector<128x512xbf16>
    %c1_69 = arith.constant 1 : index
    %c0_70 = arith.constant 0 : index
    %c0_71 = arith.constant 0 : index
    %215 = vector.load %arg7[%c1_69, %c0_70, %c0_71] : memref<2x512x128xbf16, #tpu.memory_space<vmem>>, vector<1x512x128xbf16>
    %216 = vector.shape_cast %215 : vector<1x512x128xbf16> to vector<512x128xbf16>
    %cst_72 = arith.constant dense<0.000000e+00> : vector<2x128xf32>
    %217 = vector.multi_reduction <add>, %200, %cst_72 [1] : vector<2x64x128xf32> to vector<2x128xf32>
    %218 = vector.shape_cast %217 : vector<2x128xf32> to vector<2x1x128xf32>
    %cst_73 = arith.constant 6.400000e+01 : f32
    %219 = vector.broadcast %cst_73 : f32 to vector<2x1x128xf32>
    %220 = arith.divf %218, %219 : vector<2x1x128xf32>
    %221 = vector.broadcast %220 : vector<2x1x128xf32> to vector<2x64x128xf32>
    %222 = arith.subf %200, %221 : vector<2x64x128xf32>
    %223 = arith.mulf %222, %222 : vector<2x64x128xf32>
    %cst_74 = arith.constant dense<0.000000e+00> : vector<2x128xf32>
    %224 = vector.multi_reduction <add>, %223, %cst_74 [1] : vector<2x64x128xf32> to vector<2x128xf32>
    %225 = vector.shape_cast %224 : vector<2x128xf32> to vector<2x1x128xf32>
    %cst_75 = arith.constant 0.0158730168 : f32
    %226 = vector.broadcast %cst_75 : f32 to vector<2x1x128xf32>
    %227 = arith.mulf %225, %226 : vector<2x1x128xf32>
    %cst_76 = arith.constant 9.99999974E-6 : f32
    %228 = vector.broadcast %cst_76 : f32 to vector<2x1x128xf32>
    %229 = arith.addf %227, %228 : vector<2x1x128xf32>
    %230 = math.rsqrt %229 : vector<2x1x128xf32>
    %231 = vector.broadcast %230 : vector<2x1x128xf32> to vector<2x64x128xf32>
    %232 = arith.mulf %222, %231 : vector<2x64x128xf32>
    %233 = vector.shape_cast %203 : vector<1x128xf32> to vector<1x1x128xf32>
    %234 = vector.broadcast %233 : vector<1x1x128xf32> to vector<2x64x128xf32>
    %235 = arith.mulf %234, %232 : vector<2x64x128xf32>
    %236 = vector.shape_cast %204 : vector<1x128xf32> to vector<1x1x128xf32>
    %237 = vector.broadcast %236 : vector<1x1x128xf32> to vector<2x64x128xf32>
    %238 = arith.addf %235, %237 : vector<2x64x128xf32>
    %239 = vector.shape_cast %238 : vector<2x64x128xf32> to vector<128x128xf32>
    %240 = arith.truncf %239 : vector<128x128xf32> to vector<128x128xbf16>
    %cst_77 = arith.constant dense<0.000000e+00> : vector<128x384xf32>
    %241 = tpu.matmul %240, %210, %cst_77 {dimension_numbers = #tpu.dot_dimension_numbers<[1], [0], [0], [1], [0, 0, 1, 1], [], []>} : vector<128x128xbf16>, vector<128x384xbf16>, vector<128x384xf32> -> vector<128x384xf32>
    %242 = vector.shape_cast %241 : vector<128x384xf32> to vector<2x64x384xf32>
    %cst_78 = arith.constant 0.000000e+00 : f32
    %243 = vector.broadcast %cst_78 : f32 to vector<128x128xf32>
    %244 = vector.extract_strided_slice %242 {offsets = [0, 0, 0], sizes = [2, 64, 32], strides = [1, 1, 1]} : vector<2x64x384xf32> to vector<2x64x32xf32>
    %245 = arith.truncf %244 : vector<2x64x32xf32> to vector<2x64x32xbf16>
    %246 = vector.extract_strided_slice %242 {offsets = [0, 0, 128], sizes = [2, 64, 32], strides = [1, 1, 1]} : vector<2x64x384xf32> to vector<2x64x32xf32>
    %247 = arith.truncf %246 : vector<2x64x32xf32> to vector<2x64x32xbf16>
    %248 = vector.extract_strided_slice %242 {offsets = [0, 0, 256], sizes = [2, 64, 32], strides = [1, 1, 1]} : vector<2x64x384xf32> to vector<2x64x32xf32>
    %249 = arith.truncf %248 : vector<2x64x32xf32> to vector<2x64x32xbf16>
    "tpu.trace_start"() <{level = 10 : i32, message = "bqd,bkd->bqk"}> : () -> ()
    %cst_79 = arith.constant dense<0.000000e+00> : vector<2x64x64xf32>
    %250 = tpu.matmul %245, %247, %cst_79 {dimension_numbers = #tpu.dot_dimension_numbers<[2], [2], [1], [1], [0, 0, 0, 1, 1, 1], [0], [0]>} : vector<2x64x32xbf16>, vector<2x64x32xbf16>, vector<2x64x64xf32> -> vector<2x64x64xf32>
    %cst_80 = arith.constant -1.000000e+30 : f32
    "tpu.trace_stop"() : () -> ()
    %251 = vector.shape_cast %4 : vector<1x64x64xi1> to vector<1x64x64xi1>
    %252 = vector.broadcast %251 : vector<1x64x64xi1> to vector<2x64x64xi1>
    %253 = vector.broadcast %cst_80 : f32 to vector<2x64x64xf32>
    %254 = arith.select %252, %250, %253 : vector<2x64x64xi1>, vector<2x64x64xf32>
    %cst_81 = arith.constant dense<0xFF800000> : vector<2x64xf32>
    %255 = vector.multi_reduction <maximumf>, %254, %cst_81 [2] : vector<2x64x64xf32> to vector<2x64xf32>
    %256 = vector.shape_cast %255 : vector<2x64xf32> to vector<2x64x1xf32>
    %257 = vector.broadcast %256 : vector<2x64x1xf32> to vector<2x64x64xf32>
    %258 = arith.subf %254, %257 : vector<2x64x64xf32>
    %259 = math.exp %258 : vector<2x64x64xf32>
    %cst_82 = arith.constant dense<0.000000e+00> : vector<2x64xf32>
    %260 = vector.multi_reduction <add>, %259, %cst_82 [2] : vector<2x64x64xf32> to vector<2x64xf32>
    %261 = vector.shape_cast %260 : vector<2x64xf32> to vector<2x64x1xf32>
    %262 = tpu.reciprocal %261 {approx = true} : vector<2x64x1xf32> -> vector<2x64x1xf32>
    %263 = vector.broadcast %262 : vector<2x64x1xf32> to vector<2x64x64xf32>
    %264 = arith.mulf %259, %263 : vector<2x64x64xf32>
    %265 = arith.truncf %264 : vector<2x64x64xf32> to vector<2x64x64xbf16>
    "tpu.trace_start"() <{level = 10 : i32, message = "bqk,bkd->bqd"}> : () -> ()
    %cst_83 = arith.constant dense<0.000000e+00> : vector<2x64x32xf32>
    %266 = tpu.matmul %265, %249, %cst_83 {dimension_numbers = #tpu.dot_dimension_numbers<[2], [1], [1], [2], [0, 0, 0, 1, 1, 2], [0], [0]>} : vector<2x64x64xbf16>, vector<2x64x32xbf16>, vector<2x64x32xf32> -> vector<2x64x32xf32>
    "tpu.trace_stop"() : () -> ()
    %267 = vector.shape_cast %266 : vector<2x64x32xf32> to vector<128x32xf32>
    %268 = arith.truncf %267 : vector<128x32xf32> to vector<128x32xbf16>
    %269 = vector.extract_strided_slice %212 {offsets = [0, 0], sizes = [32, 128], strides = [1, 1]} : vector<128x128xbf16> to vector<32x128xbf16>
    %cst_84 = arith.constant dense<0.000000e+00> : vector<128x128xf32>
    %270 = tpu.matmul %268, %269, %cst_84 {dimension_numbers = #tpu.dot_dimension_numbers<[1], [0], [0], [1], [0, 0, 1, 1], [], []>} : vector<128x32xbf16>, vector<32x128xbf16>, vector<128x128xf32> -> vector<128x128xf32>
    %271 = arith.addf %243, %270 : vector<128x128xf32>
    %272 = vector.extract_strided_slice %242 {offsets = [0, 0, 32], sizes = [2, 64, 32], strides = [1, 1, 1]} : vector<2x64x384xf32> to vector<2x64x32xf32>
    %273 = arith.truncf %272 : vector<2x64x32xf32> to vector<2x64x32xbf16>
    %274 = vector.extract_strided_slice %242 {offsets = [0, 0, 160], sizes = [2, 64, 32], strides = [1, 1, 1]} : vector<2x64x384xf32> to vector<2x64x32xf32>
    %275 = arith.truncf %274 : vector<2x64x32xf32> to vector<2x64x32xbf16>
    %276 = vector.extract_strided_slice %242 {offsets = [0, 0, 288], sizes = [2, 64, 32], strides = [1, 1, 1]} : vector<2x64x384xf32> to vector<2x64x32xf32>
    %277 = arith.truncf %276 : vector<2x64x32xf32> to vector<2x64x32xbf16>
    "tpu.trace_start"() <{level = 10 : i32, message = "bqd,bkd->bqk"}> : () -> ()
    %cst_85 = arith.constant dense<0.000000e+00> : vector<2x64x64xf32>
    %278 = tpu.matmul %273, %275, %cst_85 {dimension_numbers = #tpu.dot_dimension_numbers<[2], [2], [1], [1], [0, 0, 0, 1, 1, 1], [0], [0]>} : vector<2x64x32xbf16>, vector<2x64x32xbf16>, vector<2x64x64xf32> -> vector<2x64x64xf32>
    %cst_86 = arith.constant -1.000000e+30 : f32
    "tpu.trace_stop"() : () -> ()
    %279 = vector.shape_cast %4 : vector<1x64x64xi1> to vector<1x64x64xi1>
    %280 = vector.broadcast %279 : vector<1x64x64xi1> to vector<2x64x64xi1>
    %281 = vector.broadcast %cst_86 : f32 to vector<2x64x64xf32>
    %282 = arith.select %280, %278, %281 : vector<2x64x64xi1>, vector<2x64x64xf32>
    %cst_87 = arith.constant dense<0xFF800000> : vector<2x64xf32>
    %283 = vector.multi_reduction <maximumf>, %282, %cst_87 [2] : vector<2x64x64xf32> to vector<2x64xf32>
    %284 = vector.shape_cast %283 : vector<2x64xf32> to vector<2x64x1xf32>
    %285 = vector.broadcast %284 : vector<2x64x1xf32> to vector<2x64x64xf32>
    %286 = arith.subf %282, %285 : vector<2x64x64xf32>
    %287 = math.exp %286 : vector<2x64x64xf32>
    %cst_88 = arith.constant dense<0.000000e+00> : vector<2x64xf32>
    %288 = vector.multi_reduction <add>, %287, %cst_88 [2] : vector<2x64x64xf32> to vector<2x64xf32>
    %289 = vector.shape_cast %288 : vector<2x64xf32> to vector<2x64x1xf32>
    %290 = tpu.reciprocal %289 {approx = true} : vector<2x64x1xf32> -> vector<2x64x1xf32>
    %291 = vector.broadcast %290 : vector<2x64x1xf32> to vector<2x64x64xf32>
    %292 = arith.mulf %287, %291 : vector<2x64x64xf32>
    %293 = arith.truncf %292 : vector<2x64x64xf32> to vector<2x64x64xbf16>
    "tpu.trace_start"() <{level = 10 : i32, message = "bqk,bkd->bqd"}> : () -> ()
    %cst_89 = arith.constant dense<0.000000e+00> : vector<2x64x32xf32>
    %294 = tpu.matmul %293, %277, %cst_89 {dimension_numbers = #tpu.dot_dimension_numbers<[2], [1], [1], [2], [0, 0, 0, 1, 1, 2], [0], [0]>} : vector<2x64x64xbf16>, vector<2x64x32xbf16>, vector<2x64x32xf32> -> vector<2x64x32xf32>
    "tpu.trace_stop"() : () -> ()
    %295 = vector.shape_cast %294 : vector<2x64x32xf32> to vector<128x32xf32>
    %296 = arith.truncf %295 : vector<128x32xf32> to vector<128x32xbf16>
    %297 = vector.extract_strided_slice %212 {offsets = [32, 0], sizes = [32, 128], strides = [1, 1]} : vector<128x128xbf16> to vector<32x128xbf16>
    %cst_90 = arith.constant dense<0.000000e+00> : vector<128x128xf32>
    %298 = tpu.matmul %296, %297, %cst_90 {dimension_numbers = #tpu.dot_dimension_numbers<[1], [0], [0], [1], [0, 0, 1, 1], [], []>} : vector<128x32xbf16>, vector<32x128xbf16>, vector<128x128xf32> -> vector<128x128xf32>
    %299 = arith.addf %271, %298 : vector<128x128xf32>
    %300 = vector.extract_strided_slice %242 {offsets = [0, 0, 64], sizes = [2, 64, 32], strides = [1, 1, 1]} : vector<2x64x384xf32> to vector<2x64x32xf32>
    %301 = arith.truncf %300 : vector<2x64x32xf32> to vector<2x64x32xbf16>
    %302 = vector.extract_strided_slice %242 {offsets = [0, 0, 192], sizes = [2, 64, 32], strides = [1, 1, 1]} : vector<2x64x384xf32> to vector<2x64x32xf32>
    %303 = arith.truncf %302 : vector<2x64x32xf32> to vector<2x64x32xbf16>
    %304 = vector.extract_strided_slice %242 {offsets = [0, 0, 320], sizes = [2, 64, 32], strides = [1, 1, 1]} : vector<2x64x384xf32> to vector<2x64x32xf32>
    %305 = arith.truncf %304 : vector<2x64x32xf32> to vector<2x64x32xbf16>
    "tpu.trace_start"() <{level = 10 : i32, message = "bqd,bkd->bqk"}> : () -> ()
    %cst_91 = arith.constant dense<0.000000e+00> : vector<2x64x64xf32>
    %306 = tpu.matmul %301, %303, %cst_91 {dimension_numbers = #tpu.dot_dimension_numbers<[2], [2], [1], [1], [0, 0, 0, 1, 1, 1], [0], [0]>} : vector<2x64x32xbf16>, vector<2x64x32xbf16>, vector<2x64x64xf32> -> vector<2x64x64xf32>
    %cst_92 = arith.constant -1.000000e+30 : f32
    "tpu.trace_stop"() : () -> ()
    %307 = vector.shape_cast %4 : vector<1x64x64xi1> to vector<1x64x64xi1>
    %308 = vector.broadcast %307 : vector<1x64x64xi1> to vector<2x64x64xi1>
    %309 = vector.broadcast %cst_92 : f32 to vector<2x64x64xf32>
    %310 = arith.select %308, %306, %309 : vector<2x64x64xi1>, vector<2x64x64xf32>
    %cst_93 = arith.constant dense<0xFF800000> : vector<2x64xf32>
    %311 = vector.multi_reduction <maximumf>, %310, %cst_93 [2] : vector<2x64x64xf32> to vector<2x64xf32>
    %312 = vector.shape_cast %311 : vector<2x64xf32> to vector<2x64x1xf32>
    %313 = vector.broadcast %312 : vector<2x64x1xf32> to vector<2x64x64xf32>
    %314 = arith.subf %310, %313 : vector<2x64x64xf32>
    %315 = math.exp %314 : vector<2x64x64xf32>
    %cst_94 = arith.constant dense<0.000000e+00> : vector<2x64xf32>
    %316 = vector.multi_reduction <add>, %315, %cst_94 [2] : vector<2x64x64xf32> to vector<2x64xf32>
    %317 = vector.shape_cast %316 : vector<2x64xf32> to vector<2x64x1xf32>
    %318 = tpu.reciprocal %317 {approx = true} : vector<2x64x1xf32> -> vector<2x64x1xf32>
    %319 = vector.broadcast %318 : vector<2x64x1xf32> to vector<2x64x64xf32>
    %320 = arith.mulf %315, %319 : vector<2x64x64xf32>
    %321 = arith.truncf %320 : vector<2x64x64xf32> to vector<2x64x64xbf16>
    "tpu.trace_start"() <{level = 10 : i32, message = "bqk,bkd->bqd"}> : () -> ()
    %cst_95 = arith.constant dense<0.000000e+00> : vector<2x64x32xf32>
    %322 = tpu.matmul %321, %305, %cst_95 {dimension_numbers = #tpu.dot_dimension_numbers<[2], [1], [1], [2], [0, 0, 0, 1, 1, 2], [0], [0]>} : vector<2x64x64xbf16>, vector<2x64x32xbf16>, vector<2x64x32xf32> -> vector<2x64x32xf32>
    "tpu.trace_stop"() : () -> ()
    %323 = vector.shape_cast %322 : vector<2x64x32xf32> to vector<128x32xf32>
    %324 = arith.truncf %323 : vector<128x32xf32> to vector<128x32xbf16>
    %325 = vector.extract_strided_slice %212 {offsets = [64, 0], sizes = [32, 128], strides = [1, 1]} : vector<128x128xbf16> to vector<32x128xbf16>
    %cst_96 = arith.constant dense<0.000000e+00> : vector<128x128xf32>
    %326 = tpu.matmul %324, %325, %cst_96 {dimension_numbers = #tpu.dot_dimension_numbers<[1], [0], [0], [1], [0, 0, 1, 1], [], []>} : vector<128x32xbf16>, vector<32x128xbf16>, vector<128x128xf32> -> vector<128x128xf32>
    %327 = arith.addf %299, %326 : vector<128x128xf32>
    %328 = vector.extract_strided_slice %242 {offsets = [0, 0, 96], sizes = [2, 64, 32], strides = [1, 1, 1]} : vector<2x64x384xf32> to vector<2x64x32xf32>
    %329 = arith.truncf %328 : vector<2x64x32xf32> to vector<2x64x32xbf16>
    %330 = vector.extract_strided_slice %242 {offsets = [0, 0, 224], sizes = [2, 64, 32], strides = [1, 1, 1]} : vector<2x64x384xf32> to vector<2x64x32xf32>
    %331 = arith.truncf %330 : vector<2x64x32xf32> to vector<2x64x32xbf16>
    %332 = vector.extract_strided_slice %242 {offsets = [0, 0, 352], sizes = [2, 64, 32], strides = [1, 1, 1]} : vector<2x64x384xf32> to vector<2x64x32xf32>
    %333 = arith.truncf %332 : vector<2x64x32xf32> to vector<2x64x32xbf16>
    "tpu.trace_start"() <{level = 10 : i32, message = "bqd,bkd->bqk"}> : () -> ()
    %cst_97 = arith.constant dense<0.000000e+00> : vector<2x64x64xf32>
    %334 = tpu.matmul %329, %331, %cst_97 {dimension_numbers = #tpu.dot_dimension_numbers<[2], [2], [1], [1], [0, 0, 0, 1, 1, 1], [0], [0]>} : vector<2x64x32xbf16>, vector<2x64x32xbf16>, vector<2x64x64xf32> -> vector<2x64x64xf32>
    %cst_98 = arith.constant -1.000000e+30 : f32
    "tpu.trace_stop"() : () -> ()
    %335 = vector.shape_cast %4 : vector<1x64x64xi1> to vector<1x64x64xi1>
    %336 = vector.broadcast %335 : vector<1x64x64xi1> to vector<2x64x64xi1>
    %337 = vector.broadcast %cst_98 : f32 to vector<2x64x64xf32>
    %338 = arith.select %336, %334, %337 : vector<2x64x64xi1>, vector<2x64x64xf32>
    %cst_99 = arith.constant dense<0xFF800000> : vector<2x64xf32>
    %339 = vector.multi_reduction <maximumf>, %338, %cst_99 [2] : vector<2x64x64xf32> to vector<2x64xf32>
    %340 = vector.shape_cast %339 : vector<2x64xf32> to vector<2x64x1xf32>
    %341 = vector.broadcast %340 : vector<2x64x1xf32> to vector<2x64x64xf32>
    %342 = arith.subf %338, %341 : vector<2x64x64xf32>
    %343 = math.exp %342 : vector<2x64x64xf32>
    %cst_100 = arith.constant dense<0.000000e+00> : vector<2x64xf32>
    %344 = vector.multi_reduction <add>, %343, %cst_100 [2] : vector<2x64x64xf32> to vector<2x64xf32>
    %345 = vector.shape_cast %344 : vector<2x64xf32> to vector<2x64x1xf32>
    %346 = tpu.reciprocal %345 {approx = true} : vector<2x64x1xf32> -> vector<2x64x1xf32>
    %347 = vector.broadcast %346 : vector<2x64x1xf32> to vector<2x64x64xf32>
    %348 = arith.mulf %343, %347 : vector<2x64x64xf32>
    %349 = arith.truncf %348 : vector<2x64x64xf32> to vector<2x64x64xbf16>
    "tpu.trace_start"() <{level = 10 : i32, message = "bqk,bkd->bqd"}> : () -> ()
    %cst_101 = arith.constant dense<0.000000e+00> : vector<2x64x32xf32>
    %350 = tpu.matmul %349, %333, %cst_101 {dimension_numbers = #tpu.dot_dimension_numbers<[2], [1], [1], [2], [0, 0, 0, 1, 1, 2], [0], [0]>} : vector<2x64x64xbf16>, vector<2x64x32xbf16>, vector<2x64x32xf32> -> vector<2x64x32xf32>
    "tpu.trace_stop"() : () -> ()
    %351 = vector.shape_cast %350 : vector<2x64x32xf32> to vector<128x32xf32>
    %352 = arith.truncf %351 : vector<128x32xf32> to vector<128x32xbf16>
    %353 = vector.extract_strided_slice %212 {offsets = [96, 0], sizes = [32, 128], strides = [1, 1]} : vector<128x128xbf16> to vector<32x128xbf16>
    %cst_102 = arith.constant dense<0.000000e+00> : vector<128x128xf32>
    %354 = tpu.matmul %352, %353, %cst_102 {dimension_numbers = #tpu.dot_dimension_numbers<[1], [0], [0], [1], [0, 0, 1, 1], [], []>} : vector<128x32xbf16>, vector<32x128xbf16>, vector<128x128xf32> -> vector<128x128xf32>
    %355 = arith.addf %327, %354 : vector<128x128xf32>
    %356 = vector.broadcast %207 : vector<1x128xf32> to vector<128x128xf32>
    %357 = arith.addf %355, %356 : vector<128x128xf32>
    %358 = vector.shape_cast %357 : vector<128x128xf32> to vector<2x64x128xf32>
    %359 = arith.addf %200, %358 : vector<2x64x128xf32>
    %cst_103 = arith.constant dense<0.000000e+00> : vector<2x128xf32>
    %360 = vector.multi_reduction <add>, %359, %cst_103 [1] : vector<2x64x128xf32> to vector<2x128xf32>
    %361 = vector.shape_cast %360 : vector<2x128xf32> to vector<2x1x128xf32>
    %cst_104 = arith.constant 6.400000e+01 : f32
    %362 = vector.broadcast %cst_104 : f32 to vector<2x1x128xf32>
    %363 = arith.divf %361, %362 : vector<2x1x128xf32>
    %364 = vector.broadcast %363 : vector<2x1x128xf32> to vector<2x64x128xf32>
    %365 = arith.subf %359, %364 : vector<2x64x128xf32>
    %366 = arith.mulf %365, %365 : vector<2x64x128xf32>
    %cst_105 = arith.constant dense<0.000000e+00> : vector<2x128xf32>
    %367 = vector.multi_reduction <add>, %366, %cst_105 [1] : vector<2x64x128xf32> to vector<2x128xf32>
    %368 = vector.shape_cast %367 : vector<2x128xf32> to vector<2x1x128xf32>
    %cst_106 = arith.constant 0.0158730168 : f32
    %369 = vector.broadcast %cst_106 : f32 to vector<2x1x128xf32>
    %370 = arith.mulf %368, %369 : vector<2x1x128xf32>
    %cst_107 = arith.constant 9.99999974E-6 : f32
    %371 = vector.broadcast %cst_107 : f32 to vector<2x1x128xf32>
    %372 = arith.addf %370, %371 : vector<2x1x128xf32>
    %373 = math.rsqrt %372 : vector<2x1x128xf32>
    %374 = vector.broadcast %373 : vector<2x1x128xf32> to vector<2x64x128xf32>
    %375 = arith.mulf %365, %374 : vector<2x64x128xf32>
    %376 = vector.shape_cast %205 : vector<1x128xf32> to vector<1x1x128xf32>
    %377 = vector.broadcast %376 : vector<1x1x128xf32> to vector<2x64x128xf32>
    %378 = arith.mulf %377, %375 : vector<2x64x128xf32>
    %379 = vector.shape_cast %206 : vector<1x128xf32> to vector<1x1x128xf32>
    %380 = vector.broadcast %379 : vector<1x1x128xf32> to vector<2x64x128xf32>
    %381 = arith.addf %378, %380 : vector<2x64x128xf32>
    %382 = vector.shape_cast %381 : vector<2x64x128xf32> to vector<128x128xf32>
    %383 = arith.truncf %382 : vector<128x128xf32> to vector<128x128xbf16>
    %cst_108 = arith.constant dense<0.000000e+00> : vector<128x512xf32>
    %384 = tpu.matmul %383, %214, %cst_108 {dimension_numbers = #tpu.dot_dimension_numbers<[1], [0], [0], [1], [0, 0, 1, 1], [], []>} : vector<128x128xbf16>, vector<128x512xbf16>, vector<128x512xf32> -> vector<128x512xf32>
    %c1_109 = arith.constant 1 : index
    %c0_110 = arith.constant 0 : index
    %c0_111 = arith.constant 0 : index
    %385 = vector.load %arg3[%c1_109, %c0_110, %c0_111] : memref<2x1x512xf32, #tpu.memory_space<vmem>>, vector<1x1x512xf32>
    %386 = vector.shape_cast %385 : vector<1x1x512xf32> to vector<1x512xf32>
    %387 = vector.broadcast %386 : vector<1x512xf32> to vector<128x512xf32>
    %388 = arith.addf %384, %387 : vector<128x512xf32>
    %cst_112 = arith.constant 0.000000e+00 : f32
    %389 = vector.broadcast %cst_112 : f32 to vector<128x512xf32>
    %390 = arith.maximumf %388, %389 : vector<128x512xf32>
    %391 = arith.truncf %390 : vector<128x512xf32> to vector<128x512xbf16>
    %cst_113 = arith.constant dense<0.000000e+00> : vector<128x128xf32>
    %392 = tpu.matmul %391, %216, %cst_113 {dimension_numbers = #tpu.dot_dimension_numbers<[1], [0], [0], [1], [0, 0, 1, 1], [], []>} : vector<128x512xbf16>, vector<512x128xbf16>, vector<128x128xf32> -> vector<128x128xf32>
    %393 = vector.broadcast %208 : vector<1x128xf32> to vector<128x128xf32>
    %394 = arith.addf %392, %393 : vector<128x128xf32>
    %395 = vector.shape_cast %394 : vector<128x128xf32> to vector<2x64x128xf32>
    %396 = arith.addf %359, %395 : vector<2x64x128xf32>
    %c0_114 = arith.constant 0 : index
    %c0_115 = arith.constant 0 : index
    %397 = vector.load %arg8[%c0_114, %c0_115] : memref<8x128xf32, #tpu.memory_space<vmem>>, vector<8x128xf32>
    %398 = vector.extract_strided_slice %397 {offsets = [0, 0], sizes = [1, 128], strides = [1, 1]} : vector<8x128xf32> to vector<1x128xf32>
    %399 = vector.extract_strided_slice %397 {offsets = [1, 0], sizes = [1, 128], strides = [1, 1]} : vector<8x128xf32> to vector<1x128xf32>
    %cst_116 = arith.constant dense<0.000000e+00> : vector<2x128xf32>
    %400 = vector.multi_reduction <add>, %396, %cst_116 [1] : vector<2x64x128xf32> to vector<2x128xf32>
    %401 = vector.shape_cast %400 : vector<2x128xf32> to vector<2x1x128xf32>
    %cst_117 = arith.constant 6.400000e+01 : f32
    %402 = vector.broadcast %cst_117 : f32 to vector<2x1x128xf32>
    %403 = arith.divf %401, %402 : vector<2x1x128xf32>
    %404 = vector.broadcast %403 : vector<2x1x128xf32> to vector<2x64x128xf32>
    %405 = arith.subf %396, %404 : vector<2x64x128xf32>
    %406 = arith.mulf %405, %405 : vector<2x64x128xf32>
    %cst_118 = arith.constant dense<0.000000e+00> : vector<2x128xf32>
    %407 = vector.multi_reduction <add>, %406, %cst_118 [1] : vector<2x64x128xf32> to vector<2x128xf32>
    %408 = vector.shape_cast %407 : vector<2x128xf32> to vector<2x1x128xf32>
    %cst_119 = arith.constant 0.0158730168 : f32
    %409 = vector.broadcast %cst_119 : f32 to vector<2x1x128xf32>
    %410 = arith.mulf %408, %409 : vector<2x1x128xf32>
    %cst_120 = arith.constant 9.99999974E-6 : f32
    %411 = vector.broadcast %cst_120 : f32 to vector<2x1x128xf32>
    %412 = arith.addf %410, %411 : vector<2x1x128xf32>
    %413 = math.rsqrt %412 : vector<2x1x128xf32>
    %414 = vector.broadcast %413 : vector<2x1x128xf32> to vector<2x64x128xf32>
    %415 = arith.mulf %405, %414 : vector<2x64x128xf32>
    %416 = vector.shape_cast %398 : vector<1x128xf32> to vector<1x1x128xf32>
    %417 = vector.broadcast %416 : vector<1x1x128xf32> to vector<2x64x128xf32>
    %418 = arith.mulf %417, %415 : vector<2x64x128xf32>
    %419 = vector.shape_cast %399 : vector<1x128xf32> to vector<1x1x128xf32>
    %420 = vector.broadcast %419 : vector<1x1x128xf32> to vector<2x64x128xf32>
    %421 = arith.addf %418, %420 : vector<2x64x128xf32>
    %422 = vector.shape_cast %421 : vector<2x64x128xf32> to vector<128x128xf32>
    %423 = arith.truncf %422 : vector<128x128xf32> to vector<128x128xbf16>
    %c0_121 = arith.constant 0 : index
    %c0_122 = arith.constant 0 : index
    %424 = vector.load %arg9[%c0_121, %c0_122] : memref<128x128xbf16, #tpu.memory_space<vmem>>, vector<128x128xbf16>
    %cst_123 = arith.constant dense<0.000000e+00> : vector<128x128xf32>
    %425 = tpu.matmul %423, %424, %cst_123 {dimension_numbers = #tpu.dot_dimension_numbers<[1], [0], [0], [1], [0, 0, 1, 1], [], []>} : vector<128x128xbf16>, vector<128x128xbf16>, vector<128x128xf32> -> vector<128x128xf32>
    %c0_124 = arith.constant 0 : index
    %c0_125 = arith.constant 0 : index
    %426 = vector.load %arg10[%c0_124, %c0_125] : memref<1x128xf32, #tpu.memory_space<vmem>>, vector<1x128xf32>
    %427 = vector.broadcast %426 : vector<1x128xf32> to vector<128x128xf32>
    %428 = arith.addf %425, %427 : vector<128x128xf32>
    %429 = vector.shape_cast %428 : vector<128x128xf32> to vector<2x64x128xf32>
    %c0_126 = arith.constant 0 : index
    %c0_127 = arith.constant 0 : index
    %c0_128 = arith.constant 0 : index
    %430 = vector.load %arg11[%c0_126, %c0_127, %c0_128] : memref<2x64x128xf32, #tpu.memory_space<vmem>>, vector<2x64x128xf32>
    tpu.vector_store %arg11[%c0_126, %c0_127, %c0_128], %429 {strides = array<i32>} : memref<2x64x128xf32, #tpu.memory_space<vmem>>, vector<2x64x128xf32>,
    return
  }
  func.func @transform_0(%arg0: i32) -> (i32, i32, i32) {
    %c0_i32 = arith.constant 0 : i32
    %c0_i32_0 = arith.constant 0 : i32
    %c0_i32_1 = arith.constant 0 : i32
    return %arg0, %c0_i32, %c0_i32_0 : i32, i32, i32
  }
  func.func @transform_1(%arg0: i32) -> (i32, i32, i32) {
    %c0_i32 = arith.constant 0 : i32
    %c0_i32_0 = arith.constant 0 : i32
    %c0_i32_1 = arith.constant 0 : i32
    %c0_i32_2 = arith.constant 0 : i32
    return %c0_i32, %c0_i32_0, %c0_i32_1 : i32, i32, i32
  }
  func.func @transform_2(%arg0: i32) -> (i32, i32, i32) {
    %c0_i32 = arith.constant 0 : i32
    %c0_i32_0 = arith.constant 0 : i32
    %c0_i32_1 = arith.constant 0 : i32
    %c0_i32_2 = arith.constant 0 : i32
    return %c0_i32, %c0_i32_0, %c0_i32_1 : i32, i32, i32
  }
  func.func @transform_3(%arg0: i32) -> (i32, i32, i32) {
    %c0_i32 = arith.constant 0 : i32
    %c0_i32_0 = arith.constant 0 : i32
    %c0_i32_1 = arith.constant 0 : i32
    %c0_i32_2 = arith.constant 0 : i32
    return %c0_i32, %c0_i32_0, %c0_i32_1 : i32, i32, i32
  }
  func.func @transform_4(%arg0: i32) -> (i32, i32, i32) {
    %c0_i32 = arith.constant 0 : i32
    %c0_i32_0 = arith.constant 0 : i32
    %c0_i32_1 = arith.constant 0 : i32
    %c0_i32_2 = arith.constant 0 : i32
    return %c0_i32, %c0_i32_0, %c0_i32_1 : i32, i32, i32
  }
  func.func @transform_5(%arg0: i32) -> (i32, i32, i32) {
    %c0_i32 = arith.constant 0 : i32
    %c0_i32_0 = arith.constant 0 : i32
    %c0_i32_1 = arith.constant 0 : i32
    %c0_i32_2 = arith.constant 0 : i32
    return %c0_i32, %c0_i32_0, %c0_i32_1 : i32, i32, i32
  }
  func.func @transform_6(%arg0: i32) -> (i32, i32, i32) {
    %c0_i32 = arith.constant 0 : i32
    %c0_i32_0 = arith.constant 0 : i32
    %c0_i32_1 = arith.constant 0 : i32
    %c0_i32_2 = arith.constant 0 : i32
    return %c0_i32, %c0_i32_0, %c0_i32_1 : i32, i32, i32
  }
  func.func @transform_7(%arg0: i32) -> (i32, i32) {
    %c0_i32 = arith.constant 0 : i32
    %c0_i32_0 = arith.constant 0 : i32
    %c0_i32_1 = arith.constant 0 : i32
    return %c0_i32, %c0_i32_0 : i32, i32
  }
  func.func @transform_8(%arg0: i32) -> (i32, i32) {
    %c0_i32 = arith.constant 0 : i32
    %c0_i32_0 = arith.constant 0 : i32
    %c0_i32_1 = arith.constant 0 : i32
    return %c0_i32, %c0_i32_0 : i32, i32
  }
  func.func @transform_9(%arg0: i32) -> (i32, i32) {
    %c0_i32 = arith.constant 0 : i32
    %c0_i32_0 = arith.constant 0 : i32
    %c0_i32_1 = arith.constant 0 : i32
    return %c0_i32, %c0_i32_0 : i32, i32
  }
  func.func @transform_10(%arg0: i32) -> (i32, i32, i32) {
    %c0_i32 = arith.constant 0 : i32
    %c0_i32_0 = arith.constant 0 : i32
    %c0_i32_1 = arith.constant 0 : i32
    return %arg0, %c0_i32, %c0_i32_0 : i32, i32, i32
  }
}

</mosaic_0001>

<llo_original>
// kernel: gpt2_forward.1
$region0: #{gpt2_forward.1}
  #allocation0 [shape = 'u32[]', space=smem, size = 0x4, offset = 0x4, fixed_abs, tag = 'smem constant byte address 0x4 - core index']
  #allocation1 [shape = 'u32[72,128]{1,0:T(1,128)}', space=vmem, size = 0x9000, scoped, tag = 'internal scratch']
  %s0 = inlined_call_operand.vmem [shape: f32[4,64,128], index: 0, kind: input, shape index: {}]
  %s1 = inlined_call_operand.vmem [shape: f32[2,8,128], index: 1, kind: input, shape index: {}]
  %s2 = inlined_call_operand.vmem [shape: f32[2,1,512], index: 2, kind: input, shape index: {}]
  %s3 = inlined_call_operand.vmem [shape: bf16[2,128,384], index: 3, kind: input, shape index: {}]
  %s4 = inlined_call_operand.vmem [shape: bf16[2,128,128], index: 4, kind: input, shape index: {}]
  %s5 = inlined_call_operand.vmem [shape: bf16[2,128,512], index: 5, kind: input, shape index: {}]
  %s6 = inlined_call_operand.vmem [shape: bf16[2,512,128], index: 6, kind: input, shape index: {}]
  %s7 = inlined_call_operand.vmem [shape: f32[8,128], index: 7, kind: input, shape index: {}]
  %s8 = inlined_call_operand.vmem [shape: bf16[128,128], index: 8, kind: input, shape index: {}]
  %s9 = inlined_call_operand.vmem [shape: f32[1,128], index: 9, kind: input, shape index: {}]
  %s10 = inlined_call_operand.hbm [shape: f32[4,64,128], index: 10, kind: output, shape index: {}]
  %s11 = sld [smem:[#allocation0]]
  $region73: #{gpt2_forward.1} parent=0
    _
  %s13 = ssub.s32 1, %s11
  %s14 = scalar_select 0, %s13, %s11
  $region1: #{gpt2_forward.1} parent=0
    #allocation2 [shape = 'u8[131072]{0}', space=vmem, size = 0x20000, scoped, tag = 'output window, operand 0']
    #allocation3 [shape = 's32[2]{0}', space=sflag, size = 0x8, scoped, tag = 'scoped memory for gpt2_forward.1']
    %15 = vsyncpa [#allocation3], 0
    %s16 = scalar_lea.sflag [#allocation3], 1
    %17 = vsyncpa %s16, 0
    loop: start=0, step=1, limit=4
    $region2: #{gpt2_forward.1} parent=1 // loop_pre_header
      _
    $region3: #{gpt2_forward.1} parent=1 // loop_header
      %s19 = sphi 0, %s23
      %p20 = scmp.ge.s32.totalorder %s19, 4
      %s29 = sphi 0, %s31
      %s32 = sphi 0, %s29
      %s33 = sphi 0, %s32
      %s49 = sphi 0, %s33
      %s53 = sphi 0, %s53
      %s55 = sphi 0, %s53
      %s56 = sphi 0, %s55
      %s70 = sphi 0, %s56
      %s74 = sphi 0, %s74
      %s76 = sphi 0, %s74
      %s77 = sphi 0, %s76
      %s91 = sphi 0, %s77
      %s95 = sphi 0, %s95
      %s97 = sphi 0, %s95
      %s98 = sphi 0, %s97
      %s112 = sphi 0, %s98
      %s116 = sphi 0, %s116
      %s118 = sphi 0, %s116
      %s119 = sphi 0, %s118
      %s133 = sphi 0, %s119
      %s137 = sphi 0, %s137
      %s139 = sphi 0, %s137
      %s140 = sphi 0, %s139
      %s154 = sphi 0, %s140
      %s158 = sphi 0, %s158
      %s160 = sphi 0, %s158
      %s161 = sphi 0, %s160
      %s175 = sphi 0, %s161
      %s179 = sphi 0, %s179
      %s181 = sphi 0, %s179
      %s182 = sphi 0, %s181
      %s196 = sphi 0, %s182
      %s200 = sphi 0, %s200
      %s202 = sphi 0, %s200
      %s203 = sphi 0, %s202
      %s217 = sphi 0, %s203
      %s221 = sphi 0, %s221
      %s223 = sphi 0, %s221
      %s224 = sphi 0, %s223
      %s238 = sphi 0, %s224
      %s244 = sphi 0, %s246
      %s247 = sphi 0, %s244
      %s248 = sphi 0, %s247
      %s264 = sphi 0, %s248
    $region4: #{gpt2_forward.1} parent=1 // loop_header_branch
      %22 = sbr.rel (%p20) target = $region8
    $region5: #{gpt2_forward.1} parent=1 // loop_body
      %s24 = ssub.s32 %s19, 1
      %s25 = ssub.s32 %s19, 2
      %s26 = sadd.s32 %s19, 1
      %s27 = ssub.s32 %s19, %s26
      %p28 = scmp.eq.s32.totalorder %s27, 0
      %s30 = sadd.s32 %s29, 1
      %s31 = scalar_select %p28, %s29, %s30
      %p34 = pneg %p28
      %p35 = scmp.eq.s32.totalorder %s19, 1
      %p36 = por %p34, %p35
      %p37 = scmp.ne.s32.totalorder %s29, %s32
      %p38 = scmp.eq.s32.totalorder %s19, 0
      %p39 = por %p37, %p38
      %p40 = scmp.ne.s32.totalorder %s29, %s32
      %p41 = scmp.eq.s32.totalorder %s24, 1
      %p42 = por %p40, %p41
      %p43 = scmp.ne.s32.totalorder %s32, %s33
      %p44 = scmp.eq.s32.totalorder %s24, 0
      %p45 = por %p43, %p44
      %p46 = scmp.ne.s32.totalorder %s32, %s33
      %p47 = scmp.eq.s32.totalorder %s25, 1
      %p48 = por %p46, %p47
      %p50 = scmp.ne.s32.totalorder %s33, %s49
      %p51 = scmp.eq.s32.totalorder %s25, 0
      %p52 = por %p50, %p51
      %s54 = sadd.s32 %s53, 1
      %p57 = scmp.eq.s32.totalorder %s19, 1
      %p58 = scmp.ne.s32.totalorder %s53, %s55
      %p59 = scmp.eq.s32.totalorder %s19, 0
      %p60 = por %p58, %p59
      %p61 = scmp.ne.s32.totalorder %s53, %s55
      %p62 = scmp.eq.s32.totalorder %s24, 1
      %p63 = por %p61, %p62
      %p64 = scmp.ne.s32.totalorder %s55, %s56
      %p65 = scmp.eq.s32.totalorder %s24, 0
      %p66 = por %p64, %p65
      %p67 = scmp.ne.s32.totalorder %s55, %s56
      %p68 = scmp.eq.s32.totalorder %s25, 1
      %p69 = por %p67, %p68
      %p71 = scmp.ne.s32.totalorder %s56, %s70
      %p72 = scmp.eq.s32.totalorder %s25, 0
      %p73 = por %p71, %p72
      %s75 = sadd.s32 %s74, 1
      %p78 = scmp.eq.s32.totalorder %s19, 1
      %p79 = scmp.ne.s32.totalorder %s74, %s76
      %p80 = scmp.eq.s32.totalorder %s19, 0
      %p81 = por %p79, %p80
      %p82 = scmp.ne.s32.totalorder %s74, %s76
      %p83 = scmp.eq.s32.totalorder %s24, 1
      %p84 = por %p82, %p83
      %p85 = scmp.ne.s32.totalorder %s76, %s77
      %p86 = scmp.eq.s32.totalorder %s24, 0
      %p87 = por %p85, %p86
      %p88 = scmp.ne.s32.totalorder %s76, %s77
      %p89 = scmp.eq.s32.totalorder %s25, 1
      %p90 = por %p88, %p89
      %p92 = scmp.ne.s32.totalorder %s77, %s91
      %p93 = scmp.eq.s32.totalorder %s25, 0
      %p94 = por %p92, %p93
      %s96 = sadd.s32 %s95, 1
      %p99 = scmp.eq.s32.totalorder %s19, 1
      %p100 = scmp.ne.s32.totalorder %s95, %s97
      %p101 = scmp.eq.s32.totalorder %s19, 0
      %p102 = por %p100, %p101
      %p103 = scmp.ne.s32.totalorder %s95, %s97
      %p104 = scmp.eq.s32.totalorder %s24, 1
      %p105 = por %p103, %p104
      %p106 = scmp.ne.s32.totalorder %s97, %s98
      %p107 = scmp.eq.s32.totalorder %s24, 0
      %p108 = por %p106, %p107
      %p109 = scmp.ne.s32.totalorder %s97, %s98
      %p110 = scmp.eq.s32.totalorder %s25, 1
      %p111 = por %p109, %p110
      %p113 = scmp.ne.s32.totalorder %s98, %s112
      %p114 = scmp.eq.s32.totalorder %s25, 0
      %p115 = por %p113, %p114
      %s117 = sadd.s32 %s116, 1
      %p120 = scmp.eq.s32.totalorder %s19, 1
      %p121 = scmp.ne.s32.totalorder %s116, %s118
      %p122 = scmp.eq.s32.totalorder %s19, 0
      %p123 = por %p121, %p122
      %p124 = scmp.ne.s32.totalorder %s116, %s118
      %p125 = scmp.eq.s32.totalorder %s24, 1
      %p126 = por %p124, %p125
      %p127 = scmp.ne.s32.totalorder %s118, %s119
      %p128 = scmp.eq.s32.totalorder %s24, 0
      %p129 = por %p127, %p128
      %p130 = scmp.ne.s32.totalorder %s118, %s119
      %p131 = scmp.eq.s32.totalorder %s25, 1
      %p132 = por %p130, %p131
      %p134 = scmp.ne.s32.totalorder %s119, %s133
      %p135 = scmp.eq.s32.totalorder %s25, 0
      %p136 = por %p134, %p135
      %s138 = sadd.s32 %s137, 1
      %p141 = scmp.eq.s32.totalorder %s19, 1
      %p142 = scmp.ne.s32.totalorder %s137, %s139
      %p143 = scmp.eq.s32.totalorder %s19, 0
      %p144 = por %p142, %p143
      %p145 = scmp.ne.s32.totalorder %s137, %s139
      %p146 = scmp.eq.s32.totalorder %s24, 1
      %p147 = por %p145, %p146
      %p148 = scmp.ne.s32.totalorder %s139, %s140
      %p149 = scmp.eq.s32.totalorder %s24, 0
      %p150 = por %p148, %p149
      %p151 = scmp.ne.s32.totalorder %s139, %s140
      %p152 = scmp.eq.s32.totalorder %s25, 1
      %p153 = por %p151, %p152
      %p155 = scmp.ne.s32.totalorder %s140, %s154
      %p156 = scmp.eq.s32.totalorder %s25, 0
      %p157 = por %p155, %p156
      %s159 = sadd.s32 %s158, 1
      %p162 = scmp.eq.s32.totalorder %s19, 1
      %p163 = scmp.ne.s32.totalorder %s158, %s160
      %p164 = scmp.eq.s32.totalorder %s19, 0
      %p165 = por %p163, %p164
      %p166 = scmp.ne.s32.totalorder %s158, %s160
      %p167 = scmp.eq.s32.totalorder %s24, 1
      %p168 = por %p166, %p167
      %p169 = scmp.ne.s32.totalorder %s160, %s161
      %p170 = scmp.eq.s32.totalorder %s24, 0
      %p171 = por %p169, %p170
      %p172 = scmp.ne.s32.totalorder %s160, %s161
      %p173 = scmp.eq.s32.totalorder %s25, 1
      %p174 = por %p172, %p173
      %p176 = scmp.ne.s32.totalorder %s161, %s175
      %p177 = scmp.eq.s32.totalorder %s25, 0
      %p178 = por %p176, %p177
      %s180 = sadd.s32 %s179, 1
      %p183 = scmp.eq.s32.totalorder %s19, 1
      %p184 = scmp.ne.s32.totalorder %s179, %s181
      %p185 = scmp.eq.s32.totalorder %s19, 0
      %p186 = por %p184, %p185
      %p187 = scmp.ne.s32.totalorder %s179, %s181
      %p188 = scmp.eq.s32.totalorder %s24, 1
      %p189 = por %p187, %p188
      %p190 = scmp.ne.s32.totalorder %s181, %s182
      %p191 = scmp.eq.s32.totalorder %s24, 0
      %p192 = por %p190, %p191
      %p193 = scmp.ne.s32.totalorder %s181, %s182
      %p194 = scmp.eq.s32.totalorder %s25, 1
      %p195 = por %p193, %p194
      %p197 = scmp.ne.s32.totalorder %s182, %s196
      %p198 = scmp.eq.s32.totalorder %s25, 0
      %p199 = por %p197, %p198
      %s201 = sadd.s32 %s200, 1
      %p204 = scmp.eq.s32.totalorder %s19, 1
      %p205 = scmp.ne.s32.totalorder %s200, %s202
      %p206 = scmp.eq.s32.totalorder %s19, 0
      %p207 = por %p205, %p206
      %p208 = scmp.ne.s32.totalorder %s200, %s202
      %p209 = scmp.eq.s32.totalorder %s24, 1
      %p210 = por %p208, %p209
      %p211 = scmp.ne.s32.totalorder %s202, %s203
      %p212 = scmp.eq.s32.totalorder %s24, 0
      %p213 = por %p211, %p212
      %p214 = scmp.ne.s32.totalorder %s202, %s203
      %p215 = scmp.eq.s32.totalorder %s25, 1
      %p216 = por %p214, %p215
      %p218 = scmp.ne.s32.totalorder %s203, %s217
      %p219 = scmp.eq.s32.totalorder %s25, 0
      %p220 = por %p218, %p219
      %s222 = sadd.s32 %s221, 1
      %p225 = scmp.eq.s32.totalorder %s19, 1
      %p226 = scmp.ne.s32.totalorder %s221, %s223
      %p227 = scmp.eq.s32.totalorder %s19, 0
      %p228 = por %p226, %p227
      %p229 = scmp.ne.s32.totalorder %s221, %s223
      %p230 = scmp.eq.s32.totalorder %s24, 1
      %p231 = por %p229, %p230
      %p232 = scmp.ne.s32.totalorder %s223, %s224
      %p233 = scmp.eq.s32.totalorder %s24, 0
      %p234 = por %p232, %p233
      %p235 = scmp.ne.s32.totalorder %s223, %s224
      %p236 = scmp.eq.s32.totalorder %s25, 1
      %p237 = por %p235, %p236
      %p239 = scmp.ne.s32.totalorder %s224, %s238
      %p240 = scmp.eq.s32.totalorder %s25, 0
      %p241 = por %p239, %p240
      %s242 = ssub.s32 %s19, %s26
      %p243 = scmp.eq.s32.totalorder %s242, 0
      %s245 = sadd.s32 %s244, 1
      %s246 = scalar_select %p243, %s244, %s245
      %p249 = pneg %p243
      %p250 = scmp.eq.s32.totalorder %s19, 1
      %p251 = por %p249, %p250
      %p252 = scmp.ne.s32.totalorder %s244, %s247
      %p253 = scmp.eq.s32.totalorder %s19, 0
      %p254 = por %p252, %p253
      %p255 = scmp.ne.s32.totalorder %s244, %s247
      %p256 = scmp.eq.s32.totalorder %s24, 1
      %p257 = por %p255, %p256
      %p258 = scmp.ne.s32.totalorder %s247, %s248
      %p259 = scmp.eq.s32.totalorder %s24, 0
      %p260 = por %p258, %p259
      %p261 = scmp.ne.s32.totalorder %s247, %s248
      %p262 = scmp.eq.s32.totalorder %s25, 1
      %p263 = por %p261, %p262
      %p265 = scmp.ne.s32.totalorder %s248, %s264
      %p266 = scmp.eq.s32.totalorder %s25, 0
      %p267 = por %p265, %p266
      %p268 = scmp.le.s32.totalorder 1, %s19
      %p269 = scmp.lt.s32.totalorder %s19, 3
      %p270 = pnand %p268, %p269
      %p271 = pneg %p270
      // Predicated region
      $region9: #{gpt2_forward.1} parent=5 // pred_check
        _
      $region10: #{gpt2_forward.1} parent=5 // pred_check_branch
        %273 = sbr.rel (%p270) target = $region12
      $region11: #{gpt2_forward.1} parent=5 // pred_region
        %s274 = ssub.s32 %s19, 1
        // Predicated region
        $region13: #{gpt2_forward.1} parent=11 // pred_check
          %p275 = pneg %p66
        $region14: #{gpt2_forward.1} parent=11 // pred_check_branch
          %277 = sbr.rel (%p275) target = $region16
        $region15: #{gpt2_forward.1} parent=11 // pred_region
          _
        $region16: #{gpt2_forward.1} parent=11 // pred_fallthru
          _
        // Predicated region
        $region17: #{gpt2_forward.1} parent=11 // pred_check
          %p278 = pneg %p87
        $region18: #{gpt2_forward.1} parent=11 // pred_check_branch
          %280 = sbr.rel (%p278) target = $region20
        $region19: #{gpt2_forward.1} parent=11 // pred_region
          _
        $region20: #{gpt2_forward.1} parent=11 // pred_fallthru
          _
        // Predicated region
        $region21: #{gpt2_forward.1} parent=11 // pred_check
          %p281 = pneg %p108
        $region22: #{gpt2_forward.1} parent=11 // pred_check_branch
          %283 = sbr.rel (%p281) target = $region24
        $region23: #{gpt2_forward.1} parent=11 // pred_region
          _
        $region24: #{gpt2_forward.1} parent=11 // pred_fallthru
          _
        // Predicated region
        $region25: #{gpt2_forward.1} parent=11 // pred_check
          %p284 = pneg %p129
        $region26: #{gpt2_forward.1} parent=11 // pred_check_branch
          %286 = sbr.rel (%p284) target = $region28
        $region27: #{gpt2_forward.1} parent=11 // pred_region
          _
        $region28: #{gpt2_forward.1} parent=11 // pred_fallthru
          _
        // Predicated region
        $region29: #{gpt2_forward.1} parent=11 // pred_check
          %p287 = pneg %p150
        $region30: #{gpt2_forward.1} parent=11 // pred_check_branch
          %289 = sbr.rel (%p287) target = $region32
        $region31: #{gpt2_forward.1} parent=11 // pred_region
          _
        $region32: #{gpt2_forward.1} parent=11 // pred_fallthru
          _
        // Predicated region
        $region33: #{gpt2_forward.1} parent=11 // pred_check
          %p290 = pneg %p171
        $region34: #{gpt2_forward.1} parent=11 // pred_check_branch
          %292 = sbr.rel (%p290) target = $region36
        $region35: #{gpt2_forward.1} parent=11 // pred_region
          _
        $region36: #{gpt2_forward.1} parent=11 // pred_fallthru
          _
        // Predicated region
        $region37: #{gpt2_forward.1} parent=11 // pred_check
          %p293 = pneg %p192
        $region38: #{gpt2_forward.1} parent=11 // pred_check_branch
          %295 = sbr.rel (%p293) target = $region40
        $region39: #{gpt2_forward.1} parent=11 // pred_region
          _
        $region40: #{gpt2_forward.1} parent=11 // pred_fallthru
          _
        // Predicated region
        $region41: #{gpt2_forward.1} parent=11 // pred_check
          %p296 = pneg %p213
        $region42: #{gpt2_forward.1} parent=11 // pred_check_branch
          %298 = sbr.rel (%p296) target = $region44
        $region43: #{gpt2_forward.1} parent=11 // pred_region
          _
        $region44: #{gpt2_forward.1} parent=11 // pred_fallthru
          _
        // Predicated region
        $region45: #{gpt2_forward.1} parent=11 // pred_check
          %p299 = pneg %p234
        $region46: #{gpt2_forward.1} parent=11 // pred_check_branch
          %301 = sbr.rel (%p299) target = $region48
        $region47: #{gpt2_forward.1} parent=11 // pred_region
          _
        $region48: #{gpt2_forward.1} parent=11 // pred_fallthru
          _
      $region12: #{gpt2_forward.1} parent=5 // pred_fallthru
        _
      %p302 = scmp.lt.s32.totalorder %s19, 2
      // Predicated region
      $region49: #{gpt2_forward.1} parent=5 // pred_check
        %p303 = pneg %p302
      $region50: #{gpt2_forward.1} parent=5 // pred_check_branch
        %305 = sbr.rel (%p303) target = $region52
      $region51: #{gpt2_forward.1} parent=5 // pred_region
        // Predicated region
        $region53: #{gpt2_forward.1} parent=51 // pred_check
          %p306 = pneg %p39
        $region54: #{gpt2_forward.1} parent=51 // pred_check_branch
          %308 = sbr.rel (%p306) target = $region56
        $region55: #{gpt2_forward.1} parent=51 // pred_region
          %s309 = smul.u32 2, %s19
          %p310 = scmp.lt.s32.totalorder %s309, 3
          %s311 = scalar_select %p310, %s309, 3
          %s312 = smul.addr %s311, 8
          %s313 = smul.addr %s312, 8
          %s314 = scalar_lea.vmem %s0, %s313
          %s315 = smul.u32 2, %s19
        $region56: #{gpt2_forward.1} parent=51 // pred_fallthru
          _
      $region52: #{gpt2_forward.1} parent=5 // pred_fallthru
        _
      %p316 = scmp.le.s32.totalorder 1, %s19
      %p317 = scmp.lt.s32.totalorder %s19, 3
      %p318 = pnand %p316, %p317
      %p319 = pneg %p318
      // Predicated region
      $region57: #{gpt2_forward.1} parent=5 // pred_check
        _
      $region58: #{gpt2_forward.1} parent=5 // pred_check_branch
        %321 = sbr.rel (%p318) target = $region60
      $region59: #{gpt2_forward.1} parent=5 // pred_region
        %s322 = ssub.s32 %s19, 1
        %s323 = smul.u32 2, %s24
        %p324 = scmp.lt.s32.totalorder %s323, 3
        %s325 = scalar_select %p324, %s323, 3
        %s326 = smul.addr %s325, 8
        %s327 = smul.addr %s326, 8
        %s328 = scalar_lea.vmem %s0, %s327
        %p329 = pneg %p45
        %p330 = pneg %p42
        %p331 = pneg %p66
        %p332 = pneg %p63
        %p333 = pneg %p87
        %p334 = pneg %p84
        %p335 = pneg %p108
        %p336 = pneg %p105
        %p337 = pneg %p129
        %p338 = pneg %p126
        %p339 = pneg %p150
        %p340 = pneg %p147
        %p341 = pneg %p171
        %p342 = pneg %p168
        %p343 = pneg %p192
        %p344 = pneg %p189
        %p345 = pneg %p213
        %p346 = pneg %p210
        %p347 = pneg %p234
        %p348 = pneg %p231
        %p349 = pneg %p260
        %p350 = pneg %p257
        %s351 = sand.u32 %s247, 1
        %s352 = scalar_lea.sflag [#allocation3], %s351
        %s353 = sand.u32 %s247, 1
        %s354 = smul.addr %s353, 128
        %s355 = scalar_lea.vmem [#allocation2], %s354
        %s356 = smul.u32 2, %s24
        %p357 = scmp.lt.s32.totalorder %s356, 3
        %s358 = scalar_select %p357, %s356, 3
        %s359 = smul.addr %s358, 8
        %s360 = smul.addr %s359, 8
        %s361 = scalar_lea.vmem %s0, %s360
        %s362 = smul.u32 2, %s24
        %s363 = smul.u32 2, %s24
        %v365 = vld [vmem:[%s361] sm:$0xff]
        %v366 = vld [vmem:[%s361 + $0x8] sm:$0xff]
        %v367 = vld [vmem:[%s361 + $0x10] sm:$0xff]
        %v368 = vld [vmem:[%s361 + $0x18] sm:$0xff]
        %v369 = vld [vmem:[%s361 + $0x20] sm:$0xff]
        %v370 = vld [vmem:[%s361 + $0x28] sm:$0xff]
        %v371 = vld [vmem:[%s361 + $0x30] sm:$0xff]
        %v372 = vld [vmem:[%s361 + $0x38] sm:$0xff]
        %v373 = vld [vmem:[%s361 + $0x40] sm:$0xff]
        %v374 = vld [vmem:[%s361 + $0x48] sm:$0xff]
        %v375 = vld [vmem:[%s361 + $0x50] sm:$0xff]
        %v376 = vld [vmem:[%s361 + $0x58] sm:$0xff]
        %v377 = vld [vmem:[%s361 + $0x60] sm:$0xff]
        %v378 = vld [vmem:[%s361 + $0x68] sm:$0xff]
        %v379 = vld [vmem:[%s361 + $0x70] sm:$0xff]
        %v380 = vld [vmem:[%s361 + $0x78] sm:$0xff]
        %v381 = vlaneseq
        %v382 = vshrl.u32 %v381, 7
        %v383 = vadd.s32 %v382, 8
        %v384 = vadd.s32 %v382, 16
        %v385 = vadd.s32 %v382, 24
        %v386 = vadd.s32 %v382, 32
        %v387 = vadd.s32 %v382, 40
        %v388 = vadd.s32 %v382, 48
        %v389 = vadd.s32 %v382, 56
        %v390 = vlaneseq
        %v391 = vand.u32 %v390, 127
        %vm392 = vcmp.le.s32.totalorder %v391, %v382
        %vm393 = vcmp.le.s32.totalorder %v391, %v383
        %vm394 = vcmp.le.s32.totalorder %v391, %v384
        %vm395 = vcmp.le.s32.totalorder %v391, %v385
        %vm396 = vcmp.le.s32.totalorder %v391, %v386
        %vm397 = vcmp.le.s32.totalorder %v391, %v387
        %vm398 = vcmp.le.s32.totalorder %v391, %v388
        %vm399 = vcmp.le.s32.totalorder %v391, %v389
        %v400 = vld [vmem:[%s1] sm:$0xff]
        %v401 = vld [vmem:[%s3] sm:$0xff]
        %v402 = vld [vmem:[%s3 + $0x8] sm:$0xf]
        %v403 = vld [vmem:[%s3 + $0xc] sm:$0xff]
        %v404 = vld [vmem:[%s3 + $0x14] sm:$0xf]
        %v405 = vld [vmem:[%s3 + $0x18] sm:$0xff]
        %v406 = vld [vmem:[%s3 + $0x20] sm:$0xf]
        %v407 = vld [vmem:[%s3 + $0x24] sm:$0xff]
        %v408 = vld [vmem:[%s3 + $0x2c] sm:$0xf]
        %v409 = vld [vmem:[%s3 + $0x30] sm:$0xff]
        %v410 = vld [vmem:[%s3 + $0x38] sm:$0xf]
        %v411 = vld [vmem:[%s3 + $0x3c] sm:$0xff]
        %v412 = vld [vmem:[%s3 + $0x44] sm:$0xf]
        %v413 = vld [vmem:[%s3 + $0x48] sm:$0xff]
        %v414 = vld [vmem:[%s3 + $0x50] sm:$0xf]
        %v415 = vld [vmem:[%s3 + $0x54] sm:$0xff]
        %v416 = vld [vmem:[%s3 + $0x5c] sm:$0xf]
        %v417 = vld [vmem:[%s3 + $0x60] sm:$0xff]
        %v418 = vld [vmem:[%s3 + $0x68] sm:$0xf]
        %v419 = vld [vmem:[%s3 + $0x6c] sm:$0xff]
        %v420 = vld [vmem:[%s3 + $0x74] sm:$0xf]
        %v421 = vld [vmem:[%s3 + $0x78] sm:$0xff]
        %v422 = vld [vmem:[%s3 + $0x80] sm:$0xf]
        %v423 = vld [vmem:[%s3 + $0x84] sm:$0xff]
        %v424 = vld [vmem:[%s3 + $0x8c] sm:$0xf]
        %v425 = vld [vmem:[%s3 + $0x90] sm:$0xff]
        %v426 = vld [vmem:[%s3 + $0x98] sm:$0xf]
        %v427 = vld [vmem:[%s3 + $0x9c] sm:$0xff]
        %v428 = vld [vmem:[%s3 + $0xa4] sm:$0xf]
        %v429 = vld [vmem:[%s3 + $0xa8] sm:$0xff]
        %v430 = vld [vmem:[%s3 + $0xb0] sm:$0xf]
        %v431 = vld [vmem:[%s3 + $0xb4] sm:$0xff]
        %v432 = vld [vmem:[%s3 + $0xbc] sm:$0xf]
        %v433 = vld [vmem:[%s4] sm:$0xf]
        %v434 = vld [vmem:[%s4 + $0x4] sm:$0xf]
        %v435 = vld [vmem:[%s4 + $0x8] sm:$0xf]
        %v436 = vld [vmem:[%s4 + $0xc] sm:$0xf]
        %v437 = vld [vmem:[%s4 + $0x10] sm:$0xf]
        %v438 = vld [vmem:[%s4 + $0x14] sm:$0xf]
        %v439 = vld [vmem:[%s4 + $0x18] sm:$0xf]
        %v440 = vld [vmem:[%s4 + $0x1c] sm:$0xf]
        %v441 = vld [vmem:[%s4 + $0x20] sm:$0xf]
        %v442 = vld [vmem:[%s4 + $0x24] sm:$0xf]
        %v443 = vld [vmem:[%s4 + $0x28] sm:$0xf]
        %v444 = vld [vmem:[%s4 + $0x2c] sm:$0xf]
        %v445 = vld [vmem:[%s4 + $0x30] sm:$0xf]
        %v446 = vld [vmem:[%s4 + $0x34] sm:$0xf]
        %v447 = vld [vmem:[%s4 + $0x38] sm:$0xf]
        %v448 = vld [vmem:[%s4 + $0x3c] sm:$0xf]
        %v449 = vld [vmem:[%s5] sm:$0xff]
        %v450 = vld [vmem:[%s5 + $0x8] sm:$0xff]
        %v451 = vld [vmem:[%s5 + $0x10] sm:$0xff]
        %v452 = vld [vmem:[%s5 + $0x18] sm:$0xff]
        %v453 = vld [vmem:[%s5 + $0x20] sm:$0xff]
        %v454 = vld [vmem:[%s5 + $0x28] sm:$0xff]
        %v455 = vld [vmem:[%s5 + $0x30] sm:$0xff]
        %v456 = vld [vmem:[%s5 + $0x38] sm:$0xff]
        %v457 = vld [vmem:[%s5 + $0x40] sm:$0xff]
        %v458 = vld [vmem:[%s5 + $0x48] sm:$0xff]
        %v459 = vld [vmem:[%s5 + $0x50] sm:$0xff]
        %v460 = vld [vmem:[%s5 + $0x58] sm:$0xff]
        %v461 = vld [vmem:[%s5 + $0x60] sm:$0xff]
        %v462 = vld [vmem:[%s5 + $0x68] sm:$0xff]
        %v463 = vld [vmem:[%s5 + $0x70] sm:$0xff]
        %v464 = vld [vmem:[%s5 + $0x78] sm:$0xff]
        %v465 = vld [vmem:[%s5 + $0x80] sm:$0xff]
        %v466 = vld [vmem:[%s5 + $0x88] sm:$0xff]
        %v467 = vld [vmem:[%s5 + $0x90] sm:$0xff]
        %v468 = vld [vmem:[%s5 + $0x98] sm:$0xff]
        %v469 = vld [vmem:[%s5 + $0xa0] sm:$0xff]
        %v470 = vld [vmem:[%s5 + $0xa8] sm:$0xff]
        %v471 = vld [vmem:[%s5 + $0xb0] sm:$0xff]
        %v472 = vld [vmem:[%s5 + $0xb8] sm:$0xff]
        %v473 = vld [vmem:[%s5 + $0xc0] sm:$0xff]
        %v474 = vld [vmem:[%s5 + $0xc8] sm:$0xff]
        %v475 = vld [vmem:[%s5 + $0xd0] sm:$0xff]
        %v476 = vld [vmem:[%s5 + $0xd8] sm:$0xff]
        %v477 = vld [vmem:[%s5 + $0xe0] sm:$0xff]
        %v478 = vld [vmem:[%s5 + $0xe8] sm:$0xff]
        %v479 = vld [vmem:[%s5 + $0xf0] sm:$0xff]
        %v480 = vld [vmem:[%s5 + $0xf8] sm:$0xff]
        %v481 = vld [vmem:[%s6] sm:$0xf]
        %v482 = vld [vmem:[%s6 + $0x4] sm:$0xf]
        %v483 = vld [vmem:[%s6 + $0x8] sm:$0xf]
        %v484 = vld [vmem:[%s6 + $0xc] sm:$0xf]
        %v485 = vld [vmem:[%s6 + $0x10] sm:$0xf]
        %v486 = vld [vmem:[%s6 + $0x14] sm:$0xf]
        %v487 = vld [vmem:[%s6 + $0x18] sm:$0xf]
        %v488 = vld [vmem:[%s6 + $0x1c] sm:$0xf]
        %v489 = vld [vmem:[%s6 + $0x20] sm:$0xf]
        %v490 = vld [vmem:[%s6 + $0x24] sm:$0xf]
        %v491 = vld [vmem:[%s6 + $0x28] sm:$0xf]
        %v492 = vld [vmem:[%s6 + $0x2c] sm:$0xf]
        %v493 = vld [vmem:[%s6 + $0x30] sm:$0xf]
        %v494 = vld [vmem:[%s6 + $0x34] sm:$0xf]
        %v495 = vld [vmem:[%s6 + $0x38] sm:$0xf]
        %v496 = vld [vmem:[%s6 + $0x3c] sm:$0xf]
        %v497 = vld [vmem:[%s6 + $0x40] sm:$0xf]
        %v498 = vld [vmem:[%s6 + $0x44] sm:$0xf]
        %v499 = vld [vmem:[%s6 + $0x48] sm:$0xf]
        %v500 = vld [vmem:[%s6 + $0x4c] sm:$0xf]
        %v501 = vld [vmem:[%s6 + $0x50] sm:$0xf]
        %v502 = vld [vmem:[%s6 + $0x54] sm:$0xf]
        %v503 = vld [vmem:[%s6 + $0x58] sm:$0xf]
        %v504 = vld [vmem:[%s6 + $0x5c] sm:$0xf]
        %v505 = vld [vmem:[%s6 + $0x60] sm:$0xf]
        %v506 = vld [vmem:[%s6 + $0x64] sm:$0xf]
        %v507 = vld [vmem:[%s6 + $0x68] sm:$0xf]
        %v508 = vld [vmem:[%s6 + $0x6c] sm:$0xf]
        %v509 = vld [vmem:[%s6 + $0x70] sm:$0xf]
        %v510 = vld [vmem:[%s6 + $0x74] sm:$0xf]
        %v511 = vld [vmem:[%s6 + $0x78] sm:$0xf]
        %v512 = vld [vmem:[%s6 + $0x7c] sm:$0xf]
        %v513 = vld [vmem:[%s6 + $0x80] sm:$0xf]
        %v514 = vld [vmem:[%s6 + $0x84] sm:$0xf]
        %v515 = vld [vmem:[%s6 + $0x88] sm:$0xf]
        %v516 = vld [vmem:[%s6 + $0x8c] sm:$0xf]
        %v517 = vld [vmem:[%s6 + $0x90] sm:$0xf]
        %v518 = vld [vmem:[%s6 + $0x94] sm:$0xf]
        %v519 = vld [vmem:[%s6 + $0x98] sm:$0xf]
        %v520 = vld [vmem:[%s6 + $0x9c] sm:$0xf]
        %v521 = vld [vmem:[%s6 + $0xa0] sm:$0xf]
        %v522 = vld [vmem:[%s6 + $0xa4] sm:$0xf]
        %v523 = vld [vmem:[%s6 + $0xa8] sm:$0xf]
        %v524 = vld [vmem:[%s6 + $0xac] sm:$0xf]
        %v525 = vld [vmem:[%s6 + $0xb0] sm:$0xf]
        %v526 = vld [vmem:[%s6 + $0xb4] sm:$0xf]
        %v527 = vld [vmem:[%s6 + $0xb8] sm:$0xf]
        %v528 = vld [vmem:[%s6 + $0xbc] sm:$0xf]
        %v529 = vld [vmem:[%s6 + $0xc0] sm:$0xf]
        %v530 = vld [vmem:[%s6 + $0xc4] sm:$0xf]
        %v531 = vld [vmem:[%s6 + $0xc8] sm:$0xf]
        %v532 = vld [vmem:[%s6 + $0xcc] sm:$0xf]
        %v533 = vld [vmem:[%s6 + $0xd0] sm:$0xf]
        %v534 = vld [vmem:[%s6 + $0xd4] sm:$0xf]
        %v535 = vld [vmem:[%s6 + $0xd8] sm:$0xf]
        %v536 = vld [vmem:[%s6 + $0xdc] sm:$0xf]
        %v537 = vld [vmem:[%s6 + $0xe0] sm:$0xf]
        %v538 = vld [vmem:[%s6 + $0xe4] sm:$0xf]
        %v539 = vld [vmem:[%s6 + $0xe8] sm:$0xf]
        %v540 = vld [vmem:[%s6 + $0xec] sm:$0xf]
        %v541 = vld [vmem:[%s6 + $0xf0] sm:$0xf]
        %v542 = vld [vmem:[%s6 + $0xf4] sm:$0xf]
        %v543 = vld [vmem:[%s6 + $0xf8] sm:$0xf]
        %v544 = vld [vmem:[%s6 + $0xfc] sm:$0xf]
        %v545 = vadd.f32 %v365, %v366
        %v546 = vadd.f32 %v545, %v367
        %v547 = vadd.f32 %v546, %v368
        %v548 = vadd.f32 %v547, %v369
        %v549 = vadd.f32 %v548, %v370
        %v550 = vadd.f32 %v549, %v371
        %v551 = vadd.f32 %v550, %v372
        %v552 = vrot.slane %v551, 4
        %v553 = vadd.f32 %v551, %v552
        %v554 = vrot.slane %v553, 2
        %v555 = vadd.f32 %v553, %v554
        %v556 = vrot.slane %v555, 1
        %v557 = vadd.f32 %v555, %v556
        %v558 = vadd.f32 %v373, %v374
        %v559 = vadd.f32 %v558, %v375
        %v560 = vadd.f32 %v559, %v376
        %v561 = vadd.f32 %v560, %v377
        %v562 = vadd.f32 %v561, %v378
        %v563 = vadd.f32 %v562, %v379
        %v564 = vadd.f32 %v563, %v380
        %v565 = vrot.slane %v564, 4
        %v566 = vadd.f32 %v564, %v565
        %v567 = vrot.slane %v566, 2
        %v568 = vadd.f32 %v566, %v567
        %v569 = vrot.slane %v568, 1
        %v570 = vadd.f32 %v568, %v569
        %v571 = vrcp.pop 64.0
        %v572 = vmul.f32 64.0, %v571
        %v573 = vsub.f32 1.0, %v572
        %v574 = vmul.f32 %v571, %v573
        %v575 = vadd.f32 %v571, %v574
        %vm576 = vweird.f32 %v571
        %v577 = vsel %vm576, %v571, %v575
        %v578 = vmul.f32 %v557, %v577
        %v579 = vmul.f32 %v570, %v577
        %v580 = vsub.f32 %v365, %v578
        %v581 = vsub.f32 %v366, %v578
        %v582 = vsub.f32 %v367, %v578
        %v583 = vsub.f32 %v368, %v578
        %v584 = vsub.f32 %v369, %v578
        %v585 = vsub.f32 %v370, %v578
        %v586 = vsub.f32 %v371, %v578
        %v587 = vsub.f32 %v372, %v578
        %v588 = vsub.f32 %v373, %v579
        %v589 = vsub.f32 %v374, %v579
        %v590 = vsub.f32 %v375, %v579
        %v591 = vsub.f32 %v376, %v579
        %v592 = vsub.f32 %v377, %v579
        %v593 = vsub.f32 %v378, %v579
        %v594 = vsub.f32 %v379, %v579
        %v595 = vsub.f32 %v380, %v579
        %v596 = vmul.f32 %v580, %v580
        %v597 = vmul.f32 %v581, %v581
        %v598 = vmul.f32 %v582, %v582
        %v599 = vmul.f32 %v583, %v583
        %v600 = vmul.f32 %v584, %v584
        %v601 = vmul.f32 %v585, %v585
        %v602 = vmul.f32 %v586, %v586
        %v603 = vmul.f32 %v587, %v587
        %v604 = vmul.f32 %v588, %v588
        %v605 = vmul.f32 %v589, %v589
        %v606 = vmul.f32 %v590, %v590
        %v607 = vmul.f32 %v591, %v591
        %v608 = vmul.f32 %v592, %v592
        %v609 = vmul.f32 %v593, %v593
        %v610 = vmul.f32 %v594, %v594
        %v611 = vmul.f32 %v595, %v595
        %v612 = vadd.f32 %v596, %v597
        %v613 = vadd.f32 %v612, %v598
        %v614 = vadd.f32 %v613, %v599
        %v615 = vadd.f32 %v614, %v600
        %v616 = vadd.f32 %v615, %v601
        %v617 = vadd.f32 %v616, %v602
        %v618 = vadd.f32 %v617, %v603
        %v619 = vrot.slane %v618, 4
        %v620 = vadd.f32 %v618, %v619
        %v621 = vrot.slane %v620, 2
        %v622 = vadd.f32 %v620, %v621
        %v623 = vrot.slane %v622, 1
        %v624 = vadd.f32 %v622, %v623
        %v625 = vadd.f32 %v604, %v605
        %v626 = vadd.f32 %v625, %v606
        %v627 = vadd.f32 %v626, %v607
        %v628 = vadd.f32 %v627, %v608
        %v629 = vadd.f32 %v628, %v609
        %v630 = vadd.f32 %v629, %v610
        %v631 = vadd.f32 %v630, %v611
        %v632 = vrot.slane %v631, 4
        %v633 = vadd.f32 %v631, %v632
        %v634 = vrot.slane %v633, 2
        %v635 = vadd.f32 %v633, %v634
        %v636 = vrot.slane %v635, 1
        %v637 = vadd.f32 %v635, %v636
        %v638 = vmul.f32 %v624, 0.015873017
        %v639 = vmul.f32 %v637, 0.015873017
        %v640 = vadd.f32 %v638, 1e-05
        %v641 = vadd.f32 %v639, 1e-05
        %v642 = vrsqrt.pop %v640
        %v643 = vmul.f32 %v642, %v640
        %v644 = vmul.f32 %v643, %v642
        %v645 = vmul.f32 0.5, %v644
        %v646 = vsub.f32 1.5, %v645
        %v647 = vmul.f32 %v642, %v646
        %vm648 = vweird.f32 %v640
        %vm649 = vweird.f32 %v642
        %vm650 = vmor %vm648, %vm649
        %v651 = vsel %vm650, %v642, %v647
        %v652 = vrsqrt.pop %v641
        %v653 = vmul.f32 %v652, %v641
        %v654 = vmul.f32 %v653, %v652
        %v655 = vmul.f32 0.5, %v654
        %v656 = vsub.f32 1.5, %v655
        %v657 = vmul.f32 %v652, %v656
        %vm658 = vweird.f32 %v641
        %vm659 = vweird.f32 %v652
        %vm660 = vmor %vm658, %vm659
        %v661 = vsel %vm660, %v652, %v657
        %v662 = vmul.f32 %v580, %v651
        %v663 = vmul.f32 %v581, %v651
        %v664 = vmul.f32 %v582, %v651
        %v665 = vmul.f32 %v583, %v651
        %v666 = vmul.f32 %v584, %v651
        %v667 = vmul.f32 %v585, %v651
        %v668 = vmul.f32 %v586, %v651
        %v669 = vmul.f32 %v587, %v651
        %v670 = vmul.f32 %v588, %v661
        %v671 = vmul.f32 %v589, %v661
        %v672 = vmul.f32 %v590, %v661
        %v673 = vmul.f32 %v591, %v661
        %v674 = vmul.f32 %v592, %v661
        %v675 = vmul.f32 %v593, %v661
        %v676 = vmul.f32 %v594, %v661
        %v677 = vmul.f32 %v595, %v661
        %v678 = vperm.slane %v400, 0
        %v679 = vmul.f32 %v678, %v662
        %v680 = vmul.f32 %v678, %v663
        %v681 = vmul.f32 %v678, %v664
        %v682 = vmul.f32 %v678, %v665
        %v683 = vmul.f32 %v678, %v666
        %v684 = vmul.f32 %v678, %v667
        %v685 = vmul.f32 %v678, %v668
        %v686 = vmul.f32 %v678, %v669
        %v687 = vmul.f32 %v678, %v670
        %v688 = vmul.f32 %v678, %v671
        %v689 = vmul.f32 %v678, %v672
        %v690 = vmul.f32 %v678, %v673
        %v691 = vmul.f32 %v678, %v674
        %v692 = vmul.f32 %v678, %v675
        %v693 = vmul.f32 %v678, %v676
        %v694 = vmul.f32 %v678, %v677
        %v695 = vperm.slane %v400, 1
        %v696 = vadd.f32 %v679, %v695
        %v697 = vadd.f32 %v680, %v695
        %v698 = vadd.f32 %v681, %v695
        %v699 = vadd.f32 %v682, %v695
        %v700 = vadd.f32 %v683, %v695
        %v701 = vadd.f32 %v684, %v695
        %v702 = vadd.f32 %v685, %v695
        %v703 = vadd.f32 %v686, %v695
        %v704 = vadd.f32 %v687, %v695
        %v705 = vadd.f32 %v688, %v695
        %v706 = vadd.f32 %v689, %v695
        %v707 = vadd.f32 %v690, %v695
        %v708 = vadd.f32 %v691, %v695
        %v709 = vadd.f32 %v692, %v695
        %v710 = vadd.f32 %v693, %v695
        %v711 = vadd.f32 %v694, %v695
        %v712 = vpack.c.bf16 %v697, %v696
        %v713 = vpack.c.bf16 %v699, %v698
        %v714 = vpack.c.bf16 %v701, %v700
        %v715 = vpack.c.bf16 %v703, %v702
        %v716 = vpack.c.bf16 %v705, %v704
        %v717 = vpack.c.bf16 %v707, %v706
        %v718 = vpack.c.bf16 %v709, %v708
        %v719 = vpack.c.bf16 %v711, %v710
        %v752 = vunpack.c.l.b16 %v401
        %v753 = vunpack.c.h.b16 %v401
        %v754 = vunpack.c.l.b16 %v402
        %v755 = vunpack.c.l.b16 %v403
        %v756 = vunpack.c.h.b16 %v403
        %v757 = vunpack.c.l.b16 %v404
        %v758 = vunpack.c.l.b16 %v405
        %v759 = vunpack.c.h.b16 %v405
        %v760 = vunpack.c.l.b16 %v406
        %v761 = vunpack.c.l.b16 %v407
        %v762 = vunpack.c.h.b16 %v407
        %v763 = vunpack.c.l.b16 %v408
        %v764 = vunpack.c.l.b16 %v409
        %v765 = vunpack.c.h.b16 %v409
        %v766 = vunpack.c.l.b16 %v410
        %v767 = vunpack.c.l.b16 %v411
        %v768 = vunpack.c.h.b16 %v411
        %v769 = vunpack.c.l.b16 %v412
        %v770 = vunpack.c.l.b16 %v413
        %v771 = vunpack.c.h.b16 %v413
        %v772 = vunpack.c.l.b16 %v414
        %v773 = vunpack.c.l.b16 %v415
        %v774 = vunpack.c.h.b16 %v415
        %v775 = vunpack.c.l.b16 %v416
        %v776 = vunpack.c.l.b16 %v417
        %v777 = vunpack.c.h.b16 %v417
        %v778 = vunpack.c.l.b16 %v418
        %v779 = vunpack.c.l.b16 %v419
        %v780 = vunpack.c.h.b16 %v419
        %v781 = vunpack.c.l.b16 %v420
        %v782 = vunpack.c.l.b16 %v421
        %v783 = vunpack.c.h.b16 %v421
        %v784 = vunpack.c.l.b16 %v422
        %v785 = vunpack.c.l.b16 %v423
        %v786 = vunpack.c.h.b16 %v423
        %v787 = vunpack.c.l.b16 %v424
        %v788 = vunpack.c.l.b16 %v425
        %v789 = vunpack.c.h.b16 %v425
        %v790 = vunpack.c.l.b16 %v426
        %v791 = vunpack.c.l.b16 %v427
        %v792 = vunpack.c.h.b16 %v427
        %v793 = vunpack.c.l.b16 %v428
        %v794 = vunpack.c.l.b16 %v429
        %v795 = vunpack.c.h.b16 %v429
        %v796 = vunpack.c.l.b16 %v430
        %v797 = vunpack.c.l.b16 %v431
        %v798 = vunpack.c.h.b16 %v431
        %v799 = vunpack.c.l.b16 %v432
        %v800 = vpack.c.b16 %v755, %v752
        %v801 = vpack.c.b16 %v756, %v753
        %v802 = vpack.c.b16 %v757, %v754
        %v803 = vpack.c.b16 %v761, %v758
        %v804 = vpack.c.b16 %v762, %v759
        %v805 = vpack.c.b16 %v763, %v760
        %v806 = vpack.c.b16 %v767, %v764
        %v807 = vpack.c.b16 %v768, %v765
        %v808 = vpack.c.b16 %v769, %v766
        %v809 = vpack.c.b16 %v773, %v770
        %v810 = vpack.c.b16 %v774, %v771
        %v811 = vpack.c.b16 %v775, %v772
        %v812 = vpack.c.b16 %v779, %v776
        %v813 = vpack.c.b16 %v780, %v777
        %v814 = vpack.c.b16 %v781, %v778
        %v815 = vpack.c.b16 %v785, %v782
        %v816 = vpack.c.b16 %v786, %v783
        %v817 = vpack.c.b16 %v787, %v784
        %v818 = vpack.c.b16 %v791, %v788
        %v819 = vpack.c.b16 %v792, %v789
        %v820 = vpack.c.b16 %v793, %v790
        %v821 = vpack.c.b16 %v797, %v794
        %v822 = vpack.c.b16 %v798, %v795
        %v823 = vpack.c.b16 %v799, %v796
        %848 = vmatpush.bf16.msra.mxu0 %v821
        %849 = vmatpush.bf16.msra.mxu0 %v818
        %850 = vmatpush.bf16.msra.mxu0 %v815
        %851 = vmatpush.bf16.msra.mxu0 %v812
        %852 = vmatpush.bf16.msra.mxu0 %v809
        %853 = vmatpush.bf16.msra.mxu0 %v806
        %854 = vmatpush.bf16.msra.mxu0 %v803
        %855 = vmatpush.bf16.msra.mxu0 %v800
        %856 = vmatmul.bf16.gmra.mxu0 %v712
        %v857 = vpop.f32.mrf.mxu0
        %v858 = vadd.f32 0.0, %v857
        %v859 = vpop.f32.mrf.mxu0
        %v860 = vadd.f32 0.0, %v859
        %861 = vmatmul.bf16.gmra.mxu0 %v713
        %v862 = vpop.f32.mrf.mxu0
        %v863 = vadd.f32 0.0, %v862
        %v864 = vpop.f32.mrf.mxu0
        %v865 = vadd.f32 0.0, %v864
        %866 = vmatmul.bf16.gmra.mxu0 %v714
        %v867 = vpop.f32.mrf.mxu0
        %v868 = vadd.f32 0.0, %v867
        %v869 = vpop.f32.mrf.mxu0
        %v870 = vadd.f32 0.0, %v869
        %871 = vmatmul.bf16.gmra.mxu0 %v715
        %v872 = vpop.f32.mrf.mxu0
        %v873 = vadd.f32 0.0, %v872
        %v874 = vpop.f32.mrf.mxu0
        %v875 = vadd.f32 0.0, %v874
        %876 = vmatmul.bf16.gmra.mxu0 %v716
        %v877 = vpop.f32.mrf.mxu0
        %v878 = vadd.f32 0.0, %v877
        %v879 = vpop.f32.mrf.mxu0
        %v880 = vadd.f32 0.0, %v879
        %881 = vmatmul.bf16.gmra.mxu0 %v717
        %v882 = vpop.f32.mrf.mxu0
        %v883 = vadd.f32 0.0, %v882
        %v884 = vpop.f32.mrf.mxu0
        %v885 = vadd.f32 0.0, %v884
        %886 = vmatmul.bf16.gmra.mxu0 %v718
        %v887 = vpop.f32.mrf.mxu0
        %v888 = vadd.f32 0.0, %v887
        %v889 = vpop.f32.mrf.mxu0
        %v890 = vadd.f32 0.0, %v889
        %891 = vmatmul.bf16.gmra.mxu0 %v719
        %v892 = vpop.f32.mrf.mxu0
        %v893 = vadd.f32 0.0, %v892
        %v894 = vpop.f32.mrf.mxu0
        %v895 = vadd.f32 0.0, %v894
        %896 = vdwg.mxu0
        %897 = vmatpush.bf16.msra.mxu0 %v822
        %898 = vmatpush.bf16.msra.mxu0 %v819
        %899 = vmatpush.bf16.msra.mxu0 %v816
        %900 = vmatpush.bf16.msra.mxu0 %v813
        %901 = vmatpush.bf16.msra.mxu0 %v810
        %902 = vmatpush.bf16.msra.mxu0 %v807
        %903 = vmatpush.bf16.msra.mxu0 %v804
        %904 = vmatpush.bf16.msra.mxu0 %v801
        %905 = vmatmul.bf16.gmra.mxu0 %v712
        %v906 = vpop.f32.mrf.mxu0
        %v907 = vadd.f32 0.0, %v906
        %v908 = vpop.f32.mrf.mxu0
        %v909 = vadd.f32 0.0, %v908
        %910 = vmatmul.bf16.gmra.mxu0 %v713
        %v911 = vpop.f32.mrf.mxu0
        %v912 = vadd.f32 0.0, %v911
        %v913 = vpop.f32.mrf.mxu0
        %v914 = vadd.f32 0.0, %v913
        %915 = vmatmul.bf16.gmra.mxu0 %v714
        %v916 = vpop.f32.mrf.mxu0
        %v917 = vadd.f32 0.0, %v916
        %v918 = vpop.f32.mrf.mxu0
        %v919 = vadd.f32 0.0, %v918
        %920 = vmatmul.bf16.gmra.mxu0 %v715
        %v921 = vpop.f32.mrf.mxu0
        %v922 = vadd.f32 0.0, %v921
        %v923 = vpop.f32.mrf.mxu0
        %v924 = vadd.f32 0.0, %v923
        %925 = vmatmul.bf16.gmra.mxu0 %v716
        %v926 = vpop.f32.mrf.mxu0
        %v927 = vadd.f32 0.0, %v926
        %v928 = vpop.f32.mrf.mxu0
        %v929 = vadd.f32 0.0, %v928
        %930 = vmatmul.bf16.gmra.mxu0 %v717
        %v931 = vpop.f32.mrf.mxu0
        %v932 = vadd.f32 0.0, %v931
        %v933 = vpop.f32.mrf.mxu0
        %v934 = vadd.f32 0.0, %v933
        %935 = vmatmul.bf16.gmra.mxu0 %v718
        %v936 = vpop.f32.mrf.mxu0
        %v937 = vadd.f32 0.0, %v936
        %v938 = vpop.f32.mrf.mxu0
        %v939 = vadd.f32 0.0, %v938
        %940 = vmatmul.bf16.gmra.mxu0 %v719
        %v941 = vpop.f32.mrf.mxu0
        %v942 = vadd.f32 0.0, %v941
        %v943 = vpop.f32.mrf.mxu0
        %v944 = vadd.f32 0.0, %v943
        %945 = vdwg.mxu0
        %946 = vmatpush.bf16.msra.mxu0 %v823
        %947 = vmatpush.bf16.msra.mxu0 %v820
        %948 = vmatpush.bf16.msra.mxu0 %v817
        %949 = vmatpush.bf16.msra.mxu0 %v814
        %950 = vmatpush.bf16.msra.mxu0 %v811
        %951 = vmatpush.bf16.msra.mxu0 %v808
        %952 = vmatpush.bf16.msra.mxu0 %v805
        %953 = vmatpush.bf16.msra.mxu0 %v802
        %954 = vmatmul.bf16.gmra.mxu0 %v712
        %v955 = vpop.f32.mrf.mxu0
        %v956 = vadd.f32 0.0, %v955
        %v957 = vpop.f32.mrf.mxu0
        %v958 = vadd.f32 0.0, %v957
        %959 = vmatmul.bf16.gmra.mxu0 %v713
        %v960 = vpop.f32.mrf.mxu0
        %v961 = vadd.f32 0.0, %v960
        %v962 = vpop.f32.mrf.mxu0
        %v963 = vadd.f32 0.0, %v962
        %964 = vmatmul.bf16.gmra.mxu0 %v714
        %v965 = vpop.f32.mrf.mxu0
        %v966 = vadd.f32 0.0, %v965
        %v967 = vpop.f32.mrf.mxu0
        %v968 = vadd.f32 0.0, %v967
        %969 = vmatmul.bf16.gmra.mxu0 %v715
        %v970 = vpop.f32.mrf.mxu0
        %v971 = vadd.f32 0.0, %v970
        %v972 = vpop.f32.mrf.mxu0
        %v973 = vadd.f32 0.0, %v972
        %974 = vmatmul.bf16.gmra.mxu0 %v716
        %v975 = vpop.f32.mrf.mxu0
        %v976 = vadd.f32 0.0, %v975
        %v977 = vpop.f32.mrf.mxu0
        %v978 = vadd.f32 0.0, %v977
        %979 = vmatmul.bf16.gmra.mxu0 %v717
        %v980 = vpop.f32.mrf.mxu0
        %v981 = vadd.f32 0.0, %v980
        %v982 = vpop.f32.mrf.mxu0
        %v983 = vadd.f32 0.0, %v982
        %984 = vmatmul.bf16.gmra.mxu0 %v718
        %v985 = vpop.f32.mrf.mxu0
        %v986 = vadd.f32 0.0, %v985
        %v987 = vpop.f32.mrf.mxu0
        %v988 = vadd.f32 0.0, %v987
        %989 = vmatmul.bf16.gmra.mxu0 %v719
        %v990 = vpop.f32.mrf.mxu0
        %v991 = vadd.f32 0.0, %v990
        %v992 = vpop.f32.mrf.mxu0
        %v993 = vadd.f32 0.0, %v992
        %994 = vdwg.mxu0
        %v995 = vpack.c.bf16 %v858, %v858
        %v996 = vpack.c.bf16 %v860, %v860
        %v997 = vpack.c.bf16 %v863, %v863
        %v998 = vpack.c.bf16 %v865, %v865
        %v999 = vpack.c.bf16 %v868, %v868
        %v1000 = vpack.c.bf16 %v870, %v870
        %v1001 = vpack.c.bf16 %v873, %v873
        %v1002 = vpack.c.bf16 %v875, %v875
        %v1003 = vpack.c.bf16 %v878, %v878
        %v1004 = vpack.c.bf16 %v880, %v880
        %v1005 = vpack.c.bf16 %v883, %v883
        %v1006 = vpack.c.bf16 %v885, %v885
        %v1007 = vpack.c.bf16 %v888, %v888
        %v1008 = vpack.c.bf16 %v890, %v890
        %v1009 = vpack.c.bf16 %v893, %v893
        %v1010 = vpack.c.bf16 %v895, %v895
        %v1011 = vpack.c.bf16 %v907, %v907
        %v1012 = vpack.c.bf16 %v909, %v909
        %v1013 = vpack.c.bf16 %v912, %v912
        %v1014 = vpack.c.bf16 %v914, %v914
        %v1015 = vpack.c.bf16 %v917, %v917
        %v1016 = vpack.c.bf16 %v919, %v919
        %v1017 = vpack.c.bf16 %v922, %v922
        %v1018 = vpack.c.bf16 %v924, %v924
        %v1019 = vpack.c.bf16 %v927, %v927
        %v1020 = vpack.c.bf16 %v929, %v929
        %v1021 = vpack.c.bf16 %v932, %v932
        %v1022 = vpack.c.bf16 %v934, %v934
        %v1023 = vpack.c.bf16 %v937, %v937
        %v1024 = vpack.c.bf16 %v939, %v939
        %v1025 = vpack.c.bf16 %v942, %v942
        %v1026 = vpack.c.bf16 %v944, %v944
        %v1027 = vpack.c.bf16 %v956, %v956
        %v1028 = vpack.c.bf16 %v958, %v958
        %v1029 = vpack.c.bf16 %v961, %v961
        %v1030 = vpack.c.bf16 %v963, %v963
        %v1031 = vpack.c.bf16 %v966, %v966
        %v1032 = vpack.c.bf16 %v968, %v968
        %v1033 = vpack.c.bf16 %v971, %v971
        %v1034 = vpack.c.bf16 %v973, %v973
        %v1035 = vpack.c.bf16 %v976, %v976
        %v1036 = vpack.c.bf16 %v978, %v978
        %v1037 = vpack.c.bf16 %v981, %v981
        %v1038 = vpack.c.bf16 %v983, %v983
        %v1039 = vpack.c.bf16 %v986, %v986
        %v1040 = vpack.c.bf16 %v988, %v988
        %v1041 = vpack.c.bf16 %v991, %v991
        %v1042 = vpack.c.bf16 %v993, %v993
        %v1051 = vunpack.c.l.b16 %v995
        %v1052 = vunpack.c.l.b16 %v996
        %v1053 = vunpack.c.l.b16 %v997
        %v1054 = vunpack.c.l.b16 %v998
        %v1055 = vunpack.c.l.b16 %v999
        %v1056 = vunpack.c.l.b16 %v1000
        %v1057 = vunpack.c.l.b16 %v1001
        %v1058 = vunpack.c.l.b16 %v1002
        %v1059 = vpack.c.b16 %v1052, %v1051
        %v1060 = vpack.c.b16 %v1054, %v1053
        %v1061 = vpack.c.b16 %v1056, %v1055
        %v1062 = vpack.c.b16 %v1058, %v1057
        %v1071 = vunpack.c.l.b16 %v1011
        %v1072 = vunpack.c.l.b16 %v1012
        %v1073 = vunpack.c.l.b16 %v1013
        %v1074 = vunpack.c.l.b16 %v1014
        %v1075 = vunpack.c.l.b16 %v1015
        %v1076 = vunpack.c.l.b16 %v1016
        %v1077 = vunpack.c.l.b16 %v1017
        %v1078 = vunpack.c.l.b16 %v1018
        %v1079 = vpack.c.b16 %v1072, %v1071
        %v1080 = vpack.c.b16 %v1074, %v1073
        %v1081 = vpack.c.b16 %v1076, %v1075
        %v1082 = vpack.c.b16 %v1078, %v1077
        %vm1083 = vcmask 261120
        %v1085 = vsel %vm1083, %v1059, 0
        %v1088 = vsel %vm1083, %v1060, 0
        %v1091 = vsel %vm1083, %v1061, 0
        %v1094 = vsel %vm1083, %v1062, 0
        %v1097 = vsel %vm1083, %v1079, 0
        %v1100 = vsel %vm1083, %v1080, 0
        %v1103 = vsel %vm1083, %v1081, 0
        %v1106 = vsel %vm1083, %v1082, 0
        %1108 = vmatpush.bf16.xpose.msra.mxu0 0
        %1109 = vmatpush.bf16.xpose.msra.mxu0 0
        %1110 = vmatpush.bf16.xpose.msra.mxu0 0
        %1111 = vmatpush.bf16.xpose.msra.mxu0 0
        %1112 = vmatpush.bf16.xpose.msra.mxu0 %v1106
        %1113 = vmatpush.bf16.xpose.msra.mxu0 %v1103
        %1114 = vmatpush.bf16.xpose.msra.mxu0 %v1100
        %1115 = vmatpush.bf16.xpose.msra.mxu0 %v1097
        %1116 = vmatmul.bf16.gmra.mxu0 %v1085
        %v1117 = vpop.f32.mrf.mxu0
        %v1118 = vadd.f32 0.0, %v1117
        %v1119 = vpop.f32.mrf.mxu0
        %v1120 = vadd.f32 0.0, %v1119
        %1121 = vmatmul.bf16.gmra.mxu0 %v1088
        %v1122 = vpop.f32.mrf.mxu0
        %v1123 = vadd.f32 0.0, %v1122
        %v1124 = vpop.f32.mrf.mxu0
        %v1125 = vadd.f32 0.0, %v1124
        %1126 = vmatmul.bf16.gmra.mxu0 %v1091
        %v1127 = vpop.f32.mrf.mxu0
        %v1128 = vadd.f32 0.0, %v1127
        %v1129 = vpop.f32.mrf.mxu0
        %v1130 = vadd.f32 0.0, %v1129
        %1131 = vmatmul.bf16.gmra.mxu0 %v1094
        %v1132 = vpop.f32.mrf.mxu0
        %v1133 = vadd.f32 0.0, %v1132
        %v1134 = vpop.f32.mrf.mxu0
        %v1135 = vadd.f32 0.0, %v1134
        %1136 = vdwg.mxu0
        %v1145 = vunpack.c.l.b16 %v1003
        %v1146 = vunpack.c.l.b16 %v1004
        %v1147 = vunpack.c.l.b16 %v1005
        %v1148 = vunpack.c.l.b16 %v1006
        %v1149 = vunpack.c.l.b16 %v1007
        %v1150 = vunpack.c.l.b16 %v1008
        %v1151 = vunpack.c.l.b16 %v1009
        %v1152 = vunpack.c.l.b16 %v1010
        %v1153 = vpack.c.b16 %v1146, %v1145
        %v1154 = vpack.c.b16 %v1148, %v1147
        %v1155 = vpack.c.b16 %v1150, %v1149
        %v1156 = vpack.c.b16 %v1152, %v1151
        %v1165 = vunpack.c.l.b16 %v1019
        %v1166 = vunpack.c.l.b16 %v1020
        %v1167 = vunpack.c.l.b16 %v1021
        %v1168 = vunpack.c.l.b16 %v1022
        %v1169 = vunpack.c.l.b16 %v1023
        %v1170 = vunpack.c.l.b16 %v1024
        %v1171 = vunpack.c.l.b16 %v1025
        %v1172 = vunpack.c.l.b16 %v1026
        %v1173 = vpack.c.b16 %v1166, %v1165
        %v1174 = vpack.c.b16 %v1168, %v1167
        %v1175 = vpack.c.b16 %v1170, %v1169
        %v1176 = vpack.c.b16 %v1172, %v1171
        %v1178 = vsel %vm1083, %v1153, 0
        %v1181 = vsel %vm1083, %v1154, 0
        %v1184 = vsel %vm1083, %v1155, 0
        %v1187 = vsel %vm1083, %v1156, 0
        %v1190 = vsel %vm1083, %v1173, 0
        %v1193 = vsel %vm1083, %v1174, 0
        %v1196 = vsel %vm1083, %v1175, 0
        %v1199 = vsel %vm1083, %v1176, 0
        %1201 = vmatpush.bf16.xpose.msra.mxu0 0
        %1202 = vmatpush.bf16.xpose.msra.mxu0 0
        %1203 = vmatpush.bf16.xpose.msra.mxu0 0
        %1204 = vmatpush.bf16.xpose.msra.mxu0 0
        %1205 = vmatpush.bf16.xpose.msra.mxu0 %v1199
        %1206 = vmatpush.bf16.xpose.msra.mxu0 %v1196
        %1207 = vmatpush.bf16.xpose.msra.mxu0 %v1193
        %1208 = vmatpush.bf16.xpose.msra.mxu0 %v1190
        %1209 = vmatmul.bf16.gmra.mxu0 %v1178
        %v1210 = vpop.f32.mrf.mxu0
        %v1211 = vadd.f32 0.0, %v1210
        %v1212 = vpop.f32.mrf.mxu0
        %v1213 = vadd.f32 0.0, %v1212
        %1214 = vmatmul.bf16.gmra.mxu0 %v1181
        %v1215 = vpop.f32.mrf.mxu0
        %v1216 = vadd.f32 0.0, %v1215
        %v1217 = vpop.f32.mrf.mxu0
        %v1218 = vadd.f32 0.0, %v1217
        %1219 = vmatmul.bf16.gmra.mxu0 %v1184
        %v1220 = vpop.f32.mrf.mxu0
        %v1221 = vadd.f32 0.0, %v1220
        %v1222 = vpop.f32.mrf.mxu0
        %v1223 = vadd.f32 0.0, %v1222
        %1224 = vmatmul.bf16.gmra.mxu0 %v1187
        %v1225 = vpop.f32.mrf.mxu0
        %v1226 = vadd.f32 0.0, %v1225
        %v1227 = vpop.f32.mrf.mxu0
        %v1228 = vadd.f32 0.0, %v1227
        %1229 = vdwg.mxu0
        %v1230 = vsel %vm392, 1, 0
        %v1231 = vsel %vm393, 1, 0
        %v1232 = vsel %vm394, 1, 0
        %v1233 = vsel %vm395, 1, 0
        %v1234 = vsel %vm396, 1, 0
        %v1235 = vsel %vm397, 1, 0
        %v1236 = vsel %vm398, 1, 0
        %v1237 = vsel %vm399, 1, 0
        %vm1238 = vcmp.eq.s32.totalorder %v1230, 1
        %vm1239 = vcmp.eq.s32.totalorder %v1231, 1
        %vm1240 = vcmp.eq.s32.totalorder %v1232, 1
        %vm1241 = vcmp.eq.s32.totalorder %v1233, 1
        %vm1242 = vcmp.eq.s32.totalorder %v1234, 1
        %vm1243 = vcmp.eq.s32.totalorder %v1235, 1
        %vm1244 = vcmp.eq.s32.totalorder %v1236, 1
        %vm1245 = vcmp.eq.s32.totalorder %v1237, 1
        %v1246 = vsel %vm1238, %v1118, -1e+30
        %v1247 = vsel %vm1239, %v1120, -1e+30
        %v1248 = vsel %vm1240, %v1123, -1e+30
        %v1249 = vsel %vm1241, %v1125, -1e+30
        %v1250 = vsel %vm1242, %v1128, -1e+30
        %v1251 = vsel %vm1243, %v1130, -1e+30
        %v1252 = vsel %vm1244, %v1133, -1e+30
        %v1253 = vsel %vm1245, %v1135, -1e+30
        %v1254 = vsel %vm1238, %v1211, -1e+30
        %v1255 = vsel %vm1239, %v1213, -1e+30
        %v1256 = vsel %vm1240, %v1216, -1e+30
        %v1257 = vsel %vm1241, %v1218, -1e+30
        %v1258 = vsel %vm1242, %v1221, -1e+30
        %v1259 = vsel %vm1243, %v1223, -1e+30
        %v1260 = vsel %vm1244, %v1226, -1e+30
        %v1261 = vsel %vm1245, %v1228, -1e+30
        %vm1262 = vcmask 523264
        %v1263 = vsel %vm1262, %v1246, -inf
        %1264 = vmax.xlane.f32.xlu0 %v1263
        %v1265 = vpop.xlane.xlu0 %1264
        %v1266 = vsel %vm1262, %v1247, -inf
        %1267 = vmax.xlane.f32.xlu0 %v1266
        %v1268 = vpop.xlane.xlu0 %1267
        %v1269 = vsel %vm1262, %v1248, -inf
        %1270 = vmax.xlane.f32.xlu0 %v1269
        %v1271 = vpop.xlane.xlu0 %1270
        %v1272 = vsel %vm1262, %v1249, -inf
        %1273 = vmax.xlane.f32.xlu0 %v1272
        %v1274 = vpop.xlane.xlu0 %1273
        %v1275 = vsel %vm1262, %v1250, -inf
        %1276 = vmax.xlane.f32.xlu0 %v1275
        %v1277 = vpop.xlane.xlu0 %1276
        %v1278 = vsel %vm1262, %v1251, -inf
        %1279 = vmax.xlane.f32.xlu0 %v1278
        %v1280 = vpop.xlane.xlu0 %1279
        %v1281 = vsel %vm1262, %v1252, -inf
        %1282 = vmax.xlane.f32.xlu0 %v1281
        %v1283 = vpop.xlane.xlu0 %1282
        %v1284 = vsel %vm1262, %v1253, -inf
        %1285 = vmax.xlane.f32.xlu0 %v1284
        %v1286 = vpop.xlane.xlu0 %1285
        %v1287 = vsel %vm1262, %v1254, -inf
        %1288 = vmax.xlane.f32.xlu0 %v1287
        %v1289 = vpop.xlane.xlu0 %1288
        %v1290 = vsel %vm1262, %v1255, -inf
        %1291 = vmax.xlane.f32.xlu0 %v1290
        %v1292 = vpop.xlane.xlu0 %1291
        %v1293 = vsel %vm1262, %v1256, -inf
        %1294 = vmax.xlane.f32.xlu0 %v1293
        %v1295 = vpop.xlane.xlu0 %1294
        %v1296 = vsel %vm1262, %v1257, -inf
        %1297 = vmax.xlane.f32.xlu0 %v1296
        %v1298 = vpop.xlane.xlu0 %1297
        %v1299 = vsel %vm1262, %v1258, -inf
        %1300 = vmax.xlane.f32.xlu0 %v1299
        %v1301 = vpop.xlane.xlu0 %1300
        %v1302 = vsel %vm1262, %v1259, -inf
        %1303 = vmax.xlane.f32.xlu0 %v1302
        %v1304 = vpop.xlane.xlu0 %1303
        %v1305 = vsel %vm1262, %v1260, -inf
        %1306 = vmax.xlane.f32.xlu0 %v1305
        %v1307 = vpop.xlane.xlu0 %1306
        %v1308 = vsel %vm1262, %v1261, -inf
        %1309 = vmax.xlane.f32.xlu0 %v1308
        %v1310 = vpop.xlane.xlu0 %1309
        %v1311 = vsub.f32 %v1246, %v1265
        %v1312 = vsub.f32 %v1247, %v1268
        %v1313 = vsub.f32 %v1248, %v1271
        %v1314 = vsub.f32 %v1249, %v1274
        %v1315 = vsub.f32 %v1250, %v1277
        %v1316 = vsub.f32 %v1251, %v1280
        %v1317 = vsub.f32 %v1252, %v1283
        %v1318 = vsub.f32 %v1253, %v1286
        %v1319 = vsub.f32 %v1254, %v1289
        %v1320 = vsub.f32 %v1255, %v1292
        %v1321 = vsub.f32 %v1256, %v1295
        %v1322 = vsub.f32 %v1257, %v1298
        %v1323 = vsub.f32 %v1258, %v1301
        %v1324 = vsub.f32 %v1259, %v1304
        %v1325 = vsub.f32 %v1260, %v1307
        %v1326 = vsub.f32 %v1261, %v1310
        %v1327 = vmul.f32 %v1311, 1.442695
        %v1328 = vpow.pop %v1327
        %v1329 = vmul.f32 %v1312, 1.442695
        %v1330 = vpow.pop %v1329
        %v1331 = vmul.f32 %v1313, 1.442695
        %v1332 = vpow.pop %v1331
        %v1333 = vmul.f32 %v1314, 1.442695
        %v1334 = vpow.pop %v1333
        %v1335 = vmul.f32 %v1315, 1.442695
        %v1336 = vpow.pop %v1335
        %v1337 = vmul.f32 %v1316, 1.442695
        %v1338 = vpow.pop %v1337
        %v1339 = vmul.f32 %v1317, 1.442695
        %v1340 = vpow.pop %v1339
        %v1341 = vmul.f32 %v1318, 1.442695
        %v1342 = vpow.pop %v1341
        %v1343 = vmul.f32 %v1319, 1.442695
        %v1344 = vpow.pop %v1343
        %v1345 = vmul.f32 %v1320, 1.442695
        %v1346 = vpow.pop %v1345
        %v1347 = vmul.f32 %v1321, 1.442695
        %v1348 = vpow.pop %v1347
        %v1349 = vmul.f32 %v1322, 1.442695
        %v1350 = vpow.pop %v1349
        %v1351 = vmul.f32 %v1323, 1.442695
        %v1352 = vpow.pop %v1351
        %v1353 = vmul.f32 %v1324, 1.442695
        %v1354 = vpow.pop %v1353
        %v1355 = vmul.f32 %v1325, 1.442695
        %v1356 = vpow.pop %v1355
        %v1357 = vmul.f32 %v1326, 1.442695
        %v1358 = vpow.pop %v1357
        %v1359 = vsel %vm1262, %v1328, 0.0
        %1360 = vadd.xlane.f32.xlu0 %v1359
        %v1361 = vpop.xlane.xlu0 %1360
        %v1362 = vsel %vm1262, %v1330, 0.0
        %1363 = vadd.xlane.f32.xlu0 %v1362
        %v1364 = vpop.xlane.xlu0 %1363
        %v1365 = vsel %vm1262, %v1332, 0.0
        %1366 = vadd.xlane.f32.xlu0 %v1365
        %v1367 = vpop.xlane.xlu0 %1366
        %v1368 = vsel %vm1262, %v1334, 0.0
        %1369 = vadd.xlane.f32.xlu0 %v1368
        %v1370 = vpop.xlane.xlu0 %1369
        %v1371 = vsel %vm1262, %v1336, 0.0
        %1372 = vadd.xlane.f32.xlu0 %v1371
        %v1373 = vpop.xlane.xlu0 %1372
        %v1374 = vsel %vm1262, %v1338, 0.0
        %1375 = vadd.xlane.f32.xlu0 %v1374
        %v1376 = vpop.xlane.xlu0 %1375
        %v1377 = vsel %vm1262, %v1340, 0.0
        %1378 = vadd.xlane.f32.xlu0 %v1377
        %v1379 = vpop.xlane.xlu0 %1378
        %v1380 = vsel %vm1262, %v1342, 0.0
        %1381 = vadd.xlane.f32.xlu0 %v1380
        %v1382 = vpop.xlane.xlu0 %1381
        %v1383 = vsel %vm1262, %v1344, 0.0
        %1384 = vadd.xlane.f32.xlu0 %v1383
        %v1385 = vpop.xlane.xlu0 %1384
        %v1386 = vsel %vm1262, %v1346, 0.0
        %1387 = vadd.xlane.f32.xlu0 %v1386
        %v1388 = vpop.xlane.xlu0 %1387
        %v1389 = vsel %vm1262, %v1348, 0.0
        %1390 = vadd.xlane.f32.xlu0 %v1389
        %v1391 = vpop.xlane.xlu0 %1390
        %v1392 = vsel %vm1262, %v1350, 0.0
        %1393 = vadd.xlane.f32.xlu0 %v1392
        %v1394 = vpop.xlane.xlu0 %1393
        %v1395 = vsel %vm1262, %v1352, 0.0
        %1396 = vadd.xlane.f32.xlu0 %v1395
        %v1397 = vpop.xlane.xlu0 %1396
        %v1398 = vsel %vm1262, %v1354, 0.0
        %1399 = vadd.xlane.f32.xlu0 %v1398
        %v1400 = vpop.xlane.xlu0 %1399
        %v1401 = vsel %vm1262, %v1356, 0.0
        %1402 = vadd.xlane.f32.xlu0 %v1401
        %v1403 = vpop.xlane.xlu0 %1402
        %v1404 = vsel %vm1262, %v1358, 0.0
        %1405 = vadd.xlane.f32.xlu0 %v1404
        %v1406 = vpop.xlane.xlu0 %1405
        %v1407 = vrcp.pop %v1361
        %v1408 = vrcp.pop %v1364
        %v1409 = vrcp.pop %v1367
        %v1410 = vrcp.pop %v1370
        %v1411 = vrcp.pop %v1373
        %v1412 = vrcp.pop %v1376
        %v1413 = vrcp.pop %v1379
        %v1414 = vrcp.pop %v1382
        %v1415 = vrcp.pop %v1385
        %v1416 = vrcp.pop %v1388
        %v1417 = vrcp.pop %v1391
        %v1418 = vrcp.pop %v1394
        %v1419 = vrcp.pop %v1397
        %v1420 = vrcp.pop %v1400
        %v1421 = vrcp.pop %v1403
        %v1422 = vrcp.pop %v1406
        %v1423 = vmul.f32 %v1328, %v1407
        %v1424 = vmul.f32 %v1330, %v1408
        %v1425 = vmul.f32 %v1332, %v1409
        %v1426 = vmul.f32 %v1334, %v1410
        %v1427 = vmul.f32 %v1336, %v1411
        %v1428 = vmul.f32 %v1338, %v1412
        %v1429 = vmul.f32 %v1340, %v1413
        %v1430 = vmul.f32 %v1342, %v1414
        %v1431 = vmul.f32 %v1344, %v1415
        %v1432 = vmul.f32 %v1346, %v1416
        %v1433 = vmul.f32 %v1348, %v1417
        %v1434 = vmul.f32 %v1350, %v1418
        %v1435 = vmul.f32 %v1352, %v1419
        %v1436 = vmul.f32 %v1354, %v1420
        %v1437 = vmul.f32 %v1356, %v1421
        %v1438 = vmul.f32 %v1358, %v1422
        %v1439 = vpack.c.bf16 %v1423, %v1423
        %v1440 = vpack.c.bf16 %v1424, %v1424
        %v1441 = vpack.c.bf16 %v1425, %v1425
        %v1442 = vpack.c.bf16 %v1426, %v1426
        %v1443 = vpack.c.bf16 %v1427, %v1427
        %v1444 = vpack.c.bf16 %v1428, %v1428
        %v1445 = vpack.c.bf16 %v1429, %v1429
        %v1446 = vpack.c.bf16 %v1430, %v1430
        %v1447 = vpack.c.bf16 %v1431, %v1431
        %v1448 = vpack.c.bf16 %v1432, %v1432
        %v1449 = vpack.c.bf16 %v1433, %v1433
        %v1450 = vpack.c.bf16 %v1434, %v1434
        %v1451 = vpack.c.bf16 %v1435, %v1435
        %v1452 = vpack.c.bf16 %v1436, %v1436
        %v1453 = vpack.c.bf16 %v1437, %v1437
        %v1454 = vpack.c.bf16 %v1438, %v1438
        %v1463 = vunpack.c.l.b16 %v1439
        %v1464 = vunpack.c.l.b16 %v1440
        %v1465 = vunpack.c.l.b16 %v1441
        %v1466 = vunpack.c.l.b16 %v1442
        %v1467 = vunpack.c.l.b16 %v1443
        %v1468 = vunpack.c.l.b16 %v1444
        %v1469 = vunpack.c.l.b16 %v1445
        %v1470 = vunpack.c.l.b16 %v1446
        %v1471 = vpack.c.b16 %v1464, %v1463
        %v1472 = vpack.c.b16 %v1466, %v1465
        %v1473 = vpack.c.b16 %v1468, %v1467
        %v1474 = vpack.c.b16 %v1470, %v1469
        %v1483 = vunpack.c.l.b16 %v1027
        %v1484 = vunpack.c.l.b16 %v1028
        %v1485 = vunpack.c.l.b16 %v1029
        %v1486 = vunpack.c.l.b16 %v1030
        %v1487 = vunpack.c.l.b16 %v1031
        %v1488 = vunpack.c.l.b16 %v1032
        %v1489 = vunpack.c.l.b16 %v1033
        %v1490 = vunpack.c.l.b16 %v1034
        %v1491 = vpack.c.b16 %v1484, %v1483
        %v1492 = vpack.c.b16 %v1486, %v1485
        %v1493 = vpack.c.b16 %v1488, %v1487
        %v1494 = vpack.c.b16 %v1490, %v1489
        %v1500 = vsel %vm1262, %v1471, 0
        %v1503 = vsel %vm1262, %v1472, 0
        %v1506 = vsel %vm1262, %v1473, 0
        %v1509 = vsel %vm1262, %v1474, 0
        %1511 = vmatpush.bf16.msra.mxu0 0
        %1512 = vmatpush.bf16.msra.mxu0 0
        %1513 = vmatpush.bf16.msra.mxu0 0
        %1514 = vmatpush.bf16.msra.mxu0 0
        %1515 = vmatpush.bf16.msra.mxu0 %v1494
        %1516 = vmatpush.bf16.msra.mxu0 %v1493
        %1517 = vmatpush.bf16.msra.mxu0 %v1492
        %1518 = vmatpush.bf16.msra.mxu0 %v1491
        %1519 = vmatmul.bf16.gmra.mxu0 %v1500
        %v1520 = vpop.f32.mrf.mxu0
        %v1521 = vadd.f32 0.0, %v1520
        %v1522 = vpop.f32.mrf.mxu0
        %v1523 = vadd.f32 0.0, %v1522
        %1524 = vmatmul.bf16.gmra.mxu0 %v1503
        %v1525 = vpop.f32.mrf.mxu0
        %v1526 = vadd.f32 0.0, %v1525
        %v1527 = vpop.f32.mrf.mxu0
        %v1528 = vadd.f32 0.0, %v1527
        %1529 = vmatmul.bf16.gmra.mxu0 %v1506
        %v1530 = vpop.f32.mrf.mxu0
        %v1531 = vadd.f32 0.0, %v1530
        %v1532 = vpop.f32.mrf.mxu0
        %v1533 = vadd.f32 0.0, %v1532
        %1534 = vmatmul.bf16.gmra.mxu0 %v1509
        %v1535 = vpop.f32.mrf.mxu0
        %v1536 = vadd.f32 0.0, %v1535
        %v1537 = vpop.f32.mrf.mxu0
        %v1538 = vadd.f32 0.0, %v1537
        %1539 = vdwg.mxu0
        %v1548 = vunpack.c.l.b16 %v1447
        %v1549 = vunpack.c.l.b16 %v1448
        %v1550 = vunpack.c.l.b16 %v1449
        %v1551 = vunpack.c.l.b16 %v1450
        %v1552 = vunpack.c.l.b16 %v1451
        %v1553 = vunpack.c.l.b16 %v1452
        %v1554 = vunpack.c.l.b16 %v1453
        %v1555 = vunpack.c.l.b16 %v1454
        %v1556 = vpack.c.b16 %v1549, %v1548
        %v1557 = vpack.c.b16 %v1551, %v1550
        %v1558 = vpack.c.b16 %v1553, %v1552
        %v1559 = vpack.c.b16 %v1555, %v1554
        %v1568 = vunpack.c.l.b16 %v1035
        %v1569 = vunpack.c.l.b16 %v1036
        %v1570 = vunpack.c.l.b16 %v1037
        %v1571 = vunpack.c.l.b16 %v1038
        %v1572 = vunpack.c.l.b16 %v1039
        %v1573 = vunpack.c.l.b16 %v1040
        %v1574 = vunpack.c.l.b16 %v1041
        %v1575 = vunpack.c.l.b16 %v1042
        %v1576 = vpack.c.b16 %v1569, %v1568
        %v1577 = vpack.c.b16 %v1571, %v1570
        %v1578 = vpack.c.b16 %v1573, %v1572
        %v1579 = vpack.c.b16 %v1575, %v1574
        %v1585 = vsel %vm1262, %v1556, 0
        %v1588 = vsel %vm1262, %v1557, 0
        %v1591 = vsel %vm1262, %v1558, 0
        %v1594 = vsel %vm1262, %v1559, 0
        %1596 = vmatpush.bf16.msra.mxu0 0
        %1597 = vmatpush.bf16.msra.mxu0 0
        %1598 = vmatpush.bf16.msra.mxu0 0
        %1599 = vmatpush.bf16.msra.mxu0 0
        %1600 = vmatpush.bf16.msra.mxu0 %v1579
        %1601 = vmatpush.bf16.msra.mxu0 %v1578
        %1602 = vmatpush.bf16.msra.mxu0 %v1577
        %1603 = vmatpush.bf16.msra.mxu0 %v1576
        %1604 = vmatmul.bf16.gmra.mxu0 %v1585
        %v1605 = vpop.f32.mrf.mxu0
        %v1606 = vadd.f32 0.0, %v1605
        %v1607 = vpop.f32.mrf.mxu0
        %v1608 = vadd.f32 0.0, %v1607
        %1609 = vmatmul.bf16.gmra.mxu0 %v1588
        %v1610 = vpop.f32.mrf.mxu0
        %v1611 = vadd.f32 0.0, %v1610
        %v1612 = vpop.f32.mrf.mxu0
        %v1613 = vadd.f32 0.0, %v1612
        %1614 = vmatmul.bf16.gmra.mxu0 %v1591
        %v1615 = vpop.f32.mrf.mxu0
        %v1616 = vadd.f32 0.0, %v1615
        %v1617 = vpop.f32.mrf.mxu0
        %v1618 = vadd.f32 0.0, %v1617
        %1619 = vmatmul.bf16.gmra.mxu0 %v1594
        %v1620 = vpop.f32.mrf.mxu0
        %v1621 = vadd.f32 0.0, %v1620
        %v1622 = vpop.f32.mrf.mxu0
        %v1623 = vadd.f32 0.0, %v1622
        %1624 = vdwg.mxu0
        %v1625 = vpack.c.bf16 %v1523, %v1521
        %v1626 = vpack.c.bf16 %v1528, %v1526
        %v1627 = vpack.c.bf16 %v1533, %v1531
        %v1628 = vpack.c.bf16 %v1538, %v1536
        %v1629 = vpack.c.bf16 %v1608, %v1606
        %v1630 = vpack.c.bf16 %v1613, %v1611
        %v1631 = vpack.c.bf16 %v1618, %v1616
        %v1632 = vpack.c.bf16 %v1623, %v1621
        %1633 = vrot.lane.b32.xlu0 %v1059, 96
        %v1634 = vpop.permute.xlu0 %1633
        %1635 = vrot.lane.b32.xlu0 %v1060, 96
        %v1636 = vpop.permute.xlu0 %1635
        %1637 = vrot.lane.b32.xlu0 %v1061, 96
        %v1638 = vpop.permute.xlu0 %1637
        %1639 = vrot.lane.b32.xlu0 %v1062, 96
        %v1640 = vpop.permute.xlu0 %1639
        %1641 = vrot.lane.b32.xlu0 %v1079, 96
        %v1642 = vpop.permute.xlu0 %1641
        %1643 = vrot.lane.b32.xlu0 %v1080, 96
        %v1644 = vpop.permute.xlu0 %1643
        %1645 = vrot.lane.b32.xlu0 %v1081, 96
        %v1646 = vpop.permute.xlu0 %1645
        %1647 = vrot.lane.b32.xlu0 %v1082, 96
        %v1648 = vpop.permute.xlu0 %1647
        %v1650 = vsel %vm1083, %v1634, 0
        %v1653 = vsel %vm1083, %v1636, 0
        %v1656 = vsel %vm1083, %v1638, 0
        %v1659 = vsel %vm1083, %v1640, 0
        %v1662 = vsel %vm1083, %v1642, 0
        %v1665 = vsel %vm1083, %v1644, 0
        %v1668 = vsel %vm1083, %v1646, 0
        %v1671 = vsel %vm1083, %v1648, 0
        %1673 = vmatpush.bf16.xpose.msra.mxu0 0
        %1674 = vmatpush.bf16.xpose.msra.mxu0 0
        %1675 = vmatpush.bf16.xpose.msra.mxu0 0
        %1676 = vmatpush.bf16.xpose.msra.mxu0 0
        %1677 = vmatpush.bf16.xpose.msra.mxu0 %v1671
        %1678 = vmatpush.bf16.xpose.msra.mxu0 %v1668
        %1679 = vmatpush.bf16.xpose.msra.mxu0 %v1665
        %1680 = vmatpush.bf16.xpose.msra.mxu0 %v1662
        %1681 = vmatmul.bf16.gmra.mxu0 %v1650
        %v1682 = vpop.f32.mrf.mxu0
        %v1683 = vadd.f32 0.0, %v1682
        %v1684 = vpop.f32.mrf.mxu0
        %v1685 = vadd.f32 0.0, %v1684
        %1686 = vmatmul.bf16.gmra.mxu0 %v1653
        %v1687 = vpop.f32.mrf.mxu0
        %v1688 = vadd.f32 0.0, %v1687
        %v1689 = vpop.f32.mrf.mxu0
        %v1690 = vadd.f32 0.0, %v1689
        %1691 = vmatmul.bf16.gmra.mxu0 %v1656
        %v1692 = vpop.f32.mrf.mxu0
        %v1693 = vadd.f32 0.0, %v1692
        %v1694 = vpop.f32.mrf.mxu0
        %v1695 = vadd.f32 0.0, %v1694
        %1696 = vmatmul.bf16.gmra.mxu0 %v1659
        %v1697 = vpop.f32.mrf.mxu0
        %v1698 = vadd.f32 0.0, %v1697
        %v1699 = vpop.f32.mrf.mxu0
        %v1700 = vadd.f32 0.0, %v1699
        %1701 = vdwg.mxu0
        %1702 = vrot.lane.b32.xlu0 %v1153, 96
        %v1703 = vpop.permute.xlu0 %1702
        %1704 = vrot.lane.b32.xlu0 %v1154, 96
        %v1705 = vpop.permute.xlu0 %1704
        %1706 = vrot.lane.b32.xlu0 %v1155, 96
        %v1707 = vpop.permute.xlu0 %1706
        %1708 = vrot.lane.b32.xlu0 %v1156, 96
        %v1709 = vpop.permute.xlu0 %1708
        %1710 = vrot.lane.b32.xlu0 %v1173, 96
        %v1711 = vpop.permute.xlu0 %1710
        %1712 = vrot.lane.b32.xlu0 %v1174, 96
        %v1713 = vpop.permute.xlu0 %1712
        %1714 = vrot.lane.b32.xlu0 %v1175, 96
        %v1715 = vpop.permute.xlu0 %1714
        %1716 = vrot.lane.b32.xlu0 %v1176, 96
        %v1717 = vpop.permute.xlu0 %1716
        %v1719 = vsel %vm1083, %v1703, 0
        %v1722 = vsel %vm1083, %v1705, 0
        %v1725 = vsel %vm1083, %v1707, 0
        %v1728 = vsel %vm1083, %v1709, 0
        %v1731 = vsel %vm1083, %v1711, 0
        %v1734 = vsel %vm1083, %v1713, 0
        %v1737 = vsel %vm1083, %v1715, 0
        %v1740 = vsel %vm1083, %v1717, 0
        %1742 = vmatpush.bf16.xpose.msra.mxu0 0
        %1743 = vmatpush.bf16.xpose.msra.mxu0 0
        %1744 = vmatpush.bf16.xpose.msra.mxu0 0
        %1745 = vmatpush.bf16.xpose.msra.mxu0 0
        %1746 = vmatpush.bf16.xpose.msra.mxu0 %v1740
        %1747 = vmatpush.bf16.xpose.msra.mxu0 %v1737
        %1748 = vmatpush.bf16.xpose.msra.mxu0 %v1734
        %1749 = vmatpush.bf16.xpose.msra.mxu0 %v1731
        %1750 = vmatmul.bf16.gmra.mxu0 %v1719
        %v1751 = vpop.f32.mrf.mxu0
        %v1752 = vadd.f32 0.0, %v1751
        %v1753 = vpop.f32.mrf.mxu0
        %v1754 = vadd.f32 0.0, %v1753
        %1755 = vmatmul.bf16.gmra.mxu0 %v1722
        %v1756 = vpop.f32.mrf.mxu0
        %v1757 = vadd.f32 0.0, %v1756
        %v1758 = vpop.f32.mrf.mxu0
        %v1759 = vadd.f32 0.0, %v1758
        %1760 = vmatmul.bf16.gmra.mxu0 %v1725
        %v1761 = vpop.f32.mrf.mxu0
        %v1762 = vadd.f32 0.0, %v1761
        %v1763 = vpop.f32.mrf.mxu0
        %v1764 = vadd.f32 0.0, %v1763
        %1765 = vmatmul.bf16.gmra.mxu0 %v1728
        %v1766 = vpop.f32.mrf.mxu0
        %v1767 = vadd.f32 0.0, %v1766
        %v1768 = vpop.f32.mrf.mxu0
        %v1769 = vadd.f32 0.0, %v1768
        %1770 = vdwg.mxu0
        %v1771 = vsel %vm1238, %v1683, -1e+30
        %v1772 = vsel %vm1239, %v1685, -1e+30
        %v1773 = vsel %vm1240, %v1688, -1e+30
        %v1774 = vsel %vm1241, %v1690, -1e+30
        %v1775 = vsel %vm1242, %v1693, -1e+30
        %v1776 = vsel %vm1243, %v1695, -1e+30
        %v1777 = vsel %vm1244, %v1698, -1e+30
        %v1778 = vsel %vm1245, %v1700, -1e+30
        %v1779 = vsel %vm1238, %v1752, -1e+30
        %v1780 = vsel %vm1239, %v1754, -1e+30
        %v1781 = vsel %vm1240, %v1757, -1e+30
        %v1782 = vsel %vm1241, %v1759, -1e+30
        %v1783 = vsel %vm1242, %v1762, -1e+30
        %v1784 = vsel %vm1243, %v1764, -1e+30
        %v1785 = vsel %vm1244, %v1767, -1e+30
        %v1786 = vsel %vm1245, %v1769, -1e+30
        %v1787 = vsel %vm1262, %v1771, -inf
        %1788 = vmax.xlane.f32.xlu0 %v1787
        %v1789 = vpop.xlane.xlu0 %1788
        %v1790 = vsel %vm1262, %v1772, -inf
        %1791 = vmax.xlane.f32.xlu0 %v1790
        %v1792 = vpop.xlane.xlu0 %1791
        %v1793 = vsel %vm1262, %v1773, -inf
        %1794 = vmax.xlane.f32.xlu0 %v1793
        %v1795 = vpop.xlane.xlu0 %1794
        %v1796 = vsel %vm1262, %v1774, -inf
        %1797 = vmax.xlane.f32.xlu0 %v1796
        %v1798 = vpop.xlane.xlu0 %1797
        %v1799 = vsel %vm1262, %v1775, -inf
        %1800 = vmax.xlane.f32.xlu0 %v1799
        %v1801 = vpop.xlane.xlu0 %1800
        %v1802 = vsel %vm1262, %v1776, -inf
        %1803 = vmax.xlane.f32.xlu0 %v1802
        %v1804 = vpop.xlane.xlu0 %1803
        %v1805 = vsel %vm1262, %v1777, -inf
        %1806 = vmax.xlane.f32.xlu0 %v1805
        %v1807 = vpop.xlane.xlu0 %1806
        %v1808 = vsel %vm1262, %v1778, -inf
        %1809 = vmax.xlane.f32.xlu0 %v1808
        %v1810 = vpop.xlane.xlu0 %1809
        %v1811 = vsel %vm1262, %v1779, -inf
        %1812 = vmax.xlane.f32.xlu0 %v1811
        %v1813 = vpop.xlane.xlu0 %1812
        %v1814 = vsel %vm1262, %v1780, -inf
        %1815 = vmax.xlane.f32.xlu0 %v1814
        %v1816 = vpop.xlane.xlu0 %1815
        %v1817 = vsel %vm1262, %v1781, -inf
        %1818 = vmax.xlane.f32.xlu0 %v1817
        %v1819 = vpop.xlane.xlu0 %1818
        %v1820 = vsel %vm1262, %v1782, -inf
        %1821 = vmax.xlane.f32.xlu0 %v1820
        %v1822 = vpop.xlane.xlu0 %1821
        %v1823 = vsel %vm1262, %v1783, -inf
        %1824 = vmax.xlane.f32.xlu0 %v1823
        %v1825 = vpop.xlane.xlu0 %1824
        %v1826 = vsel %vm1262, %v1784, -inf
        %1827 = vmax.xlane.f32.xlu0 %v1826
        %v1828 = vpop.xlane.xlu0 %1827
        %v1829 = vsel %vm1262, %v1785, -inf
        %1830 = vmax.xlane.f32.xlu0 %v1829
        %v1831 = vpop.xlane.xlu0 %1830
        %v1832 = vsel %vm1262, %v1786, -inf
        %1833 = vmax.xlane.f32.xlu0 %v1832
        %v1834 = vpop.xlane.xlu0 %1833
        %v1835 = vsub.f32 %v1771, %v1789
        %v1836 = vsub.f32 %v1772, %v1792
        %v1837 = vsub.f32 %v1773, %v1795
        %v1838 = vsub.f32 %v1774, %v1798
        %v1839 = vsub.f32 %v1775, %v1801
        %v1840 = vsub.f32 %v1776, %v1804
        %v1841 = vsub.f32 %v1777, %v1807
        %v1842 = vsub.f32 %v1778, %v1810
        %v1843 = vsub.f32 %v1779, %v1813
        %v1844 = vsub.f32 %v1780, %v1816
        %v1845 = vsub.f32 %v1781, %v1819
        %v1846 = vsub.f32 %v1782, %v1822
        %v1847 = vsub.f32 %v1783, %v1825
        %v1848 = vsub.f32 %v1784, %v1828
        %v1849 = vsub.f32 %v1785, %v1831
        %v1850 = vsub.f32 %v1786, %v1834
        %v1851 = vmul.f32 %v1835, 1.442695
        %v1852 = vpow.pop %v1851
        %v1853 = vmul.f32 %v1836, 1.442695
        %v1854 = vpow.pop %v1853
        %v1855 = vmul.f32 %v1837, 1.442695
        %v1856 = vpow.pop %v1855
        %v1857 = vmul.f32 %v1838, 1.442695
        %v1858 = vpow.pop %v1857
        %v1859 = vmul.f32 %v1839, 1.442695
        %v1860 = vpow.pop %v1859
        %v1861 = vmul.f32 %v1840, 1.442695
        %v1862 = vpow.pop %v1861
        %v1863 = vmul.f32 %v1841, 1.442695
        %v1864 = vpow.pop %v1863
        %v1865 = vmul.f32 %v1842, 1.442695
        %v1866 = vpow.pop %v1865
        %v1867 = vmul.f32 %v1843, 1.442695
        %v1868 = vpow.pop %v1867
        %v1869 = vmul.f32 %v1844, 1.442695
        %v1870 = vpow.pop %v1869
        %v1871 = vmul.f32 %v1845, 1.442695
        %v1872 = vpow.pop %v1871
        %v1873 = vmul.f32 %v1846, 1.442695
        %v1874 = vpow.pop %v1873
        %v1875 = vmul.f32 %v1847, 1.442695
        %v1876 = vpow.pop %v1875
        %v1877 = vmul.f32 %v1848, 1.442695
        %v1878 = vpow.pop %v1877
        %v1879 = vmul.f32 %v1849, 1.442695
        %v1880 = vpow.pop %v1879
        %v1881 = vmul.f32 %v1850, 1.442695
        %v1882 = vpow.pop %v1881
        %v1883 = vsel %vm1262, %v1852, 0.0
        %1884 = vadd.xlane.f32.xlu0 %v1883
        %v1885 = vpop.xlane.xlu0 %1884
        %v1886 = vsel %vm1262, %v1854, 0.0
        %1887 = vadd.xlane.f32.xlu0 %v1886
        %v1888 = vpop.xlane.xlu0 %1887
        %v1889 = vsel %vm1262, %v1856, 0.0
        %1890 = vadd.xlane.f32.xlu0 %v1889
        %v1891 = vpop.xlane.xlu0 %1890
        %v1892 = vsel %vm1262, %v1858, 0.0
        %1893 = vadd.xlane.f32.xlu0 %v1892
        %v1894 = vpop.xlane.xlu0 %1893
        %v1895 = vsel %vm1262, %v1860, 0.0
        %1896 = vadd.xlane.f32.xlu0 %v1895
        %v1897 = vpop.xlane.xlu0 %1896
        %v1898 = vsel %vm1262, %v1862, 0.0
        %1899 = vadd.xlane.f32.xlu0 %v1898
        %v1900 = vpop.xlane.xlu0 %1899
        %v1901 = vsel %vm1262, %v1864, 0.0
        %1902 = vadd.xlane.f32.xlu0 %v1901
        %v1903 = vpop.xlane.xlu0 %1902
        %v1904 = vsel %vm1262, %v1866, 0.0
        %1905 = vadd.xlane.f32.xlu0 %v1904
        %v1906 = vpop.xlane.xlu0 %1905
        %v1907 = vsel %vm1262, %v1868, 0.0
        %1908 = vadd.xlane.f32.xlu0 %v1907
        %v1909 = vpop.xlane.xlu0 %1908
        %v1910 = vsel %vm1262, %v1870, 0.0
        %1911 = vadd.xlane.f32.xlu0 %v1910
        %v1912 = vpop.xlane.xlu0 %1911
        %v1913 = vsel %vm1262, %v1872, 0.0
        %1914 = vadd.xlane.f32.xlu0 %v1913
        %v1915 = vpop.xlane.xlu0 %1914
        %v1916 = vsel %vm1262, %v1874, 0.0
        %1917 = vadd.xlane.f32.xlu0 %v1916
        %v1918 = vpop.xlane.xlu0 %1917
        %v1919 = vsel %vm1262, %v1876, 0.0
        %1920 = vadd.xlane.f32.xlu0 %v1919
        %v1921 = vpop.xlane.xlu0 %1920
        %v1922 = vsel %vm1262, %v1878, 0.0
        %1923 = vadd.xlane.f32.xlu0 %v1922
        %v1924 = vpop.xlane.xlu0 %1923
        %v1925 = vsel %vm1262, %v1880, 0.0
        %1926 = vadd.xlane.f32.xlu0 %v1925
        %v1927 = vpop.xlane.xlu0 %1926
        %v1928 = vsel %vm1262, %v1882, 0.0
        %1929 = vadd.xlane.f32.xlu0 %v1928
        %v1930 = vpop.xlane.xlu0 %1929
        %v1931 = vrcp.pop %v1885
        %v1932 = vrcp.pop %v1888
        %v1933 = vrcp.pop %v1891
        %v1934 = vrcp.pop %v1894
        %v1935 = vrcp.pop %v1897
        %v1936 = vrcp.pop %v1900
        %v1937 = vrcp.pop %v1903
        %v1938 = vrcp.pop %v1906
        %v1939 = vrcp.pop %v1909
        %v1940 = vrcp.pop %v1912
        %v1941 = vrcp.pop %v1915
        %v1942 = vrcp.pop %v1918
        %v1943 = vrcp.pop %v1921
        %v1944 = vrcp.pop %v1924
        %v1945 = vrcp.pop %v1927
        %v1946 = vrcp.pop %v1930
        %v1947 = vmul.f32 %v1852, %v1931
        %v1948 = vmul.f32 %v1854, %v1932
        %v1949 = vmul.f32 %v1856, %v1933
        %v1950 = vmul.f32 %v1858, %v1934
        %v1951 = vmul.f32 %v1860, %v1935
        %v1952 = vmul.f32 %v1862, %v1936
        %v1953 = vmul.f32 %v1864, %v1937
        %v1954 = vmul.f32 %v1866, %v1938
        %v1955 = vmul.f32 %v1868, %v1939
        %v1956 = vmul.f32 %v1870, %v1940
        %v1957 = vmul.f32 %v1872, %v1941
        %v1958 = vmul.f32 %v1874, %v1942
        %v1959 = vmul.f32 %v1876, %v1943
        %v1960 = vmul.f32 %v1878, %v1944
        %v1961 = vmul.f32 %v1880, %v1945
        %v1962 = vmul.f32 %v1882, %v1946
        %v1963 = vpack.c.bf16 %v1947, %v1947
        %v1964 = vpack.c.bf16 %v1948, %v1948
        %v1965 = vpack.c.bf16 %v1949, %v1949
        %v1966 = vpack.c.bf16 %v1950, %v1950
        %v1967 = vpack.c.bf16 %v1951, %v1951
        %v1968 = vpack.c.bf16 %v1952, %v1952
        %v1969 = vpack.c.bf16 %v1953, %v1953
        %v1970 = vpack.c.bf16 %v1954, %v1954
        %v1971 = vpack.c.bf16 %v1955, %v1955
        %v1972 = vpack.c.bf16 %v1956, %v1956
        %v1973 = vpack.c.bf16 %v1957, %v1957
        %v1974 = vpack.c.bf16 %v1958, %v1958
        %v1975 = vpack.c.bf16 %v1959, %v1959
        %v1976 = vpack.c.bf16 %v1960, %v1960
        %v1977 = vpack.c.bf16 %v1961, %v1961
        %v1978 = vpack.c.bf16 %v1962, %v1962
        %v1987 = vunpack.c.l.b16 %v1963
        %v1988 = vunpack.c.l.b16 %v1964
        %v1989 = vunpack.c.l.b16 %v1965
        %v1990 = vunpack.c.l.b16 %v1966
        %v1991 = vunpack.c.l.b16 %v1967
        %v1992 = vunpack.c.l.b16 %v1968
        %v1993 = vunpack.c.l.b16 %v1969
        %v1994 = vunpack.c.l.b16 %v1970
        %v1995 = vpack.c.b16 %v1988, %v1987
        %v1996 = vpack.c.b16 %v1990, %v1989
        %v1997 = vpack.c.b16 %v1992, %v1991
        %v1998 = vpack.c.b16 %v1994, %v1993
        %1999 = vrot.lane.b32.xlu0 %v1491, 96
        %v2000 = vpop.permute.xlu0 %1999
        %2001 = vrot.lane.b32.xlu0 %v1492, 96
        %v2002 = vpop.permute.xlu0 %2001
        %2003 = vrot.lane.b32.xlu0 %v1493, 96
        %v2004 = vpop.permute.xlu0 %2003
        %2005 = vrot.lane.b32.xlu0 %v1494, 96
        %v2006 = vpop.permute.xlu0 %2005
        %v2012 = vsel %vm1262, %v1995, 0
        %v2015 = vsel %vm1262, %v1996, 0
        %v2018 = vsel %vm1262, %v1997, 0
        %v2021 = vsel %vm1262, %v1998, 0
        %2023 = vmatpush.bf16.msra.mxu0 0
        %2024 = vmatpush.bf16.msra.mxu0 0
        %2025 = vmatpush.bf16.msra.mxu0 0
        %2026 = vmatpush.bf16.msra.mxu0 0
        %2027 = vmatpush.bf16.msra.mxu0 %v2006
        %2028 = vmatpush.bf16.msra.mxu0 %v2004
        %2029 = vmatpush.bf16.msra.mxu0 %v2002
        %2030 = vmatpush.bf16.msra.mxu0 %v2000
        %2031 = vmatmul.bf16.gmra.mxu0 %v2012
        %v2032 = vpop.f32.mrf.mxu0
        %v2033 = vadd.f32 0.0, %v2032
        %v2034 = vpop.f32.mrf.mxu0
        %v2035 = vadd.f32 0.0, %v2034
        %2036 = vmatmul.bf16.gmra.mxu0 %v2015
        %v2037 = vpop.f32.mrf.mxu0
        %v2038 = vadd.f32 0.0, %v2037
        %v2039 = vpop.f32.mrf.mxu0
        %v2040 = vadd.f32 0.0, %v2039
        %2041 = vmatmul.bf16.gmra.mxu0 %v2018
        %v2042 = vpop.f32.mrf.mxu0
        %v2043 = vadd.f32 0.0, %v2042
        %v2044 = vpop.f32.mrf.mxu0
        %v2045 = vadd.f32 0.0, %v2044
        %2046 = vmatmul.bf16.gmra.mxu0 %v2021
        %v2047 = vpop.f32.mrf.mxu0
        %v2048 = vadd.f32 0.0, %v2047
        %v2049 = vpop.f32.mrf.mxu0
        %v2050 = vadd.f32 0.0, %v2049
        %2051 = vdwg.mxu0
        %v2060 = vunpack.c.l.b16 %v1971
        %v2061 = vunpack.c.l.b16 %v1972
        %v2062 = vunpack.c.l.b16 %v1973
        %v2063 = vunpack.c.l.b16 %v1974
        %v2064 = vunpack.c.l.b16 %v1975
        %v2065 = vunpack.c.l.b16 %v1976
        %v2066 = vunpack.c.l.b16 %v1977
        %v2067 = vunpack.c.l.b16 %v1978
        %v2068 = vpack.c.b16 %v2061, %v2060
        %v2069 = vpack.c.b16 %v2063, %v2062
        %v2070 = vpack.c.b16 %v2065, %v2064
        %v2071 = vpack.c.b16 %v2067, %v2066
        %2072 = vrot.lane.b32.xlu0 %v1576, 96
        %v2073 = vpop.permute.xlu0 %2072
        %2074 = vrot.lane.b32.xlu0 %v1577, 96
        %v2075 = vpop.permute.xlu0 %2074
        %2076 = vrot.lane.b32.xlu0 %v1578, 96
        %v2077 = vpop.permute.xlu0 %2076
        %2078 = vrot.lane.b32.xlu0 %v1579, 96
        %v2079 = vpop.permute.xlu0 %2078
        %v2085 = vsel %vm1262, %v2068, 0
        %v2088 = vsel %vm1262, %v2069, 0
        %v2091 = vsel %vm1262, %v2070, 0
        %v2094 = vsel %vm1262, %v2071, 0
        %2096 = vmatpush.bf16.msra.mxu0 0
        %2097 = vmatpush.bf16.msra.mxu0 0
        %2098 = vmatpush.bf16.msra.mxu0 0
        %2099 = vmatpush.bf16.msra.mxu0 0
        %2100 = vmatpush.bf16.msra.mxu0 %v2079
        %2101 = vmatpush.bf16.msra.mxu0 %v2077
        %2102 = vmatpush.bf16.msra.mxu0 %v2075
        %2103 = vmatpush.bf16.msra.mxu0 %v2073
        %2104 = vmatmul.bf16.gmra.mxu0 %v2085
        %v2105 = vpop.f32.mrf.mxu0
        %v2106 = vadd.f32 0.0, %v2105
        %v2107 = vpop.f32.mrf.mxu0
        %v2108 = vadd.f32 0.0, %v2107
        %2109 = vmatmul.bf16.gmra.mxu0 %v2088
        %v2110 = vpop.f32.mrf.mxu0
        %v2111 = vadd.f32 0.0, %v2110
        %v2112 = vpop.f32.mrf.mxu0
        %v2113 = vadd.f32 0.0, %v2112
        %2114 = vmatmul.bf16.gmra.mxu0 %v2091
        %v2115 = vpop.f32.mrf.mxu0
        %v2116 = vadd.f32 0.0, %v2115
        %v2117 = vpop.f32.mrf.mxu0
        %v2118 = vadd.f32 0.0, %v2117
        %2119 = vmatmul.bf16.gmra.mxu0 %v2094
        %v2120 = vpop.f32.mrf.mxu0
        %v2121 = vadd.f32 0.0, %v2120
        %v2122 = vpop.f32.mrf.mxu0
        %v2123 = vadd.f32 0.0, %v2122
        %2124 = vdwg.mxu0
        %v2125 = vpack.c.bf16 %v2035, %v2033
        %v2126 = vpack.c.bf16 %v2040, %v2038
        %v2127 = vpack.c.bf16 %v2045, %v2043
        %v2128 = vpack.c.bf16 %v2050, %v2048
        %v2129 = vpack.c.bf16 %v2108, %v2106
        %v2130 = vpack.c.bf16 %v2113, %v2111
        %v2131 = vpack.c.bf16 %v2118, %v2116
        %v2132 = vpack.c.bf16 %v2123, %v2121
        %v2137 = vunpack.c.l.b16 %v437
        %v2138 = vunpack.c.l.b16 %v438
        %v2139 = vunpack.c.l.b16 %v439
        %v2140 = vunpack.c.l.b16 %v440
        %v2141 = vpack.c.b16 %v2138, %v2137
        %v2142 = vpack.c.b16 %v2140, %v2139
        %v2146 = vsel %vm1083, %v2125, 0
        %v2149 = vsel %vm1083, %v2126, 0
        %v2152 = vsel %vm1083, %v2127, 0
        %v2155 = vsel %vm1083, %v2128, 0
        %v2158 = vsel %vm1083, %v2129, 0
        %v2161 = vsel %vm1083, %v2130, 0
        %v2164 = vsel %vm1083, %v2131, 0
        %v2167 = vsel %vm1083, %v2132, 0
        %2169 = vmatpush.bf16.msra.mxu0 0
        %2170 = vmatpush.bf16.msra.mxu0 0
        %2171 = vmatpush.bf16.msra.mxu0 0
        %2172 = vmatpush.bf16.msra.mxu0 0
        %2173 = vmatpush.bf16.msra.mxu0 0
        %2174 = vmatpush.bf16.msra.mxu0 0
        %2175 = vmatpush.bf16.msra.mxu0 %v2142
        %2176 = vmatpush.bf16.msra.mxu0 %v2141
        %2177 = vmatmul.bf16.gmra.mxu0 %v2146
        %v2178 = vpop.f32.mrf.mxu0
        %v2179 = vadd.f32 0.0, %v2178
        %v2180 = vpop.f32.mrf.mxu0
        %v2181 = vadd.f32 0.0, %v2180
        %2182 = vmatmul.bf16.gmra.mxu0 %v2149
        %v2183 = vpop.f32.mrf.mxu0
        %v2184 = vadd.f32 0.0, %v2183
        %v2185 = vpop.f32.mrf.mxu0
        %v2186 = vadd.f32 0.0, %v2185
        %2187 = vmatmul.bf16.gmra.mxu0 %v2152
        %v2188 = vpop.f32.mrf.mxu0
        %v2189 = vadd.f32 0.0, %v2188
        %v2190 = vpop.f32.mrf.mxu0
        %v2191 = vadd.f32 0.0, %v2190
        %2192 = vmatmul.bf16.gmra.mxu0 %v2155
        %v2193 = vpop.f32.mrf.mxu0
        %v2194 = vadd.f32 0.0, %v2193
        %v2195 = vpop.f32.mrf.mxu0
        %v2196 = vadd.f32 0.0, %v2195
        %2197 = vmatmul.bf16.gmra.mxu0 %v2158
        %v2198 = vpop.f32.mrf.mxu0
        %v2199 = vadd.f32 0.0, %v2198
        %v2200 = vpop.f32.mrf.mxu0
        %v2201 = vadd.f32 0.0, %v2200
        %2202 = vmatmul.bf16.gmra.mxu0 %v2161
        %v2203 = vpop.f32.mrf.mxu0
        %v2204 = vadd.f32 0.0, %v2203
        %v2205 = vpop.f32.mrf.mxu0
        %v2206 = vadd.f32 0.0, %v2205
        %2207 = vmatmul.bf16.gmra.mxu0 %v2164
        %v2208 = vpop.f32.mrf.mxu0
        %v2209 = vadd.f32 0.0, %v2208
        %v2210 = vpop.f32.mrf.mxu0
        %v2211 = vadd.f32 0.0, %v2210
        %2212 = vmatmul.bf16.gmra.mxu0 %v2167
        %v2213 = vpop.f32.mrf.mxu0
        %v2214 = vadd.f32 0.0, %v2213
        %v2215 = vpop.f32.mrf.mxu0
        %v2216 = vadd.f32 0.0, %v2215
        %2217 = vdwg.mxu0
        %v2222 = vunpack.c.l.b16 %v433
        %v2223 = vunpack.c.l.b16 %v434
        %v2224 = vunpack.c.l.b16 %v435
        %v2225 = vunpack.c.l.b16 %v436
        %v2226 = vpack.c.b16 %v2223, %v2222
        %v2227 = vpack.c.b16 %v2225, %v2224
        %v2231 = vsel %vm1083, %v1625, 0
        %v2234 = vsel %vm1083, %v1626, 0
        %v2237 = vsel %vm1083, %v1627, 0
        %v2240 = vsel %vm1083, %v1628, 0
        %v2243 = vsel %vm1083, %v1629, 0
        %v2246 = vsel %vm1083, %v1630, 0
        %v2249 = vsel %vm1083, %v1631, 0
        %v2252 = vsel %vm1083, %v1632, 0
        %2254 = vmatpush.bf16.msra.mxu0 0
        %2255 = vmatpush.bf16.msra.mxu0 0
        %2256 = vmatpush.bf16.msra.mxu0 0
        %2257 = vmatpush.bf16.msra.mxu0 0
        %2258 = vmatpush.bf16.msra.mxu0 0
        %2259 = vmatpush.bf16.msra.mxu0 0
        %2260 = vmatpush.bf16.msra.mxu0 %v2227
        %2261 = vmatpush.bf16.msra.mxu0 %v2226
        %2262 = vmatmul.bf16.gmra.mxu0 %v2231
        %v2263 = vpop.f32.mrf.mxu0
        %v2264 = vadd.f32 %v2179, %v2263
        %v2265 = vpop.f32.mrf.mxu0
        %v2266 = vadd.f32 %v2181, %v2265
        %2267 = vmatmul.bf16.gmra.mxu0 %v2234
        %v2268 = vpop.f32.mrf.mxu0
        %v2269 = vadd.f32 %v2184, %v2268
        %v2270 = vpop.f32.mrf.mxu0
        %v2271 = vadd.f32 %v2186, %v2270
        %2272 = vmatmul.bf16.gmra.mxu0 %v2237
        %v2273 = vpop.f32.mrf.mxu0
        %v2274 = vadd.f32 %v2189, %v2273
        %v2275 = vpop.f32.mrf.mxu0
        %v2276 = vadd.f32 %v2191, %v2275
        %2277 = vmatmul.bf16.gmra.mxu0 %v2240
        %v2278 = vpop.f32.mrf.mxu0
        %v2279 = vadd.f32 %v2194, %v2278
        %v2280 = vpop.f32.mrf.mxu0
        %v2281 = vadd.f32 %v2196, %v2280
        %2282 = vmatmul.bf16.gmra.mxu0 %v2243
        %v2283 = vpop.f32.mrf.mxu0
        %v2284 = vadd.f32 %v2199, %v2283
        %v2285 = vpop.f32.mrf.mxu0
        %v2286 = vadd.f32 %v2201, %v2285
        %2287 = vmatmul.bf16.gmra.mxu0 %v2246
        %v2288 = vpop.f32.mrf.mxu0
        %v2289 = vadd.f32 %v2204, %v2288
        %v2290 = vpop.f32.mrf.mxu0
        %v2291 = vadd.f32 %v2206, %v2290
        %2292 = vmatmul.bf16.gmra.mxu0 %v2249
        %v2293 = vpop.f32.mrf.mxu0
        %v2294 = vadd.f32 %v2209, %v2293
        %v2295 = vpop.f32.mrf.mxu0
        %v2296 = vadd.f32 %v2211, %v2295
        %2297 = vmatmul.bf16.gmra.mxu0 %v2252
        %v2298 = vpop.f32.mrf.mxu0
        %v2299 = vadd.f32 %v2214, %v2298
        %v2300 = vpop.f32.mrf.mxu0
        %v2301 = vadd.f32 %v2216, %v2300
        %2302 = vdwg.mxu0
        %2303 = vrot.lane.b32.xlu0 %v1059, 64
        %v2304 = vpop.permute.xlu0 %2303
        %2305 = vrot.lane.b32.xlu0 %v1060, 64
        %v2306 = vpop.permute.xlu0 %2305
        %2307 = vrot.lane.b32.xlu0 %v1061, 64
        %v2308 = vpop.permute.xlu0 %2307
        %2309 = vrot.lane.b32.xlu0 %v1062, 64
        %v2310 = vpop.permute.xlu0 %2309
        %2311 = vrot.lane.b32.xlu0 %v1079, 64
        %v2312 = vpop.permute.xlu0 %2311
        %2313 = vrot.lane.b32.xlu0 %v1080, 64
        %v2314 = vpop.permute.xlu0 %2313
        %2315 = vrot.lane.b32.xlu0 %v1081, 64
        %v2316 = vpop.permute.xlu0 %2315
        %2317 = vrot.lane.b32.xlu0 %v1082, 64
        %v2318 = vpop.permute.xlu0 %2317
        %v2320 = vsel %vm1083, %v2304, 0
        %v2323 = vsel %vm1083, %v2306, 0
        %v2326 = vsel %vm1083, %v2308, 0
        %v2329 = vsel %vm1083, %v2310, 0
        %v2332 = vsel %vm1083, %v2312, 0
        %v2335 = vsel %vm1083, %v2314, 0
        %v2338 = vsel %vm1083, %v2316, 0
        %v2341 = vsel %vm1083, %v2318, 0
        %2343 = vmatpush.bf16.xpose.msra.mxu0 0
        %2344 = vmatpush.bf16.xpose.msra.mxu0 0
        %2345 = vmatpush.bf16.xpose.msra.mxu0 0
        %2346 = vmatpush.bf16.xpose.msra.mxu0 0
        %2347 = vmatpush.bf16.xpose.msra.mxu0 %v2341
        %2348 = vmatpush.bf16.xpose.msra.mxu0 %v2338
        %2349 = vmatpush.bf16.xpose.msra.mxu0 %v2335
        %2350 = vmatpush.bf16.xpose.msra.mxu0 %v2332
        %2351 = vmatmul.bf16.gmra.mxu0 %v2320
        %v2352 = vpop.f32.mrf.mxu0
        %v2353 = vadd.f32 0.0, %v2352
        %v2354 = vpop.f32.mrf.mxu0
        %v2355 = vadd.f32 0.0, %v2354
        %2356 = vmatmul.bf16.gmra.mxu0 %v2323
        %v2357 = vpop.f32.mrf.mxu0
        %v2358 = vadd.f32 0.0, %v2357
        %v2359 = vpop.f32.mrf.mxu0
        %v2360 = vadd.f32 0.0, %v2359
        %2361 = vmatmul.bf16.gmra.mxu0 %v2326
        %v2362 = vpop.f32.mrf.mxu0
        %v2363 = vadd.f32 0.0, %v2362
        %v2364 = vpop.f32.mrf.mxu0
        %v2365 = vadd.f32 0.0, %v2364
        %2366 = vmatmul.bf16.gmra.mxu0 %v2329
        %v2367 = vpop.f32.mrf.mxu0
        %v2368 = vadd.f32 0.0, %v2367
        %v2369 = vpop.f32.mrf.mxu0
        %v2370 = vadd.f32 0.0, %v2369
        %2371 = vdwg.mxu0
        %2372 = vrot.lane.b32.xlu0 %v1153, 64
        %v2373 = vpop.permute.xlu0 %2372
        %2374 = vrot.lane.b32.xlu0 %v1154, 64
        %v2375 = vpop.permute.xlu0 %2374
        %2376 = vrot.lane.b32.xlu0 %v1155, 64
        %v2377 = vpop.permute.xlu0 %2376
        %2378 = vrot.lane.b32.xlu0 %v1156, 64
        %v2379 = vpop.permute.xlu0 %2378
        %2380 = vrot.lane.b32.xlu0 %v1173, 64
        %v2381 = vpop.permute.xlu0 %2380
        %2382 = vrot.lane.b32.xlu0 %v1174, 64
        %v2383 = vpop.permute.xlu0 %2382
        %2384 = vrot.lane.b32.xlu0 %v1175, 64
        %v2385 = vpop.permute.xlu0 %2384
        %2386 = vrot.lane.b32.xlu0 %v1176, 64
        %v2387 = vpop.permute.xlu0 %2386
        %v2389 = vsel %vm1083, %v2373, 0
        %v2392 = vsel %vm1083, %v2375, 0
        %v2395 = vsel %vm1083, %v2377, 0
        %v2398 = vsel %vm1083, %v2379, 0
        %v2401 = vsel %vm1083, %v2381, 0
        %v2404 = vsel %vm1083, %v2383, 0
        %v2407 = vsel %vm1083, %v2385, 0
        %v2410 = vsel %vm1083, %v2387, 0
        %2412 = vmatpush.bf16.xpose.msra.mxu0 0
        %2413 = vmatpush.bf16.xpose.msra.mxu0 0
        %2414 = vmatpush.bf16.xpose.msra.mxu0 0
        %2415 = vmatpush.bf16.xpose.msra.mxu0 0
        %2416 = vmatpush.bf16.xpose.msra.mxu0 %v2410
        %2417 = vmatpush.bf16.xpose.msra.mxu0 %v2407
        %2418 = vmatpush.bf16.xpose.msra.mxu0 %v2404
        %2419 = vmatpush.bf16.xpose.msra.mxu0 %v2401
        %2420 = vmatmul.bf16.gmra.mxu0 %v2389
        %v2421 = vpop.f32.mrf.mxu0
        %v2422 = vadd.f32 0.0, %v2421
        %v2423 = vpop.f32.mrf.mxu0
        %v2424 = vadd.f32 0.0, %v2423
        %2425 = vmatmul.bf16.gmra.mxu0 %v2392
        %v2426 = vpop.f32.mrf.mxu0
        %v2427 = vadd.f32 0.0, %v2426
        %v2428 = vpop.f32.mrf.mxu0
        %v2429 = vadd.f32 0.0, %v2428
        %2430 = vmatmul.bf16.gmra.mxu0 %v2395
        %v2431 = vpop.f32.mrf.mxu0
        %v2432 = vadd.f32 0.0, %v2431
        %v2433 = vpop.f32.mrf.mxu0
        %v2434 = vadd.f32 0.0, %v2433
        %2435 = vmatmul.bf16.gmra.mxu0 %v2398
        %v2436 = vpop.f32.mrf.mxu0
        %v2437 = vadd.f32 0.0, %v2436
        %v2438 = vpop.f32.mrf.mxu0
        %v2439 = vadd.f32 0.0, %v2438
        %2440 = vdwg.mxu0
        %v2441 = vsel %vm1238, %v2353, -1e+30
        %v2442 = vsel %vm1239, %v2355, -1e+30
        %v2443 = vsel %vm1240, %v2358, -1e+30
        %v2444 = vsel %vm1241, %v2360, -1e+30
        %v2445 = vsel %vm1242, %v2363, -1e+30
        %v2446 = vsel %vm1243, %v2365, -1e+30
        %v2447 = vsel %vm1244, %v2368, -1e+30
        %v2448 = vsel %vm1245, %v2370, -1e+30
        %v2449 = vsel %vm1238, %v2422, -1e+30
        %v2450 = vsel %vm1239, %v2424, -1e+30
        %v2451 = vsel %vm1240, %v2427, -1e+30
        %v2452 = vsel %vm1241, %v2429, -1e+30
        %v2453 = vsel %vm1242, %v2432, -1e+30
        %v2454 = vsel %vm1243, %v2434, -1e+30
        %v2455 = vsel %vm1244, %v2437, -1e+30
        %v2456 = vsel %vm1245, %v2439, -1e+30
        %v2457 = vsel %vm1262, %v2441, -inf
        %2458 = vmax.xlane.f32.xlu0 %v2457
        %v2459 = vpop.xlane.xlu0 %2458
        %v2460 = vsel %vm1262, %v2442, -inf
        %2461 = vmax.xlane.f32.xlu0 %v2460
        %v2462 = vpop.xlane.xlu0 %2461
        %v2463 = vsel %vm1262, %v2443, -inf
        %2464 = vmax.xlane.f32.xlu0 %v2463
        %v2465 = vpop.xlane.xlu0 %2464
        %v2466 = vsel %vm1262, %v2444, -inf
        %2467 = vmax.xlane.f32.xlu0 %v2466
        %v2468 = vpop.xlane.xlu0 %2467
        %v2469 = vsel %vm1262, %v2445, -inf
        %2470 = vmax.xlane.f32.xlu0 %v2469
        %v2471 = vpop.xlane.xlu0 %2470
        %v2472 = vsel %vm1262, %v2446, -inf
        %2473 = vmax.xlane.f32.xlu0 %v2472
        %v2474 = vpop.xlane.xlu0 %2473
        %v2475 = vsel %vm1262, %v2447, -inf
        %2476 = vmax.xlane.f32.xlu0 %v2475
        %v2477 = vpop.xlane.xlu0 %2476
        %v2478 = vsel %vm1262, %v2448, -inf
        %2479 = vmax.xlane.f32.xlu0 %v2478
        %v2480 = vpop.xlane.xlu0 %2479
        %v2481 = vsel %vm1262, %v2449, -inf
        %2482 = vmax.xlane.f32.xlu0 %v2481
        %v2483 = vpop.xlane.xlu0 %2482
        %v2484 = vsel %vm1262, %v2450, -inf
        %2485 = vmax.xlane.f32.xlu0 %v2484
        %v2486 = vpop.xlane.xlu0 %2485
        %v2487 = vsel %vm1262, %v2451, -inf
        %2488 = vmax.xlane.f32.xlu0 %v2487
        %v2489 = vpop.xlane.xlu0 %2488
        %v2490 = vsel %vm1262, %v2452, -inf
        %2491 = vmax.xlane.f32.xlu0 %v2490
        %v2492 = vpop.xlane.xlu0 %2491
        %v2493 = vsel %vm1262, %v2453, -inf
        %2494 = vmax.xlane.f32.xlu0 %v2493
        %v2495 = vpop.xlane.xlu0 %2494
        %v2496 = vsel %vm1262, %v2454, -inf
        %2497 = vmax.xlane.f32.xlu0 %v2496
        %v2498 = vpop.xlane.xlu0 %2497
        %v2499 = vsel %vm1262, %v2455, -inf
        %2500 = vmax.xlane.f32.xlu0 %v2499
        %v2501 = vpop.xlane.xlu0 %2500
        %v2502 = vsel %vm1262, %v2456, -inf
        %2503 = vmax.xlane.f32.xlu0 %v2502
        %v2504 = vpop.xlane.xlu0 %2503
        %v2505 = vsub.f32 %v2441, %v2459
        %v2506 = vsub.f32 %v2442, %v2462
        %v2507 = vsub.f32 %v2443, %v2465
        %v2508 = vsub.f32 %v2444, %v2468
        %v2509 = vsub.f32 %v2445, %v2471
        %v2510 = vsub.f32 %v2446, %v2474
        %v2511 = vsub.f32 %v2447, %v2477
        %v2512 = vsub.f32 %v2448, %v2480
        %v2513 = vsub.f32 %v2449, %v2483
        %v2514 = vsub.f32 %v2450, %v2486
        %v2515 = vsub.f32 %v2451, %v2489
        %v2516 = vsub.f32 %v2452, %v2492
        %v2517 = vsub.f32 %v2453, %v2495
        %v2518 = vsub.f32 %v2454, %v2498
        %v2519 = vsub.f32 %v2455, %v2501
        %v2520 = vsub.f32 %v2456, %v2504
        %v2521 = vmul.f32 %v2505, 1.442695
        %v2522 = vpow.pop %v2521
        %v2523 = vmul.f32 %v2506, 1.442695
        %v2524 = vpow.pop %v2523
        %v2525 = vmul.f32 %v2507, 1.442695
        %v2526 = vpow.pop %v2525
        %v2527 = vmul.f32 %v2508, 1.442695
        %v2528 = vpow.pop %v2527
        %v2529 = vmul.f32 %v2509, 1.442695
        %v2530 = vpow.pop %v2529
        %v2531 = vmul.f32 %v2510, 1.442695
        %v2532 = vpow.pop %v2531
        %v2533 = vmul.f32 %v2511, 1.442695
        %v2534 = vpow.pop %v2533
        %v2535 = vmul.f32 %v2512, 1.442695
        %v2536 = vpow.pop %v2535
        %v2537 = vmul.f32 %v2513, 1.442695
        %v2538 = vpow.pop %v2537
        %v2539 = vmul.f32 %v2514, 1.442695
        %v2540 = vpow.pop %v2539
        %v2541 = vmul.f32 %v2515, 1.442695
        %v2542 = vpow.pop %v2541
        %v2543 = vmul.f32 %v2516, 1.442695
        %v2544 = vpow.pop %v2543
        %v2545 = vmul.f32 %v2517, 1.442695
        %v2546 = vpow.pop %v2545
        %v2547 = vmul.f32 %v2518, 1.442695
        %v2548 = vpow.pop %v2547
        %v2549 = vmul.f32 %v2519, 1.442695
        %v2550 = vpow.pop %v2549
        %v2551 = vmul.f32 %v2520, 1.442695
        %v2552 = vpow.pop %v2551
        %v2553 = vsel %vm1262, %v2522, 0.0
        %2554 = vadd.xlane.f32.xlu0 %v2553
        %v2555 = vpop.xlane.xlu0 %2554
        %v2556 = vsel %vm1262, %v2524, 0.0
        %2557 = vadd.xlane.f32.xlu0 %v2556
        %v2558 = vpop.xlane.xlu0 %2557
        %v2559 = vsel %vm1262, %v2526, 0.0
        %2560 = vadd.xlane.f32.xlu0 %v2559
        %v2561 = vpop.xlane.xlu0 %2560
        %v2562 = vsel %vm1262, %v2528, 0.0
        %2563 = vadd.xlane.f32.xlu0 %v2562
        %v2564 = vpop.xlane.xlu0 %2563
        %v2565 = vsel %vm1262, %v2530, 0.0
        %2566 = vadd.xlane.f32.xlu0 %v2565
        %v2567 = vpop.xlane.xlu0 %2566
        %v2568 = vsel %vm1262, %v2532, 0.0
        %2569 = vadd.xlane.f32.xlu0 %v2568
        %v2570 = vpop.xlane.xlu0 %2569
        %v2571 = vsel %vm1262, %v2534, 0.0
        %2572 = vadd.xlane.f32.xlu0 %v2571
        %v2573 = vpop.xlane.xlu0 %2572
        %v2574 = vsel %vm1262, %v2536, 0.0
        %2575 = vadd.xlane.f32.xlu0 %v2574
        %v2576 = vpop.xlane.xlu0 %2575
        %v2577 = vsel %vm1262, %v2538, 0.0
        %2578 = vadd.xlane.f32.xlu0 %v2577
        %v2579 = vpop.xlane.xlu0 %2578
        %v2580 = vsel %vm1262, %v2540, 0.0
        %2581 = vadd.xlane.f32.xlu0 %v2580
        %v2582 = vpop.xlane.xlu0 %2581
        %v2583 = vsel %vm1262, %v2542, 0.0
        %2584 = vadd.xlane.f32.xlu0 %v2583
        %v2585 = vpop.xlane.xlu0 %2584
        %v2586 = vsel %vm1262, %v2544, 0.0
        %2587 = vadd.xlane.f32.xlu0 %v2586
        %v2588 = vpop.xlane.xlu0 %2587
        %v2589 = vsel %vm1262, %v2546, 0.0
        %2590 = vadd.xlane.f32.xlu0 %v2589
        %v2591 = vpop.xlane.xlu0 %2590
        %v2592 = vsel %vm1262, %v2548, 0.0
        %2593 = vadd.xlane.f32.xlu0 %v2592
        %v2594 = vpop.xlane.xlu0 %2593
        %v2595 = vsel %vm1262, %v2550, 0.0
        %2596 = vadd.xlane.f32.xlu0 %v2595
        %v2597 = vpop.xlane.xlu0 %2596
        %v2598 = vsel %vm1262, %v2552, 0.0
        %2599 = vadd.xlane.f32.xlu0 %v2598
        %v2600 = vpop.xlane.xlu0 %2599
        %v2601 = vrcp.pop %v2555
        %v2602 = vrcp.pop %v2558
        %v2603 = vrcp.pop %v2561
        %v2604 = vrcp.pop %v2564
        %v2605 = vrcp.pop %v2567
        %v2606 = vrcp.pop %v2570
        %v2607 = vrcp.pop %v2573
        %v2608 = vrcp.pop %v2576
        %v2609 = vrcp.pop %v2579
        %v2610 = vrcp.pop %v2582
        %v2611 = vrcp.pop %v2585
        %v2612 = vrcp.pop %v2588
        %v2613 = vrcp.pop %v2591
        %v2614 = vrcp.pop %v2594
        %v2615 = vrcp.pop %v2597
        %v2616 = vrcp.pop %v2600
        %v2617 = vmul.f32 %v2522, %v2601
        %v2618 = vmul.f32 %v2524, %v2602
        %v2619 = vmul.f32 %v2526, %v2603
        %v2620 = vmul.f32 %v2528, %v2604
        %v2621 = vmul.f32 %v2530, %v2605
        %v2622 = vmul.f32 %v2532, %v2606
        %v2623 = vmul.f32 %v2534, %v2607
        %v2624 = vmul.f32 %v2536, %v2608
        %v2625 = vmul.f32 %v2538, %v2609
        %v2626 = vmul.f32 %v2540, %v2610
        %v2627 = vmul.f32 %v2542, %v2611
        %v2628 = vmul.f32 %v2544, %v2612
        %v2629 = vmul.f32 %v2546, %v2613
        %v2630 = vmul.f32 %v2548, %v2614
        %v2631 = vmul.f32 %v2550, %v2615
        %v2632 = vmul.f32 %v2552, %v2616
        %v2633 = vpack.c.bf16 %v2617, %v2617
        %v2634 = vpack.c.bf16 %v2618, %v2618
        %v2635 = vpack.c.bf16 %v2619, %v2619
        %v2636 = vpack.c.bf16 %v2620, %v2620
        %v2637 = vpack.c.bf16 %v2621, %v2621
        %v2638 = vpack.c.bf16 %v2622, %v2622
        %v2639 = vpack.c.bf16 %v2623, %v2623
        %v2640 = vpack.c.bf16 %v2624, %v2624
        %v2641 = vpack.c.bf16 %v2625, %v2625
        %v2642 = vpack.c.bf16 %v2626, %v2626
        %v2643 = vpack.c.bf16 %v2627, %v2627
        %v2644 = vpack.c.bf16 %v2628, %v2628
        %v2645 = vpack.c.bf16 %v2629, %v2629
        %v2646 = vpack.c.bf16 %v2630, %v2630
        %v2647 = vpack.c.bf16 %v2631, %v2631
        %v2648 = vpack.c.bf16 %v2632, %v2632
        %v2657 = vunpack.c.l.b16 %v2633
        %v2658 = vunpack.c.l.b16 %v2634
        %v2659 = vunpack.c.l.b16 %v2635
        %v2660 = vunpack.c.l.b16 %v2636
        %v2661 = vunpack.c.l.b16 %v2637
        %v2662 = vunpack.c.l.b16 %v2638
        %v2663 = vunpack.c.l.b16 %v2639
        %v2664 = vunpack.c.l.b16 %v2640
        %v2665 = vpack.c.b16 %v2658, %v2657
        %v2666 = vpack.c.b16 %v2660, %v2659
        %v2667 = vpack.c.b16 %v2662, %v2661
        %v2668 = vpack.c.b16 %v2664, %v2663
        %2669 = vrot.lane.b32.xlu0 %v1491, 64
        %v2670 = vpop.permute.xlu0 %2669
        %2671 = vrot.lane.b32.xlu0 %v1492, 64
        %v2672 = vpop.permute.xlu0 %2671
        %2673 = vrot.lane.b32.xlu0 %v1493, 64
        %v2674 = vpop.permute.xlu0 %2673
        %2675 = vrot.lane.b32.xlu0 %v1494, 64
        %v2676 = vpop.permute.xlu0 %2675
        %v2682 = vsel %vm1262, %v2665, 0
        %v2685 = vsel %vm1262, %v2666, 0
        %v2688 = vsel %vm1262, %v2667, 0
        %v2691 = vsel %vm1262, %v2668, 0
        %2693 = vmatpush.bf16.msra.mxu0 0
        %2694 = vmatpush.bf16.msra.mxu0 0
        %2695 = vmatpush.bf16.msra.mxu0 0
        %2696 = vmatpush.bf16.msra.mxu0 0
        %2697 = vmatpush.bf16.msra.mxu0 %v2676
        %2698 = vmatpush.bf16.msra.mxu0 %v2674
        %2699 = vmatpush.bf16.msra.mxu0 %v2672
        %2700 = vmatpush.bf16.msra.mxu0 %v2670
        %2701 = vmatmul.bf16.gmra.mxu0 %v2682
        %v2702 = vpop.f32.mrf.mxu0
        %v2703 = vadd.f32 0.0, %v2702
        %v2704 = vpop.f32.mrf.mxu0
        %v2705 = vadd.f32 0.0, %v2704
        %2706 = vmatmul.bf16.gmra.mxu0 %v2685
        %v2707 = vpop.f32.mrf.mxu0
        %v2708 = vadd.f32 0.0, %v2707
        %v2709 = vpop.f32.mrf.mxu0
        %v2710 = vadd.f32 0.0, %v2709
        %2711 = vmatmul.bf16.gmra.mxu0 %v2688
        %v2712 = vpop.f32.mrf.mxu0
        %v2713 = vadd.f32 0.0, %v2712
        %v2714 = vpop.f32.mrf.mxu0
        %v2715 = vadd.f32 0.0, %v2714
        %2716 = vmatmul.bf16.gmra.mxu0 %v2691
        %v2717 = vpop.f32.mrf.mxu0
        %v2718 = vadd.f32 0.0, %v2717
        %v2719 = vpop.f32.mrf.mxu0
        %v2720 = vadd.f32 0.0, %v2719
        %2721 = vdwg.mxu0
        %v2730 = vunpack.c.l.b16 %v2641
        %v2731 = vunpack.c.l.b16 %v2642
        %v2732 = vunpack.c.l.b16 %v2643
        %v2733 = vunpack.c.l.b16 %v2644
        %v2734 = vunpack.c.l.b16 %v2645
        %v2735 = vunpack.c.l.b16 %v2646
        %v2736 = vunpack.c.l.b16 %v2647
        %v2737 = vunpack.c.l.b16 %v2648
        %v2738 = vpack.c.b16 %v2731, %v2730
        %v2739 = vpack.c.b16 %v2733, %v2732
        %v2740 = vpack.c.b16 %v2735, %v2734
        %v2741 = vpack.c.b16 %v2737, %v2736
        %2742 = vrot.lane.b32.xlu0 %v1576, 64
        %v2743 = vpop.permute.xlu0 %2742
        %2744 = vrot.lane.b32.xlu0 %v1577, 64
        %v2745 = vpop.permute.xlu0 %2744
        %2746 = vrot.lane.b32.xlu0 %v1578, 64
        %v2747 = vpop.permute.xlu0 %2746
        %2748 = vrot.lane.b32.xlu0 %v1579, 64
        %v2749 = vpop.permute.xlu0 %2748
        %v2755 = vsel %vm1262, %v2738, 0
        %v2758 = vsel %vm1262, %v2739, 0
        %v2761 = vsel %vm1262, %v2740, 0
        %v2764 = vsel %vm1262, %v2741, 0
        %2766 = vmatpush.bf16.msra.mxu0 0
        %2767 = vmatpush.bf16.msra.mxu0 0
        %2768 = vmatpush.bf16.msra.mxu0 0
        %2769 = vmatpush.bf16.msra.mxu0 0
        %2770 = vmatpush.bf16.msra.mxu0 %v2749
        %2771 = vmatpush.bf16.msra.mxu0 %v2747
        %2772 = vmatpush.bf16.msra.mxu0 %v2745
        %2773 = vmatpush.bf16.msra.mxu0 %v2743
        %2774 = vmatmul.bf16.gmra.mxu0 %v2755
        %v2775 = vpop.f32.mrf.mxu0
        %v2776 = vadd.f32 0.0, %v2775
        %v2777 = vpop.f32.mrf.mxu0
        %v2778 = vadd.f32 0.0, %v2777
        %2779 = vmatmul.bf16.gmra.mxu0 %v2758
        %v2780 = vpop.f32.mrf.mxu0
        %v2781 = vadd.f32 0.0, %v2780
        %v2782 = vpop.f32.mrf.mxu0
        %v2783 = vadd.f32 0.0, %v2782
        %2784 = vmatmul.bf16.gmra.mxu0 %v2761
        %v2785 = vpop.f32.mrf.mxu0
        %v2786 = vadd.f32 0.0, %v2785
        %v2787 = vpop.f32.mrf.mxu0
        %v2788 = vadd.f32 0.0, %v2787
        %2789 = vmatmul.bf16.gmra.mxu0 %v2764
        %v2790 = vpop.f32.mrf.mxu0
        %v2791 = vadd.f32 0.0, %v2790
        %v2792 = vpop.f32.mrf.mxu0
        %v2793 = vadd.f32 0.0, %v2792
        %2794 = vdwg.mxu0
        %v2795 = vpack.c.bf16 %v2705, %v2703
        %v2796 = vpack.c.bf16 %v2710, %v2708
        %v2797 = vpack.c.bf16 %v2715, %v2713
        %v2798 = vpack.c.bf16 %v2720, %v2718
        %v2799 = vpack.c.bf16 %v2778, %v2776
        %v2800 = vpack.c.bf16 %v2783, %v2781
        %v2801 = vpack.c.bf16 %v2788, %v2786
        %v2802 = vpack.c.bf16 %v2793, %v2791
        %v2807 = vunpack.c.l.b16 %v441
        %v2808 = vunpack.c.l.b16 %v442
        %v2809 = vunpack.c.l.b16 %v443
        %v2810 = vunpack.c.l.b16 %v444
        %v2811 = vpack.c.b16 %v2808, %v2807
        %v2812 = vpack.c.b16 %v2810, %v2809
        %v2816 = vsel %vm1083, %v2795, 0
        %v2819 = vsel %vm1083, %v2796, 0
        %v2822 = vsel %vm1083, %v2797, 0
        %v2825 = vsel %vm1083, %v2798, 0
        %v2828 = vsel %vm1083, %v2799, 0
        %v2831 = vsel %vm1083, %v2800, 0
        %v2834 = vsel %vm1083, %v2801, 0
        %v2837 = vsel %vm1083, %v2802, 0
        %2839 = vmatpush.bf16.msra.mxu0 0
        %2840 = vmatpush.bf16.msra.mxu0 0
        %2841 = vmatpush.bf16.msra.mxu0 0
        %2842 = vmatpush.bf16.msra.mxu0 0
        %2843 = vmatpush.bf16.msra.mxu0 0
        %2844 = vmatpush.bf16.msra.mxu0 0
        %2845 = vmatpush.bf16.msra.mxu0 %v2812
        %2846 = vmatpush.bf16.msra.mxu0 %v2811
        %2847 = vmatmul.bf16.gmra.mxu0 %v2816
        %v2848 = vpop.f32.mrf.mxu0
        %v2849 = vadd.f32 0.0, %v2848
        %v2850 = vpop.f32.mrf.mxu0
        %v2851 = vadd.f32 0.0, %v2850
        %2852 = vmatmul.bf16.gmra.mxu0 %v2819
        %v2853 = vpop.f32.mrf.mxu0
        %v2854 = vadd.f32 0.0, %v2853
        %v2855 = vpop.f32.mrf.mxu0
        %v2856 = vadd.f32 0.0, %v2855
        %2857 = vmatmul.bf16.gmra.mxu0 %v2822
        %v2858 = vpop.f32.mrf.mxu0
        %v2859 = vadd.f32 0.0, %v2858
        %v2860 = vpop.f32.mrf.mxu0
        %v2861 = vadd.f32 0.0, %v2860
        %2862 = vmatmul.bf16.gmra.mxu0 %v2825
        %v2863 = vpop.f32.mrf.mxu0
        %v2864 = vadd.f32 0.0, %v2863
        %v2865 = vpop.f32.mrf.mxu0
        %v2866 = vadd.f32 0.0, %v2865
        %2867 = vmatmul.bf16.gmra.mxu0 %v2828
        %v2868 = vpop.f32.mrf.mxu0
        %v2869 = vadd.f32 0.0, %v2868
        %v2870 = vpop.f32.mrf.mxu0
        %v2871 = vadd.f32 0.0, %v2870
        %2872 = vmatmul.bf16.gmra.mxu0 %v2831
        %v2873 = vpop.f32.mrf.mxu0
        %v2874 = vadd.f32 0.0, %v2873
        %v2875 = vpop.f32.mrf.mxu0
        %v2876 = vadd.f32 0.0, %v2875
        %2877 = vmatmul.bf16.gmra.mxu0 %v2834
        %v2878 = vpop.f32.mrf.mxu0
        %v2879 = vadd.f32 0.0, %v2878
        %v2880 = vpop.f32.mrf.mxu0
        %v2881 = vadd.f32 0.0, %v2880
        %2882 = vmatmul.bf16.gmra.mxu0 %v2837
        %v2883 = vpop.f32.mrf.mxu0
        %v2884 = vadd.f32 0.0, %v2883
        %v2885 = vpop.f32.mrf.mxu0
        %v2886 = vadd.f32 0.0, %v2885
        %2887 = vdwg.mxu0
        %v2888 = vadd.f32 %v2264, %v2849
        %v2889 = vadd.f32 %v2266, %v2851
        %v2890 = vadd.f32 %v2269, %v2854
        %v2891 = vadd.f32 %v2271, %v2856
        %v2892 = vadd.f32 %v2274, %v2859
        %v2893 = vadd.f32 %v2276, %v2861
        %v2894 = vadd.f32 %v2279, %v2864
        %v2895 = vadd.f32 %v2281, %v2866
        %v2896 = vadd.f32 %v2284, %v2869
        %v2897 = vadd.f32 %v2286, %v2871
        %v2898 = vadd.f32 %v2289, %v2874
        %v2899 = vadd.f32 %v2291, %v2876
        %v2900 = vadd.f32 %v2294, %v2879
        %v2901 = vadd.f32 %v2296, %v2881
        %v2902 = vadd.f32 %v2299, %v2884
        %v2903 = vadd.f32 %v2301, %v2886
        %2904 = vrot.lane.b32.xlu0 %v1059, 32
        %v2905 = vpop.permute.xlu0 %2904
        %2906 = vrot.lane.b32.xlu0 %v1060, 32
        %v2907 = vpop.permute.xlu0 %2906
        %2908 = vrot.lane.b32.xlu0 %v1061, 32
        %v2909 = vpop.permute.xlu0 %2908
        %2910 = vrot.lane.b32.xlu0 %v1062, 32
        %v2911 = vpop.permute.xlu0 %2910
        %2912 = vrot.lane.b32.xlu0 %v1079, 32
        %v2913 = vpop.permute.xlu0 %2912
        %2914 = vrot.lane.b32.xlu0 %v1080, 32
        %v2915 = vpop.permute.xlu0 %2914
        %2916 = vrot.lane.b32.xlu0 %v1081, 32
        %v2917 = vpop.permute.xlu0 %2916
        %2918 = vrot.lane.b32.xlu0 %v1082, 32
        %v2919 = vpop.permute.xlu0 %2918
        %v2921 = vsel %vm1083, %v2905, 0
        %v2924 = vsel %vm1083, %v2907, 0
        %v2927 = vsel %vm1083, %v2909, 0
        %v2930 = vsel %vm1083, %v2911, 0
        %v2933 = vsel %vm1083, %v2913, 0
        %v2936 = vsel %vm1083, %v2915, 0
        %v2939 = vsel %vm1083, %v2917, 0
        %v2942 = vsel %vm1083, %v2919, 0
        %2944 = vmatpush.bf16.xpose.msra.mxu0 0
        %2945 = vmatpush.bf16.xpose.msra.mxu0 0
        %2946 = vmatpush.bf16.xpose.msra.mxu0 0
        %2947 = vmatpush.bf16.xpose.msra.mxu0 0
        %2948 = vmatpush.bf16.xpose.msra.mxu0 %v2942
        %2949 = vmatpush.bf16.xpose.msra.mxu0 %v2939
        %2950 = vmatpush.bf16.xpose.msra.mxu0 %v2936
        %2951 = vmatpush.bf16.xpose.msra.mxu0 %v2933
        %2952 = vmatmul.bf16.gmra.mxu0 %v2921
        %v2953 = vpop.f32.mrf.mxu0
        %v2954 = vadd.f32 0.0, %v2953
        %v2955 = vpop.f32.mrf.mxu0
        %v2956 = vadd.f32 0.0, %v2955
        %2957 = vmatmul.bf16.gmra.mxu0 %v2924
        %v2958 = vpop.f32.mrf.mxu0
        %v2959 = vadd.f32 0.0, %v2958
        %v2960 = vpop.f32.mrf.mxu0
        %v2961 = vadd.f32 0.0, %v2960
        %2962 = vmatmul.bf16.gmra.mxu0 %v2927
        %v2963 = vpop.f32.mrf.mxu0
        %v2964 = vadd.f32 0.0, %v2963
        %v2965 = vpop.f32.mrf.mxu0
        %v2966 = vadd.f32 0.0, %v2965
        %2967 = vmatmul.bf16.gmra.mxu0 %v2930
        %v2968 = vpop.f32.mrf.mxu0
        %v2969 = vadd.f32 0.0, %v2968
        %v2970 = vpop.f32.mrf.mxu0
        %v2971 = vadd.f32 0.0, %v2970
        %2972 = vdwg.mxu0
        %2973 = vrot.lane.b32.xlu0 %v1153, 32
        %v2974 = vpop.permute.xlu0 %2973
        %2975 = vrot.lane.b32.xlu0 %v1154, 32
        %v2976 = vpop.permute.xlu0 %2975
        %2977 = vrot.lane.b32.xlu0 %v1155, 32
        %v2978 = vpop.permute.xlu0 %2977
        %2979 = vrot.lane.b32.xlu0 %v1156, 32
        %v2980 = vpop.permute.xlu0 %2979
        %2981 = vrot.lane.b32.xlu0 %v1173, 32
        %v2982 = vpop.permute.xlu0 %2981
        %2983 = vrot.lane.b32.xlu0 %v1174, 32
        %v2984 = vpop.permute.xlu0 %2983
        %2985 = vrot.lane.b32.xlu0 %v1175, 32
        %v2986 = vpop.permute.xlu0 %2985
        %2987 = vrot.lane.b32.xlu0 %v1176, 32
        %v2988 = vpop.permute.xlu0 %2987
        %v2990 = vsel %vm1083, %v2974, 0
        %v2993 = vsel %vm1083, %v2976, 0
        %v2996 = vsel %vm1083, %v2978, 0
        %v2999 = vsel %vm1083, %v2980, 0
        %v3002 = vsel %vm1083, %v2982, 0
        %v3005 = vsel %vm1083, %v2984, 0
        %v3008 = vsel %vm1083, %v2986, 0
        %v3011 = vsel %vm1083, %v2988, 0
        %3013 = vmatpush.bf16.xpose.msra.mxu0 0
        %3014 = vmatpush.bf16.xpose.msra.mxu0 0
        %3015 = vmatpush.bf16.xpose.msra.mxu0 0
        %3016 = vmatpush.bf16.xpose.msra.mxu0 0
        %3017 = vmatpush.bf16.xpose.msra.mxu0 %v3011
        %3018 = vmatpush.bf16.xpose.msra.mxu0 %v3008
        %3019 = vmatpush.bf16.xpose.msra.mxu0 %v3005
        %3020 = vmatpush.bf16.xpose.msra.mxu0 %v3002
        %3021 = vmatmul.bf16.gmra.mxu0 %v2990
        %v3022 = vpop.f32.mrf.mxu0
        %v3023 = vadd.f32 0.0, %v3022
        %v3024 = vpop.f32.mrf.mxu0
        %v3025 = vadd.f32 0.0, %v3024
        %3026 = vmatmul.bf16.gmra.mxu0 %v2993
        %v3027 = vpop.f32.mrf.mxu0
        %v3028 = vadd.f32 0.0, %v3027
        %v3029 = vpop.f32.mrf.mxu0
        %v3030 = vadd.f32 0.0, %v3029
        %3031 = vmatmul.bf16.gmra.mxu0 %v2996
        %v3032 = vpop.f32.mrf.mxu0
        %v3033 = vadd.f32 0.0, %v3032
        %v3034 = vpop.f32.mrf.mxu0
        %v3035 = vadd.f32 0.0, %v3034
        %3036 = vmatmul.bf16.gmra.mxu0 %v2999
        %v3037 = vpop.f32.mrf.mxu0
        %v3038 = vadd.f32 0.0, %v3037
        %v3039 = vpop.f32.mrf.mxu0
        %v3040 = vadd.f32 0.0, %v3039
        %3041 = vdwg.mxu0
        %v3042 = vsel %vm1238, %v2954, -1e+30
        %v3043 = vsel %vm1239, %v2956, -1e+30
        %v3044 = vsel %vm1240, %v2959, -1e+30
        %v3045 = vsel %vm1241, %v2961, -1e+30
        %v3046 = vsel %vm1242, %v2964, -1e+30
        %v3047 = vsel %vm1243, %v2966, -1e+30
        %v3048 = vsel %vm1244, %v2969, -1e+30
        %v3049 = vsel %vm1245, %v2971, -1e+30
        %v3050 = vsel %vm1238, %v3023, -1e+30
        %v3051 = vsel %vm1239, %v3025, -1e+30
        %v3052 = vsel %vm1240, %v3028, -1e+30
        %v3053 = vsel %vm1241, %v3030, -1e+30
        %v3054 = vsel %vm1242, %v3033, -1e+30
        %v3055 = vsel %vm1243, %v3035, -1e+30
        %v3056 = vsel %vm1244, %v3038, -1e+30
        %v3057 = vsel %vm1245, %v3040, -1e+30
        %v3058 = vsel %vm1262, %v3042, -inf
        %3059 = vmax.xlane.f32.xlu0 %v3058
        %v3060 = vpop.xlane.xlu0 %3059
        %v3061 = vsel %vm1262, %v3043, -inf
        %3062 = vmax.xlane.f32.xlu0 %v3061
        %v3063 = vpop.xlane.xlu0 %3062
        %v3064 = vsel %vm1262, %v3044, -inf
        %3065 = vmax.xlane.f32.xlu0 %v3064
        %v3066 = vpop.xlane.xlu0 %3065
        %v3067 = vsel %vm1262, %v3045, -inf
        %3068 = vmax.xlane.f32.xlu0 %v3067
        %v3069 = vpop.xlane.xlu0 %3068
        %v3070 = vsel %vm1262, %v3046, -inf
        %3071 = vmax.xlane.f32.xlu0 %v3070
        %v3072 = vpop.xlane.xlu0 %3071
        %v3073 = vsel %vm1262, %v3047, -inf
        %3074 = vmax.xlane.f32.xlu0 %v3073
        %v3075 = vpop.xlane.xlu0 %3074
        %v3076 = vsel %vm1262, %v3048, -inf
        %3077 = vmax.xlane.f32.xlu0 %v3076
        %v3078 = vpop.xlane.xlu0 %3077
        %v3079 = vsel %vm1262, %v3049, -inf
        %3080 = vmax.xlane.f32.xlu0 %v3079
        %v3081 = vpop.xlane.xlu0 %3080
        %v3082 = vsel %vm1262, %v3050, -inf
        %3083 = vmax.xlane.f32.xlu0 %v3082
        %v3084 = vpop.xlane.xlu0 %3083
        %v3085 = vsel %vm1262, %v3051, -inf
        %3086 = vmax.xlane.f32.xlu0 %v3085
        %v3087 = vpop.xlane.xlu0 %3086
        %v3088 = vsel %vm1262, %v3052, -inf
        %3089 = vmax.xlane.f32.xlu0 %v3088
        %v3090 = vpop.xlane.xlu0 %3089
        %v3091 = vsel %vm1262, %v3053, -inf
        %3092 = vmax.xlane.f32.xlu0 %v3091
        %v3093 = vpop.xlane.xlu0 %3092
        %v3094 = vsel %vm1262, %v3054, -inf
        %3095 = vmax.xlane.f32.xlu0 %v3094
        %v3096 = vpop.xlane.xlu0 %3095
        %v3097 = vsel %vm1262, %v3055, -inf
        %3098 = vmax.xlane.f32.xlu0 %v3097
        %v3099 = vpop.xlane.xlu0 %3098
        %v3100 = vsel %vm1262, %v3056, -inf
        %3101 = vmax.xlane.f32.xlu0 %v3100
        %v3102 = vpop.xlane.xlu0 %3101
        %v3103 = vsel %vm1262, %v3057, -inf
        %3104 = vmax.xlane.f32.xlu0 %v3103
        %v3105 = vpop.xlane.xlu0 %3104
        %v3106 = vsub.f32 %v3042, %v3060
        %v3107 = vsub.f32 %v3043, %v3063
        %v3108 = vsub.f32 %v3044, %v3066
        %v3109 = vsub.f32 %v3045, %v3069
        %v3110 = vsub.f32 %v3046, %v3072
        %v3111 = vsub.f32 %v3047, %v3075
        %v3112 = vsub.f32 %v3048, %v3078
        %v3113 = vsub.f32 %v3049, %v3081
        %v3114 = vsub.f32 %v3050, %v3084
        %v3115 = vsub.f32 %v3051, %v3087
        %v3116 = vsub.f32 %v3052, %v3090
        %v3117 = vsub.f32 %v3053, %v3093
        %v3118 = vsub.f32 %v3054, %v3096
        %v3119 = vsub.f32 %v3055, %v3099
        %v3120 = vsub.f32 %v3056, %v3102
        %v3121 = vsub.f32 %v3057, %v3105
        %v3122 = vmul.f32 %v3106, 1.442695
        %v3123 = vpow.pop %v3122
        %v3124 = vmul.f32 %v3107, 1.442695
        %v3125 = vpow.pop %v3124
        %v3126 = vmul.f32 %v3108, 1.442695
        %v3127 = vpow.pop %v3126
        %v3128 = vmul.f32 %v3109, 1.442695
        %v3129 = vpow.pop %v3128
        %v3130 = vmul.f32 %v3110, 1.442695
        %v3131 = vpow.pop %v3130
        %v3132 = vmul.f32 %v3111, 1.442695
        %v3133 = vpow.pop %v3132
        %v3134 = vmul.f32 %v3112, 1.442695
        %v3135 = vpow.pop %v3134
        %v3136 = vmul.f32 %v3113, 1.442695
        %v3137 = vpow.pop %v3136
        %v3138 = vmul.f32 %v3114, 1.442695
        %v3139 = vpow.pop %v3138
        %v3140 = vmul.f32 %v3115, 1.442695
        %v3141 = vpow.pop %v3140
        %v3142 = vmul.f32 %v3116, 1.442695
        %v3143 = vpow.pop %v3142
        %v3144 = vmul.f32 %v3117, 1.442695
        %v3145 = vpow.pop %v3144
        %v3146 = vmul.f32 %v3118, 1.442695
        %v3147 = vpow.pop %v3146
        %v3148 = vmul.f32 %v3119, 1.442695
        %v3149 = vpow.pop %v3148
        %v3150 = vmul.f32 %v3120, 1.442695
        %v3151 = vpow.pop %v3150
        %v3152 = vmul.f32 %v3121, 1.442695
        %v3153 = vpow.pop %v3152
        %v3154 = vsel %vm1262, %v3123, 0.0
        %3155 = vadd.xlane.f32.xlu0 %v3154
        %v3156 = vpop.xlane.xlu0 %3155
        %v3157 = vsel %vm1262, %v3125, 0.0
        %3158 = vadd.xlane.f32.xlu0 %v3157
        %v3159 = vpop.xlane.xlu0 %3158
        %v3160 = vsel %vm1262, %v3127, 0.0
        %3161 = vadd.xlane.f32.xlu0 %v3160
        %v3162 = vpop.xlane.xlu0 %3161
        %v3163 = vsel %vm1262, %v3129, 0.0
        %3164 = vadd.xlane.f32.xlu0 %v3163
        %v3165 = vpop.xlane.xlu0 %3164
        %v3166 = vsel %vm1262, %v3131, 0.0
        %3167 = vadd.xlane.f32.xlu0 %v3166
        %v3168 = vpop.xlane.xlu0 %3167
        %v3169 = vsel %vm1262, %v3133, 0.0
        %3170 = vadd.xlane.f32.xlu0 %v3169
        %v3171 = vpop.xlane.xlu0 %3170
        %v3172 = vsel %vm1262, %v3135, 0.0
        %3173 = vadd.xlane.f32.xlu0 %v3172
        %v3174 = vpop.xlane.xlu0 %3173
        %v3175 = vsel %vm1262, %v3137, 0.0
        %3176 = vadd.xlane.f32.xlu0 %v3175
        %v3177 = vpop.xlane.xlu0 %3176
        %v3178 = vsel %vm1262, %v3139, 0.0
        %3179 = vadd.xlane.f32.xlu0 %v3178
        %v3180 = vpop.xlane.xlu0 %3179
        %v3181 = vsel %vm1262, %v3141, 0.0
        %3182 = vadd.xlane.f32.xlu0 %v3181
        %v3183 = vpop.xlane.xlu0 %3182
        %v3184 = vsel %vm1262, %v3143, 0.0
        %3185 = vadd.xlane.f32.xlu0 %v3184
        %v3186 = vpop.xlane.xlu0 %3185
        %v3187 = vsel %vm1262, %v3145, 0.0
        %3188 = vadd.xlane.f32.xlu0 %v3187
        %v3189 = vpop.xlane.xlu0 %3188
        %v3190 = vsel %vm1262, %v3147, 0.0
        %3191 = vadd.xlane.f32.xlu0 %v3190
        %v3192 = vpop.xlane.xlu0 %3191
        %v3193 = vsel %vm1262, %v3149, 0.0
        %3194 = vadd.xlane.f32.xlu0 %v3193
        %v3195 = vpop.xlane.xlu0 %3194
        %v3196 = vsel %vm1262, %v3151, 0.0
        %3197 = vadd.xlane.f32.xlu0 %v3196
        %v3198 = vpop.xlane.xlu0 %3197
        %v3199 = vsel %vm1262, %v3153, 0.0
        %3200 = vadd.xlane.f32.xlu0 %v3199
        %v3201 = vpop.xlane.xlu0 %3200
        %v3202 = vrcp.pop %v3156
        %v3203 = vrcp.pop %v3159
        %v3204 = vrcp.pop %v3162
        %v3205 = vrcp.pop %v3165
        %v3206 = vrcp.pop %v3168
        %v3207 = vrcp.pop %v3171
        %v3208 = vrcp.pop %v3174
        %v3209 = vrcp.pop %v3177
        %v3210 = vrcp.pop %v3180
        %v3211 = vrcp.pop %v3183
        %v3212 = vrcp.pop %v3186
        %v3213 = vrcp.pop %v3189
        %v3214 = vrcp.pop %v3192
        %v3215 = vrcp.pop %v3195
        %v3216 = vrcp.pop %v3198
        %v3217 = vrcp.pop %v3201
        %v3218 = vmul.f32 %v3123, %v3202
        %v3219 = vmul.f32 %v3125, %v3203
        %v3220 = vmul.f32 %v3127, %v3204
        %v3221 = vmul.f32 %v3129, %v3205
        %v3222 = vmul.f32 %v3131, %v3206
        %v3223 = vmul.f32 %v3133, %v3207
        %v3224 = vmul.f32 %v3135, %v3208
        %v3225 = vmul.f32 %v3137, %v3209
        %v3226 = vmul.f32 %v3139, %v3210
        %v3227 = vmul.f32 %v3141, %v3211
        %v3228 = vmul.f32 %v3143, %v3212
        %v3229 = vmul.f32 %v3145, %v3213
        %v3230 = vmul.f32 %v3147, %v3214
        %v3231 = vmul.f32 %v3149, %v3215
        %v3232 = vmul.f32 %v3151, %v3216
        %v3233 = vmul.f32 %v3153, %v3217
        %v3234 = vpack.c.bf16 %v3218, %v3218
        %v3235 = vpack.c.bf16 %v3219, %v3219
        %v3236 = vpack.c.bf16 %v3220, %v3220
        %v3237 = vpack.c.bf16 %v3221, %v3221
        %v3238 = vpack.c.bf16 %v3222, %v3222
        %v3239 = vpack.c.bf16 %v3223, %v3223
        %v3240 = vpack.c.bf16 %v3224, %v3224
        %v3241 = vpack.c.bf16 %v3225, %v3225
        %v3242 = vpack.c.bf16 %v3226, %v3226
        %v3243 = vpack.c.bf16 %v3227, %v3227
        %v3244 = vpack.c.bf16 %v3228, %v3228
        %v3245 = vpack.c.bf16 %v3229, %v3229
        %v3246 = vpack.c.bf16 %v3230, %v3230
        %v3247 = vpack.c.bf16 %v3231, %v3231
        %v3248 = vpack.c.bf16 %v3232, %v3232
        %v3249 = vpack.c.bf16 %v3233, %v3233
        %v3258 = vunpack.c.l.b16 %v3234
        %v3259 = vunpack.c.l.b16 %v3235
        %v3260 = vunpack.c.l.b16 %v3236
        %v3261 = vunpack.c.l.b16 %v3237
        %v3262 = vunpack.c.l.b16 %v3238
        %v3263 = vunpack.c.l.b16 %v3239
        %v3264 = vunpack.c.l.b16 %v3240
        %v3265 = vunpack.c.l.b16 %v3241
        %v3266 = vpack.c.b16 %v3259, %v3258
        %v3267 = vpack.c.b16 %v3261, %v3260
        %v3268 = vpack.c.b16 %v3263, %v3262
        %v3269 = vpack.c.b16 %v3265, %v3264
        %3270 = vrot.lane.b32.xlu0 %v1491, 32
        %v3271 = vpop.permute.xlu0 %3270
        %3272 = vrot.lane.b32.xlu0 %v1492, 32
        %v3273 = vpop.permute.xlu0 %3272
        %3274 = vrot.lane.b32.xlu0 %v1493, 32
        %v3275 = vpop.permute.xlu0 %3274
        %3276 = vrot.lane.b32.xlu0 %v1494, 32
        %v3277 = vpop.permute.xlu0 %3276
        %v3283 = vsel %vm1262, %v3266, 0
        %v3286 = vsel %vm1262, %v3267, 0
        %v3289 = vsel %vm1262, %v3268, 0
        %v3292 = vsel %vm1262, %v3269, 0
        %3294 = vmatpush.bf16.msra.mxu0 0
        %3295 = vmatpush.bf16.msra.mxu0 0
        %3296 = vmatpush.bf16.msra.mxu0 0
        %3297 = vmatpush.bf16.msra.mxu0 0
        %3298 = vmatpush.bf16.msra.mxu0 %v3277
        %3299 = vmatpush.bf16.msra.mxu0 %v3275
        %3300 = vmatpush.bf16.msra.mxu0 %v3273
        %3301 = vmatpush.bf16.msra.mxu0 %v3271
        %3302 = vmatmul.bf16.gmra.mxu0 %v3283
        %v3303 = vpop.f32.mrf.mxu0
        %v3304 = vadd.f32 0.0, %v3303
        %v3305 = vpop.f32.mrf.mxu0
        %v3306 = vadd.f32 0.0, %v3305
        %3307 = vmatmul.bf16.gmra.mxu0 %v3286
        %v3308 = vpop.f32.mrf.mxu0
        %v3309 = vadd.f32 0.0, %v3308
        %v3310 = vpop.f32.mrf.mxu0
        %v3311 = vadd.f32 0.0, %v3310
        %3312 = vmatmul.bf16.gmra.mxu0 %v3289
        %v3313 = vpop.f32.mrf.mxu0
        %v3314 = vadd.f32 0.0, %v3313
        %v3315 = vpop.f32.mrf.mxu0
        %v3316 = vadd.f32 0.0, %v3315
        %3317 = vmatmul.bf16.gmra.mxu0 %v3292
        %v3318 = vpop.f32.mrf.mxu0
        %v3319 = vadd.f32 0.0, %v3318
        %v3320 = vpop.f32.mrf.mxu0
        %v3321 = vadd.f32 0.0, %v3320
        %3322 = vdwg.mxu0
        %v3331 = vunpack.c.l.b16 %v3242
        %v3332 = vunpack.c.l.b16 %v3243
        %v3333 = vunpack.c.l.b16 %v3244
        %v3334 = vunpack.c.l.b16 %v3245
        %v3335 = vunpack.c.l.b16 %v3246
        %v3336 = vunpack.c.l.b16 %v3247
        %v3337 = vunpack.c.l.b16 %v3248
        %v3338 = vunpack.c.l.b16 %v3249
        %v3339 = vpack.c.b16 %v3332, %v3331
        %v3340 = vpack.c.b16 %v3334, %v3333
        %v3341 = vpack.c.b16 %v3336, %v3335
        %v3342 = vpack.c.b16 %v3338, %v3337
        %3343 = vrot.lane.b32.xlu0 %v1576, 32
        %v3344 = vpop.permute.xlu0 %3343
        %3345 = vrot.lane.b32.xlu0 %v1577, 32
        %v3346 = vpop.permute.xlu0 %3345
        %3347 = vrot.lane.b32.xlu0 %v1578, 32
        %v3348 = vpop.permute.xlu0 %3347
        %3349 = vrot.lane.b32.xlu0 %v1579, 32
        %v3350 = vpop.permute.xlu0 %3349
        %v3356 = vsel %vm1262, %v3339, 0
        %v3359 = vsel %vm1262, %v3340, 0
        %v3362 = vsel %vm1262, %v3341, 0
        %v3365 = vsel %vm1262, %v3342, 0
        %3367 = vmatpush.bf16.msra.mxu0 0
        %3368 = vmatpush.bf16.msra.mxu0 0
        %3369 = vmatpush.bf16.msra.mxu0 0
        %3370 = vmatpush.bf16.msra.mxu0 0
        %3371 = vmatpush.bf16.msra.mxu0 %v3350
        %3372 = vmatpush.bf16.msra.mxu0 %v3348
        %3373 = vmatpush.bf16.msra.mxu0 %v3346
        %3374 = vmatpush.bf16.msra.mxu0 %v3344
        %3375 = vmatmul.bf16.gmra.mxu0 %v3356
        %v3376 = vpop.f32.mrf.mxu0
        %v3377 = vadd.f32 0.0, %v3376
        %v3378 = vpop.f32.mrf.mxu0
        %v3379 = vadd.f32 0.0, %v3378
        %3380 = vmatmul.bf16.gmra.mxu0 %v3359
        %v3381 = vpop.f32.mrf.mxu0
        %v3382 = vadd.f32 0.0, %v3381
        %v3383 = vpop.f32.mrf.mxu0
        %v3384 = vadd.f32 0.0, %v3383
        %3385 = vmatmul.bf16.gmra.mxu0 %v3362
        %v3386 = vpop.f32.mrf.mxu0
        %v3387 = vadd.f32 0.0, %v3386
        %v3388 = vpop.f32.mrf.mxu0
        %v3389 = vadd.f32 0.0, %v3388
        %3390 = vmatmul.bf16.gmra.mxu0 %v3365
        %v3391 = vpop.f32.mrf.mxu0
        %v3392 = vadd.f32 0.0, %v3391
        %v3393 = vpop.f32.mrf.mxu0
        %v3394 = vadd.f32 0.0, %v3393
        %3395 = vdwg.mxu0
        %v3396 = vpack.c.bf16 %v3306, %v3304
        %v3397 = vpack.c.bf16 %v3311, %v3309
        %v3398 = vpack.c.bf16 %v3316, %v3314
        %v3399 = vpack.c.bf16 %v3321, %v3319
        %v3400 = vpack.c.bf16 %v3379, %v3377
        %v3401 = vpack.c.bf16 %v3384, %v3382
        %v3402 = vpack.c.bf16 %v3389, %v3387
        %v3403 = vpack.c.bf16 %v3394, %v3392
        %v3408 = vunpack.c.l.b16 %v445
        %v3409 = vunpack.c.l.b16 %v446
        %v3410 = vunpack.c.l.b16 %v447
        %v3411 = vunpack.c.l.b16 %v448
        %v3412 = vpack.c.b16 %v3409, %v3408
        %v3413 = vpack.c.b16 %v3411, %v3410
        %v3417 = vsel %vm1083, %v3396, 0
        %v3420 = vsel %vm1083, %v3397, 0
        %v3423 = vsel %vm1083, %v3398, 0
        %v3426 = vsel %vm1083, %v3399, 0
        %v3429 = vsel %vm1083, %v3400, 0
        %v3432 = vsel %vm1083, %v3401, 0
        %v3435 = vsel %vm1083, %v3402, 0
        %v3438 = vsel %vm1083, %v3403, 0
        %3440 = vmatpush.bf16.msra.mxu0 0
        %3441 = vmatpush.bf16.msra.mxu0 0
        %3442 = vmatpush.bf16.msra.mxu0 0
        %3443 = vmatpush.bf16.msra.mxu0 0
        %3444 = vmatpush.bf16.msra.mxu0 0
        %3445 = vmatpush.bf16.msra.mxu0 0
        %3446 = vmatpush.bf16.msra.mxu0 %v3413
        %3447 = vmatpush.bf16.msra.mxu0 %v3412
        %3448 = vmatmul.bf16.gmra.mxu0 %v3417
        %v3449 = vpop.f32.mrf.mxu0
        %v3450 = vadd.f32 0.0, %v3449
        %v3451 = vpop.f32.mrf.mxu0
        %v3452 = vadd.f32 0.0, %v3451
        %3453 = vmatmul.bf16.gmra.mxu0 %v3420
        %v3454 = vpop.f32.mrf.mxu0
        %v3455 = vadd.f32 0.0, %v3454
        %v3456 = vpop.f32.mrf.mxu0
        %v3457 = vadd.f32 0.0, %v3456
        %3458 = vmatmul.bf16.gmra.mxu0 %v3423
        %v3459 = vpop.f32.mrf.mxu0
        %v3460 = vadd.f32 0.0, %v3459
        %v3461 = vpop.f32.mrf.mxu0
        %v3462 = vadd.f32 0.0, %v3461
        %3463 = vmatmul.bf16.gmra.mxu0 %v3426
        %v3464 = vpop.f32.mrf.mxu0
        %v3465 = vadd.f32 0.0, %v3464
        %v3466 = vpop.f32.mrf.mxu0
        %v3467 = vadd.f32 0.0, %v3466
        %3468 = vmatmul.bf16.gmra.mxu0 %v3429
        %v3469 = vpop.f32.mrf.mxu0
        %v3470 = vadd.f32 0.0, %v3469
        %v3471 = vpop.f32.mrf.mxu0
        %v3472 = vadd.f32 0.0, %v3471
        %3473 = vmatmul.bf16.gmra.mxu0 %v3432
        %v3474 = vpop.f32.mrf.mxu0
        %v3475 = vadd.f32 0.0, %v3474
        %v3476 = vpop.f32.mrf.mxu0
        %v3477 = vadd.f32 0.0, %v3476
        %3478 = vmatmul.bf16.gmra.mxu0 %v3435
        %v3479 = vpop.f32.mrf.mxu0
        %v3480 = vadd.f32 0.0, %v3479
        %v3481 = vpop.f32.mrf.mxu0
        %v3482 = vadd.f32 0.0, %v3481
        %3483 = vmatmul.bf16.gmra.mxu0 %v3438
        %v3484 = vpop.f32.mrf.mxu0
        %v3485 = vadd.f32 0.0, %v3484
        %v3486 = vpop.f32.mrf.mxu0
        %v3487 = vadd.f32 0.0, %v3486
        %3488 = vdwg.mxu0
        %v3489 = vadd.f32 %v2888, %v3450
        %v3490 = vadd.f32 %v2889, %v3452
        %v3491 = vadd.f32 %v2890, %v3455
        %v3492 = vadd.f32 %v2891, %v3457
        %v3493 = vadd.f32 %v2892, %v3460
        %v3494 = vadd.f32 %v2893, %v3462
        %v3495 = vadd.f32 %v2894, %v3465
        %v3496 = vadd.f32 %v2895, %v3467
        %v3497 = vadd.f32 %v2896, %v3470
        %v3498 = vadd.f32 %v2897, %v3472
        %v3499 = vadd.f32 %v2898, %v3475
        %v3500 = vadd.f32 %v2899, %v3477
        %v3501 = vadd.f32 %v2900, %v3480
        %v3502 = vadd.f32 %v2901, %v3482
        %v3503 = vadd.f32 %v2902, %v3485
        %v3504 = vadd.f32 %v2903, %v3487
        %v3505 = vperm.slane %v400, 4
        %v3506 = vadd.f32 %v3489, %v3505
        %v3507 = vadd.f32 %v3490, %v3505
        %v3508 = vadd.f32 %v3491, %v3505
        %v3509 = vadd.f32 %v3492, %v3505
        %v3510 = vadd.f32 %v3493, %v3505
        %v3511 = vadd.f32 %v3494, %v3505
        %v3512 = vadd.f32 %v3495, %v3505
        %v3513 = vadd.f32 %v3496, %v3505
        %v3514 = vadd.f32 %v3497, %v3505
        %v3515 = vadd.f32 %v3498, %v3505
        %v3516 = vadd.f32 %v3499, %v3505
        %v3517 = vadd.f32 %v3500, %v3505
        %v3518 = vadd.f32 %v3501, %v3505
        %v3519 = vadd.f32 %v3502, %v3505
        %v3520 = vadd.f32 %v3503, %v3505
        %v3521 = vadd.f32 %v3504, %v3505
        %v3522 = vadd.f32 %v365, %v3506
        %v3523 = vadd.f32 %v366, %v3507
        %v3524 = vadd.f32 %v367, %v3508
        %v3525 = vadd.f32 %v368, %v3509
        %v3526 = vadd.f32 %v369, %v3510
        %v3527 = vadd.f32 %v370, %v3511
        %v3528 = vadd.f32 %v371, %v3512
        %v3529 = vadd.f32 %v372, %v3513
        %v3530 = vadd.f32 %v373, %v3514
        %v3531 = vadd.f32 %v374, %v3515
        %v3532 = vadd.f32 %v375, %v3516
        %v3533 = vadd.f32 %v376, %v3517
        %v3534 = vadd.f32 %v377, %v3518
        %v3535 = vadd.f32 %v378, %v3519
        %v3536 = vadd.f32 %v379, %v3520
        %v3537 = vadd.f32 %v380, %v3521
        %v3538 = vadd.f32 %v3522, %v3523
        %v3539 = vadd.f32 %v3538, %v3524
        %v3540 = vadd.f32 %v3539, %v3525
        %v3541 = vadd.f32 %v3540, %v3526
        %v3542 = vadd.f32 %v3541, %v3527
        %v3543 = vadd.f32 %v3542, %v3528
        %v3544 = vadd.f32 %v3543, %v3529
        %v3545 = vrot.slane %v3544, 4
        %v3546 = vadd.f32 %v3544, %v3545
        %v3547 = vrot.slane %v3546, 2
        %v3548 = vadd.f32 %v3546, %v3547
        %v3549 = vrot.slane %v3548, 1
        %v3550 = vadd.f32 %v3548, %v3549
        %v3551 = vadd.f32 %v3530, %v3531
        %v3552 = vadd.f32 %v3551, %v3532
        %v3553 = vadd.f32 %v3552, %v3533
        %v3554 = vadd.f32 %v3553, %v3534
        %v3555 = vadd.f32 %v3554, %v3535
        %v3556 = vadd.f32 %v3555, %v3536
        %v3557 = vadd.f32 %v3556, %v3537
        %v3558 = vrot.slane %v3557, 4
        %v3559 = vadd.f32 %v3557, %v3558
        %v3560 = vrot.slane %v3559, 2
        %v3561 = vadd.f32 %v3559, %v3560
        %v3562 = vrot.slane %v3561, 1
        %v3563 = vadd.f32 %v3561, %v3562
        %v3564 = vmul.f32 %v3550, %v577
        %v3565 = vmul.f32 %v3563, %v577
        %v3566 = vsub.f32 %v3522, %v3564
        %v3567 = vsub.f32 %v3523, %v3564
        %v3568 = vsub.f32 %v3524, %v3564
        %v3569 = vsub.f32 %v3525, %v3564
        %v3570 = vsub.f32 %v3526, %v3564
        %v3571 = vsub.f32 %v3527, %v3564
        %v3572 = vsub.f32 %v3528, %v3564
        %v3573 = vsub.f32 %v3529, %v3564
        %v3574 = vsub.f32 %v3530, %v3565
        %v3575 = vsub.f32 %v3531, %v3565
        %v3576 = vsub.f32 %v3532, %v3565
        %v3577 = vsub.f32 %v3533, %v3565
        %v3578 = vsub.f32 %v3534, %v3565
        %v3579 = vsub.f32 %v3535, %v3565
        %v3580 = vsub.f32 %v3536, %v3565
        %v3581 = vsub.f32 %v3537, %v3565
        %v3582 = vmul.f32 %v3566, %v3566
        %v3583 = vmul.f32 %v3567, %v3567
        %v3584 = vmul.f32 %v3568, %v3568
        %v3585 = vmul.f32 %v3569, %v3569
        %v3586 = vmul.f32 %v3570, %v3570
        %v3587 = vmul.f32 %v3571, %v3571
        %v3588 = vmul.f32 %v3572, %v3572
        %v3589 = vmul.f32 %v3573, %v3573
        %v3590 = vmul.f32 %v3574, %v3574
        %v3591 = vmul.f32 %v3575, %v3575
        %v3592 = vmul.f32 %v3576, %v3576
        %v3593 = vmul.f32 %v3577, %v3577
        %v3594 = vmul.f32 %v3578, %v3578
        %v3595 = vmul.f32 %v3579, %v3579
        %v3596 = vmul.f32 %v3580, %v3580
        %v3597 = vmul.f32 %v3581, %v3581
        %v3598 = vadd.f32 %v3582, %v3583
        %v3599 = vadd.f32 %v3598, %v3584
        %v3600 = vadd.f32 %v3599, %v3585
        %v3601 = vadd.f32 %v3600, %v3586
        %v3602 = vadd.f32 %v3601, %v3587
        %v3603 = vadd.f32 %v3602, %v3588
        %v3604 = vadd.f32 %v3603, %v3589
        %v3605 = vrot.slane %v3604, 4
        %v3606 = vadd.f32 %v3604, %v3605
        %v3607 = vrot.slane %v3606, 2
        %v3608 = vadd.f32 %v3606, %v3607
        %v3609 = vrot.slane %v3608, 1
        %v3610 = vadd.f32 %v3608, %v3609
        %v3611 = vadd.f32 %v3590, %v3591
        %v3612 = vadd.f32 %v3611, %v3592
        %v3613 = vadd.f32 %v3612, %v3593
        %v3614 = vadd.f32 %v3613, %v3594
        %v3615 = vadd.f32 %v3614, %v3595
        %v3616 = vadd.f32 %v3615, %v3596
        %v3617 = vadd.f32 %v3616, %v3597
        %v3618 = vrot.slane %v3617, 4
        %v3619 = vadd.f32 %v3617, %v3618
        %v3620 = vrot.slane %v3619, 2
        %v3621 = vadd.f32 %v3619, %v3620
        %v3622 = vrot.slane %v3621, 1
        %v3623 = vadd.f32 %v3621, %v3622
        %v3624 = vmul.f32 %v3610, 0.015873017
        %v3625 = vmul.f32 %v3623, 0.015873017
        %v3626 = vadd.f32 %v3624, 1e-05
        %v3627 = vadd.f32 %v3625, 1e-05
        %v3628 = vrsqrt.pop %v3626
        %v3629 = vmul.f32 %v3628, %v3626
        %v3630 = vmul.f32 %v3629, %v3628
        %v3631 = vmul.f32 0.5, %v3630
        %v3632 = vsub.f32 1.5, %v3631
        %v3633 = vmul.f32 %v3628, %v3632
        %vm3634 = vweird.f32 %v3626
        %vm3635 = vweird.f32 %v3628
        %vm3636 = vmor %vm3634, %vm3635
        %v3637 = vsel %vm3636, %v3628, %v3633
        %v3638 = vrsqrt.pop %v3627
        %v3639 = vmul.f32 %v3638, %v3627
        %v3640 = vmul.f32 %v3639, %v3638
        %v3641 = vmul.f32 0.5, %v3640
        %v3642 = vsub.f32 1.5, %v3641
        %v3643 = vmul.f32 %v3638, %v3642
        %vm3644 = vweird.f32 %v3627
        %vm3645 = vweird.f32 %v3638
        %vm3646 = vmor %vm3644, %vm3645
        %v3647 = vsel %vm3646, %v3638, %v3643
        %v3648 = vmul.f32 %v3566, %v3637
        %v3649 = vmul.f32 %v3567, %v3637
        %v3650 = vmul.f32 %v3568, %v3637
        %v3651 = vmul.f32 %v3569, %v3637
        %v3652 = vmul.f32 %v3570, %v3637
        %v3653 = vmul.f32 %v3571, %v3637
        %v3654 = vmul.f32 %v3572, %v3637
        %v3655 = vmul.f32 %v3573, %v3637
        %v3656 = vmul.f32 %v3574, %v3647
        %v3657 = vmul.f32 %v3575, %v3647
        %v3658 = vmul.f32 %v3576, %v3647
        %v3659 = vmul.f32 %v3577, %v3647
        %v3660 = vmul.f32 %v3578, %v3647
        %v3661 = vmul.f32 %v3579, %v3647
        %v3662 = vmul.f32 %v3580, %v3647
        %v3663 = vmul.f32 %v3581, %v3647
        %v3664 = vperm.slane %v400, 2
        %v3665 = vmul.f32 %v3664, %v3648
        %v3666 = vmul.f32 %v3664, %v3649
        %v3667 = vmul.f32 %v3664, %v3650
        %v3668 = vmul.f32 %v3664, %v3651
        %v3669 = vmul.f32 %v3664, %v3652
        %v3670 = vmul.f32 %v3664, %v3653
        %v3671 = vmul.f32 %v3664, %v3654
        %v3672 = vmul.f32 %v3664, %v3655
        %v3673 = vmul.f32 %v3664, %v3656
        %v3674 = vmul.f32 %v3664, %v3657
        %v3675 = vmul.f32 %v3664, %v3658
        %v3676 = vmul.f32 %v3664, %v3659
        %v3677 = vmul.f32 %v3664, %v3660
        %v3678 = vmul.f32 %v3664, %v3661
        %v3679 = vmul.f32 %v3664, %v3662
        %v3680 = vmul.f32 %v3664, %v3663
        %v3681 = vperm.slane %v400, 3
        %v3682 = vadd.f32 %v3665, %v3681
        %v3683 = vadd.f32 %v3666, %v3681
        %v3684 = vadd.f32 %v3667, %v3681
        %v3685 = vadd.f32 %v3668, %v3681
        %v3686 = vadd.f32 %v3669, %v3681
        %v3687 = vadd.f32 %v3670, %v3681
        %v3688 = vadd.f32 %v3671, %v3681
        %v3689 = vadd.f32 %v3672, %v3681
        %v3690 = vadd.f32 %v3673, %v3681
        %v3691 = vadd.f32 %v3674, %v3681
        %v3692 = vadd.f32 %v3675, %v3681
        %v3693 = vadd.f32 %v3676, %v3681
        %v3694 = vadd.f32 %v3677, %v3681
        %v3695 = vadd.f32 %v3678, %v3681
        %v3696 = vadd.f32 %v3679, %v3681
        %v3697 = vadd.f32 %v3680, %v3681
        %v3698 = vpack.c.bf16 %v3683, %v3682
        %v3699 = vpack.c.bf16 %v3685, %v3684
        %v3700 = vpack.c.bf16 %v3687, %v3686
        %v3701 = vpack.c.bf16 %v3689, %v3688
        %v3702 = vpack.c.bf16 %v3691, %v3690
        %v3703 = vpack.c.bf16 %v3693, %v3692
        %v3704 = vpack.c.bf16 %v3695, %v3694
        %v3705 = vpack.c.bf16 %v3697, %v3696
        %v3706 = vld [vmem:[%s2] sm:$0xf]
        %v3708 = vperm.slane %v3706, 0
        %v3709 = vperm.slane %v3706, 1
        %v3710 = vperm.slane %v3706, 2
        %v3711 = vperm.slane %v3706, 3
        %v3748 = vunpack.c.l.b16 %v449
        %v3749 = vunpack.c.h.b16 %v449
        %v3750 = vunpack.c.l.b16 %v450
        %v3751 = vunpack.c.h.b16 %v450
        %v3752 = vunpack.c.l.b16 %v451
        %v3753 = vunpack.c.h.b16 %v451
        %v3754 = vunpack.c.l.b16 %v452
        %v3755 = vunpack.c.h.b16 %v452
        %v3756 = vunpack.c.l.b16 %v453
        %v3757 = vunpack.c.h.b16 %v453
        %v3758 = vunpack.c.l.b16 %v454
        %v3759 = vunpack.c.h.b16 %v454
        %v3760 = vunpack.c.l.b16 %v455
        %v3761 = vunpack.c.h.b16 %v455
        %v3762 = vunpack.c.l.b16 %v456
        %v3763 = vunpack.c.h.b16 %v456
        %v3764 = vunpack.c.l.b16 %v457
        %v3765 = vunpack.c.h.b16 %v457
        %v3766 = vunpack.c.l.b16 %v458
        %v3767 = vunpack.c.h.b16 %v458
        %v3768 = vunpack.c.l.b16 %v459
        %v3769 = vunpack.c.h.b16 %v459
        %v3770 = vunpack.c.l.b16 %v460
        %v3771 = vunpack.c.h.b16 %v460
        %v3772 = vunpack.c.l.b16 %v461
        %v3773 = vunpack.c.h.b16 %v461
        %v3774 = vunpack.c.l.b16 %v462
        %v3775 = vunpack.c.h.b16 %v462
        %v3776 = vunpack.c.l.b16 %v463
        %v3777 = vunpack.c.h.b16 %v463
        %v3778 = vunpack.c.l.b16 %v464
        %v3779 = vunpack.c.h.b16 %v464
        %v3780 = vunpack.c.l.b16 %v465
        %v3781 = vunpack.c.h.b16 %v465
        %v3782 = vunpack.c.l.b16 %v466
        %v3783 = vunpack.c.h.b16 %v466
        %v3784 = vunpack.c.l.b16 %v467
        %v3785 = vunpack.c.h.b16 %v467
        %v3786 = vunpack.c.l.b16 %v468
        %v3787 = vunpack.c.h.b16 %v468
        %v3788 = vunpack.c.l.b16 %v469
        %v3789 = vunpack.c.h.b16 %v469
        %v3790 = vunpack.c.l.b16 %v470
        %v3791 = vunpack.c.h.b16 %v470
        %v3792 = vunpack.c.l.b16 %v471
        %v3793 = vunpack.c.h.b16 %v471
        %v3794 = vunpack.c.l.b16 %v472
        %v3795 = vunpack.c.h.b16 %v472
        %v3796 = vunpack.c.l.b16 %v473
        %v3797 = vunpack.c.h.b16 %v473
        %v3798 = vunpack.c.l.b16 %v474
        %v3799 = vunpack.c.h.b16 %v474
        %v3800 = vunpack.c.l.b16 %v475
        %v3801 = vunpack.c.h.b16 %v475
        %v3802 = vunpack.c.l.b16 %v476
        %v3803 = vunpack.c.h.b16 %v476
        %v3804 = vunpack.c.l.b16 %v477
        %v3805 = vunpack.c.h.b16 %v477
        %v3806 = vunpack.c.l.b16 %v478
        %v3807 = vunpack.c.h.b16 %v478
        %v3808 = vunpack.c.l.b16 %v479
        %v3809 = vunpack.c.h.b16 %v479
        %v3810 = vunpack.c.l.b16 %v480
        %v3811 = vunpack.c.h.b16 %v480
        %v3812 = vpack.c.b16 %v3752, %v3748
        %v3813 = vpack.c.b16 %v3753, %v3749
        %v3814 = vpack.c.b16 %v3754, %v3750
        %v3815 = vpack.c.b16 %v3755, %v3751
        %v3816 = vpack.c.b16 %v3760, %v3756
        %v3817 = vpack.c.b16 %v3761, %v3757
        %v3818 = vpack.c.b16 %v3762, %v3758
        %v3819 = vpack.c.b16 %v3763, %v3759
        %v3820 = vpack.c.b16 %v3768, %v3764
        %v3821 = vpack.c.b16 %v3769, %v3765
        %v3822 = vpack.c.b16 %v3770, %v3766
        %v3823 = vpack.c.b16 %v3771, %v3767
        %v3824 = vpack.c.b16 %v3776, %v3772
        %v3825 = vpack.c.b16 %v3777, %v3773
        %v3826 = vpack.c.b16 %v3778, %v3774
        %v3827 = vpack.c.b16 %v3779, %v3775
        %v3828 = vpack.c.b16 %v3784, %v3780
        %v3829 = vpack.c.b16 %v3785, %v3781
        %v3830 = vpack.c.b16 %v3786, %v3782
        %v3831 = vpack.c.b16 %v3787, %v3783
        %v3832 = vpack.c.b16 %v3792, %v3788
        %v3833 = vpack.c.b16 %v3793, %v3789
        %v3834 = vpack.c.b16 %v3794, %v3790
        %v3835 = vpack.c.b16 %v3795, %v3791
        %v3836 = vpack.c.b16 %v3800, %v3796
        %v3837 = vpack.c.b16 %v3801, %v3797
        %v3838 = vpack.c.b16 %v3802, %v3798
        %v3839 = vpack.c.b16 %v3803, %v3799
        %v3840 = vpack.c.b16 %v3808, %v3804
        %v3841 = vpack.c.b16 %v3809, %v3805
        %v3842 = vpack.c.b16 %v3810, %v3806
        %v3843 = vpack.c.b16 %v3811, %v3807
        %3876 = vmatpush.bf16.msra.mxu0 %v3840
        %3877 = vmatpush.bf16.msra.mxu0 %v3836
        %3878 = vmatpush.bf16.msra.mxu0 %v3832
        %3879 = vmatpush.bf16.msra.mxu0 %v3828
        %3880 = vmatpush.bf16.msra.mxu0 %v3824
        %3881 = vmatpush.bf16.msra.mxu0 %v3820
        %3882 = vmatpush.bf16.msra.mxu0 %v3816
        %3883 = vmatpush.bf16.msra.mxu0 %v3812
        %3884 = vmatmul.bf16.gmra.mxu0 %v3698
        %v3885 = vpop.f32.mrf.mxu0
        %v3886 = vadd.f32 %v3708, %v3885
        %v3887 = vpop.f32.mrf.mxu0
        %v3888 = vadd.f32 %v3708, %v3887
        %3889 = vmatmul.bf16.gmra.mxu0 %v3699
        %v3890 = vpop.f32.mrf.mxu0
        %v3891 = vadd.f32 %v3708, %v3890
        %v3892 = vpop.f32.mrf.mxu0
        %v3893 = vadd.f32 %v3708, %v3892
        %3894 = vmatmul.bf16.gmra.mxu0 %v3700
        %v3895 = vpop.f32.mrf.mxu0
        %v3896 = vadd.f32 %v3708, %v3895
        %v3897 = vpop.f32.mrf.mxu0
        %v3898 = vadd.f32 %v3708, %v3897
        %3899 = vmatmul.bf16.gmra.mxu0 %v3701
        %v3900 = vpop.f32.mrf.mxu0
        %v3901 = vadd.f32 %v3708, %v3900
        %v3902 = vpop.f32.mrf.mxu0
        %v3903 = vadd.f32 %v3708, %v3902
        %3904 = vmatmul.bf16.gmra.mxu0 %v3702
        %v3905 = vpop.f32.mrf.mxu0
        %v3906 = vadd.f32 %v3708, %v3905
        %v3907 = vpop.f32.mrf.mxu0
        %v3908 = vadd.f32 %v3708, %v3907
        %3909 = vmatmul.bf16.gmra.mxu0 %v3703
        %v3910 = vpop.f32.mrf.mxu0
        %v3911 = vadd.f32 %v3708, %v3910
        %v3912 = vpop.f32.mrf.mxu0
        %v3913 = vadd.f32 %v3708, %v3912
        %3914 = vmatmul.bf16.gmra.mxu0 %v3704
        %v3915 = vpop.f32.mrf.mxu0
        %v3916 = vadd.f32 %v3708, %v3915
        %v3917 = vpop.f32.mrf.mxu0
        %v3918 = vadd.f32 %v3708, %v3917
        %3919 = vmatmul.bf16.gmra.mxu0 %v3705
        %v3920 = vpop.f32.mrf.mxu0
        %v3921 = vadd.f32 %v3708, %v3920
        %v3922 = vpop.f32.mrf.mxu0
        %v3923 = vadd.f32 %v3708, %v3922
        %3924 = vdwg.mxu0
        %3925 = vmatpush.bf16.msra.mxu0 %v3841
        %3926 = vmatpush.bf16.msra.mxu0 %v3837
        %3927 = vmatpush.bf16.msra.mxu0 %v3833
        %3928 = vmatpush.bf16.msra.mxu0 %v3829
        %3929 = vmatpush.bf16.msra.mxu0 %v3825
        %3930 = vmatpush.bf16.msra.mxu0 %v3821
        %3931 = vmatpush.bf16.msra.mxu0 %v3817
        %3932 = vmatpush.bf16.msra.mxu0 %v3813
        %3933 = vmatmul.bf16.gmra.mxu0 %v3698
        %v3934 = vpop.f32.mrf.mxu0
        %v3935 = vadd.f32 %v3709, %v3934
        %v3936 = vpop.f32.mrf.mxu0
        %v3937 = vadd.f32 %v3709, %v3936
        %3938 = vmatmul.bf16.gmra.mxu0 %v3699
        %v3939 = vpop.f32.mrf.mxu0
        %v3940 = vadd.f32 %v3709, %v3939
        %v3941 = vpop.f32.mrf.mxu0
        %v3942 = vadd.f32 %v3709, %v3941
        %3943 = vmatmul.bf16.gmra.mxu0 %v3700
        %v3944 = vpop.f32.mrf.mxu0
        %v3945 = vadd.f32 %v3709, %v3944
        %v3946 = vpop.f32.mrf.mxu0
        %v3947 = vadd.f32 %v3709, %v3946
        %3948 = vmatmul.bf16.gmra.mxu0 %v3701
        %v3949 = vpop.f32.mrf.mxu0
        %v3950 = vadd.f32 %v3709, %v3949
        %v3951 = vpop.f32.mrf.mxu0
        %v3952 = vadd.f32 %v3709, %v3951
        %3953 = vmatmul.bf16.gmra.mxu0 %v3702
        %v3954 = vpop.f32.mrf.mxu0
        %v3955 = vadd.f32 %v3709, %v3954
        %v3956 = vpop.f32.mrf.mxu0
        %v3957 = vadd.f32 %v3709, %v3956
        %3958 = vmatmul.bf16.gmra.mxu0 %v3703
        %v3959 = vpop.f32.mrf.mxu0
        %v3960 = vadd.f32 %v3709, %v3959
        %v3961 = vpop.f32.mrf.mxu0
        %v3962 = vadd.f32 %v3709, %v3961
        %3963 = vmatmul.bf16.gmra.mxu0 %v3704
        %v3964 = vpop.f32.mrf.mxu0
        %v3965 = vadd.f32 %v3709, %v3964
        %v3966 = vpop.f32.mrf.mxu0
        %v3967 = vadd.f32 %v3709, %v3966
        %3968 = vmatmul.bf16.gmra.mxu0 %v3705
        %v3969 = vpop.f32.mrf.mxu0
        %v3970 = vadd.f32 %v3709, %v3969
        %v3971 = vpop.f32.mrf.mxu0
        %v3972 = vadd.f32 %v3709, %v3971
        %3973 = vdwg.mxu0
        %3974 = vmatpush.bf16.msra.mxu0 %v3842
        %3975 = vmatpush.bf16.msra.mxu0 %v3838
        %3976 = vmatpush.bf16.msra.mxu0 %v3834
        %3977 = vmatpush.bf16.msra.mxu0 %v3830
        %3978 = vmatpush.bf16.msra.mxu0 %v3826
        %3979 = vmatpush.bf16.msra.mxu0 %v3822
        %3980 = vmatpush.bf16.msra.mxu0 %v3818
        %3981 = vmatpush.bf16.msra.mxu0 %v3814
        %3982 = vmatmul.bf16.gmra.mxu0 %v3698
        %v3983 = vpop.f32.mrf.mxu0
        %v3984 = vadd.f32 %v3710, %v3983
        %v3985 = vpop.f32.mrf.mxu0
        %v3986 = vadd.f32 %v3710, %v3985
        %3987 = vmatmul.bf16.gmra.mxu0 %v3699
        %v3988 = vpop.f32.mrf.mxu0
        %v3989 = vadd.f32 %v3710, %v3988
        %v3990 = vpop.f32.mrf.mxu0
        %v3991 = vadd.f32 %v3710, %v3990
        %3992 = vmatmul.bf16.gmra.mxu0 %v3700
        %v3993 = vpop.f32.mrf.mxu0
        %v3994 = vadd.f32 %v3710, %v3993
        %v3995 = vpop.f32.mrf.mxu0
        %v3996 = vadd.f32 %v3710, %v3995
        %3997 = vmatmul.bf16.gmra.mxu0 %v3701
        %v3998 = vpop.f32.mrf.mxu0
        %v3999 = vadd.f32 %v3710, %v3998
        %v4000 = vpop.f32.mrf.mxu0
        %v4001 = vadd.f32 %v3710, %v4000
        %4002 = vmatmul.bf16.gmra.mxu0 %v3702
        %v4003 = vpop.f32.mrf.mxu0
        %v4004 = vadd.f32 %v3710, %v4003
        %v4005 = vpop.f32.mrf.mxu0
        %v4006 = vadd.f32 %v3710, %v4005
        %4007 = vmatmul.bf16.gmra.mxu0 %v3703
        %v4008 = vpop.f32.mrf.mxu0
        %v4009 = vadd.f32 %v3710, %v4008
        %v4010 = vpop.f32.mrf.mxu0
        %v4011 = vadd.f32 %v3710, %v4010
        %4012 = vmatmul.bf16.gmra.mxu0 %v3704
        %v4013 = vpop.f32.mrf.mxu0
        %v4014 = vadd.f32 %v3710, %v4013
        %v4015 = vpop.f32.mrf.mxu0
        %v4016 = vadd.f32 %v3710, %v4015
        %4017 = vmatmul.bf16.gmra.mxu0 %v3705
        %v4018 = vpop.f32.mrf.mxu0
        %v4019 = vadd.f32 %v3710, %v4018
        %v4020 = vpop.f32.mrf.mxu0
        %v4021 = vadd.f32 %v3710, %v4020
        %4022 = vdwg.mxu0
        %4023 = vmatpush.bf16.msra.mxu0 %v3843
        %4024 = vmatpush.bf16.msra.mxu0 %v3839
        %4025 = vmatpush.bf16.msra.mxu0 %v3835
        %4026 = vmatpush.bf16.msra.mxu0 %v3831
        %4027 = vmatpush.bf16.msra.mxu0 %v3827
        %4028 = vmatpush.bf16.msra.mxu0 %v3823
        %4029 = vmatpush.bf16.msra.mxu0 %v3819
        %4030 = vmatpush.bf16.msra.mxu0 %v3815
        %4031 = vmatmul.bf16.gmra.mxu0 %v3698
        %v4032 = vpop.f32.mrf.mxu0
        %v4033 = vadd.f32 %v3711, %v4032
        %v4034 = vpop.f32.mrf.mxu0
        %v4035 = vadd.f32 %v3711, %v4034
        %4036 = vmatmul.bf16.gmra.mxu0 %v3699
        %v4037 = vpop.f32.mrf.mxu0
        %v4038 = vadd.f32 %v3711, %v4037
        %v4039 = vpop.f32.mrf.mxu0
        %v4040 = vadd.f32 %v3711, %v4039
        %4041 = vmatmul.bf16.gmra.mxu0 %v3700
        %v4042 = vpop.f32.mrf.mxu0
        %v4043 = vadd.f32 %v3711, %v4042
        %v4044 = vpop.f32.mrf.mxu0
        %v4045 = vadd.f32 %v3711, %v4044
        %4046 = vmatmul.bf16.gmra.mxu0 %v3701
        %v4047 = vpop.f32.mrf.mxu0
        %v4048 = vadd.f32 %v3711, %v4047
        %v4049 = vpop.f32.mrf.mxu0
        %v4050 = vadd.f32 %v3711, %v4049
        %4051 = vmatmul.bf16.gmra.mxu0 %v3702
        %v4052 = vpop.f32.mrf.mxu0
        %v4053 = vadd.f32 %v3711, %v4052
        %v4054 = vpop.f32.mrf.mxu0
        %v4055 = vadd.f32 %v3711, %v4054
        %4056 = vmatmul.bf16.gmra.mxu0 %v3703
        %v4057 = vpop.f32.mrf.mxu0
        %v4058 = vadd.f32 %v3711, %v4057
        %v4059 = vpop.f32.mrf.mxu0
        %v4060 = vadd.f32 %v3711, %v4059
        %4061 = vmatmul.bf16.gmra.mxu0 %v3704
        %v4062 = vpop.f32.mrf.mxu0
        %v4063 = vadd.f32 %v3711, %v4062
        %v4064 = vpop.f32.mrf.mxu0
        %v4065 = vadd.f32 %v3711, %v4064
        %4066 = vmatmul.bf16.gmra.mxu0 %v3705
        %v4067 = vpop.f32.mrf.mxu0
        %v4068 = vadd.f32 %v3711, %v4067
        %v4069 = vpop.f32.mrf.mxu0
        %v4070 = vadd.f32 %v3711, %v4069
        %4071 = vdwg.mxu0
        %v4072 = vmax.f32 %v3886, 0.0
        %v4073 = vmax.f32 %v3935, 0.0
        %v4074 = vmax.f32 %v3984, 0.0
        %v4075 = vmax.f32 %v4033, 0.0
        %v4076 = vmax.f32 %v3888, 0.0
        %v4077 = vmax.f32 %v3937, 0.0
        %v4078 = vmax.f32 %v3986, 0.0
        %v4079 = vmax.f32 %v4035, 0.0
        %v4080 = vmax.f32 %v3891, 0.0
        %v4081 = vmax.f32 %v3940, 0.0
        %v4082 = vmax.f32 %v3989, 0.0
        %v4083 = vmax.f32 %v4038, 0.0
        %v4084 = vmax.f32 %v3893, 0.0
        %v4085 = vmax.f32 %v3942, 0.0
        %v4086 = vmax.f32 %v3991, 0.0
        %v4087 = vmax.f32 %v4040, 0.0
        %v4088 = vmax.f32 %v3896, 0.0
        %v4089 = vmax.f32 %v3945, 0.0
        %v4090 = vmax.f32 %v3994, 0.0
        %v4091 = vmax.f32 %v4043, 0.0
        %v4092 = vmax.f32 %v3898, 0.0
        %v4093 = vmax.f32 %v3947, 0.0
        %v4094 = vmax.f32 %v3996, 0.0
        %v4095 = vmax.f32 %v4045, 0.0
        %v4096 = vmax.f32 %v3901, 0.0
        %v4097 = vmax.f32 %v3950, 0.0
        %v4098 = vmax.f32 %v3999, 0.0
        %v4099 = vmax.f32 %v4048, 0.0
        %v4100 = vmax.f32 %v3903, 0.0
        %v4101 = vmax.f32 %v3952, 0.0
        %v4102 = vmax.f32 %v4001, 0.0
        %v4103 = vmax.f32 %v4050, 0.0
        %v4104 = vmax.f32 %v3906, 0.0
        %v4105 = vmax.f32 %v3955, 0.0
        %v4106 = vmax.f32 %v4004, 0.0
        %v4107 = vmax.f32 %v4053, 0.0
        %v4108 = vmax.f32 %v3908, 0.0
        %v4109 = vmax.f32 %v3957, 0.0
        %v4110 = vmax.f32 %v4006, 0.0
        %v4111 = vmax.f32 %v4055, 0.0
        %v4112 = vmax.f32 %v3911, 0.0
        %v4113 = vmax.f32 %v3960, 0.0
        %v4114 = vmax.f32 %v4009, 0.0
        %v4115 = vmax.f32 %v4058, 0.0
        %v4116 = vmax.f32 %v3913, 0.0
        %v4117 = vmax.f32 %v3962, 0.0
        %v4118 = vmax.f32 %v4011, 0.0
        %v4119 = vmax.f32 %v4060, 0.0
        %v4120 = vmax.f32 %v3916, 0.0
        %v4121 = vmax.f32 %v3965, 0.0
        %v4122 = vmax.f32 %v4014, 0.0
        %v4123 = vmax.f32 %v4063, 0.0
        %v4124 = vmax.f32 %v3918, 0.0
        %v4125 = vmax.f32 %v3967, 0.0
        %v4126 = vmax.f32 %v4016, 0.0
        %v4127 = vmax.f32 %v4065, 0.0
        %v4128 = vmax.f32 %v3921, 0.0
        %v4129 = vmax.f32 %v3970, 0.0
        %v4130 = vmax.f32 %v4019, 0.0
        %v4131 = vmax.f32 %v4068, 0.0
        %v4132 = vmax.f32 %v3923, 0.0
        %v4133 = vmax.f32 %v3972, 0.0
        %v4134 = vmax.f32 %v4021, 0.0
        %v4135 = vmax.f32 %v4070, 0.0
        %v4136 = vpack.c.bf16 %v4076, %v4072
        %v4137 = vpack.c.bf16 %v4077, %v4073
        %v4138 = vpack.c.bf16 %v4078, %v4074
        %v4139 = vpack.c.bf16 %v4079, %v4075
        %v4140 = vpack.c.bf16 %v4084, %v4080
        %v4141 = vpack.c.bf16 %v4085, %v4081
        %v4142 = vpack.c.bf16 %v4086, %v4082
        %v4143 = vpack.c.bf16 %v4087, %v4083
        %v4144 = vpack.c.bf16 %v4092, %v4088
        %v4145 = vpack.c.bf16 %v4093, %v4089
        %v4146 = vpack.c.bf16 %v4094, %v4090
        %v4147 = vpack.c.bf16 %v4095, %v4091
        %v4148 = vpack.c.bf16 %v4100, %v4096
        %v4149 = vpack.c.bf16 %v4101, %v4097
        %v4150 = vpack.c.bf16 %v4102, %v4098
        %v4151 = vpack.c.bf16 %v4103, %v4099
        %v4152 = vpack.c.bf16 %v4108, %v4104
        %v4153 = vpack.c.bf16 %v4109, %v4105
        %v4154 = vpack.c.bf16 %v4110, %v4106
        %v4155 = vpack.c.bf16 %v4111, %v4107
        %v4156 = vpack.c.bf16 %v4116, %v4112
        %v4157 = vpack.c.bf16 %v4117, %v4113
        %v4158 = vpack.c.bf16 %v4118, %v4114
        %v4159 = vpack.c.bf16 %v4119, %v4115
        %v4160 = vpack.c.bf16 %v4124, %v4120
        %v4161 = vpack.c.bf16 %v4125, %v4121
        %v4162 = vpack.c.bf16 %v4126, %v4122
        %v4163 = vpack.c.bf16 %v4127, %v4123
        %v4164 = vpack.c.bf16 %v4132, %v4128
        %v4165 = vpack.c.bf16 %v4133, %v4129
        %v4166 = vpack.c.bf16 %v4134, %v4130
        %v4167 = vpack.c.bf16 %v4135, %v4131
        %v4168 = vperm.slane %v400, 5
        %v4233 = vunpack.c.l.b16 %v481
        %v4234 = vunpack.c.l.b16 %v482
        %v4235 = vunpack.c.l.b16 %v483
        %v4236 = vunpack.c.l.b16 %v484
        %v4237 = vunpack.c.l.b16 %v485
        %v4238 = vunpack.c.l.b16 %v486
        %v4239 = vunpack.c.l.b16 %v487
        %v4240 = vunpack.c.l.b16 %v488
        %v4241 = vunpack.c.l.b16 %v489
        %v4242 = vunpack.c.l.b16 %v490
        %v4243 = vunpack.c.l.b16 %v491
        %v4244 = vunpack.c.l.b16 %v492
        %v4245 = vunpack.c.l.b16 %v493
        %v4246 = vunpack.c.l.b16 %v494
        %v4247 = vunpack.c.l.b16 %v495
        %v4248 = vunpack.c.l.b16 %v496
        %v4249 = vunpack.c.l.b16 %v497
        %v4250 = vunpack.c.l.b16 %v498
        %v4251 = vunpack.c.l.b16 %v499
        %v4252 = vunpack.c.l.b16 %v500
        %v4253 = vunpack.c.l.b16 %v501
        %v4254 = vunpack.c.l.b16 %v502
        %v4255 = vunpack.c.l.b16 %v503
        %v4256 = vunpack.c.l.b16 %v504
        %v4257 = vunpack.c.l.b16 %v505
        %v4258 = vunpack.c.l.b16 %v506
        %v4259 = vunpack.c.l.b16 %v507
        %v4260 = vunpack.c.l.b16 %v508
        %v4261 = vunpack.c.l.b16 %v509
        %v4262 = vunpack.c.l.b16 %v510
        %v4263 = vunpack.c.l.b16 %v511
        %v4264 = vunpack.c.l.b16 %v512
        %v4265 = vunpack.c.l.b16 %v513
        %v4266 = vunpack.c.l.b16 %v514
        %v4267 = vunpack.c.l.b16 %v515
        %v4268 = vunpack.c.l.b16 %v516
        %v4269 = vunpack.c.l.b16 %v517
        %v4270 = vunpack.c.l.b16 %v518
        %v4271 = vunpack.c.l.b16 %v519
        %v4272 = vunpack.c.l.b16 %v520
        %v4273 = vunpack.c.l.b16 %v521
        %v4274 = vunpack.c.l.b16 %v522
        %v4275 = vunpack.c.l.b16 %v523
        %v4276 = vunpack.c.l.b16 %v524
        %v4277 = vunpack.c.l.b16 %v525
        %v4278 = vunpack.c.l.b16 %v526
        %v4279 = vunpack.c.l.b16 %v527
        %v4280 = vunpack.c.l.b16 %v528
        %v4281 = vunpack.c.l.b16 %v529
        %v4282 = vunpack.c.l.b16 %v530
        %v4283 = vunpack.c.l.b16 %v531
        %v4284 = vunpack.c.l.b16 %v532
        %v4285 = vunpack.c.l.b16 %v533
        %v4286 = vunpack.c.l.b16 %v534
        %v4287 = vunpack.c.l.b16 %v535
        %v4288 = vunpack.c.l.b16 %v536
        %v4289 = vunpack.c.l.b16 %v537
        %v4290 = vunpack.c.l.b16 %v538
        %v4291 = vunpack.c.l.b16 %v539
        %v4292 = vunpack.c.l.b16 %v540
        %v4293 = vunpack.c.l.b16 %v541
        %v4294 = vunpack.c.l.b16 %v542
        %v4295 = vunpack.c.l.b16 %v543
        %v4296 = vunpack.c.l.b16 %v544
        %v4297 = vpack.c.b16 %v4234, %v4233
        %v4298 = vpack.c.b16 %v4236, %v4235
        %v4299 = vpack.c.b16 %v4238, %v4237
        %v4300 = vpack.c.b16 %v4240, %v4239
        %v4301 = vpack.c.b16 %v4242, %v4241
        %v4302 = vpack.c.b16 %v4244, %v4243
        %v4303 = vpack.c.b16 %v4246, %v4245
        %v4304 = vpack.c.b16 %v4248, %v4247
        %v4305 = vpack.c.b16 %v4250, %v4249
        %v4306 = vpack.c.b16 %v4252, %v4251
        %v4307 = vpack.c.b16 %v4254, %v4253
        %v4308 = vpack.c.b16 %v4256, %v4255
        %v4309 = vpack.c.b16 %v4258, %v4257
        %v4310 = vpack.c.b16 %v4260, %v4259
        %v4311 = vpack.c.b16 %v4262, %v4261
        %v4312 = vpack.c.b16 %v4264, %v4263
        %v4313 = vpack.c.b16 %v4266, %v4265
        %v4314 = vpack.c.b16 %v4268, %v4267
        %v4315 = vpack.c.b16 %v4270, %v4269
        %v4316 = vpack.c.b16 %v4272, %v4271
        %v4317 = vpack.c.b16 %v4274, %v4273
        %v4318 = vpack.c.b16 %v4276, %v4275
        %v4319 = vpack.c.b16 %v4278, %v4277
        %v4320 = vpack.c.b16 %v4280, %v4279
        %v4321 = vpack.c.b16 %v4282, %v4281
        %v4322 = vpack.c.b16 %v4284, %v4283
        %v4323 = vpack.c.b16 %v4286, %v4285
        %v4324 = vpack.c.b16 %v4288, %v4287
        %v4325 = vpack.c.b16 %v4290, %v4289
        %v4326 = vpack.c.b16 %v4292, %v4291
        %v4327 = vpack.c.b16 %v4294, %v4293
        %v4328 = vpack.c.b16 %v4296, %v4295
        %4361 = vmatpush.bf16.msra.mxu0 %v4304
        %4362 = vmatpush.bf16.msra.mxu0 %v4303
        %4363 = vmatpush.bf16.msra.mxu0 %v4302
        %4364 = vmatpush.bf16.msra.mxu0 %v4301
        %4365 = vmatpush.bf16.msra.mxu0 %v4300
        %4366 = vmatpush.bf16.msra.mxu0 %v4299
        %4367 = vmatpush.bf16.msra.mxu0 %v4298
        %4368 = vmatpush.bf16.msra.mxu0 %v4297
        %4369 = vmatmul.bf16.gmra.mxu0 %v4136
        %v4370 = vpop.f32.mrf.mxu0
        %v4371 = vadd.f32 %v4168, %v4370
        %v4372 = vpop.f32.mrf.mxu0
        %v4373 = vadd.f32 %v4168, %v4372
        %4374 = vmatmul.bf16.gmra.mxu0 %v4140
        %v4375 = vpop.f32.mrf.mxu0
        %v4376 = vadd.f32 %v4168, %v4375
        %v4377 = vpop.f32.mrf.mxu0
        %v4378 = vadd.f32 %v4168, %v4377
        %4379 = vmatmul.bf16.gmra.mxu0 %v4144
        %v4380 = vpop.f32.mrf.mxu0
        %v4381 = vadd.f32 %v4168, %v4380
        %v4382 = vpop.f32.mrf.mxu0
        %v4383 = vadd.f32 %v4168, %v4382
        %4384 = vmatmul.bf16.gmra.mxu0 %v4148
        %v4385 = vpop.f32.mrf.mxu0
        %v4386 = vadd.f32 %v4168, %v4385
        %v4387 = vpop.f32.mrf.mxu0
        %v4388 = vadd.f32 %v4168, %v4387
        %4389 = vmatmul.bf16.gmra.mxu0 %v4152
        %v4390 = vpop.f32.mrf.mxu0
        %v4391 = vadd.f32 %v4168, %v4390
        %v4392 = vpop.f32.mrf.mxu0
        %v4393 = vadd.f32 %v4168, %v4392
        %4394 = vmatmul.bf16.gmra.mxu0 %v4156
        %v4395 = vpop.f32.mrf.mxu0
        %v4396 = vadd.f32 %v4168, %v4395
        %v4397 = vpop.f32.mrf.mxu0
        %v4398 = vadd.f32 %v4168, %v4397
        %4399 = vmatmul.bf16.gmra.mxu0 %v4160
        %v4400 = vpop.f32.mrf.mxu0
        %v4401 = vadd.f32 %v4168, %v4400
        %v4402 = vpop.f32.mrf.mxu0
        %v4403 = vadd.f32 %v4168, %v4402
        %4404 = vmatmul.bf16.gmra.mxu0 %v4164
        %v4405 = vpop.f32.mrf.mxu0
        %v4406 = vadd.f32 %v4168, %v4405
        %v4407 = vpop.f32.mrf.mxu0
        %v4408 = vadd.f32 %v4168, %v4407
        %4409 = vdwg.mxu0
        %4410 = vmatpush.bf16.msra.mxu0 %v4312
        %4411 = vmatpush.bf16.msra.mxu0 %v4311
        %4412 = vmatpush.bf16.msra.mxu0 %v4310
        %4413 = vmatpush.bf16.msra.mxu0 %v4309
        %4414 = vmatpush.bf16.msra.mxu0 %v4308
        %4415 = vmatpush.bf16.msra.mxu0 %v4307
        %4416 = vmatpush.bf16.msra.mxu0 %v4306
        %4417 = vmatpush.bf16.msra.mxu0 %v4305
        %4418 = vmatmul.bf16.gmra.mxu0 %v4137
        %v4419 = vpop.f32.mrf.mxu0
        %v4420 = vadd.f32 %v4371, %v4419
        %v4421 = vpop.f32.mrf.mxu0
        %v4422 = vadd.f32 %v4373, %v4421
        %4423 = vmatmul.bf16.gmra.mxu0 %v4141
        %v4424 = vpop.f32.mrf.mxu0
        %v4425 = vadd.f32 %v4376, %v4424
        %v4426 = vpop.f32.mrf.mxu0
        %v4427 = vadd.f32 %v4378, %v4426
        %4428 = vmatmul.bf16.gmra.mxu0 %v4145
        %v4429 = vpop.f32.mrf.mxu0
        %v4430 = vadd.f32 %v4381, %v4429
        %v4431 = vpop.f32.mrf.mxu0
        %v4432 = vadd.f32 %v4383, %v4431
        %4433 = vmatmul.bf16.gmra.mxu0 %v4149
        %v4434 = vpop.f32.mrf.mxu0
        %v4435 = vadd.f32 %v4386, %v4434
        %v4436 = vpop.f32.mrf.mxu0
        %v4437 = vadd.f32 %v4388, %v4436
        %4438 = vmatmul.bf16.gmra.mxu0 %v4153
        %v4439 = vpop.f32.mrf.mxu0
        %v4440 = vadd.f32 %v4391, %v4439
        %v4441 = vpop.f32.mrf.mxu0
        %v4442 = vadd.f32 %v4393, %v4441
        %4443 = vmatmul.bf16.gmra.mxu0 %v4157
        %v4444 = vpop.f32.mrf.mxu0
        %v4445 = vadd.f32 %v4396, %v4444
        %v4446 = vpop.f32.mrf.mxu0
        %v4447 = vadd.f32 %v4398, %v4446
        %4448 = vmatmul.bf16.gmra.mxu0 %v4161
        %v4449 = vpop.f32.mrf.mxu0
        %v4450 = vadd.f32 %v4401, %v4449
        %v4451 = vpop.f32.mrf.mxu0
        %v4452 = vadd.f32 %v4403, %v4451
        %4453 = vmatmul.bf16.gmra.mxu0 %v4165
        %v4454 = vpop.f32.mrf.mxu0
        %v4455 = vadd.f32 %v4406, %v4454
        %v4456 = vpop.f32.mrf.mxu0
        %v4457 = vadd.f32 %v4408, %v4456
        %4458 = vdwg.mxu0
        %4459 = vmatpush.bf16.msra.mxu0 %v4320
        %4460 = vmatpush.bf16.msra.mxu0 %v4319
        %4461 = vmatpush.bf16.msra.mxu0 %v4318
        %4462 = vmatpush.bf16.msra.mxu0 %v4317
        %4463 = vmatpush.bf16.msra.mxu0 %v4316
        %4464 = vmatpush.bf16.msra.mxu0 %v4315
        %4465 = vmatpush.bf16.msra.mxu0 %v4314
        %4466 = vmatpush.bf16.msra.mxu0 %v4313
        %4467 = vmatmul.bf16.gmra.mxu0 %v4138
        %v4468 = vpop.f32.mrf.mxu0
        %v4469 = vadd.f32 %v4420, %v4468
        %v4470 = vpop.f32.mrf.mxu0
        %v4471 = vadd.f32 %v4422, %v4470
        %4472 = vmatmul.bf16.gmra.mxu0 %v4142
        %v4473 = vpop.f32.mrf.mxu0
        %v4474 = vadd.f32 %v4425, %v4473
        %v4475 = vpop.f32.mrf.mxu0
        %v4476 = vadd.f32 %v4427, %v4475
        %4477 = vmatmul.bf16.gmra.mxu0 %v4146
        %v4478 = vpop.f32.mrf.mxu0
        %v4479 = vadd.f32 %v4430, %v4478
        %v4480 = vpop.f32.mrf.mxu0
        %v4481 = vadd.f32 %v4432, %v4480
        %4482 = vmatmul.bf16.gmra.mxu0 %v4150
        %v4483 = vpop.f32.mrf.mxu0
        %v4484 = vadd.f32 %v4435, %v4483
        %v4485 = vpop.f32.mrf.mxu0
        %v4486 = vadd.f32 %v4437, %v4485
        %4487 = vmatmul.bf16.gmra.mxu0 %v4154
        %v4488 = vpop.f32.mrf.mxu0
        %v4489 = vadd.f32 %v4440, %v4488
        %v4490 = vpop.f32.mrf.mxu0
        %v4491 = vadd.f32 %v4442, %v4490
        %4492 = vmatmul.bf16.gmra.mxu0 %v4158
        %v4493 = vpop.f32.mrf.mxu0
        %v4494 = vadd.f32 %v4445, %v4493
        %v4495 = vpop.f32.mrf.mxu0
        %v4496 = vadd.f32 %v4447, %v4495
        %4497 = vmatmul.bf16.gmra.mxu0 %v4162
        %v4498 = vpop.f32.mrf.mxu0
        %v4499 = vadd.f32 %v4450, %v4498
        %v4500 = vpop.f32.mrf.mxu0
        %v4501 = vadd.f32 %v4452, %v4500
        %4502 = vmatmul.bf16.gmra.mxu0 %v4166
        %v4503 = vpop.f32.mrf.mxu0
        %v4504 = vadd.f32 %v4455, %v4503
        %v4505 = vpop.f32.mrf.mxu0
        %v4506 = vadd.f32 %v4457, %v4505
        %4507 = vdwg.mxu0
        %4508 = vmatpush.bf16.msra.mxu0 %v4328
        %4509 = vmatpush.bf16.msra.mxu0 %v4327
        %4510 = vmatpush.bf16.msra.mxu0 %v4326
        %4511 = vmatpush.bf16.msra.mxu0 %v4325
        %4512 = vmatpush.bf16.msra.mxu0 %v4324
        %4513 = vmatpush.bf16.msra.mxu0 %v4323
        %4514 = vmatpush.bf16.msra.mxu0 %v4322
        %4515 = vmatpush.bf16.msra.mxu0 %v4321
        %4516 = vmatmul.bf16.gmra.mxu0 %v4139
        %v4517 = vpop.f32.mrf.mxu0
        %v4518 = vadd.f32 %v4469, %v4517
        %v4519 = vpop.f32.mrf.mxu0
        %v4520 = vadd.f32 %v4471, %v4519
        %4521 = vmatmul.bf16.gmra.mxu0 %v4143
        %v4522 = vpop.f32.mrf.mxu0
        %v4523 = vadd.f32 %v4474, %v4522
        %v4524 = vpop.f32.mrf.mxu0
        %v4525 = vadd.f32 %v4476, %v4524
        %4526 = vmatmul.bf16.gmra.mxu0 %v4147
        %v4527 = vpop.f32.mrf.mxu0
        %v4528 = vadd.f32 %v4479, %v4527
        %v4529 = vpop.f32.mrf.mxu0
        %v4530 = vadd.f32 %v4481, %v4529
        %4531 = vmatmul.bf16.gmra.mxu0 %v4151
        %v4532 = vpop.f32.mrf.mxu0
        %v4533 = vadd.f32 %v4484, %v4532
        %v4534 = vpop.f32.mrf.mxu0
        %v4535 = vadd.f32 %v4486, %v4534
        %4536 = vmatmul.bf16.gmra.mxu0 %v4155
        %v4537 = vpop.f32.mrf.mxu0
        %v4538 = vadd.f32 %v4489, %v4537
        %v4539 = vpop.f32.mrf.mxu0
        %v4540 = vadd.f32 %v4491, %v4539
        %4541 = vmatmul.bf16.gmra.mxu0 %v4159
        %v4542 = vpop.f32.mrf.mxu0
        %v4543 = vadd.f32 %v4494, %v4542
        %v4544 = vpop.f32.mrf.mxu0
        %v4545 = vadd.f32 %v4496, %v4544
        %4546 = vmatmul.bf16.gmra.mxu0 %v4163
        %v4547 = vpop.f32.mrf.mxu0
        %v4548 = vadd.f32 %v4499, %v4547
        %v4549 = vpop.f32.mrf.mxu0
        %v4550 = vadd.f32 %v4501, %v4549
        %4551 = vmatmul.bf16.gmra.mxu0 %v4167
        %v4552 = vpop.f32.mrf.mxu0
        %v4553 = vadd.f32 %v4504, %v4552
        %v4554 = vpop.f32.mrf.mxu0
        %v4555 = vadd.f32 %v4506, %v4554
        %4556 = vdwg.mxu0
        %v4557 = vadd.f32 %v3522, %v4518
        %v4558 = vadd.f32 %v3523, %v4520
        %v4559 = vadd.f32 %v3524, %v4523
        %v4560 = vadd.f32 %v3525, %v4525
        %v4561 = vadd.f32 %v3526, %v4528
        %v4562 = vadd.f32 %v3527, %v4530
        %v4563 = vadd.f32 %v3528, %v4533
        %v4564 = vadd.f32 %v3529, %v4535
        %v4565 = vadd.f32 %v3530, %v4538
        %v4566 = vadd.f32 %v3531, %v4540
        %v4567 = vadd.f32 %v3532, %v4543
        %v4568 = vadd.f32 %v3533, %v4545
        %v4569 = vadd.f32 %v3534, %v4548
        %v4570 = vadd.f32 %v3535, %v4550
        %v4571 = vadd.f32 %v3536, %v4553
        %v4572 = vadd.f32 %v3537, %v4555
        %s4573 = scalar_lea.vmem %s1, 8
        %v4574 = vld [vmem:[%s4573] sm:$0xff]
        %s4575 = scalar_lea.vmem %s3, 192
        %v4576 = vld [vmem:[%s4575] sm:$0xff]
        %v4577 = vld [vmem:[%s4575 + $0x8] sm:$0xf]
        %v4578 = vld [vmem:[%s4575 + $0xc] sm:$0xff]
        %v4579 = vld [vmem:[%s4575 + $0x14] sm:$0xf]
        %v4580 = vld [vmem:[%s4575 + $0x18] sm:$0xff]
        %v4581 = vld [vmem:[%s4575 + $0x20] sm:$0xf]
        %v4582 = vld [vmem:[%s4575 + $0x24] sm:$0xff]
        %v4583 = vld [vmem:[%s4575 + $0x2c] sm:$0xf]
        %v4584 = vld [vmem:[%s4575 + $0x30] sm:$0xff]
        %v4585 = vld [vmem:[%s4575 + $0x38] sm:$0xf]
        %v4586 = vld [vmem:[%s4575 + $0x3c] sm:$0xff]
        %v4587 = vld [vmem:[%s4575 + $0x44] sm:$0xf]
        %v4588 = vld [vmem:[%s4575 + $0x48] sm:$0xff]
        %v4589 = vld [vmem:[%s4575 + $0x50] sm:$0xf]
        %v4590 = vld [vmem:[%s4575 + $0x54] sm:$0xff]
        %v4591 = vld [vmem:[%s4575 + $0x5c] sm:$0xf]
        %v4592 = vld [vmem:[%s4575 + $0x60] sm:$0xff]
        %v4593 = vld [vmem:[%s4575 + $0x68] sm:$0xf]
        %v4594 = vld [vmem:[%s4575 + $0x6c] sm:$0xff]
        %v4595 = vld [vmem:[%s4575 + $0x74] sm:$0xf]
        %v4596 = vld [vmem:[%s4575 + $0x78] sm:$0xff]
        %v4597 = vld [vmem:[%s4575 + $0x80] sm:$0xf]
        %v4598 = vld [vmem:[%s4575 + $0x84] sm:$0xff]
        %v4599 = vld [vmem:[%s4575 + $0x8c] sm:$0xf]
        %v4600 = vld [vmem:[%s4575 + $0x90] sm:$0xff]
        %v4601 = vld [vmem:[%s4575 + $0x98] sm:$0xf]
        %v4602 = vld [vmem:[%s4575 + $0x9c] sm:$0xff]
        %v4603 = vld [vmem:[%s4575 + $0xa4] sm:$0xf]
        %v4604 = vld [vmem:[%s4575 + $0xa8] sm:$0xff]
        %v4605 = vld [vmem:[%s4575 + $0xb0] sm:$0xf]
        %v4606 = vld [vmem:[%s4575 + $0xb4] sm:$0xff]
        %v4607 = vld [vmem:[%s4575 + $0xbc] sm:$0xf]
        %s4608 = scalar_lea.vmem %s4, 64
        %v4609 = vld [vmem:[%s4608] sm:$0xf]
        %v4610 = vld [vmem:[%s4608 + $0x4] sm:$0xf]
        %v4611 = vld [vmem:[%s4608 + $0x8] sm:$0xf]
        %v4612 = vld [vmem:[%s4608 + $0xc] sm:$0xf]
        %v4613 = vld [vmem:[%s4608 + $0x10] sm:$0xf]
        %v4614 = vld [vmem:[%s4608 + $0x14] sm:$0xf]
        %v4615 = vld [vmem:[%s4608 + $0x18] sm:$0xf]
        %v4616 = vld [vmem:[%s4608 + $0x1c] sm:$0xf]
        %v4617 = vld [vmem:[%s4608 + $0x20] sm:$0xf]
        %v4618 = vld [vmem:[%s4608 + $0x24] sm:$0xf]
        %v4619 = vld [vmem:[%s4608 + $0x28] sm:$0xf]
        %v4620 = vld [vmem:[%s4608 + $0x2c] sm:$0xf]
        %v4621 = vld [vmem:[%s4608 + $0x30] sm:$0xf]
        %v4622 = vld [vmem:[%s4608 + $0x34] sm:$0xf]
        %v4623 = vld [vmem:[%s4608 + $0x38] sm:$0xf]
        %v4624 = vld [vmem:[%s4608 + $0x3c] sm:$0xf]
        %s4625 = scalar_lea.vmem %s5, 256
        %v4626 = vld [vmem:[%s4625] sm:$0xff]
        %v4627 = vld [vmem:[%s4625 + $0x8] sm:$0xff]
        %v4628 = vld [vmem:[%s4625 + $0x10] sm:$0xff]
        %v4629 = vld [vmem:[%s4625 + $0x18] sm:$0xff]
        %v4630 = vld [vmem:[%s4625 + $0x20] sm:$0xff]
        %v4631 = vld [vmem:[%s4625 + $0x28] sm:$0xff]
        %v4632 = vld [vmem:[%s4625 + $0x30] sm:$0xff]
        %v4633 = vld [vmem:[%s4625 + $0x38] sm:$0xff]
        %v4634 = vld [vmem:[%s4625 + $0x40] sm:$0xff]
        %v4635 = vld [vmem:[%s4625 + $0x48] sm:$0xff]
        %v4636 = vld [vmem:[%s4625 + $0x50] sm:$0xff]
        %v4637 = vld [vmem:[%s4625 + $0x58] sm:$0xff]
        %v4638 = vld [vmem:[%s4625 + $0x60] sm:$0xff]
        %v4639 = vld [vmem:[%s4625 + $0x68] sm:$0xff]
        %v4640 = vld [vmem:[%s4625 + $0x70] sm:$0xff]
        %v4641 = vld [vmem:[%s4625 + $0x78] sm:$0xff]
        %v4642 = vld [vmem:[%s4625 + $0x80] sm:$0xff]
        %v4643 = vld [vmem:[%s4625 + $0x88] sm:$0xff]
        %v4644 = vld [vmem:[%s4625 + $0x90] sm:$0xff]
        %v4645 = vld [vmem:[%s4625 + $0x98] sm:$0xff]
        %v4646 = vld [vmem:[%s4625 + $0xa0] sm:$0xff]
        %v4647 = vld [vmem:[%s4625 + $0xa8] sm:$0xff]
        %v4648 = vld [vmem:[%s4625 + $0xb0] sm:$0xff]
        %v4649 = vld [vmem:[%s4625 + $0xb8] sm:$0xff]
        %v4650 = vld [vmem:[%s4625 + $0xc0] sm:$0xff]
        %v4651 = vld [vmem:[%s4625 + $0xc8] sm:$0xff]
        %v4652 = vld [vmem:[%s4625 + $0xd0] sm:$0xff]
        %v4653 = vld [vmem:[%s4625 + $0xd8] sm:$0xff]
        %v4654 = vld [vmem:[%s4625 + $0xe0] sm:$0xff]
        %v4655 = vld [vmem:[%s4625 + $0xe8] sm:$0xff]
        %v4656 = vld [vmem:[%s4625 + $0xf0] sm:$0xff]
        %v4657 = vld [vmem:[%s4625 + $0xf8] sm:$0xff]
        %s4658 = scalar_lea.vmem %s6, 256
        %v4659 = vld [vmem:[%s4658] sm:$0xf]
        %v4660 = vld [vmem:[%s4658 + $0x4] sm:$0xf]
        %v4661 = vld [vmem:[%s4658 + $0x8] sm:$0xf]
        %v4662 = vld [vmem:[%s4658 + $0xc] sm:$0xf]
        %v4663 = vld [vmem:[%s4658 + $0x10] sm:$0xf]
        %v4664 = vld [vmem:[%s4658 + $0x14] sm:$0xf]
        %v4665 = vld [vmem:[%s4658 + $0x18] sm:$0xf]
        %v4666 = vld [vmem:[%s4658 + $0x1c] sm:$0xf]
        %v4667 = vld [vmem:[%s4658 + $0x20] sm:$0xf]
        %v4668 = vld [vmem:[%s4658 + $0x24] sm:$0xf]
        %v4669 = vld [vmem:[%s4658 + $0x28] sm:$0xf]
        %v4670 = vld [vmem:[%s4658 + $0x2c] sm:$0xf]
        %v4671 = vld [vmem:[%s4658 + $0x30] sm:$0xf]
        %v4672 = vld [vmem:[%s4658 + $0x34] sm:$0xf]
        %v4673 = vld [vmem:[%s4658 + $0x38] sm:$0xf]
        %v4674 = vld [vmem:[%s4658 + $0x3c] sm:$0xf]
        %v4675 = vld [vmem:[%s4658 + $0x40] sm:$0xf]
        %v4676 = vld [vmem:[%s4658 + $0x44] sm:$0xf]
        %v4677 = vld [vmem:[%s4658 + $0x48] sm:$0xf]
        %v4678 = vld [vmem:[%s4658 + $0x4c] sm:$0xf]
        %v4679 = vld [vmem:[%s4658 + $0x50] sm:$0xf]
        %v4680 = vld [vmem:[%s4658 + $0x54] sm:$0xf]
        %v4681 = vld [vmem:[%s4658 + $0x58] sm:$0xf]
        %v4682 = vld [vmem:[%s4658 + $0x5c] sm:$0xf]
        %v4683 = vld [vmem:[%s4658 + $0x60] sm:$0xf]
        %v4684 = vld [vmem:[%s4658 + $0x64] sm:$0xf]
        %v4685 = vld [vmem:[%s4658 + $0x68] sm:$0xf]
        %v4686 = vld [vmem:[%s4658 + $0x6c] sm:$0xf]
        %v4687 = vld [vmem:[%s4658 + $0x70] sm:$0xf]
        %v4688 = vld [vmem:[%s4658 + $0x74] sm:$0xf]
        %v4689 = vld [vmem:[%s4658 + $0x78] sm:$0xf]
        %v4690 = vld [vmem:[%s4658 + $0x7c] sm:$0xf]
        %v4691 = vld [vmem:[%s4658 + $0x80] sm:$0xf]
        %v4692 = vld [vmem:[%s4658 + $0x84] sm:$0xf]
        %v4693 = vld [vmem:[%s4658 + $0x88] sm:$0xf]
        %v4694 = vld [vmem:[%s4658 + $0x8c] sm:$0xf]
        %v4695 = vld [vmem:[%s4658 + $0x90] sm:$0xf]
        %v4696 = vld [vmem:[%s4658 + $0x94] sm:$0xf]
        %v4697 = vld [vmem:[%s4658 + $0x98] sm:$0xf]
        %v4698 = vld [vmem:[%s4658 + $0x9c] sm:$0xf]
        %v4699 = vld [vmem:[%s4658 + $0xa0] sm:$0xf]
        %v4700 = vld [vmem:[%s4658 + $0xa4] sm:$0xf]
        %v4701 = vld [vmem:[%s4658 + $0xa8] sm:$0xf]
        %v4702 = vld [vmem:[%s4658 + $0xac] sm:$0xf]
        %v4703 = vld [vmem:[%s4658 + $0xb0] sm:$0xf]
        %v4704 = vld [vmem:[%s4658 + $0xb4] sm:$0xf]
        %v4705 = vld [vmem:[%s4658 + $0xb8] sm:$0xf]
        %v4706 = vld [vmem:[%s4658 + $0xbc] sm:$0xf]
        %v4707 = vld [vmem:[%s4658 + $0xc0] sm:$0xf]
        %v4708 = vld [vmem:[%s4658 + $0xc4] sm:$0xf]
        %v4709 = vld [vmem:[%s4658 + $0xc8] sm:$0xf]
        %v4710 = vld [vmem:[%s4658 + $0xcc] sm:$0xf]
        %v4711 = vld [vmem:[%s4658 + $0xd0] sm:$0xf]
        %v4712 = vld [vmem:[%s4658 + $0xd4] sm:$0xf]
        %v4713 = vld [vmem:[%s4658 + $0xd8] sm:$0xf]
        %v4714 = vld [vmem:[%s4658 + $0xdc] sm:$0xf]
        %v4715 = vld [vmem:[%s4658 + $0xe0] sm:$0xf]
        %v4716 = vld [vmem:[%s4658 + $0xe4] sm:$0xf]
        %v4717 = vld [vmem:[%s4658 + $0xe8] sm:$0xf]
        %v4718 = vld [vmem:[%s4658 + $0xec] sm:$0xf]
        %v4719 = vld [vmem:[%s4658 + $0xf0] sm:$0xf]
        %v4720 = vld [vmem:[%s4658 + $0xf4] sm:$0xf]
        %v4721 = vld [vmem:[%s4658 + $0xf8] sm:$0xf]
        %v4722 = vld [vmem:[%s4658 + $0xfc] sm:$0xf]
        %v4723 = vadd.f32 %v4557, %v4558
        %v4724 = vadd.f32 %v4723, %v4559
        %v4725 = vadd.f32 %v4724, %v4560
        %v4726 = vadd.f32 %v4725, %v4561
        %v4727 = vadd.f32 %v4726, %v4562
        %v4728 = vadd.f32 %v4727, %v4563
        %v4729 = vadd.f32 %v4728, %v4564
        %v4730 = vrot.slane %v4729, 4
        %v4731 = vadd.f32 %v4729, %v4730
        %v4732 = vrot.slane %v4731, 2
        %v4733 = vadd.f32 %v4731, %v4732
        %v4734 = vrot.slane %v4733, 1
        %v4735 = vadd.f32 %v4733, %v4734
        %v4736 = vadd.f32 %v4565, %v4566
        %v4737 = vadd.f32 %v4736, %v4567
        %v4738 = vadd.f32 %v4737, %v4568
        %v4739 = vadd.f32 %v4738, %v4569
        %v4740 = vadd.f32 %v4739, %v4570
        %v4741 = vadd.f32 %v4740, %v4571
        %v4742 = vadd.f32 %v4741, %v4572
        %v4743 = vrot.slane %v4742, 4
        %v4744 = vadd.f32 %v4742, %v4743
        %v4745 = vrot.slane %v4744, 2
        %v4746 = vadd.f32 %v4744, %v4745
        %v4747 = vrot.slane %v4746, 1
        %v4748 = vadd.f32 %v4746, %v4747
        %v4749 = vmul.f32 %v4735, %v577
        %v4750 = vmul.f32 %v4748, %v577
        %v4751 = vsub.f32 %v4557, %v4749
        %v4752 = vsub.f32 %v4558, %v4749
        %v4753 = vsub.f32 %v4559, %v4749
        %v4754 = vsub.f32 %v4560, %v4749
        %v4755 = vsub.f32 %v4561, %v4749
        %v4756 = vsub.f32 %v4562, %v4749
        %v4757 = vsub.f32 %v4563, %v4749
        %v4758 = vsub.f32 %v4564, %v4749
        %v4759 = vsub.f32 %v4565, %v4750
        %v4760 = vsub.f32 %v4566, %v4750
        %v4761 = vsub.f32 %v4567, %v4750
        %v4762 = vsub.f32 %v4568, %v4750
        %v4763 = vsub.f32 %v4569, %v4750
        %v4764 = vsub.f32 %v4570, %v4750
        %v4765 = vsub.f32 %v4571, %v4750
        %v4766 = vsub.f32 %v4572, %v4750
        %v4767 = vmul.f32 %v4751, %v4751
        %v4768 = vmul.f32 %v4752, %v4752
        %v4769 = vmul.f32 %v4753, %v4753
        %v4770 = vmul.f32 %v4754, %v4754
        %v4771 = vmul.f32 %v4755, %v4755
        %v4772 = vmul.f32 %v4756, %v4756
        %v4773 = vmul.f32 %v4757, %v4757
        %v4774 = vmul.f32 %v4758, %v4758
        %v4775 = vmul.f32 %v4759, %v4759
        %v4776 = vmul.f32 %v4760, %v4760
        %v4777 = vmul.f32 %v4761, %v4761
        %v4778 = vmul.f32 %v4762, %v4762
        %v4779 = vmul.f32 %v4763, %v4763
        %v4780 = vmul.f32 %v4764, %v4764
        %v4781 = vmul.f32 %v4765, %v4765
        %v4782 = vmul.f32 %v4766, %v4766
        %v4783 = vadd.f32 %v4767, %v4768
        %v4784 = vadd.f32 %v4783, %v4769
        %v4785 = vadd.f32 %v4784, %v4770
        %v4786 = vadd.f32 %v4785, %v4771
        %v4787 = vadd.f32 %v4786, %v4772
        %v4788 = vadd.f32 %v4787, %v4773
        %v4789 = vadd.f32 %v4788, %v4774
        %v4790 = vrot.slane %v4789, 4
        %v4791 = vadd.f32 %v4789, %v4790
        %v4792 = vrot.slane %v4791, 2
        %v4793 = vadd.f32 %v4791, %v4792
        %v4794 = vrot.slane %v4793, 1
        %v4795 = vadd.f32 %v4793, %v4794
        %v4796 = vadd.f32 %v4775, %v4776
        %v4797 = vadd.f32 %v4796, %v4777
        %v4798 = vadd.f32 %v4797, %v4778
        %v4799 = vadd.f32 %v4798, %v4779
        %v4800 = vadd.f32 %v4799, %v4780
        %v4801 = vadd.f32 %v4800, %v4781
        %v4802 = vadd.f32 %v4801, %v4782
        %v4803 = vrot.slane %v4802, 4
        %v4804 = vadd.f32 %v4802, %v4803
        %v4805 = vrot.slane %v4804, 2
        %v4806 = vadd.f32 %v4804, %v4805
        %v4807 = vrot.slane %v4806, 1
        %v4808 = vadd.f32 %v4806, %v4807
        %v4809 = vmul.f32 %v4795, 0.015873017
        %v4810 = vmul.f32 %v4808, 0.015873017
        %v4811 = vadd.f32 %v4809, 1e-05
        %v4812 = vadd.f32 %v4810, 1e-05
        %v4813 = vrsqrt.pop %v4811
        %v4814 = vmul.f32 %v4813, %v4811
        %v4815 = vmul.f32 %v4814, %v4813
        %v4816 = vmul.f32 0.5, %v4815
        %v4817 = vsub.f32 1.5, %v4816
        %v4818 = vmul.f32 %v4813, %v4817
        %vm4819 = vweird.f32 %v4811
        %vm4820 = vweird.f32 %v4813
        %vm4821 = vmor %vm4819, %vm4820
        %v4822 = vsel %vm4821, %v4813, %v4818
        %v4823 = vrsqrt.pop %v4812
        %v4824 = vmul.f32 %v4823, %v4812
        %v4825 = vmul.f32 %v4824, %v4823
        %v4826 = vmul.f32 0.5, %v4825
        %v4827 = vsub.f32 1.5, %v4826
        %v4828 = vmul.f32 %v4823, %v4827
        %vm4829 = vweird.f32 %v4812
        %vm4830 = vweird.f32 %v4823
        %vm4831 = vmor %vm4829, %vm4830
        %v4832 = vsel %vm4831, %v4823, %v4828
        %v4833 = vmul.f32 %v4751, %v4822
        %v4834 = vmul.f32 %v4752, %v4822
        %v4835 = vmul.f32 %v4753, %v4822
        %v4836 = vmul.f32 %v4754, %v4822
        %v4837 = vmul.f32 %v4755, %v4822
        %v4838 = vmul.f32 %v4756, %v4822
        %v4839 = vmul.f32 %v4757, %v4822
        %v4840 = vmul.f32 %v4758, %v4822
        %v4841 = vmul.f32 %v4759, %v4832
        %v4842 = vmul.f32 %v4760, %v4832
        %v4843 = vmul.f32 %v4761, %v4832
        %v4844 = vmul.f32 %v4762, %v4832
        %v4845 = vmul.f32 %v4763, %v4832
        %v4846 = vmul.f32 %v4764, %v4832
        %v4847 = vmul.f32 %v4765, %v4832
        %v4848 = vmul.f32 %v4766, %v4832
        %v4849 = vperm.slane %v4574, 0
        %v4850 = vmul.f32 %v4849, %v4833
        %v4851 = vmul.f32 %v4849, %v4834
        %v4852 = vmul.f32 %v4849, %v4835
        %v4853 = vmul.f32 %v4849, %v4836
        %v4854 = vmul.f32 %v4849, %v4837
        %v4855 = vmul.f32 %v4849, %v4838
        %v4856 = vmul.f32 %v4849, %v4839
        %v4857 = vmul.f32 %v4849, %v4840
        %v4858 = vmul.f32 %v4849, %v4841
        %v4859 = vmul.f32 %v4849, %v4842
        %v4860 = vmul.f32 %v4849, %v4843
        %v4861 = vmul.f32 %v4849, %v4844
        %v4862 = vmul.f32 %v4849, %v4845
        %v4863 = vmul.f32 %v4849, %v4846
        %v4864 = vmul.f32 %v4849, %v4847
        %v4865 = vmul.f32 %v4849, %v4848
        %v4866 = vperm.slane %v4574, 1
        %v4867 = vadd.f32 %v4850, %v4866
        %v4868 = vadd.f32 %v4851, %v4866
        %v4869 = vadd.f32 %v4852, %v4866
        %v4870 = vadd.f32 %v4853, %v4866
        %v4871 = vadd.f32 %v4854, %v4866
        %v4872 = vadd.f32 %v4855, %v4866
        %v4873 = vadd.f32 %v4856, %v4866
        %v4874 = vadd.f32 %v4857, %v4866
        %v4875 = vadd.f32 %v4858, %v4866
        %v4876 = vadd.f32 %v4859, %v4866
        %v4877 = vadd.f32 %v4860, %v4866
        %v4878 = vadd.f32 %v4861, %v4866
        %v4879 = vadd.f32 %v4862, %v4866
        %v4880 = vadd.f32 %v4863, %v4866
        %v4881 = vadd.f32 %v4864, %v4866
        %v4882 = vadd.f32 %v4865, %v4866
        %v4883 = vpack.c.bf16 %v4868, %v4867
        %v4884 = vpack.c.bf16 %v4870, %v4869
        %v4885 = vpack.c.bf16 %v4872, %v4871
        %v4886 = vpack.c.bf16 %v4874, %v4873
        %v4887 = vpack.c.bf16 %v4876, %v4875
        %v4888 = vpack.c.bf16 %v4878, %v4877
        %v4889 = vpack.c.bf16 %v4880, %v4879
        %v4890 = vpack.c.bf16 %v4882, %v4881
        %v4923 = vunpack.c.l.b16 %v4576
        %v4924 = vunpack.c.h.b16 %v4576
        %v4925 = vunpack.c.l.b16 %v4577
        %v4926 = vunpack.c.l.b16 %v4578
        %v4927 = vunpack.c.h.b16 %v4578
        %v4928 = vunpack.c.l.b16 %v4579
        %v4929 = vunpack.c.l.b16 %v4580
        %v4930 = vunpack.c.h.b16 %v4580
        %v4931 = vunpack.c.l.b16 %v4581
        %v4932 = vunpack.c.l.b16 %v4582
        %v4933 = vunpack.c.h.b16 %v4582
        %v4934 = vunpack.c.l.b16 %v4583
        %v4935 = vunpack.c.l.b16 %v4584
        %v4936 = vunpack.c.h.b16 %v4584
        %v4937 = vunpack.c.l.b16 %v4585
        %v4938 = vunpack.c.l.b16 %v4586
        %v4939 = vunpack.c.h.b16 %v4586
        %v4940 = vunpack.c.l.b16 %v4587
        %v4941 = vunpack.c.l.b16 %v4588
        %v4942 = vunpack.c.h.b16 %v4588
        %v4943 = vunpack.c.l.b16 %v4589
        %v4944 = vunpack.c.l.b16 %v4590
        %v4945 = vunpack.c.h.b16 %v4590
        %v4946 = vunpack.c.l.b16 %v4591
        %v4947 = vunpack.c.l.b16 %v4592
        %v4948 = vunpack.c.h.b16 %v4592
        %v4949 = vunpack.c.l.b16 %v4593
        %v4950 = vunpack.c.l.b16 %v4594
        %v4951 = vunpack.c.h.b16 %v4594
        %v4952 = vunpack.c.l.b16 %v4595
        %v4953 = vunpack.c.l.b16 %v4596
        %v4954 = vunpack.c.h.b16 %v4596
        %v4955 = vunpack.c.l.b16 %v4597
        %v4956 = vunpack.c.l.b16 %v4598
        %v4957 = vunpack.c.h.b16 %v4598
        %v4958 = vunpack.c.l.b16 %v4599
        %v4959 = vunpack.c.l.b16 %v4600
        %v4960 = vunpack.c.h.b16 %v4600
        %v4961 = vunpack.c.l.b16 %v4601
        %v4962 = vunpack.c.l.b16 %v4602
        %v4963 = vunpack.c.h.b16 %v4602
        %v4964 = vunpack.c.l.b16 %v4603
        %v4965 = vunpack.c.l.b16 %v4604
        %v4966 = vunpack.c.h.b16 %v4604
        %v4967 = vunpack.c.l.b16 %v4605
        %v4968 = vunpack.c.l.b16 %v4606
        %v4969 = vunpack.c.h.b16 %v4606
        %v4970 = vunpack.c.l.b16 %v4607
        %v4971 = vpack.c.b16 %v4926, %v4923
        %v4972 = vpack.c.b16 %v4927, %v4924
        %v4973 = vpack.c.b16 %v4928, %v4925
        %v4974 = vpack.c.b16 %v4932, %v4929
        %v4975 = vpack.c.b16 %v4933, %v4930
        %v4976 = vpack.c.b16 %v4934, %v4931
        %v4977 = vpack.c.b16 %v4938, %v4935
        %v4978 = vpack.c.b16 %v4939, %v4936
        %v4979 = vpack.c.b16 %v4940, %v4937
        %v4980 = vpack.c.b16 %v4944, %v4941
        %v4981 = vpack.c.b16 %v4945, %v4942
        %v4982 = vpack.c.b16 %v4946, %v4943
        %v4983 = vpack.c.b16 %v4950, %v4947
        %v4984 = vpack.c.b16 %v4951, %v4948
        %v4985 = vpack.c.b16 %v4952, %v4949
        %v4986 = vpack.c.b16 %v4956, %v4953
        %v4987 = vpack.c.b16 %v4957, %v4954
        %v4988 = vpack.c.b16 %v4958, %v4955
        %v4989 = vpack.c.b16 %v4962, %v4959
        %v4990 = vpack.c.b16 %v4963, %v4960
        %v4991 = vpack.c.b16 %v4964, %v4961
        %v4992 = vpack.c.b16 %v4968, %v4965
        %v4993 = vpack.c.b16 %v4969, %v4966
        %v4994 = vpack.c.b16 %v4970, %v4967
        %5019 = vmatpush.bf16.msra.mxu0 %v4992
        %5020 = vmatpush.bf16.msra.mxu0 %v4989
        %5021 = vmatpush.bf16.msra.mxu0 %v4986
        %5022 = vmatpush.bf16.msra.mxu0 %v4983
        %5023 = vmatpush.bf16.msra.mxu0 %v4980
        %5024 = vmatpush.bf16.msra.mxu0 %v4977
        %5025 = vmatpush.bf16.msra.mxu0 %v4974
        %5026 = vmatpush.bf16.msra.mxu0 %v4971
        %5027 = vmatmul.bf16.gmra.mxu0 %v4883
        %v5028 = vpop.f32.mrf.mxu0
        %v5029 = vadd.f32 0.0, %v5028
        %v5030 = vpop.f32.mrf.mxu0
        %v5031 = vadd.f32 0.0, %v5030
        %5032 = vmatmul.bf16.gmra.mxu0 %v4884
        %v5033 = vpop.f32.mrf.mxu0
        %v5034 = vadd.f32 0.0, %v5033
        %v5035 = vpop.f32.mrf.mxu0
        %v5036 = vadd.f32 0.0, %v5035
        %5037 = vmatmul.bf16.gmra.mxu0 %v4885
        %v5038 = vpop.f32.mrf.mxu0
        %v5039 = vadd.f32 0.0, %v5038
        %v5040 = vpop.f32.mrf.mxu0
        %v5041 = vadd.f32 0.0, %v5040
        %5042 = vmatmul.bf16.gmra.mxu0 %v4886
        %v5043 = vpop.f32.mrf.mxu0
        %v5044 = vadd.f32 0.0, %v5043
        %v5045 = vpop.f32.mrf.mxu0
        %v5046 = vadd.f32 0.0, %v5045
        %5047 = vmatmul.bf16.gmra.mxu0 %v4887
        %v5048 = vpop.f32.mrf.mxu0
        %v5049 = vadd.f32 0.0, %v5048
        %v5050 = vpop.f32.mrf.mxu0
        %v5051 = vadd.f32 0.0, %v5050
        %5052 = vmatmul.bf16.gmra.mxu0 %v4888
        %v5053 = vpop.f32.mrf.mxu0
        %v5054 = vadd.f32 0.0, %v5053
        %v5055 = vpop.f32.mrf.mxu0
        %v5056 = vadd.f32 0.0, %v5055
        %5057 = vmatmul.bf16.gmra.mxu0 %v4889
        %v5058 = vpop.f32.mrf.mxu0
        %v5059 = vadd.f32 0.0, %v5058
        %v5060 = vpop.f32.mrf.mxu0
        %v5061 = vadd.f32 0.0, %v5060
        %5062 = vmatmul.bf16.gmra.mxu0 %v4890
        %v5063 = vpop.f32.mrf.mxu0
        %v5064 = vadd.f32 0.0, %v5063
        %v5065 = vpop.f32.mrf.mxu0
        %v5066 = vadd.f32 0.0, %v5065
        %5067 = vdwg.mxu0
        %5068 = vmatpush.bf16.msra.mxu0 %v4993
        %5069 = vmatpush.bf16.msra.mxu0 %v4990
        %5070 = vmatpush.bf16.msra.mxu0 %v4987
        %5071 = vmatpush.bf16.msra.mxu0 %v4984
        %5072 = vmatpush.bf16.msra.mxu0 %v4981
        %5073 = vmatpush.bf16.msra.mxu0 %v4978
        %5074 = vmatpush.bf16.msra.mxu0 %v4975
        %5075 = vmatpush.bf16.msra.mxu0 %v4972
        %5076 = vmatmul.bf16.gmra.mxu0 %v4883
        %v5077 = vpop.f32.mrf.mxu0
        %v5078 = vadd.f32 0.0, %v5077
        %v5079 = vpop.f32.mrf.mxu0
        %v5080 = vadd.f32 0.0, %v5079
        %5081 = vmatmul.bf16.gmra.mxu0 %v4884
        %v5082 = vpop.f32.mrf.mxu0
        %v5083 = vadd.f32 0.0, %v5082
        %v5084 = vpop.f32.mrf.mxu0
        %v5085 = vadd.f32 0.0, %v5084
        %5086 = vmatmul.bf16.gmra.mxu0 %v4885
        %v5087 = vpop.f32.mrf.mxu0
        %v5088 = vadd.f32 0.0, %v5087
        %v5089 = vpop.f32.mrf.mxu0
        %v5090 = vadd.f32 0.0, %v5089
        %5091 = vmatmul.bf16.gmra.mxu0 %v4886
        %v5092 = vpop.f32.mrf.mxu0
        %v5093 = vadd.f32 0.0, %v5092
        %v5094 = vpop.f32.mrf.mxu0
        %v5095 = vadd.f32 0.0, %v5094
        %5096 = vmatmul.bf16.gmra.mxu0 %v4887
        %v5097 = vpop.f32.mrf.mxu0
        %v5098 = vadd.f32 0.0, %v5097
        %v5099 = vpop.f32.mrf.mxu0
        %v5100 = vadd.f32 0.0, %v5099
        %5101 = vmatmul.bf16.gmra.mxu0 %v4888
        %v5102 = vpop.f32.mrf.mxu0
        %v5103 = vadd.f32 0.0, %v5102
        %v5104 = vpop.f32.mrf.mxu0
        %v5105 = vadd.f32 0.0, %v5104
        %5106 = vmatmul.bf16.gmra.mxu0 %v4889
        %v5107 = vpop.f32.mrf.mxu0
        %v5108 = vadd.f32 0.0, %v5107
        %v5109 = vpop.f32.mrf.mxu0
        %v5110 = vadd.f32 0.0, %v5109
        %5111 = vmatmul.bf16.gmra.mxu0 %v4890
        %v5112 = vpop.f32.mrf.mxu0
        %v5113 = vadd.f32 0.0, %v5112
        %v5114 = vpop.f32.mrf.mxu0
        %v5115 = vadd.f32 0.0, %v5114
        %5116 = vdwg.mxu0
        %5117 = vmatpush.bf16.msra.mxu0 %v4994
        %5118 = vmatpush.bf16.msra.mxu0 %v4991
        %5119 = vmatpush.bf16.msra.mxu0 %v4988
        %5120 = vmatpush.bf16.msra.mxu0 %v4985
        %5121 = vmatpush.bf16.msra.mxu0 %v4982
        %5122 = vmatpush.bf16.msra.mxu0 %v4979
        %5123 = vmatpush.bf16.msra.mxu0 %v4976
        %5124 = vmatpush.bf16.msra.mxu0 %v4973
        %5125 = vmatmul.bf16.gmra.mxu0 %v4883
        %v5126 = vpop.f32.mrf.mxu0
        %v5127 = vadd.f32 0.0, %v5126
        %v5128 = vpop.f32.mrf.mxu0
        %v5129 = vadd.f32 0.0, %v5128
        %5130 = vmatmul.bf16.gmra.mxu0 %v4884
        %v5131 = vpop.f32.mrf.mxu0
        %v5132 = vadd.f32 0.0, %v5131
        %v5133 = vpop.f32.mrf.mxu0
        %v5134 = vadd.f32 0.0, %v5133
        %5135 = vmatmul.bf16.gmra.mxu0 %v4885
        %v5136 = vpop.f32.mrf.mxu0
        %v5137 = vadd.f32 0.0, %v5136
        %v5138 = vpop.f32.mrf.mxu0
        %v5139 = vadd.f32 0.0, %v5138
        %5140 = vmatmul.bf16.gmra.mxu0 %v4886
        %v5141 = vpop.f32.mrf.mxu0
        %v5142 = vadd.f32 0.0, %v5141
        %v5143 = vpop.f32.mrf.mxu0
        %v5144 = vadd.f32 0.0, %v5143
        %5145 = vmatmul.bf16.gmra.mxu0 %v4887
        %v5146 = vpop.f32.mrf.mxu0
        %v5147 = vadd.f32 0.0, %v5146
        %v5148 = vpop.f32.mrf.mxu0
        %v5149 = vadd.f32 0.0, %v5148
        %5150 = vmatmul.bf16.gmra.mxu0 %v4888
        %v5151 = vpop.f32.mrf.mxu0
        %v5152 = vadd.f32 0.0, %v5151
        %v5153 = vpop.f32.mrf.mxu0
        %v5154 = vadd.f32 0.0, %v5153
        %5155 = vmatmul.bf16.gmra.mxu0 %v4889
        %v5156 = vpop.f32.mrf.mxu0
        %v5157 = vadd.f32 0.0, %v5156
        %v5158 = vpop.f32.mrf.mxu0
        %v5159 = vadd.f32 0.0, %v5158
        %5160 = vmatmul.bf16.gmra.mxu0 %v4890
        %v5161 = vpop.f32.mrf.mxu0
        %v5162 = vadd.f32 0.0, %v5161
        %v5163 = vpop.f32.mrf.mxu0
        %v5164 = vadd.f32 0.0, %v5163
        %5165 = vdwg.mxu0
        %v5166 = vpack.c.bf16 %v5029, %v5029
        %v5167 = vpack.c.bf16 %v5031, %v5031
        %v5168 = vpack.c.bf16 %v5034, %v5034
        %v5169 = vpack.c.bf16 %v5036, %v5036
        %v5170 = vpack.c.bf16 %v5039, %v5039
        %v5171 = vpack.c.bf16 %v5041, %v5041
        %v5172 = vpack.c.bf16 %v5044, %v5044
        %v5173 = vpack.c.bf16 %v5046, %v5046
        %v5174 = vpack.c.bf16 %v5049, %v5049
        %v5175 = vpack.c.bf16 %v5051, %v5051
        %v5176 = vpack.c.bf16 %v5054, %v5054
        %v5177 = vpack.c.bf16 %v5056, %v5056
        %v5178 = vpack.c.bf16 %v5059, %v5059
        %v5179 = vpack.c.bf16 %v5061, %v5061
        %v5180 = vpack.c.bf16 %v5064, %v5064
        %v5181 = vpack.c.bf16 %v5066, %v5066
        %v5182 = vpack.c.bf16 %v5078, %v5078
        %v5183 = vpack.c.bf16 %v5080, %v5080
        %v5184 = vpack.c.bf16 %v5083, %v5083
        %v5185 = vpack.c.bf16 %v5085, %v5085
        %v5186 = vpack.c.bf16 %v5088, %v5088
        %v5187 = vpack.c.bf16 %v5090, %v5090
        %v5188 = vpack.c.bf16 %v5093, %v5093
        %v5189 = vpack.c.bf16 %v5095, %v5095
        %v5190 = vpack.c.bf16 %v5098, %v5098
        %v5191 = vpack.c.bf16 %v5100, %v5100
        %v5192 = vpack.c.bf16 %v5103, %v5103
        %v5193 = vpack.c.bf16 %v5105, %v5105
        %v5194 = vpack.c.bf16 %v5108, %v5108
        %v5195 = vpack.c.bf16 %v5110, %v5110
        %v5196 = vpack.c.bf16 %v5113, %v5113
        %v5197 = vpack.c.bf16 %v5115, %v5115
        %v5198 = vpack.c.bf16 %v5127, %v5127
        %v5199 = vpack.c.bf16 %v5129, %v5129
        %v5200 = vpack.c.bf16 %v5132, %v5132
        %v5201 = vpack.c.bf16 %v5134, %v5134
        %v5202 = vpack.c.bf16 %v5137, %v5137
        %v5203 = vpack.c.bf16 %v5139, %v5139
        %v5204 = vpack.c.bf16 %v5142, %v5142
        %v5205 = vpack.c.bf16 %v5144, %v5144
        %v5206 = vpack.c.bf16 %v5147, %v5147
        %v5207 = vpack.c.bf16 %v5149, %v5149
        %v5208 = vpack.c.bf16 %v5152, %v5152
        %v5209 = vpack.c.bf16 %v5154, %v5154
        %v5210 = vpack.c.bf16 %v5157, %v5157
        %v5211 = vpack.c.bf16 %v5159, %v5159
        %v5212 = vpack.c.bf16 %v5162, %v5162
        %v5213 = vpack.c.bf16 %v5164, %v5164
        %v5222 = vunpack.c.l.b16 %v5166
        %v5223 = vunpack.c.l.b16 %v5167
        %v5224 = vunpack.c.l.b16 %v5168
        %v5225 = vunpack.c.l.b16 %v5169
        %v5226 = vunpack.c.l.b16 %v5170
        %v5227 = vunpack.c.l.b16 %v5171
        %v5228 = vunpack.c.l.b16 %v5172
        %v5229 = vunpack.c.l.b16 %v5173
        %v5230 = vpack.c.b16 %v5223, %v5222
        %v5231 = vpack.c.b16 %v5225, %v5224
        %v5232 = vpack.c.b16 %v5227, %v5226
        %v5233 = vpack.c.b16 %v5229, %v5228
        %v5242 = vunpack.c.l.b16 %v5182
        %v5243 = vunpack.c.l.b16 %v5183
        %v5244 = vunpack.c.l.b16 %v5184
        %v5245 = vunpack.c.l.b16 %v5185
        %v5246 = vunpack.c.l.b16 %v5186
        %v5247 = vunpack.c.l.b16 %v5187
        %v5248 = vunpack.c.l.b16 %v5188
        %v5249 = vunpack.c.l.b16 %v5189
        %v5250 = vpack.c.b16 %v5243, %v5242
        %v5251 = vpack.c.b16 %v5245, %v5244
        %v5252 = vpack.c.b16 %v5247, %v5246
        %v5253 = vpack.c.b16 %v5249, %v5248
        %v5255 = vsel %vm1083, %v5230, 0
        %v5258 = vsel %vm1083, %v5231, 0
        %v5261 = vsel %vm1083, %v5232, 0
        %v5264 = vsel %vm1083, %v5233, 0
        %v5267 = vsel %vm1083, %v5250, 0
        %v5270 = vsel %vm1083, %v5251, 0
        %v5273 = vsel %vm1083, %v5252, 0
        %v5276 = vsel %vm1083, %v5253, 0
        %5278 = vmatpush.bf16.xpose.msra.mxu0 0
        %5279 = vmatpush.bf16.xpose.msra.mxu0 0
        %5280 = vmatpush.bf16.xpose.msra.mxu0 0
        %5281 = vmatpush.bf16.xpose.msra.mxu0 0
        %5282 = vmatpush.bf16.xpose.msra.mxu0 %v5276
        %5283 = vmatpush.bf16.xpose.msra.mxu0 %v5273
        %5284 = vmatpush.bf16.xpose.msra.mxu0 %v5270
        %5285 = vmatpush.bf16.xpose.msra.mxu0 %v5267
        %5286 = vmatmul.bf16.gmra.mxu0 %v5255
        %v5287 = vpop.f32.mrf.mxu0
        %v5288 = vadd.f32 0.0, %v5287
        %v5289 = vpop.f32.mrf.mxu0
        %v5290 = vadd.f32 0.0, %v5289
        %5291 = vmatmul.bf16.gmra.mxu0 %v5258
        %v5292 = vpop.f32.mrf.mxu0
        %v5293 = vadd.f32 0.0, %v5292
        %v5294 = vpop.f32.mrf.mxu0
        %v5295 = vadd.f32 0.0, %v5294
        %5296 = vmatmul.bf16.gmra.mxu0 %v5261
        %v5297 = vpop.f32.mrf.mxu0
        %v5298 = vadd.f32 0.0, %v5297
        %v5299 = vpop.f32.mrf.mxu0
        %v5300 = vadd.f32 0.0, %v5299
        %5301 = vmatmul.bf16.gmra.mxu0 %v5264
        %v5302 = vpop.f32.mrf.mxu0
        %v5303 = vadd.f32 0.0, %v5302
        %v5304 = vpop.f32.mrf.mxu0
        %v5305 = vadd.f32 0.0, %v5304
        %5306 = vdwg.mxu0
        %v5315 = vunpack.c.l.b16 %v5174
        %v5316 = vunpack.c.l.b16 %v5175
        %v5317 = vunpack.c.l.b16 %v5176
        %v5318 = vunpack.c.l.b16 %v5177
        %v5319 = vunpack.c.l.b16 %v5178
        %v5320 = vunpack.c.l.b16 %v5179
        %v5321 = vunpack.c.l.b16 %v5180
        %v5322 = vunpack.c.l.b16 %v5181
        %v5323 = vpack.c.b16 %v5316, %v5315
        %v5324 = vpack.c.b16 %v5318, %v5317
        %v5325 = vpack.c.b16 %v5320, %v5319
        %v5326 = vpack.c.b16 %v5322, %v5321
        %v5335 = vunpack.c.l.b16 %v5190
        %v5336 = vunpack.c.l.b16 %v5191
        %v5337 = vunpack.c.l.b16 %v5192
        %v5338 = vunpack.c.l.b16 %v5193
        %v5339 = vunpack.c.l.b16 %v5194
        %v5340 = vunpack.c.l.b16 %v5195
        %v5341 = vunpack.c.l.b16 %v5196
        %v5342 = vunpack.c.l.b16 %v5197
        %v5343 = vpack.c.b16 %v5336, %v5335
        %v5344 = vpack.c.b16 %v5338, %v5337
        %v5345 = vpack.c.b16 %v5340, %v5339
        %v5346 = vpack.c.b16 %v5342, %v5341
        %v5348 = vsel %vm1083, %v5323, 0
        %v5351 = vsel %vm1083, %v5324, 0
        %v5354 = vsel %vm1083, %v5325, 0
        %v5357 = vsel %vm1083, %v5326, 0
        %v5360 = vsel %vm1083, %v5343, 0
        %v5363 = vsel %vm1083, %v5344, 0
        %v5366 = vsel %vm1083, %v5345, 0
        %v5369 = vsel %vm1083, %v5346, 0
        %5371 = vmatpush.bf16.xpose.msra.mxu0 0
        %5372 = vmatpush.bf16.xpose.msra.mxu0 0
        %5373 = vmatpush.bf16.xpose.msra.mxu0 0
        %5374 = vmatpush.bf16.xpose.msra.mxu0 0
        %5375 = vmatpush.bf16.xpose.msra.mxu0 %v5369
        %5376 = vmatpush.bf16.xpose.msra.mxu0 %v5366
        %5377 = vmatpush.bf16.xpose.msra.mxu0 %v5363
        %5378 = vmatpush.bf16.xpose.msra.mxu0 %v5360
        %5379 = vmatmul.bf16.gmra.mxu0 %v5348
        %v5380 = vpop.f32.mrf.mxu0
        %v5381 = vadd.f32 0.0, %v5380
        %v5382 = vpop.f32.mrf.mxu0
        %v5383 = vadd.f32 0.0, %v5382
        %5384 = vmatmul.bf16.gmra.mxu0 %v5351
        %v5385 = vpop.f32.mrf.mxu0
        %v5386 = vadd.f32 0.0, %v5385
        %v5387 = vpop.f32.mrf.mxu0
        %v5388 = vadd.f32 0.0, %v5387
        %5389 = vmatmul.bf16.gmra.mxu0 %v5354
        %v5390 = vpop.f32.mrf.mxu0
        %v5391 = vadd.f32 0.0, %v5390
        %v5392 = vpop.f32.mrf.mxu0
        %v5393 = vadd.f32 0.0, %v5392
        %5394 = vmatmul.bf16.gmra.mxu0 %v5357
        %v5395 = vpop.f32.mrf.mxu0
        %v5396 = vadd.f32 0.0, %v5395
        %v5397 = vpop.f32.mrf.mxu0
        %v5398 = vadd.f32 0.0, %v5397
        %5399 = vdwg.mxu0
        %v5400 = vsel %vm1238, %v5288, -1e+30
        %v5401 = vsel %vm1239, %v5290, -1e+30
        %v5402 = vsel %vm1240, %v5293, -1e+30
        %v5403 = vsel %vm1241, %v5295, -1e+30
        %v5404 = vsel %vm1242, %v5298, -1e+30
        %v5405 = vsel %vm1243, %v5300, -1e+30
        %v5406 = vsel %vm1244, %v5303, -1e+30
        %v5407 = vsel %vm1245, %v5305, -1e+30
        %v5408 = vsel %vm1238, %v5381, -1e+30
        %v5409 = vsel %vm1239, %v5383, -1e+30
        %v5410 = vsel %vm1240, %v5386, -1e+30
        %v5411 = vsel %vm1241, %v5388, -1e+30
        %v5412 = vsel %vm1242, %v5391, -1e+30
        %v5413 = vsel %vm1243, %v5393, -1e+30
        %v5414 = vsel %vm1244, %v5396, -1e+30
        %v5415 = vsel %vm1245, %v5398, -1e+30
        %v5416 = vsel %vm1262, %v5400, -inf
        %5417 = vmax.xlane.f32.xlu0 %v5416
        %v5418 = vpop.xlane.xlu0 %5417
        %v5419 = vsel %vm1262, %v5401, -inf
        %5420 = vmax.xlane.f32.xlu0 %v5419
        %v5421 = vpop.xlane.xlu0 %5420
        %v5422 = vsel %vm1262, %v5402, -inf
        %5423 = vmax.xlane.f32.xlu0 %v5422
        %v5424 = vpop.xlane.xlu0 %5423
        %v5425 = vsel %vm1262, %v5403, -inf
        %5426 = vmax.xlane.f32.xlu0 %v5425
        %v5427 = vpop.xlane.xlu0 %5426
        %v5428 = vsel %vm1262, %v5404, -inf
        %5429 = vmax.xlane.f32.xlu0 %v5428
        %v5430 = vpop.xlane.xlu0 %5429
        %v5431 = vsel %vm1262, %v5405, -inf
        %5432 = vmax.xlane.f32.xlu0 %v5431
        %v5433 = vpop.xlane.xlu0 %5432
        %v5434 = vsel %vm1262, %v5406, -inf
        %5435 = vmax.xlane.f32.xlu0 %v5434
        %v5436 = vpop.xlane.xlu0 %5435
        %v5437 = vsel %vm1262, %v5407, -inf
        %5438 = vmax.xlane.f32.xlu0 %v5437
        %v5439 = vpop.xlane.xlu0 %5438
        %v5440 = vsel %vm1262, %v5408, -inf
        %5441 = vmax.xlane.f32.xlu0 %v5440
        %v5442 = vpop.xlane.xlu0 %5441
        %v5443 = vsel %vm1262, %v5409, -inf
        %5444 = vmax.xlane.f32.xlu0 %v5443
        %v5445 = vpop.xlane.xlu0 %5444
        %v5446 = vsel %vm1262, %v5410, -inf
        %5447 = vmax.xlane.f32.xlu0 %v5446
        %v5448 = vpop.xlane.xlu0 %5447
        %v5449 = vsel %vm1262, %v5411, -inf
        %5450 = vmax.xlane.f32.xlu0 %v5449
        %v5451 = vpop.xlane.xlu0 %5450
        %v5452 = vsel %vm1262, %v5412, -inf
        %5453 = vmax.xlane.f32.xlu0 %v5452
        %v5454 = vpop.xlane.xlu0 %5453
        %v5455 = vsel %vm1262, %v5413, -inf
        %5456 = vmax.xlane.f32.xlu0 %v5455
        %v5457 = vpop.xlane.xlu0 %5456
        %v5458 = vsel %vm1262, %v5414, -inf
        %5459 = vmax.xlane.f32.xlu0 %v5458
        %v5460 = vpop.xlane.xlu0 %5459
        %v5461 = vsel %vm1262, %v5415, -inf
        %5462 = vmax.xlane.f32.xlu0 %v5461
        %v5463 = vpop.xlane.xlu0 %5462
        %v5464 = vsub.f32 %v5400, %v5418
        %v5465 = vsub.f32 %v5401, %v5421
        %v5466 = vsub.f32 %v5402, %v5424
        %v5467 = vsub.f32 %v5403, %v5427
        %v5468 = vsub.f32 %v5404, %v5430
        %v5469 = vsub.f32 %v5405, %v5433
        %v5470 = vsub.f32 %v5406, %v5436
        %v5471 = vsub.f32 %v5407, %v5439
        %v5472 = vsub.f32 %v5408, %v5442
        %v5473 = vsub.f32 %v5409, %v5445
        %v5474 = vsub.f32 %v5410, %v5448
        %v5475 = vsub.f32 %v5411, %v5451
        %v5476 = vsub.f32 %v5412, %v5454
        %v5477 = vsub.f32 %v5413, %v5457
        %v5478 = vsub.f32 %v5414, %v5460
        %v5479 = vsub.f32 %v5415, %v5463
        %v5480 = vmul.f32 %v5464, 1.442695
        %v5481 = vpow.pop %v5480
        %v5482 = vmul.f32 %v5465, 1.442695
        %v5483 = vpow.pop %v5482
        %v5484 = vmul.f32 %v5466, 1.442695
        %v5485 = vpow.pop %v5484
        %v5486 = vmul.f32 %v5467, 1.442695
        %v5487 = vpow.pop %v5486
        %v5488 = vmul.f32 %v5468, 1.442695
        %v5489 = vpow.pop %v5488
        %v5490 = vmul.f32 %v5469, 1.442695
        %v5491 = vpow.pop %v5490
        %v5492 = vmul.f32 %v5470, 1.442695
        %v5493 = vpow.pop %v5492
        %v5494 = vmul.f32 %v5471, 1.442695
        %v5495 = vpow.pop %v5494
        %v5496 = vmul.f32 %v5472, 1.442695
        %v5497 = vpow.pop %v5496
        %v5498 = vmul.f32 %v5473, 1.442695
        %v5499 = vpow.pop %v5498
        %v5500 = vmul.f32 %v5474, 1.442695
        %v5501 = vpow.pop %v5500
        %v5502 = vmul.f32 %v5475, 1.442695
        %v5503 = vpow.pop %v5502
        %v5504 = vmul.f32 %v5476, 1.442695
        %v5505 = vpow.pop %v5504
        %v5506 = vmul.f32 %v5477, 1.442695
        %v5507 = vpow.pop %v5506
        %v5508 = vmul.f32 %v5478, 1.442695
        %v5509 = vpow.pop %v5508
        %v5510 = vmul.f32 %v5479, 1.442695
        %v5511 = vpow.pop %v5510
        %v5512 = vsel %vm1262, %v5481, 0.0
        %5513 = vadd.xlane.f32.xlu0 %v5512
        %v5514 = vpop.xlane.xlu0 %5513
        %v5515 = vsel %vm1262, %v5483, 0.0
        %5516 = vadd.xlane.f32.xlu0 %v5515
        %v5517 = vpop.xlane.xlu0 %5516
        %v5518 = vsel %vm1262, %v5485, 0.0
        %5519 = vadd.xlane.f32.xlu0 %v5518
        %v5520 = vpop.xlane.xlu0 %5519
        %v5521 = vsel %vm1262, %v5487, 0.0
        %5522 = vadd.xlane.f32.xlu0 %v5521
        %v5523 = vpop.xlane.xlu0 %5522
        %v5524 = vsel %vm1262, %v5489, 0.0
        %5525 = vadd.xlane.f32.xlu0 %v5524
        %v5526 = vpop.xlane.xlu0 %5525
        %v5527 = vsel %vm1262, %v5491, 0.0
        %5528 = vadd.xlane.f32.xlu0 %v5527
        %v5529 = vpop.xlane.xlu0 %5528
        %v5530 = vsel %vm1262, %v5493, 0.0
        %5531 = vadd.xlane.f32.xlu0 %v5530
        %v5532 = vpop.xlane.xlu0 %5531
        %v5533 = vsel %vm1262, %v5495, 0.0
        %5534 = vadd.xlane.f32.xlu0 %v5533
        %v5535 = vpop.xlane.xlu0 %5534
        %v5536 = vsel %vm1262, %v5497, 0.0
        %5537 = vadd.xlane.f32.xlu0 %v5536
        %v5538 = vpop.xlane.xlu0 %5537
        %v5539 = vsel %vm1262, %v5499, 0.0
        %5540 = vadd.xlane.f32.xlu0 %v5539
        %v5541 = vpop.xlane.xlu0 %5540
        %v5542 = vsel %vm1262, %v5501, 0.0
        %5543 = vadd.xlane.f32.xlu0 %v5542
        %v5544 = vpop.xlane.xlu0 %5543
        %v5545 = vsel %vm1262, %v5503, 0.0
        %5546 = vadd.xlane.f32.xlu0 %v5545
        %v5547 = vpop.xlane.xlu0 %5546
        %v5548 = vsel %vm1262, %v5505, 0.0
        %5549 = vadd.xlane.f32.xlu0 %v5548
        %v5550 = vpop.xlane.xlu0 %5549
        %v5551 = vsel %vm1262, %v5507, 0.0
        %5552 = vadd.xlane.f32.xlu0 %v5551
        %v5553 = vpop.xlane.xlu0 %5552
        %v5554 = vsel %vm1262, %v5509, 0.0
        %5555 = vadd.xlane.f32.xlu0 %v5554
        %v5556 = vpop.xlane.xlu0 %5555
        %v5557 = vsel %vm1262, %v5511, 0.0
        %5558 = vadd.xlane.f32.xlu0 %v5557
        %v5559 = vpop.xlane.xlu0 %5558
        %v5560 = vrcp.pop %v5514
        %v5561 = vrcp.pop %v5517
        %v5562 = vrcp.pop %v5520
        %v5563 = vrcp.pop %v5523
        %v5564 = vrcp.pop %v5526
        %v5565 = vrcp.pop %v5529
        %v5566 = vrcp.pop %v5532
        %v5567 = vrcp.pop %v5535
        %v5568 = vrcp.pop %v5538
        %v5569 = vrcp.pop %v5541
        %v5570 = vrcp.pop %v5544
        %v5571 = vrcp.pop %v5547
        %v5572 = vrcp.pop %v5550
        %v5573 = vrcp.pop %v5553
        %v5574 = vrcp.pop %v5556
        %v5575 = vrcp.pop %v5559
        %v5576 = vmul.f32 %v5481, %v5560
        %v5577 = vmul.f32 %v5483, %v5561
        %v5578 = vmul.f32 %v5485, %v5562
        %v5579 = vmul.f32 %v5487, %v5563
        %v5580 = vmul.f32 %v5489, %v5564
        %v5581 = vmul.f32 %v5491, %v5565
        %v5582 = vmul.f32 %v5493, %v5566
        %v5583 = vmul.f32 %v5495, %v5567
        %v5584 = vmul.f32 %v5497, %v5568
        %v5585 = vmul.f32 %v5499, %v5569
        %v5586 = vmul.f32 %v5501, %v5570
        %v5587 = vmul.f32 %v5503, %v5571
        %v5588 = vmul.f32 %v5505, %v5572
        %v5589 = vmul.f32 %v5507, %v5573
        %v5590 = vmul.f32 %v5509, %v5574
        %v5591 = vmul.f32 %v5511, %v5575
        %v5592 = vpack.c.bf16 %v5576, %v5576
        %v5593 = vpack.c.bf16 %v5577, %v5577
        %v5594 = vpack.c.bf16 %v5578, %v5578
        %v5595 = vpack.c.bf16 %v5579, %v5579
        %v5596 = vpack.c.bf16 %v5580, %v5580
        %v5597 = vpack.c.bf16 %v5581, %v5581
        %v5598 = vpack.c.bf16 %v5582, %v5582
        %v5599 = vpack.c.bf16 %v5583, %v5583
        %v5600 = vpack.c.bf16 %v5584, %v5584
        %v5601 = vpack.c.bf16 %v5585, %v5585
        %v5602 = vpack.c.bf16 %v5586, %v5586
        %v5603 = vpack.c.bf16 %v5587, %v5587
        %v5604 = vpack.c.bf16 %v5588, %v5588
        %v5605 = vpack.c.bf16 %v5589, %v5589
        %v5606 = vpack.c.bf16 %v5590, %v5590
        %v5607 = vpack.c.bf16 %v5591, %v5591
        %v5616 = vunpack.c.l.b16 %v5592
        %v5617 = vunpack.c.l.b16 %v5593
        %v5618 = vunpack.c.l.b16 %v5594
        %v5619 = vunpack.c.l.b16 %v5595
        %v5620 = vunpack.c.l.b16 %v5596
        %v5621 = vunpack.c.l.b16 %v5597
        %v5622 = vunpack.c.l.b16 %v5598
        %v5623 = vunpack.c.l.b16 %v5599
        %v5624 = vpack.c.b16 %v5617, %v5616
        %v5625 = vpack.c.b16 %v5619, %v5618
        %v5626 = vpack.c.b16 %v5621, %v5620
        %v5627 = vpack.c.b16 %v5623, %v5622
        %v5636 = vunpack.c.l.b16 %v5198
        %v5637 = vunpack.c.l.b16 %v5199
        %v5638 = vunpack.c.l.b16 %v5200
        %v5639 = vunpack.c.l.b16 %v5201
        %v5640 = vunpack.c.l.b16 %v5202
        %v5641 = vunpack.c.l.b16 %v5203
        %v5642 = vunpack.c.l.b16 %v5204
        %v5643 = vunpack.c.l.b16 %v5205
        %v5644 = vpack.c.b16 %v5637, %v5636
        %v5645 = vpack.c.b16 %v5639, %v5638
        %v5646 = vpack.c.b16 %v5641, %v5640
        %v5647 = vpack.c.b16 %v5643, %v5642
        %v5653 = vsel %vm1262, %v5624, 0
        %v5656 = vsel %vm1262, %v5625, 0
        %v5659 = vsel %vm1262, %v5626, 0
        %v5662 = vsel %vm1262, %v5627, 0
        %5664 = vmatpush.bf16.msra.mxu0 0
        %5665 = vmatpush.bf16.msra.mxu0 0
        %5666 = vmatpush.bf16.msra.mxu0 0
        %5667 = vmatpush.bf16.msra.mxu0 0
        %5668 = vmatpush.bf16.msra.mxu0 %v5647
        %5669 = vmatpush.bf16.msra.mxu0 %v5646
        %5670 = vmatpush.bf16.msra.mxu0 %v5645
        %5671 = vmatpush.bf16.msra.mxu0 %v5644
        %5672 = vmatmul.bf16.gmra.mxu0 %v5653
        %v5673 = vpop.f32.mrf.mxu0
        %v5674 = vadd.f32 0.0, %v5673
        %v5675 = vpop.f32.mrf.mxu0
        %v5676 = vadd.f32 0.0, %v5675
        %5677 = vmatmul.bf16.gmra.mxu0 %v5656
        %v5678 = vpop.f32.mrf.mxu0
        %v5679 = vadd.f32 0.0, %v5678
        %v5680 = vpop.f32.mrf.mxu0
        %v5681 = vadd.f32 0.0, %v5680
        %5682 = vmatmul.bf16.gmra.mxu0 %v5659
        %v5683 = vpop.f32.mrf.mxu0
        %v5684 = vadd.f32 0.0, %v5683
        %v5685 = vpop.f32.mrf.mxu0
        %v5686 = vadd.f32 0.0, %v5685
        %5687 = vmatmul.bf16.gmra.mxu0 %v5662
        %v5688 = vpop.f32.mrf.mxu0
        %v5689 = vadd.f32 0.0, %v5688
        %v5690 = vpop.f32.mrf.mxu0
        %v5691 = vadd.f32 0.0, %v5690
        %5692 = vdwg.mxu0
        %v5701 = vunpack.c.l.b16 %v5600
        %v5702 = vunpack.c.l.b16 %v5601
        %v5703 = vunpack.c.l.b16 %v5602
        %v5704 = vunpack.c.l.b16 %v5603
        %v5705 = vunpack.c.l.b16 %v5604
        %v5706 = vunpack.c.l.b16 %v5605
        %v5707 = vunpack.c.l.b16 %v5606
        %v5708 = vunpack.c.l.b16 %v5607
        %v5709 = vpack.c.b16 %v5702, %v5701
        %v5710 = vpack.c.b16 %v5704, %v5703
        %v5711 = vpack.c.b16 %v5706, %v5705
        %v5712 = vpack.c.b16 %v5708, %v5707
        %v5721 = vunpack.c.l.b16 %v5206
        %v5722 = vunpack.c.l.b16 %v5207
        %v5723 = vunpack.c.l.b16 %v5208
        %v5724 = vunpack.c.l.b16 %v5209
        %v5725 = vunpack.c.l.b16 %v5210
        %v5726 = vunpack.c.l.b16 %v5211
        %v5727 = vunpack.c.l.b16 %v5212
        %v5728 = vunpack.c.l.b16 %v5213
        %v5729 = vpack.c.b16 %v5722, %v5721
        %v5730 = vpack.c.b16 %v5724, %v5723
        %v5731 = vpack.c.b16 %v5726, %v5725
        %v5732 = vpack.c.b16 %v5728, %v5727
        %v5738 = vsel %vm1262, %v5709, 0
        %v5741 = vsel %vm1262, %v5710, 0
        %v5744 = vsel %vm1262, %v5711, 0
        %v5747 = vsel %vm1262, %v5712, 0
        %5749 = vmatpush.bf16.msra.mxu0 0
        %5750 = vmatpush.bf16.msra.mxu0 0
        %5751 = vmatpush.bf16.msra.mxu0 0
        %5752 = vmatpush.bf16.msra.mxu0 0
        %5753 = vmatpush.bf16.msra.mxu0 %v5732
        %5754 = vmatpush.bf16.msra.mxu0 %v5731
        %5755 = vmatpush.bf16.msra.mxu0 %v5730
        %5756 = vmatpush.bf16.msra.mxu0 %v5729
        %5757 = vmatmul.bf16.gmra.mxu0 %v5738
        %v5758 = vpop.f32.mrf.mxu0
        %v5759 = vadd.f32 0.0, %v5758
        %v5760 = vpop.f32.mrf.mxu0
        %v5761 = vadd.f32 0.0, %v5760
        %5762 = vmatmul.bf16.gmra.mxu0 %v5741
        %v5763 = vpop.f32.mrf.mxu0
        %v5764 = vadd.f32 0.0, %v5763
        %v5765 = vpop.f32.mrf.mxu0
        %v5766 = vadd.f32 0.0, %v5765
        %5767 = vmatmul.bf16.gmra.mxu0 %v5744
        %v5768 = vpop.f32.mrf.mxu0
        %v5769 = vadd.f32 0.0, %v5768
        %v5770 = vpop.f32.mrf.mxu0
        %v5771 = vadd.f32 0.0, %v5770
        %5772 = vmatmul.bf16.gmra.mxu0 %v5747
        %v5773 = vpop.f32.mrf.mxu0
        %v5774 = vadd.f32 0.0, %v5773
        %v5775 = vpop.f32.mrf.mxu0
        %v5776 = vadd.f32 0.0, %v5775
        %5777 = vdwg.mxu0
        %v5778 = vpack.c.bf16 %v5676, %v5674
        %v5779 = vpack.c.bf16 %v5681, %v5679
        %v5780 = vpack.c.bf16 %v5686, %v5684
        %v5781 = vpack.c.bf16 %v5691, %v5689
        %v5782 = vpack.c.bf16 %v5761, %v5759
        %v5783 = vpack.c.bf16 %v5766, %v5764
        %v5784 = vpack.c.bf16 %v5771, %v5769
        %v5785 = vpack.c.bf16 %v5776, %v5774
        %5786 = vrot.lane.b32.xlu0 %v5230, 96
        %v5787 = vpop.permute.xlu0 %5786
        %5788 = vrot.lane.b32.xlu0 %v5231, 96
        %v5789 = vpop.permute.xlu0 %5788
        %5790 = vrot.lane.b32.xlu0 %v5232, 96
        %v5791 = vpop.permute.xlu0 %5790
        %5792 = vrot.lane.b32.xlu0 %v5233, 96
        %v5793 = vpop.permute.xlu0 %5792
        %5794 = vrot.lane.b32.xlu0 %v5250, 96
        %v5795 = vpop.permute.xlu0 %5794
        %5796 = vrot.lane.b32.xlu0 %v5251, 96
        %v5797 = vpop.permute.xlu0 %5796
        %5798 = vrot.lane.b32.xlu0 %v5252, 96
        %v5799 = vpop.permute.xlu0 %5798
        %5800 = vrot.lane.b32.xlu0 %v5253, 96
        %v5801 = vpop.permute.xlu0 %5800
        %v5803 = vsel %vm1083, %v5787, 0
        %v5806 = vsel %vm1083, %v5789, 0
        %v5809 = vsel %vm1083, %v5791, 0
        %v5812 = vsel %vm1083, %v5793, 0
        %v5815 = vsel %vm1083, %v5795, 0
        %v5818 = vsel %vm1083, %v5797, 0
        %v5821 = vsel %vm1083, %v5799, 0
        %v5824 = vsel %vm1083, %v5801, 0
        %5826 = vmatpush.bf16.xpose.msra.mxu0 0
        %5827 = vmatpush.bf16.xpose.msra.mxu0 0
        %5828 = vmatpush.bf16.xpose.msra.mxu0 0
        %5829 = vmatpush.bf16.xpose.msra.mxu0 0
        %5830 = vmatpush.bf16.xpose.msra.mxu0 %v5824
        %5831 = vmatpush.bf16.xpose.msra.mxu0 %v5821
        %5832 = vmatpush.bf16.xpose.msra.mxu0 %v5818
        %5833 = vmatpush.bf16.xpose.msra.mxu0 %v5815
        %5834 = vmatmul.bf16.gmra.mxu0 %v5803
        %v5835 = vpop.f32.mrf.mxu0
        %v5836 = vadd.f32 0.0, %v5835
        %v5837 = vpop.f32.mrf.mxu0
        %v5838 = vadd.f32 0.0, %v5837
        %5839 = vmatmul.bf16.gmra.mxu0 %v5806
        %v5840 = vpop.f32.mrf.mxu0
        %v5841 = vadd.f32 0.0, %v5840
        %v5842 = vpop.f32.mrf.mxu0
        %v5843 = vadd.f32 0.0, %v5842
        %5844 = vmatmul.bf16.gmra.mxu0 %v5809
        %v5845 = vpop.f32.mrf.mxu0
        %v5846 = vadd.f32 0.0, %v5845
        %v5847 = vpop.f32.mrf.mxu0
        %v5848 = vadd.f32 0.0, %v5847
        %5849 = vmatmul.bf16.gmra.mxu0 %v5812
        %v5850 = vpop.f32.mrf.mxu0
        %v5851 = vadd.f32 0.0, %v5850
        %v5852 = vpop.f32.mrf.mxu0
        %v5853 = vadd.f32 0.0, %v5852
        %5854 = vdwg.mxu0
        %5855 = vrot.lane.b32.xlu0 %v5323, 96
        %v5856 = vpop.permute.xlu0 %5855
        %5857 = vrot.lane.b32.xlu0 %v5324, 96
        %v5858 = vpop.permute.xlu0 %5857
        %5859 = vrot.lane.b32.xlu0 %v5325, 96
        %v5860 = vpop.permute.xlu0 %5859
        %5861 = vrot.lane.b32.xlu0 %v5326, 96
        %v5862 = vpop.permute.xlu0 %5861
        %5863 = vrot.lane.b32.xlu0 %v5343, 96
        %v5864 = vpop.permute.xlu0 %5863
        %5865 = vrot.lane.b32.xlu0 %v5344, 96
        %v5866 = vpop.permute.xlu0 %5865
        %5867 = vrot.lane.b32.xlu0 %v5345, 96
        %v5868 = vpop.permute.xlu0 %5867
        %5869 = vrot.lane.b32.xlu0 %v5346, 96
        %v5870 = vpop.permute.xlu0 %5869
        %v5872 = vsel %vm1083, %v5856, 0
        %v5875 = vsel %vm1083, %v5858, 0
        %v5878 = vsel %vm1083, %v5860, 0
        %v5881 = vsel %vm1083, %v5862, 0
        %v5884 = vsel %vm1083, %v5864, 0
        %v5887 = vsel %vm1083, %v5866, 0
        %v5890 = vsel %vm1083, %v5868, 0
        %v5893 = vsel %vm1083, %v5870, 0
        %5895 = vmatpush.bf16.xpose.msra.mxu0 0
        %5896 = vmatpush.bf16.xpose.msra.mxu0 0
        %5897 = vmatpush.bf16.xpose.msra.mxu0 0
        %5898 = vmatpush.bf16.xpose.msra.mxu0 0
        %5899 = vmatpush.bf16.xpose.msra.mxu0 %v5893
        %5900 = vmatpush.bf16.xpose.msra.mxu0 %v5890
        %5901 = vmatpush.bf16.xpose.msra.mxu0 %v5887
        %5902 = vmatpush.bf16.xpose.msra.mxu0 %v5884
        %5903 = vmatmul.bf16.gmra.mxu0 %v5872
        %v5904 = vpop.f32.mrf.mxu0
        %v5905 = vadd.f32 0.0, %v5904
        %v5906 = vpop.f32.mrf.mxu0
        %v5907 = vadd.f32 0.0, %v5906
        %5908 = vmatmul.bf16.gmra.mxu0 %v5875
        %v5909 = vpop.f32.mrf.mxu0
        %v5910 = vadd.f32 0.0, %v5909
        %v5911 = vpop.f32.mrf.mxu0
        %v5912 = vadd.f32 0.0, %v5911
        %5913 = vmatmul.bf16.gmra.mxu0 %v5878
        %v5914 = vpop.f32.mrf.mxu0
        %v5915 = vadd.f32 0.0, %v5914
        %v5916 = vpop.f32.mrf.mxu0
        %v5917 = vadd.f32 0.0, %v5916
        %5918 = vmatmul.bf16.gmra.mxu0 %v5881
        %v5919 = vpop.f32.mrf.mxu0
        %v5920 = vadd.f32 0.0, %v5919
        %v5921 = vpop.f32.mrf.mxu0
        %v5922 = vadd.f32 0.0, %v5921
        %5923 = vdwg.mxu0
        %v5924 = vsel %vm1238, %v5836, -1e+30
        %v5925 = vsel %vm1239, %v5838, -1e+30
        %v5926 = vsel %vm1240, %v5841, -1e+30
        %v5927 = vsel %vm1241, %v5843, -1e+30
        %v5928 = vsel %vm1242, %v5846, -1e+30
        %v5929 = vsel %vm1243, %v5848, -1e+30
        %v5930 = vsel %vm1244, %v5851, -1e+30
        %v5931 = vsel %vm1245, %v5853, -1e+30
        %v5932 = vsel %vm1238, %v5905, -1e+30
        %v5933 = vsel %vm1239, %v5907, -1e+30
        %v5934 = vsel %vm1240, %v5910, -1e+30
        %v5935 = vsel %vm1241, %v5912, -1e+30
        %v5936 = vsel %vm1242, %v5915, -1e+30
        %v5937 = vsel %vm1243, %v5917, -1e+30
        %v5938 = vsel %vm1244, %v5920, -1e+30
        %v5939 = vsel %vm1245, %v5922, -1e+30
        %v5940 = vsel %vm1262, %v5924, -inf
        %5941 = vmax.xlane.f32.xlu0 %v5940
        %v5942 = vpop.xlane.xlu0 %5941
        %v5943 = vsel %vm1262, %v5925, -inf
        %5944 = vmax.xlane.f32.xlu0 %v5943
        %v5945 = vpop.xlane.xlu0 %5944
        %v5946 = vsel %vm1262, %v5926, -inf
        %5947 = vmax.xlane.f32.xlu0 %v5946
        %v5948 = vpop.xlane.xlu0 %5947
        %v5949 = vsel %vm1262, %v5927, -inf
        %5950 = vmax.xlane.f32.xlu0 %v5949
        %v5951 = vpop.xlane.xlu0 %5950
        %v5952 = vsel %vm1262, %v5928, -inf
        %5953 = vmax.xlane.f32.xlu0 %v5952
        %v5954 = vpop.xlane.xlu0 %5953
        %v5955 = vsel %vm1262, %v5929, -inf
        %5956 = vmax.xlane.f32.xlu0 %v5955
        %v5957 = vpop.xlane.xlu0 %5956
        %v5958 = vsel %vm1262, %v5930, -inf
        %5959 = vmax.xlane.f32.xlu0 %v5958
        %v5960 = vpop.xlane.xlu0 %5959
        %v5961 = vsel %vm1262, %v5931, -inf
        %5962 = vmax.xlane.f32.xlu0 %v5961
        %v5963 = vpop.xlane.xlu0 %5962
        %v5964 = vsel %vm1262, %v5932, -inf
        %5965 = vmax.xlane.f32.xlu0 %v5964
        %v5966 = vpop.xlane.xlu0 %5965
        %v5967 = vsel %vm1262, %v5933, -inf
        %5968 = vmax.xlane.f32.xlu0 %v5967
        %v5969 = vpop.xlane.xlu0 %5968
        %v5970 = vsel %vm1262, %v5934, -inf
        %5971 = vmax.xlane.f32.xlu0 %v5970
        %v5972 = vpop.xlane.xlu0 %5971
        %v5973 = vsel %vm1262, %v5935, -inf
        %5974 = vmax.xlane.f32.xlu0 %v5973
        %v5975 = vpop.xlane.xlu0 %5974
        %v5976 = vsel %vm1262, %v5936, -inf
        %5977 = vmax.xlane.f32.xlu0 %v5976
        %v5978 = vpop.xlane.xlu0 %5977
        %v5979 = vsel %vm1262, %v5937, -inf
        %5980 = vmax.xlane.f32.xlu0 %v5979
        %v5981 = vpop.xlane.xlu0 %5980
        %v5982 = vsel %vm1262, %v5938, -inf
        %5983 = vmax.xlane.f32.xlu0 %v5982
        %v5984 = vpop.xlane.xlu0 %5983
        %v5985 = vsel %vm1262, %v5939, -inf
        %5986 = vmax.xlane.f32.xlu0 %v5985
        %v5987 = vpop.xlane.xlu0 %5986
        %v5988 = vsub.f32 %v5924, %v5942
        %v5989 = vsub.f32 %v5925, %v5945
        %v5990 = vsub.f32 %v5926, %v5948
        %v5991 = vsub.f32 %v5927, %v5951
        %v5992 = vsub.f32 %v5928, %v5954
        %v5993 = vsub.f32 %v5929, %v5957
        %v5994 = vsub.f32 %v5930, %v5960
        %v5995 = vsub.f32 %v5931, %v5963
        %v5996 = vsub.f32 %v5932, %v5966
        %v5997 = vsub.f32 %v5933, %v5969
        %v5998 = vsub.f32 %v5934, %v5972
        %v5999 = vsub.f32 %v5935, %v5975
        %v6000 = vsub.f32 %v5936, %v5978
        %v6001 = vsub.f32 %v5937, %v5981
        %v6002 = vsub.f32 %v5938, %v5984
        %v6003 = vsub.f32 %v5939, %v5987
        %v6004 = vmul.f32 %v5988, 1.442695
        %v6005 = vpow.pop %v6004
        %v6006 = vmul.f32 %v5989, 1.442695
        %v6007 = vpow.pop %v6006
        %v6008 = vmul.f32 %v5990, 1.442695
        %v6009 = vpow.pop %v6008
        %v6010 = vmul.f32 %v5991, 1.442695
        %v6011 = vpow.pop %v6010
        %v6012 = vmul.f32 %v5992, 1.442695
        %v6013 = vpow.pop %v6012
        %v6014 = vmul.f32 %v5993, 1.442695
        %v6015 = vpow.pop %v6014
        %v6016 = vmul.f32 %v5994, 1.442695
        %v6017 = vpow.pop %v6016
        %v6018 = vmul.f32 %v5995, 1.442695
        %v6019 = vpow.pop %v6018
        %v6020 = vmul.f32 %v5996, 1.442695
        %v6021 = vpow.pop %v6020
        %v6022 = vmul.f32 %v5997, 1.442695
        %v6023 = vpow.pop %v6022
        %v6024 = vmul.f32 %v5998, 1.442695
        %v6025 = vpow.pop %v6024
        %v6026 = vmul.f32 %v5999, 1.442695
        %v6027 = vpow.pop %v6026
        %v6028 = vmul.f32 %v6000, 1.442695
        %v6029 = vpow.pop %v6028
        %v6030 = vmul.f32 %v6001, 1.442695
        %v6031 = vpow.pop %v6030
        %v6032 = vmul.f32 %v6002, 1.442695
        %v6033 = vpow.pop %v6032
        %v6034 = vmul.f32 %v6003, 1.442695
        %v6035 = vpow.pop %v6034
        %v6036 = vsel %vm1262, %v6005, 0.0
        %6037 = vadd.xlane.f32.xlu0 %v6036
        %v6038 = vpop.xlane.xlu0 %6037
        %v6039 = vsel %vm1262, %v6007, 0.0
        %6040 = vadd.xlane.f32.xlu0 %v6039
        %v6041 = vpop.xlane.xlu0 %6040
        %v6042 = vsel %vm1262, %v6009, 0.0
        %6043 = vadd.xlane.f32.xlu0 %v6042
        %v6044 = vpop.xlane.xlu0 %6043
        %v6045 = vsel %vm1262, %v6011, 0.0
        %6046 = vadd.xlane.f32.xlu0 %v6045
        %v6047 = vpop.xlane.xlu0 %6046
        %v6048 = vsel %vm1262, %v6013, 0.0
        %6049 = vadd.xlane.f32.xlu0 %v6048
        %v6050 = vpop.xlane.xlu0 %6049
        %v6051 = vsel %vm1262, %v6015, 0.0
        %6052 = vadd.xlane.f32.xlu0 %v6051
        %v6053 = vpop.xlane.xlu0 %6052
        %v6054 = vsel %vm1262, %v6017, 0.0
        %6055 = vadd.xlane.f32.xlu0 %v6054
        %v6056 = vpop.xlane.xlu0 %6055
        %v6057 = vsel %vm1262, %v6019, 0.0
        %6058 = vadd.xlane.f32.xlu0 %v6057
        %v6059 = vpop.xlane.xlu0 %6058
        %v6060 = vsel %vm1262, %v6021, 0.0
        %6061 = vadd.xlane.f32.xlu0 %v6060
        %v6062 = vpop.xlane.xlu0 %6061
        %v6063 = vsel %vm1262, %v6023, 0.0
        %6064 = vadd.xlane.f32.xlu0 %v6063
        %v6065 = vpop.xlane.xlu0 %6064
        %v6066 = vsel %vm1262, %v6025, 0.0
        %6067 = vadd.xlane.f32.xlu0 %v6066
        %v6068 = vpop.xlane.xlu0 %6067
        %v6069 = vsel %vm1262, %v6027, 0.0
        %6070 = vadd.xlane.f32.xlu0 %v6069
        %v6071 = vpop.xlane.xlu0 %6070
        %v6072 = vsel %vm1262, %v6029, 0.0
        %6073 = vadd.xlane.f32.xlu0 %v6072
        %v6074 = vpop.xlane.xlu0 %6073
        %v6075 = vsel %vm1262, %v6031, 0.0
        %6076 = vadd.xlane.f32.xlu0 %v6075
        %v6077 = vpop.xlane.xlu0 %6076
        %v6078 = vsel %vm1262, %v6033, 0.0
        %6079 = vadd.xlane.f32.xlu0 %v6078
        %v6080 = vpop.xlane.xlu0 %6079
        %v6081 = vsel %vm1262, %v6035, 0.0
        %6082 = vadd.xlane.f32.xlu0 %v6081
        %v6083 = vpop.xlane.xlu0 %6082
        %v6084 = vrcp.pop %v6038
        %v6085 = vrcp.pop %v6041
        %v6086 = vrcp.pop %v6044
        %v6087 = vrcp.pop %v6047
        %v6088 = vrcp.pop %v6050
        %v6089 = vrcp.pop %v6053
        %v6090 = vrcp.pop %v6056
        %v6091 = vrcp.pop %v6059
        %v6092 = vrcp.pop %v6062
        %v6093 = vrcp.pop %v6065
        %v6094 = vrcp.pop %v6068
        %v6095 = vrcp.pop %v6071
        %v6096 = vrcp.pop %v6074
        %v6097 = vrcp.pop %v6077
        %v6098 = vrcp.pop %v6080
        %v6099 = vrcp.pop %v6083
        %v6100 = vmul.f32 %v6005, %v6084
        %v6101 = vmul.f32 %v6007, %v6085
        %v6102 = vmul.f32 %v6009, %v6086
        %v6103 = vmul.f32 %v6011, %v6087
        %v6104 = vmul.f32 %v6013, %v6088
        %v6105 = vmul.f32 %v6015, %v6089
        %v6106 = vmul.f32 %v6017, %v6090
        %v6107 = vmul.f32 %v6019, %v6091
        %v6108 = vmul.f32 %v6021, %v6092
        %v6109 = vmul.f32 %v6023, %v6093
        %v6110 = vmul.f32 %v6025, %v6094
        %v6111 = vmul.f32 %v6027, %v6095
        %v6112 = vmul.f32 %v6029, %v6096
        %v6113 = vmul.f32 %v6031, %v6097
        %v6114 = vmul.f32 %v6033, %v6098
        %v6115 = vmul.f32 %v6035, %v6099
        %v6116 = vpack.c.bf16 %v6100, %v6100
        %v6117 = vpack.c.bf16 %v6101, %v6101
        %v6118 = vpack.c.bf16 %v6102, %v6102
        %v6119 = vpack.c.bf16 %v6103, %v6103
        %v6120 = vpack.c.bf16 %v6104, %v6104
        %v6121 = vpack.c.bf16 %v6105, %v6105
        %v6122 = vpack.c.bf16 %v6106, %v6106
        %v6123 = vpack.c.bf16 %v6107, %v6107
        %v6124 = vpack.c.bf16 %v6108, %v6108
        %v6125 = vpack.c.bf16 %v6109, %v6109
        %v6126 = vpack.c.bf16 %v6110, %v6110
        %v6127 = vpack.c.bf16 %v6111, %v6111
        %v6128 = vpack.c.bf16 %v6112, %v6112
        %v6129 = vpack.c.bf16 %v6113, %v6113
        %v6130 = vpack.c.bf16 %v6114, %v6114
        %v6131 = vpack.c.bf16 %v6115, %v6115
        %v6140 = vunpack.c.l.b16 %v6116
        %v6141 = vunpack.c.l.b16 %v6117
        %v6142 = vunpack.c.l.b16 %v6118
        %v6143 = vunpack.c.l.b16 %v6119
        %v6144 = vunpack.c.l.b16 %v6120
        %v6145 = vunpack.c.l.b16 %v6121
        %v6146 = vunpack.c.l.b16 %v6122
        %v6147 = vunpack.c.l.b16 %v6123
        %v6148 = vpack.c.b16 %v6141, %v6140
        %v6149 = vpack.c.b16 %v6143, %v6142
        %v6150 = vpack.c.b16 %v6145, %v6144
        %v6151 = vpack.c.b16 %v6147, %v6146
        %6152 = vrot.lane.b32.xlu0 %v5644, 96
        %v6153 = vpop.permute.xlu0 %6152
        %6154 = vrot.lane.b32.xlu0 %v5645, 96
        %v6155 = vpop.permute.xlu0 %6154
        %6156 = vrot.lane.b32.xlu0 %v5646, 96
        %v6157 = vpop.permute.xlu0 %6156
        %6158 = vrot.lane.b32.xlu0 %v5647, 96
        %v6159 = vpop.permute.xlu0 %6158
        %v6165 = vsel %vm1262, %v6148, 0
        %v6168 = vsel %vm1262, %v6149, 0
        %v6171 = vsel %vm1262, %v6150, 0
        %v6174 = vsel %vm1262, %v6151, 0
        %6176 = vmatpush.bf16.msra.mxu0 0
        %6177 = vmatpush.bf16.msra.mxu0 0
        %6178 = vmatpush.bf16.msra.mxu0 0
        %6179 = vmatpush.bf16.msra.mxu0 0
        %6180 = vmatpush.bf16.msra.mxu0 %v6159
        %6181 = vmatpush.bf16.msra.mxu0 %v6157
        %6182 = vmatpush.bf16.msra.mxu0 %v6155
        %6183 = vmatpush.bf16.msra.mxu0 %v6153
        %6184 = vmatmul.bf16.gmra.mxu0 %v6165
        %v6185 = vpop.f32.mrf.mxu0
        %v6186 = vadd.f32 0.0, %v6185
        %v6187 = vpop.f32.mrf.mxu0
        %v6188 = vadd.f32 0.0, %v6187
        %6189 = vmatmul.bf16.gmra.mxu0 %v6168
        %v6190 = vpop.f32.mrf.mxu0
        %v6191 = vadd.f32 0.0, %v6190
        %v6192 = vpop.f32.mrf.mxu0
        %v6193 = vadd.f32 0.0, %v6192
        %6194 = vmatmul.bf16.gmra.mxu0 %v6171
        %v6195 = vpop.f32.mrf.mxu0
        %v6196 = vadd.f32 0.0, %v6195
        %v6197 = vpop.f32.mrf.mxu0
        %v6198 = vadd.f32 0.0, %v6197
        %6199 = vmatmul.bf16.gmra.mxu0 %v6174
        %v6200 = vpop.f32.mrf.mxu0
        %v6201 = vadd.f32 0.0, %v6200
        %v6202 = vpop.f32.mrf.mxu0
        %v6203 = vadd.f32 0.0, %v6202
        %6204 = vdwg.mxu0
        %v6213 = vunpack.c.l.b16 %v6124
        %v6214 = vunpack.c.l.b16 %v6125
        %v6215 = vunpack.c.l.b16 %v6126
        %v6216 = vunpack.c.l.b16 %v6127
        %v6217 = vunpack.c.l.b16 %v6128
        %v6218 = vunpack.c.l.b16 %v6129
        %v6219 = vunpack.c.l.b16 %v6130
        %v6220 = vunpack.c.l.b16 %v6131
        %v6221 = vpack.c.b16 %v6214, %v6213
        %v6222 = vpack.c.b16 %v6216, %v6215
        %v6223 = vpack.c.b16 %v6218, %v6217
        %v6224 = vpack.c.b16 %v6220, %v6219
        %6225 = vrot.lane.b32.xlu0 %v5729, 96
        %v6226 = vpop.permute.xlu0 %6225
        %6227 = vrot.lane.b32.xlu0 %v5730, 96
        %v6228 = vpop.permute.xlu0 %6227
        %6229 = vrot.lane.b32.xlu0 %v5731, 96
        %v6230 = vpop.permute.xlu0 %6229
        %6231 = vrot.lane.b32.xlu0 %v5732, 96
        %v6232 = vpop.permute.xlu0 %6231
        %v6238 = vsel %vm1262, %v6221, 0
        %v6241 = vsel %vm1262, %v6222, 0
        %v6244 = vsel %vm1262, %v6223, 0
        %v6247 = vsel %vm1262, %v6224, 0
        %6249 = vmatpush.bf16.msra.mxu0 0
        %6250 = vmatpush.bf16.msra.mxu0 0
        %6251 = vmatpush.bf16.msra.mxu0 0
        %6252 = vmatpush.bf16.msra.mxu0 0
        %6253 = vmatpush.bf16.msra.mxu0 %v6232
        %6254 = vmatpush.bf16.msra.mxu0 %v6230
        %6255 = vmatpush.bf16.msra.mxu0 %v6228
        %6256 = vmatpush.bf16.msra.mxu0 %v6226
        %6257 = vmatmul.bf16.gmra.mxu0 %v6238
        %v6258 = vpop.f32.mrf.mxu0
        %v6259 = vadd.f32 0.0, %v6258
        %v6260 = vpop.f32.mrf.mxu0
        %v6261 = vadd.f32 0.0, %v6260
        %6262 = vmatmul.bf16.gmra.mxu0 %v6241
        %v6263 = vpop.f32.mrf.mxu0
        %v6264 = vadd.f32 0.0, %v6263
        %v6265 = vpop.f32.mrf.mxu0
        %v6266 = vadd.f32 0.0, %v6265
        %6267 = vmatmul.bf16.gmra.mxu0 %v6244
        %v6268 = vpop.f32.mrf.mxu0
        %v6269 = vadd.f32 0.0, %v6268
        %v6270 = vpop.f32.mrf.mxu0
        %v6271 = vadd.f32 0.0, %v6270
        %6272 = vmatmul.bf16.gmra.mxu0 %v6247
        %v6273 = vpop.f32.mrf.mxu0
        %v6274 = vadd.f32 0.0, %v6273
        %v6275 = vpop.f32.mrf.mxu0
        %v6276 = vadd.f32 0.0, %v6275
        %6277 = vdwg.mxu0
        %v6278 = vpack.c.bf16 %v6188, %v6186
        %v6279 = vpack.c.bf16 %v6193, %v6191
        %v6280 = vpack.c.bf16 %v6198, %v6196
        %v6281 = vpack.c.bf16 %v6203, %v6201
        %v6282 = vpack.c.bf16 %v6261, %v6259
        %v6283 = vpack.c.bf16 %v6266, %v6264
        %v6284 = vpack.c.bf16 %v6271, %v6269
        %v6285 = vpack.c.bf16 %v6276, %v6274
        %v6290 = vunpack.c.l.b16 %v4613
        %v6291 = vunpack.c.l.b16 %v4614
        %v6292 = vunpack.c.l.b16 %v4615
        %v6293 = vunpack.c.l.b16 %v4616
        %v6294 = vpack.c.b16 %v6291, %v6290
        %v6295 = vpack.c.b16 %v6293, %v6292
        %v6299 = vsel %vm1083, %v6278, 0
        %v6302 = vsel %vm1083, %v6279, 0
        %v6305 = vsel %vm1083, %v6280, 0
        %v6308 = vsel %vm1083, %v6281, 0
        %v6311 = vsel %vm1083, %v6282, 0
        %v6314 = vsel %vm1083, %v6283, 0
        %v6317 = vsel %vm1083, %v6284, 0
        %v6320 = vsel %vm1083, %v6285, 0
        %6322 = vmatpush.bf16.msra.mxu0 0
        %6323 = vmatpush.bf16.msra.mxu0 0
        %6324 = vmatpush.bf16.msra.mxu0 0
        %6325 = vmatpush.bf16.msra.mxu0 0
        %6326 = vmatpush.bf16.msra.mxu0 0
        %6327 = vmatpush.bf16.msra.mxu0 0
        %6328 = vmatpush.bf16.msra.mxu0 %v6295
        %6329 = vmatpush.bf16.msra.mxu0 %v6294
        %6330 = vmatmul.bf16.gmra.mxu0 %v6299
        %v6331 = vpop.f32.mrf.mxu0
        %v6332 = vadd.f32 0.0, %v6331
        %v6333 = vpop.f32.mrf.mxu0
        %v6334 = vadd.f32 0.0, %v6333
        %6335 = vmatmul.bf16.gmra.mxu0 %v6302
        %v6336 = vpop.f32.mrf.mxu0
        %v6337 = vadd.f32 0.0, %v6336
        %v6338 = vpop.f32.mrf.mxu0
        %v6339 = vadd.f32 0.0, %v6338
        %6340 = vmatmul.bf16.gmra.mxu0 %v6305
        %v6341 = vpop.f32.mrf.mxu0
        %v6342 = vadd.f32 0.0, %v6341
        %v6343 = vpop.f32.mrf.mxu0
        %v6344 = vadd.f32 0.0, %v6343
        %6345 = vmatmul.bf16.gmra.mxu0 %v6308
        %v6346 = vpop.f32.mrf.mxu0
        %v6347 = vadd.f32 0.0, %v6346
        %v6348 = vpop.f32.mrf.mxu0
        %v6349 = vadd.f32 0.0, %v6348
        %6350 = vmatmul.bf16.gmra.mxu0 %v6311
        %v6351 = vpop.f32.mrf.mxu0
        %v6352 = vadd.f32 0.0, %v6351
        %v6353 = vpop.f32.mrf.mxu0
        %v6354 = vadd.f32 0.0, %v6353
        %6355 = vmatmul.bf16.gmra.mxu0 %v6314
        %v6356 = vpop.f32.mrf.mxu0
        %v6357 = vadd.f32 0.0, %v6356
        %v6358 = vpop.f32.mrf.mxu0
        %v6359 = vadd.f32 0.0, %v6358
        %6360 = vmatmul.bf16.gmra.mxu0 %v6317
        %v6361 = vpop.f32.mrf.mxu0
        %v6362 = vadd.f32 0.0, %v6361
        %v6363 = vpop.f32.mrf.mxu0
        %v6364 = vadd.f32 0.0, %v6363
        %6365 = vmatmul.bf16.gmra.mxu0 %v6320
        %v6366 = vpop.f32.mrf.mxu0
        %v6367 = vadd.f32 0.0, %v6366
        %v6368 = vpop.f32.mrf.mxu0
        %v6369 = vadd.f32 0.0, %v6368
        %6370 = vdwg.mxu0
        %v6375 = vunpack.c.l.b16 %v4609
        %v6376 = vunpack.c.l.b16 %v4610
        %v6377 = vunpack.c.l.b16 %v4611
        %v6378 = vunpack.c.l.b16 %v4612
        %v6379 = vpack.c.b16 %v6376, %v6375
        %v6380 = vpack.c.b16 %v6378, %v6377
        %v6384 = vsel %vm1083, %v5778, 0
        %v6387 = vsel %vm1083, %v5779, 0
        %v6390 = vsel %vm1083, %v5780, 0
        %v6393 = vsel %vm1083, %v5781, 0
        %v6396 = vsel %vm1083, %v5782, 0
        %v6399 = vsel %vm1083, %v5783, 0
        %v6402 = vsel %vm1083, %v5784, 0
        %v6405 = vsel %vm1083, %v5785, 0
        %6407 = vmatpush.bf16.msra.mxu0 0
        %6408 = vmatpush.bf16.msra.mxu0 0
        %6409 = vmatpush.bf16.msra.mxu0 0
        %6410 = vmatpush.bf16.msra.mxu0 0
        %6411 = vmatpush.bf16.msra.mxu0 0
        %6412 = vmatpush.bf16.msra.mxu0 0
        %6413 = vmatpush.bf16.msra.mxu0 %v6380
        %6414 = vmatpush.bf16.msra.mxu0 %v6379
        %6415 = vmatmul.bf16.gmra.mxu0 %v6384
        %v6416 = vpop.f32.mrf.mxu0
        %v6417 = vadd.f32 %v6332, %v6416
        %v6418 = vpop.f32.mrf.mxu0
        %v6419 = vadd.f32 %v6334, %v6418
        %6420 = vmatmul.bf16.gmra.mxu0 %v6387
        %v6421 = vpop.f32.mrf.mxu0
        %v6422 = vadd.f32 %v6337, %v6421
        %v6423 = vpop.f32.mrf.mxu0
        %v6424 = vadd.f32 %v6339, %v6423
        %6425 = vmatmul.bf16.gmra.mxu0 %v6390
        %v6426 = vpop.f32.mrf.mxu0
        %v6427 = vadd.f32 %v6342, %v6426
        %v6428 = vpop.f32.mrf.mxu0
        %v6429 = vadd.f32 %v6344, %v6428
        %6430 = vmatmul.bf16.gmra.mxu0 %v6393
        %v6431 = vpop.f32.mrf.mxu0
        %v6432 = vadd.f32 %v6347, %v6431
        %v6433 = vpop.f32.mrf.mxu0
        %v6434 = vadd.f32 %v6349, %v6433
        %6435 = vmatmul.bf16.gmra.mxu0 %v6396
        %v6436 = vpop.f32.mrf.mxu0
        %v6437 = vadd.f32 %v6352, %v6436
        %v6438 = vpop.f32.mrf.mxu0
        %v6439 = vadd.f32 %v6354, %v6438
        %6440 = vmatmul.bf16.gmra.mxu0 %v6399
        %v6441 = vpop.f32.mrf.mxu0
        %v6442 = vadd.f32 %v6357, %v6441
        %v6443 = vpop.f32.mrf.mxu0
        %v6444 = vadd.f32 %v6359, %v6443
        %6445 = vmatmul.bf16.gmra.mxu0 %v6402
        %v6446 = vpop.f32.mrf.mxu0
        %v6447 = vadd.f32 %v6362, %v6446
        %v6448 = vpop.f32.mrf.mxu0
        %v6449 = vadd.f32 %v6364, %v6448
        %6450 = vmatmul.bf16.gmra.mxu0 %v6405
        %v6451 = vpop.f32.mrf.mxu0
        %v6452 = vadd.f32 %v6367, %v6451
        %v6453 = vpop.f32.mrf.mxu0
        %v6454 = vadd.f32 %v6369, %v6453
        %6455 = vdwg.mxu0
        %6456 = vrot.lane.b32.xlu0 %v5230, 64
        %v6457 = vpop.permute.xlu0 %6456
        %6458 = vrot.lane.b32.xlu0 %v5231, 64
        %v6459 = vpop.permute.xlu0 %6458
        %6460 = vrot.lane.b32.xlu0 %v5232, 64
        %v6461 = vpop.permute.xlu0 %6460
        %6462 = vrot.lane.b32.xlu0 %v5233, 64
        %v6463 = vpop.permute.xlu0 %6462
        %6464 = vrot.lane.b32.xlu0 %v5250, 64
        %v6465 = vpop.permute.xlu0 %6464
        %6466 = vrot.lane.b32.xlu0 %v5251, 64
        %v6467 = vpop.permute.xlu0 %6466
        %6468 = vrot.lane.b32.xlu0 %v5252, 64
        %v6469 = vpop.permute.xlu0 %6468
        %6470 = vrot.lane.b32.xlu0 %v5253, 64
        %v6471 = vpop.permute.xlu0 %6470
        %v6473 = vsel %vm1083, %v6457, 0
        %v6476 = vsel %vm1083, %v6459, 0
        %v6479 = vsel %vm1083, %v6461, 0
        %v6482 = vsel %vm1083, %v6463, 0
        %v6485 = vsel %vm1083, %v6465, 0
        %v6488 = vsel %vm1083, %v6467, 0
        %v6491 = vsel %vm1083, %v6469, 0
        %v6494 = vsel %vm1083, %v6471, 0
        %6496 = vmatpush.bf16.xpose.msra.mxu0 0
        %6497 = vmatpush.bf16.xpose.msra.mxu0 0
        %6498 = vmatpush.bf16.xpose.msra.mxu0 0
        %6499 = vmatpush.bf16.xpose.msra.mxu0 0
        %6500 = vmatpush.bf16.xpose.msra.mxu0 %v6494
        %6501 = vmatpush.bf16.xpose.msra.mxu0 %v6491
        %6502 = vmatpush.bf16.xpose.msra.mxu0 %v6488
        %6503 = vmatpush.bf16.xpose.msra.mxu0 %v6485
        %6504 = vmatmul.bf16.gmra.mxu0 %v6473
        %v6505 = vpop.f32.mrf.mxu0
        %v6506 = vadd.f32 0.0, %v6505
        %v6507 = vpop.f32.mrf.mxu0
        %v6508 = vadd.f32 0.0, %v6507
        %6509 = vmatmul.bf16.gmra.mxu0 %v6476
        %v6510 = vpop.f32.mrf.mxu0
        %v6511 = vadd.f32 0.0, %v6510
        %v6512 = vpop.f32.mrf.mxu0
        %v6513 = vadd.f32 0.0, %v6512
        %6514 = vmatmul.bf16.gmra.mxu0 %v6479
        %v6515 = vpop.f32.mrf.mxu0
        %v6516 = vadd.f32 0.0, %v6515
        %v6517 = vpop.f32.mrf.mxu0
        %v6518 = vadd.f32 0.0, %v6517
        %6519 = vmatmul.bf16.gmra.mxu0 %v6482
        %v6520 = vpop.f32.mrf.mxu0
        %v6521 = vadd.f32 0.0, %v6520
        %v6522 = vpop.f32.mrf.mxu0
        %v6523 = vadd.f32 0.0, %v6522
        %6524 = vdwg.mxu0
        %6525 = vrot.lane.b32.xlu0 %v5323, 64
        %v6526 = vpop.permute.xlu0 %6525
        %6527 = vrot.lane.b32.xlu0 %v5324, 64
        %v6528 = vpop.permute.xlu0 %6527
        %6529 = vrot.lane.b32.xlu0 %v5325, 64
        %v6530 = vpop.permute.xlu0 %6529
        %6531 = vrot.lane.b32.xlu0 %v5326, 64
        %v6532 = vpop.permute.xlu0 %6531
        %6533 = vrot.lane.b32.xlu0 %v5343, 64
        %v6534 = vpop.permute.xlu0 %6533
        %6535 = vrot.lane.b32.xlu0 %v5344, 64
        %v6536 = vpop.permute.xlu0 %6535
        %6537 = vrot.lane.b32.xlu0 %v5345, 64
        %v6538 = vpop.permute.xlu0 %6537
        %6539 = vrot.lane.b32.xlu0 %v5346, 64
        %v6540 = vpop.permute.xlu0 %6539
        %v6542 = vsel %vm1083, %v6526, 0
        %v6545 = vsel %vm1083, %v6528, 0
        %v6548 = vsel %vm1083, %v6530, 0
        %v6551 = vsel %vm1083, %v6532, 0
        %v6554 = vsel %vm1083, %v6534, 0
        %v6557 = vsel %vm1083, %v6536, 0
        %v6560 = vsel %vm1083, %v6538, 0
        %v6563 = vsel %vm1083, %v6540, 0
        %6565 = vmatpush.bf16.xpose.msra.mxu0 0
        %6566 = vmatpush.bf16.xpose.msra.mxu0 0
        %6567 = vmatpush.bf16.xpose.msra.mxu0 0
        %6568 = vmatpush.bf16.xpose.msra.mxu0 0
        %6569 = vmatpush.bf16.xpose.msra.mxu0 %v6563
        %6570 = vmatpush.bf16.xpose.msra.mxu0 %v6560
        %6571 = vmatpush.bf16.xpose.msra.mxu0 %v6557
        %6572 = vmatpush.bf16.xpose.msra.mxu0 %v6554
        %6573 = vmatmul.bf16.gmra.mxu0 %v6542
        %v6574 = vpop.f32.mrf.mxu0
        %v6575 = vadd.f32 0.0, %v6574
        %v6576 = vpop.f32.mrf.mxu0
        %v6577 = vadd.f32 0.0, %v6576
        %6578 = vmatmul.bf16.gmra.mxu0 %v6545
        %v6579 = vpop.f32.mrf.mxu0
        %v6580 = vadd.f32 0.0, %v6579
        %v6581 = vpop.f32.mrf.mxu0
        %v6582 = vadd.f32 0.0, %v6581
        %6583 = vmatmul.bf16.gmra.mxu0 %v6548
        %v6584 = vpop.f32.mrf.mxu0
        %v6585 = vadd.f32 0.0, %v6584
        %v6586 = vpop.f32.mrf.mxu0
        %v6587 = vadd.f32 0.0, %v6586
        %6588 = vmatmul.bf16.gmra.mxu0 %v6551
        %v6589 = vpop.f32.mrf.mxu0
        %v6590 = vadd.f32 0.0, %v6589
        %v6591 = vpop.f32.mrf.mxu0
        %v6592 = vadd.f32 0.0, %v6591
        %6593 = vdwg.mxu0
        %v6594 = vsel %vm1238, %v6506, -1e+30
        %v6595 = vsel %vm1239, %v6508, -1e+30
        %v6596 = vsel %vm1240, %v6511, -1e+30
        %v6597 = vsel %vm1241, %v6513, -1e+30
        %v6598 = vsel %vm1242, %v6516, -1e+30
        %v6599 = vsel %vm1243, %v6518, -1e+30
        %v6600 = vsel %vm1244, %v6521, -1e+30
        %v6601 = vsel %vm1245, %v6523, -1e+30
        %v6602 = vsel %vm1238, %v6575, -1e+30
        %v6603 = vsel %vm1239, %v6577, -1e+30
        %v6604 = vsel %vm1240, %v6580, -1e+30
        %v6605 = vsel %vm1241, %v6582, -1e+30
        %v6606 = vsel %vm1242, %v6585, -1e+30
        %v6607 = vsel %vm1243, %v6587, -1e+30
        %v6608 = vsel %vm1244, %v6590, -1e+30
        %v6609 = vsel %vm1245, %v6592, -1e+30
        %v6610 = vsel %vm1262, %v6594, -inf
        %6611 = vmax.xlane.f32.xlu0 %v6610
        %v6612 = vpop.xlane.xlu0 %6611
        %v6613 = vsel %vm1262, %v6595, -inf
        %6614 = vmax.xlane.f32.xlu0 %v6613
        %v6615 = vpop.xlane.xlu0 %6614
        %v6616 = vsel %vm1262, %v6596, -inf
        %6617 = vmax.xlane.f32.xlu0 %v6616
        %v6618 = vpop.xlane.xlu0 %6617
        %v6619 = vsel %vm1262, %v6597, -inf
        %6620 = vmax.xlane.f32.xlu0 %v6619
        %v6621 = vpop.xlane.xlu0 %6620
        %v6622 = vsel %vm1262, %v6598, -inf
        %6623 = vmax.xlane.f32.xlu0 %v6622
        %v6624 = vpop.xlane.xlu0 %6623
        %v6625 = vsel %vm1262, %v6599, -inf
        %6626 = vmax.xlane.f32.xlu0 %v6625
        %v6627 = vpop.xlane.xlu0 %6626
        %v6628 = vsel %vm1262, %v6600, -inf
        %6629 = vmax.xlane.f32.xlu0 %v6628
        %v6630 = vpop.xlane.xlu0 %6629
        %v6631 = vsel %vm1262, %v6601, -inf
        %6632 = vmax.xlane.f32.xlu0 %v6631
        %v6633 = vpop.xlane.xlu0 %6632
        %v6634 = vsel %vm1262, %v6602, -inf
        %6635 = vmax.xlane.f32.xlu0 %v6634
        %v6636 = vpop.xlane.xlu0 %6635
        %v6637 = vsel %vm1262, %v6603, -inf
        %6638 = vmax.xlane.f32.xlu0 %v6637
        %v6639 = vpop.xlane.xlu0 %6638
        %v6640 = vsel %vm1262, %v6604, -inf
        %6641 = vmax.xlane.f32.xlu0 %v6640
        %v6642 = vpop.xlane.xlu0 %6641
        %v6643 = vsel %vm1262, %v6605, -inf
        %6644 = vmax.xlane.f32.xlu0 %v6643
        %v6645 = vpop.xlane.xlu0 %6644
        %v6646 = vsel %vm1262, %v6606, -inf
        %6647 = vmax.xlane.f32.xlu0 %v6646
        %v6648 = vpop.xlane.xlu0 %6647
        %v6649 = vsel %vm1262, %v6607, -inf
        %6650 = vmax.xlane.f32.xlu0 %v6649
        %v6651 = vpop.xlane.xlu0 %6650
        %v6652 = vsel %vm1262, %v6608, -inf
        %6653 = vmax.xlane.f32.xlu0 %v6652
        %v6654 = vpop.xlane.xlu0 %6653
        %v6655 = vsel %vm1262, %v6609, -inf
        %6656 = vmax.xlane.f32.xlu0 %v6655
        %v6657 = vpop.xlane.xlu0 %6656
        %v6658 = vsub.f32 %v6594, %v6612
        %v6659 = vsub.f32 %v6595, %v6615
        %v6660 = vsub.f32 %v6596, %v6618
        %v6661 = vsub.f32 %v6597, %v6621
        %v6662 = vsub.f32 %v6598, %v6624
        %v6663 = vsub.f32 %v6599, %v6627
        %v6664 = vsub.f32 %v6600, %v6630
        %v6665 = vsub.f32 %v6601, %v6633
        %v6666 = vsub.f32 %v6602, %v6636
        %v6667 = vsub.f32 %v6603, %v6639
        %v6668 = vsub.f32 %v6604, %v6642
        %v6669 = vsub.f32 %v6605, %v6645
        %v6670 = vsub.f32 %v6606, %v6648
        %v6671 = vsub.f32 %v6607, %v6651
        %v6672 = vsub.f32 %v6608, %v6654
        %v6673 = vsub.f32 %v6609, %v6657
        %v6674 = vmul.f32 %v6658, 1.442695
        %v6675 = vpow.pop %v6674
        %v6676 = vmul.f32 %v6659, 1.442695
        %v6677 = vpow.pop %v6676
        %v6678 = vmul.f32 %v6660, 1.442695
        %v6679 = vpow.pop %v6678
        %v6680 = vmul.f32 %v6661, 1.442695
        %v6681 = vpow.pop %v6680
        %v6682 = vmul.f32 %v6662, 1.442695
        %v6683 = vpow.pop %v6682
        %v6684 = vmul.f32 %v6663, 1.442695
        %v6685 = vpow.pop %v6684
        %v6686 = vmul.f32 %v6664, 1.442695
        %v6687 = vpow.pop %v6686
        %v6688 = vmul.f32 %v6665, 1.442695
        %v6689 = vpow.pop %v6688
        %v6690 = vmul.f32 %v6666, 1.442695
        %v6691 = vpow.pop %v6690
        %v6692 = vmul.f32 %v6667, 1.442695
        %v6693 = vpow.pop %v6692
        %v6694 = vmul.f32 %v6668, 1.442695
        %v6695 = vpow.pop %v6694
        %v6696 = vmul.f32 %v6669, 1.442695
        %v6697 = vpow.pop %v6696
        %v6698 = vmul.f32 %v6670, 1.442695
        %v6699 = vpow.pop %v6698
        %v6700 = vmul.f32 %v6671, 1.442695
        %v6701 = vpow.pop %v6700
        %v6702 = vmul.f32 %v6672, 1.442695
        %v6703 = vpow.pop %v6702
        %v6704 = vmul.f32 %v6673, 1.442695
        %v6705 = vpow.pop %v6704
        %v6706 = vsel %vm1262, %v6675, 0.0
        %6707 = vadd.xlane.f32.xlu0 %v6706
        %v6708 = vpop.xlane.xlu0 %6707
        %v6709 = vsel %vm1262, %v6677, 0.0
        %6710 = vadd.xlane.f32.xlu0 %v6709
        %v6711 = vpop.xlane.xlu0 %6710
        %v6712 = vsel %vm1262, %v6679, 0.0
        %6713 = vadd.xlane.f32.xlu0 %v6712
        %v6714 = vpop.xlane.xlu0 %6713
        %v6715 = vsel %vm1262, %v6681, 0.0
        %6716 = vadd.xlane.f32.xlu0 %v6715
        %v6717 = vpop.xlane.xlu0 %6716
        %v6718 = vsel %vm1262, %v6683, 0.0
        %6719 = vadd.xlane.f32.xlu0 %v6718
        %v6720 = vpop.xlane.xlu0 %6719
        %v6721 = vsel %vm1262, %v6685, 0.0
        %6722 = vadd.xlane.f32.xlu0 %v6721
        %v6723 = vpop.xlane.xlu0 %6722
        %v6724 = vsel %vm1262, %v6687, 0.0
        %6725 = vadd.xlane.f32.xlu0 %v6724
        %v6726 = vpop.xlane.xlu0 %6725
        %v6727 = vsel %vm1262, %v6689, 0.0
        %6728 = vadd.xlane.f32.xlu0 %v6727
        %v6729 = vpop.xlane.xlu0 %6728
        %v6730 = vsel %vm1262, %v6691, 0.0
        %6731 = vadd.xlane.f32.xlu0 %v6730
        %v6732 = vpop.xlane.xlu0 %6731
        %v6733 = vsel %vm1262, %v6693, 0.0
        %6734 = vadd.xlane.f32.xlu0 %v6733
        %v6735 = vpop.xlane.xlu0 %6734
        %v6736 = vsel %vm1262, %v6695, 0.0
        %6737 = vadd.xlane.f32.xlu0 %v6736
        %v6738 = vpop.xlane.xlu0 %6737
        %v6739 = vsel %vm1262, %v6697, 0.0
        %6740 = vadd.xlane.f32.xlu0 %v6739
        %v6741 = vpop.xlane.xlu0 %6740
        %v6742 = vsel %vm1262, %v6699, 0.0
        %6743 = vadd.xlane.f32.xlu0 %v6742
        %v6744 = vpop.xlane.xlu0 %6743
        %v6745 = vsel %vm1262, %v6701, 0.0
        %6746 = vadd.xlane.f32.xlu0 %v6745
        %v6747 = vpop.xlane.xlu0 %6746
        %v6748 = vsel %vm1262, %v6703, 0.0
        %6749 = vadd.xlane.f32.xlu0 %v6748
        %v6750 = vpop.xlane.xlu0 %6749
        %v6751 = vsel %vm1262, %v6705, 0.0
        %6752 = vadd.xlane.f32.xlu0 %v6751
        %v6753 = vpop.xlane.xlu0 %6752
        %v6754 = vrcp.pop %v6708
        %v6755 = vrcp.pop %v6711
        %v6756 = vrcp.pop %v6714
        %v6757 = vrcp.pop %v6717
        %v6758 = vrcp.pop %v6720
        %v6759 = vrcp.pop %v6723
        %v6760 = vrcp.pop %v6726
        %v6761 = vrcp.pop %v6729
        %v6762 = vrcp.pop %v6732
        %v6763 = vrcp.pop %v6735
        %v6764 = vrcp.pop %v6738
        %v6765 = vrcp.pop %v6741
        %v6766 = vrcp.pop %v6744
        %v6767 = vrcp.pop %v6747
        %v6768 = vrcp.pop %v6750
        %v6769 = vrcp.pop %v6753
        %v6770 = vmul.f32 %v6675, %v6754
        %v6771 = vmul.f32 %v6677, %v6755
        %v6772 = vmul.f32 %v6679, %v6756
        %v6773 = vmul.f32 %v6681, %v6757
        %v6774 = vmul.f32 %v6683, %v6758
        %v6775 = vmul.f32 %v6685, %v6759
        %v6776 = vmul.f32 %v6687, %v6760
        %v6777 = vmul.f32 %v6689, %v6761
        %v6778 = vmul.f32 %v6691, %v6762
        %v6779 = vmul.f32 %v6693, %v6763
        %v6780 = vmul.f32 %v6695, %v6764
        %v6781 = vmul.f32 %v6697, %v6765
        %v6782 = vmul.f32 %v6699, %v6766
        %v6783 = vmul.f32 %v6701, %v6767
        %v6784 = vmul.f32 %v6703, %v6768
        %v6785 = vmul.f32 %v6705, %v6769
        %v6786 = vpack.c.bf16 %v6770, %v6770
        %v6787 = vpack.c.bf16 %v6771, %v6771
        %v6788 = vpack.c.bf16 %v6772, %v6772
        %v6789 = vpack.c.bf16 %v6773, %v6773
        %v6790 = vpack.c.bf16 %v6774, %v6774
        %v6791 = vpack.c.bf16 %v6775, %v6775
        %v6792 = vpack.c.bf16 %v6776, %v6776
        %v6793 = vpack.c.bf16 %v6777, %v6777
        %v6794 = vpack.c.bf16 %v6778, %v6778
        %v6795 = vpack.c.bf16 %v6779, %v6779
        %v6796 = vpack.c.bf16 %v6780, %v6780
        %v6797 = vpack.c.bf16 %v6781, %v6781
        %v6798 = vpack.c.bf16 %v6782, %v6782
        %v6799 = vpack.c.bf16 %v6783, %v6783
        %v6800 = vpack.c.bf16 %v6784, %v6784
        %v6801 = vpack.c.bf16 %v6785, %v6785
        %v6810 = vunpack.c.l.b16 %v6786
        %v6811 = vunpack.c.l.b16 %v6787
        %v6812 = vunpack.c.l.b16 %v6788
        %v6813 = vunpack.c.l.b16 %v6789
        %v6814 = vunpack.c.l.b16 %v6790
        %v6815 = vunpack.c.l.b16 %v6791
        %v6816 = vunpack.c.l.b16 %v6792
        %v6817 = vunpack.c.l.b16 %v6793
        %v6818 = vpack.c.b16 %v6811, %v6810
        %v6819 = vpack.c.b16 %v6813, %v6812
        %v6820 = vpack.c.b16 %v6815, %v6814
        %v6821 = vpack.c.b16 %v6817, %v6816
        %6822 = vrot.lane.b32.xlu0 %v5644, 64
        %v6823 = vpop.permute.xlu0 %6822
        %6824 = vrot.lane.b32.xlu0 %v5645, 64
        %v6825 = vpop.permute.xlu0 %6824
        %6826 = vrot.lane.b32.xlu0 %v5646, 64
        %v6827 = vpop.permute.xlu0 %6826
        %6828 = vrot.lane.b32.xlu0 %v5647, 64
        %v6829 = vpop.permute.xlu0 %6828
        %v6835 = vsel %vm1262, %v6818, 0
        %v6838 = vsel %vm1262, %v6819, 0
        %v6841 = vsel %vm1262, %v6820, 0
        %v6844 = vsel %vm1262, %v6821, 0
        %6846 = vmatpush.bf16.msra.mxu0 0
        %6847 = vmatpush.bf16.msra.mxu0 0
        %6848 = vmatpush.bf16.msra.mxu0 0
        %6849 = vmatpush.bf16.msra.mxu0 0
        %6850 = vmatpush.bf16.msra.mxu0 %v6829
        %6851 = vmatpush.bf16.msra.mxu0 %v6827
        %6852 = vmatpush.bf16.msra.mxu0 %v6825
        %6853 = vmatpush.bf16.msra.mxu0 %v6823
        %6854 = vmatmul.bf16.gmra.mxu0 %v6835
        %v6855 = vpop.f32.mrf.mxu0
        %v6856 = vadd.f32 0.0, %v6855
        %v6857 = vpop.f32.mrf.mxu0
        %v6858 = vadd.f32 0.0, %v6857
        %6859 = vmatmul.bf16.gmra.mxu0 %v6838
        %v6860 = vpop.f32.mrf.mxu0
        %v6861 = vadd.f32 0.0, %v6860
        %v6862 = vpop.f32.mrf.mxu0
        %v6863 = vadd.f32 0.0, %v6862
        %6864 = vmatmul.bf16.gmra.mxu0 %v6841
        %v6865 = vpop.f32.mrf.mxu0
        %v6866 = vadd.f32 0.0, %v6865
        %v6867 = vpop.f32.mrf.mxu0
        %v6868 = vadd.f32 0.0, %v6867
        %6869 = vmatmul.bf16.gmra.mxu0 %v6844
        %v6870 = vpop.f32.mrf.mxu0
        %v6871 = vadd.f32 0.0, %v6870
        %v6872 = vpop.f32.mrf.mxu0
        %v6873 = vadd.f32 0.0, %v6872
        %6874 = vdwg.mxu0
        %v6883 = vunpack.c.l.b16 %v6794
        %v6884 = vunpack.c.l.b16 %v6795
        %v6885 = vunpack.c.l.b16 %v6796
        %v6886 = vunpack.c.l.b16 %v6797
        %v6887 = vunpack.c.l.b16 %v6798
        %v6888 = vunpack.c.l.b16 %v6799
        %v6889 = vunpack.c.l.b16 %v6800
        %v6890 = vunpack.c.l.b16 %v6801
        %v6891 = vpack.c.b16 %v6884, %v6883
        %v6892 = vpack.c.b16 %v6886, %v6885
        %v6893 = vpack.c.b16 %v6888, %v6887
        %v6894 = vpack.c.b16 %v6890, %v6889
        %6895 = vrot.lane.b32.xlu0 %v5729, 64
        %v6896 = vpop.permute.xlu0 %6895
        %6897 = vrot.lane.b32.xlu0 %v5730, 64
        %v6898 = vpop.permute.xlu0 %6897
        %6899 = vrot.lane.b32.xlu0 %v5731, 64
        %v6900 = vpop.permute.xlu0 %6899
        %6901 = vrot.lane.b32.xlu0 %v5732, 64
        %v6902 = vpop.permute.xlu0 %6901
        %v6908 = vsel %vm1262, %v6891, 0
        %v6911 = vsel %vm1262, %v6892, 0
        %v6914 = vsel %vm1262, %v6893, 0
        %v6917 = vsel %vm1262, %v6894, 0
        %6919 = vmatpush.bf16.msra.mxu0 0
        %6920 = vmatpush.bf16.msra.mxu0 0
        %6921 = vmatpush.bf16.msra.mxu0 0
        %6922 = vmatpush.bf16.msra.mxu0 0
        %6923 = vmatpush.bf16.msra.mxu0 %v6902
        %6924 = vmatpush.bf16.msra.mxu0 %v6900
        %6925 = vmatpush.bf16.msra.mxu0 %v6898
        %6926 = vmatpush.bf16.msra.mxu0 %v6896
        %6927 = vmatmul.bf16.gmra.mxu0 %v6908
        %v6928 = vpop.f32.mrf.mxu0
        %v6929 = vadd.f32 0.0, %v6928
        %v6930 = vpop.f32.mrf.mxu0
        %v6931 = vadd.f32 0.0, %v6930
        %6932 = vmatmul.bf16.gmra.mxu0 %v6911
        %v6933 = vpop.f32.mrf.mxu0
        %v6934 = vadd.f32 0.0, %v6933
        %v6935 = vpop.f32.mrf.mxu0
        %v6936 = vadd.f32 0.0, %v6935
        %6937 = vmatmul.bf16.gmra.mxu0 %v6914
        %v6938 = vpop.f32.mrf.mxu0
        %v6939 = vadd.f32 0.0, %v6938
        %v6940 = vpop.f32.mrf.mxu0
        %v6941 = vadd.f32 0.0, %v6940
        %6942 = vmatmul.bf16.gmra.mxu0 %v6917
        %v6943 = vpop.f32.mrf.mxu0
        %v6944 = vadd.f32 0.0, %v6943
        %v6945 = vpop.f32.mrf.mxu0
        %v6946 = vadd.f32 0.0, %v6945
        %6947 = vdwg.mxu0
        %v6948 = vpack.c.bf16 %v6858, %v6856
        %v6949 = vpack.c.bf16 %v6863, %v6861
        %v6950 = vpack.c.bf16 %v6868, %v6866
        %v6951 = vpack.c.bf16 %v6873, %v6871
        %v6952 = vpack.c.bf16 %v6931, %v6929
        %v6953 = vpack.c.bf16 %v6936, %v6934
        %v6954 = vpack.c.bf16 %v6941, %v6939
        %v6955 = vpack.c.bf16 %v6946, %v6944
        %v6960 = vunpack.c.l.b16 %v4617
        %v6961 = vunpack.c.l.b16 %v4618
        %v6962 = vunpack.c.l.b16 %v4619
        %v6963 = vunpack.c.l.b16 %v4620
        %v6964 = vpack.c.b16 %v6961, %v6960
        %v6965 = vpack.c.b16 %v6963, %v6962
        %v6969 = vsel %vm1083, %v6948, 0
        %v6972 = vsel %vm1083, %v6949, 0
        %v6975 = vsel %vm1083, %v6950, 0
        %v6978 = vsel %vm1083, %v6951, 0
        %v6981 = vsel %vm1083, %v6952, 0
        %v6984 = vsel %vm1083, %v6953, 0
        %v6987 = vsel %vm1083, %v6954, 0
        %v6990 = vsel %vm1083, %v6955, 0
        %6992 = vmatpush.bf16.msra.mxu0 0
        %6993 = vmatpush.bf16.msra.mxu0 0
        %6994 = vmatpush.bf16.msra.mxu0 0
        %6995 = vmatpush.bf16.msra.mxu0 0
        %6996 = vmatpush.bf16.msra.mxu0 0
        %6997 = vmatpush.bf16.msra.mxu0 0
        %6998 = vmatpush.bf16.msra.mxu0 %v6965
        %6999 = vmatpush.bf16.msra.mxu0 %v6964
        %7000 = vmatmul.bf16.gmra.mxu0 %v6969
        %v7001 = vpop.f32.mrf.mxu0
        %v7002 = vadd.f32 0.0, %v7001
        %v7003 = vpop.f32.mrf.mxu0
        %v7004 = vadd.f32 0.0, %v7003
        %7005 = vmatmul.bf16.gmra.mxu0 %v6972
        %v7006 = vpop.f32.mrf.mxu0
        %v7007 = vadd.f32 0.0, %v7006
        %v7008 = vpop.f32.mrf.mxu0
        %v7009 = vadd.f32 0.0, %v7008
        %7010 = vmatmul.bf16.gmra.mxu0 %v6975
        %v7011 = vpop.f32.mrf.mxu0
        %v7012 = vadd.f32 0.0, %v7011
        %v7013 = vpop.f32.mrf.mxu0
        %v7014 = vadd.f32 0.0, %v7013
        %7015 = vmatmul.bf16.gmra.mxu0 %v6978
        %v7016 = vpop.f32.mrf.mxu0
        %v7017 = vadd.f32 0.0, %v7016
        %v7018 = vpop.f32.mrf.mxu0
        %v7019 = vadd.f32 0.0, %v7018
        %7020 = vmatmul.bf16.gmra.mxu0 %v6981
        %v7021 = vpop.f32.mrf.mxu0
        %v7022 = vadd.f32 0.0, %v7021
        %v7023 = vpop.f32.mrf.mxu0
        %v7024 = vadd.f32 0.0, %v7023
        %7025 = vmatmul.bf16.gmra.mxu0 %v6984
        %v7026 = vpop.f32.mrf.mxu0
        %v7027 = vadd.f32 0.0, %v7026
        %v7028 = vpop.f32.mrf.mxu0
        %v7029 = vadd.f32 0.0, %v7028
        %7030 = vmatmul.bf16.gmra.mxu0 %v6987
        %v7031 = vpop.f32.mrf.mxu0
        %v7032 = vadd.f32 0.0, %v7031
        %v7033 = vpop.f32.mrf.mxu0
        %v7034 = vadd.f32 0.0, %v7033
        %7035 = vmatmul.bf16.gmra.mxu0 %v6990
        %v7036 = vpop.f32.mrf.mxu0
        %v7037 = vadd.f32 0.0, %v7036
        %v7038 = vpop.f32.mrf.mxu0
        %v7039 = vadd.f32 0.0, %v7038
        %7040 = vdwg.mxu0
        %v7041 = vadd.f32 %v6417, %v7002
        %v7042 = vadd.f32 %v6419, %v7004
        %v7043 = vadd.f32 %v6422, %v7007
        %v7044 = vadd.f32 %v6424, %v7009
        %v7045 = vadd.f32 %v6427, %v7012
        %v7046 = vadd.f32 %v6429, %v7014
        %v7047 = vadd.f32 %v6432, %v7017
        %v7048 = vadd.f32 %v6434, %v7019
        %v7049 = vadd.f32 %v6437, %v7022
        %v7050 = vadd.f32 %v6439, %v7024
        %v7051 = vadd.f32 %v6442, %v7027
        %v7052 = vadd.f32 %v6444, %v7029
        %v7053 = vadd.f32 %v6447, %v7032
        %v7054 = vadd.f32 %v6449, %v7034
        %v7055 = vadd.f32 %v6452, %v7037
        %v7056 = vadd.f32 %v6454, %v7039
        %7057 = vrot.lane.b32.xlu0 %v5230, 32
        %v7058 = vpop.permute.xlu0 %7057
        %7059 = vrot.lane.b32.xlu0 %v5231, 32
        %v7060 = vpop.permute.xlu0 %7059
        %7061 = vrot.lane.b32.xlu0 %v5232, 32
        %v7062 = vpop.permute.xlu0 %7061
        %7063 = vrot.lane.b32.xlu0 %v5233, 32
        %v7064 = vpop.permute.xlu0 %7063
        %7065 = vrot.lane.b32.xlu0 %v5250, 32
        %v7066 = vpop.permute.xlu0 %7065
        %7067 = vrot.lane.b32.xlu0 %v5251, 32
        %v7068 = vpop.permute.xlu0 %7067
        %7069 = vrot.lane.b32.xlu0 %v5252, 32
        %v7070 = vpop.permute.xlu0 %7069
        %7071 = vrot.lane.b32.xlu0 %v5253, 32
        %v7072 = vpop.permute.xlu0 %7071
        %v7074 = vsel %vm1083, %v7058, 0
        %v7077 = vsel %vm1083, %v7060, 0
        %v7080 = vsel %vm1083, %v7062, 0
        %v7083 = vsel %vm1083, %v7064, 0
        %v7086 = vsel %vm1083, %v7066, 0
        %v7089 = vsel %vm1083, %v7068, 0
        %v7092 = vsel %vm1083, %v7070, 0
        %v7095 = vsel %vm1083, %v7072, 0
        %7097 = vmatpush.bf16.xpose.msra.mxu0 0
        %7098 = vmatpush.bf16.xpose.msra.mxu0 0
        %7099 = vmatpush.bf16.xpose.msra.mxu0 0
        %7100 = vmatpush.bf16.xpose.msra.mxu0 0
        %7101 = vmatpush.bf16.xpose.msra.mxu0 %v7095
        %7102 = vmatpush.bf16.xpose.msra.mxu0 %v7092
        %7103 = vmatpush.bf16.xpose.msra.mxu0 %v7089
        %7104 = vmatpush.bf16.xpose.msra.mxu0 %v7086
        %7105 = vmatmul.bf16.gmra.mxu0 %v7074
        %v7106 = vpop.f32.mrf.mxu0
        %v7107 = vadd.f32 0.0, %v7106
        %v7108 = vpop.f32.mrf.mxu0
        %v7109 = vadd.f32 0.0, %v7108
        %7110 = vmatmul.bf16.gmra.mxu0 %v7077
        %v7111 = vpop.f32.mrf.mxu0
        %v7112 = vadd.f32 0.0, %v7111
        %v7113 = vpop.f32.mrf.mxu0
        %v7114 = vadd.f32 0.0, %v7113
        %7115 = vmatmul.bf16.gmra.mxu0 %v7080
        %v7116 = vpop.f32.mrf.mxu0
        %v7117 = vadd.f32 0.0, %v7116
        %v7118 = vpop.f32.mrf.mxu0
        %v7119 = vadd.f32 0.0, %v7118
        %7120 = vmatmul.bf16.gmra.mxu0 %v7083
        %v7121 = vpop.f32.mrf.mxu0
        %v7122 = vadd.f32 0.0, %v7121
        %v7123 = vpop.f32.mrf.mxu0
        %v7124 = vadd.f32 0.0, %v7123
        %7125 = vdwg.mxu0
        %7126 = vrot.lane.b32.xlu0 %v5323, 32
        %v7127 = vpop.permute.xlu0 %7126
        %7128 = vrot.lane.b32.xlu0 %v5324, 32
        %v7129 = vpop.permute.xlu0 %7128
        %7130 = vrot.lane.b32.xlu0 %v5325, 32
        %v7131 = vpop.permute.xlu0 %7130
        %7132 = vrot.lane.b32.xlu0 %v5326, 32
        %v7133 = vpop.permute.xlu0 %7132
        %7134 = vrot.lane.b32.xlu0 %v5343, 32
        %v7135 = vpop.permute.xlu0 %7134
        %7136 = vrot.lane.b32.xlu0 %v5344, 32
        %v7137 = vpop.permute.xlu0 %7136
        %7138 = vrot.lane.b32.xlu0 %v5345, 32
        %v7139 = vpop.permute.xlu0 %7138
        %7140 = vrot.lane.b32.xlu0 %v5346, 32
        %v7141 = vpop.permute.xlu0 %7140
        %v7143 = vsel %vm1083, %v7127, 0
        %v7146 = vsel %vm1083, %v7129, 0
        %v7149 = vsel %vm1083, %v7131, 0
        %v7152 = vsel %vm1083, %v7133, 0
        %v7155 = vsel %vm1083, %v7135, 0
        %v7158 = vsel %vm1083, %v7137, 0
        %v7161 = vsel %vm1083, %v7139, 0
        %v7164 = vsel %vm1083, %v7141, 0
        %7166 = vmatpush.bf16.xpose.msra.mxu0 0
        %7167 = vmatpush.bf16.xpose.msra.mxu0 0
        %7168 = vmatpush.bf16.xpose.msra.mxu0 0
        %7169 = vmatpush.bf16.xpose.msra.mxu0 0
        %7170 = vmatpush.bf16.xpose.msra.mxu0 %v7164
        %7171 = vmatpush.bf16.xpose.msra.mxu0 %v7161
        %7172 = vmatpush.bf16.xpose.msra.mxu0 %v7158
        %7173 = vmatpush.bf16.xpose.msra.mxu0 %v7155
        %7174 = vmatmul.bf16.gmra.mxu0 %v7143
        %v7175 = vpop.f32.mrf.mxu0
        %v7176 = vadd.f32 0.0, %v7175
        %v7177 = vpop.f32.mrf.mxu0
        %v7178 = vadd.f32 0.0, %v7177
        %7179 = vmatmul.bf16.gmra.mxu0 %v7146
        %v7180 = vpop.f32.mrf.mxu0
        %v7181 = vadd.f32 0.0, %v7180
        %v7182 = vpop.f32.mrf.mxu0
        %v7183 = vadd.f32 0.0, %v7182
        %7184 = vmatmul.bf16.gmra.mxu0 %v7149
        %v7185 = vpop.f32.mrf.mxu0
        %v7186 = vadd.f32 0.0, %v7185
        %v7187 = vpop.f32.mrf.mxu0
        %v7188 = vadd.f32 0.0, %v7187
        %7189 = vmatmul.bf16.gmra.mxu0 %v7152
        %v7190 = vpop.f32.mrf.mxu0
        %v7191 = vadd.f32 0.0, %v7190
        %v7192 = vpop.f32.mrf.mxu0
        %v7193 = vadd.f32 0.0, %v7192
        %7194 = vdwg.mxu0
        %v7195 = vsel %vm1238, %v7107, -1e+30
        %v7196 = vsel %vm1239, %v7109, -1e+30
        %v7197 = vsel %vm1240, %v7112, -1e+30
        %v7198 = vsel %vm1241, %v7114, -1e+30
        %v7199 = vsel %vm1242, %v7117, -1e+30
        %v7200 = vsel %vm1243, %v7119, -1e+30
        %v7201 = vsel %vm1244, %v7122, -1e+30
        %v7202 = vsel %vm1245, %v7124, -1e+30
        %v7203 = vsel %vm1238, %v7176, -1e+30
        %v7204 = vsel %vm1239, %v7178, -1e+30
        %v7205 = vsel %vm1240, %v7181, -1e+30
        %v7206 = vsel %vm1241, %v7183, -1e+30
        %v7207 = vsel %vm1242, %v7186, -1e+30
        %v7208 = vsel %vm1243, %v7188, -1e+30
        %v7209 = vsel %vm1244, %v7191, -1e+30
        %v7210 = vsel %vm1245, %v7193, -1e+30
        %v7211 = vsel %vm1262, %v7195, -inf
        %7212 = vmax.xlane.f32.xlu0 %v7211
        %v7213 = vpop.xlane.xlu0 %7212
        %v7214 = vsel %vm1262, %v7196, -inf
        %7215 = vmax.xlane.f32.xlu0 %v7214
        %v7216 = vpop.xlane.xlu0 %7215
        %v7217 = vsel %vm1262, %v7197, -inf
        %7218 = vmax.xlane.f32.xlu0 %v7217
        %v7219 = vpop.xlane.xlu0 %7218
        %v7220 = vsel %vm1262, %v7198, -inf
        %7221 = vmax.xlane.f32.xlu0 %v7220
        %v7222 = vpop.xlane.xlu0 %7221
        %v7223 = vsel %vm1262, %v7199, -inf
        %7224 = vmax.xlane.f32.xlu0 %v7223
        %v7225 = vpop.xlane.xlu0 %7224
        %v7226 = vsel %vm1262, %v7200, -inf
        %7227 = vmax.xlane.f32.xlu0 %v7226
        %v7228 = vpop.xlane.xlu0 %7227
        %v7229 = vsel %vm1262, %v7201, -inf
        %7230 = vmax.xlane.f32.xlu0 %v7229
        %v7231 = vpop.xlane.xlu0 %7230
        %v7232 = vsel %vm1262, %v7202, -inf
        %7233 = vmax.xlane.f32.xlu0 %v7232
        %v7234 = vpop.xlane.xlu0 %7233
        %v7235 = vsel %vm1262, %v7203, -inf
        %7236 = vmax.xlane.f32.xlu0 %v7235
        %v7237 = vpop.xlane.xlu0 %7236
        %v7238 = vsel %vm1262, %v7204, -inf
        %7239 = vmax.xlane.f32.xlu0 %v7238
        %v7240 = vpop.xlane.xlu0 %7239
        %v7241 = vsel %vm1262, %v7205, -inf
        %7242 = vmax.xlane.f32.xlu0 %v7241
        %v7243 = vpop.xlane.xlu0 %7242
        %v7244 = vsel %vm1262, %v7206, -inf
        %7245 = vmax.xlane.f32.xlu0 %v7244
        %v7246 = vpop.xlane.xlu0 %7245
        %v7247 = vsel %vm1262, %v7207, -inf
        %7248 = vmax.xlane.f32.xlu0 %v7247
        %v7249 = vpop.xlane.xlu0 %7248
        %v7250 = vsel %vm1262, %v7208, -inf
        %7251 = vmax.xlane.f32.xlu0 %v7250
        %v7252 = vpop.xlane.xlu0 %7251
        %v7253 = vsel %vm1262, %v7209, -inf
        %7254 = vmax.xlane.f32.xlu0 %v7253
        %v7255 = vpop.xlane.xlu0 %7254
        %v7256 = vsel %vm1262, %v7210, -inf
        %7257 = vmax.xlane.f32.xlu0 %v7256
        %v7258 = vpop.xlane.xlu0 %7257
        %v7259 = vsub.f32 %v7195, %v7213
        %v7260 = vsub.f32 %v7196, %v7216
        %v7261 = vsub.f32 %v7197, %v7219
        %v7262 = vsub.f32 %v7198, %v7222
        %v7263 = vsub.f32 %v7199, %v7225
        %v7264 = vsub.f32 %v7200, %v7228
        %v7265 = vsub.f32 %v7201, %v7231
        %v7266 = vsub.f32 %v7202, %v7234
        %v7267 = vsub.f32 %v7203, %v7237
        %v7268 = vsub.f32 %v7204, %v7240
        %v7269 = vsub.f32 %v7205, %v7243
        %v7270 = vsub.f32 %v7206, %v7246
        %v7271 = vsub.f32 %v7207, %v7249
        %v7272 = vsub.f32 %v7208, %v7252
        %v7273 = vsub.f32 %v7209, %v7255
        %v7274 = vsub.f32 %v7210, %v7258
        %v7275 = vmul.f32 %v7259, 1.442695
        %v7276 = vpow.pop %v7275
        %v7277 = vmul.f32 %v7260, 1.442695
        %v7278 = vpow.pop %v7277
        %v7279 = vmul.f32 %v7261, 1.442695
        %v7280 = vpow.pop %v7279
        %v7281 = vmul.f32 %v7262, 1.442695
        %v7282 = vpow.pop %v7281
        %v7283 = vmul.f32 %v7263, 1.442695
        %v7284 = vpow.pop %v7283
        %v7285 = vmul.f32 %v7264, 1.442695
        %v7286 = vpow.pop %v7285
        %v7287 = vmul.f32 %v7265, 1.442695
        %v7288 = vpow.pop %v7287
        %v7289 = vmul.f32 %v7266, 1.442695
        %v7290 = vpow.pop %v7289
        %v7291 = vmul.f32 %v7267, 1.442695
        %v7292 = vpow.pop %v7291
        %v7293 = vmul.f32 %v7268, 1.442695
        %v7294 = vpow.pop %v7293
        %v7295 = vmul.f32 %v7269, 1.442695
        %v7296 = vpow.pop %v7295
        %v7297 = vmul.f32 %v7270, 1.442695
        %v7298 = vpow.pop %v7297
        %v7299 = vmul.f32 %v7271, 1.442695
        %v7300 = vpow.pop %v7299
        %v7301 = vmul.f32 %v7272, 1.442695
        %v7302 = vpow.pop %v7301
        %v7303 = vmul.f32 %v7273, 1.442695
        %v7304 = vpow.pop %v7303
        %v7305 = vmul.f32 %v7274, 1.442695
        %v7306 = vpow.pop %v7305
        %v7307 = vsel %vm1262, %v7276, 0.0
        %7308 = vadd.xlane.f32.xlu0 %v7307
        %v7309 = vpop.xlane.xlu0 %7308
        %v7310 = vsel %vm1262, %v7278, 0.0
        %7311 = vadd.xlane.f32.xlu0 %v7310
        %v7312 = vpop.xlane.xlu0 %7311
        %v7313 = vsel %vm1262, %v7280, 0.0
        %7314 = vadd.xlane.f32.xlu0 %v7313
        %v7315 = vpop.xlane.xlu0 %7314
        %v7316 = vsel %vm1262, %v7282, 0.0
        %7317 = vadd.xlane.f32.xlu0 %v7316
        %v7318 = vpop.xlane.xlu0 %7317
        %v7319 = vsel %vm1262, %v7284, 0.0
        %7320 = vadd.xlane.f32.xlu0 %v7319
        %v7321 = vpop.xlane.xlu0 %7320
        %v7322 = vsel %vm1262, %v7286, 0.0
        %7323 = vadd.xlane.f32.xlu0 %v7322
        %v7324 = vpop.xlane.xlu0 %7323
        %v7325 = vsel %vm1262, %v7288, 0.0
        %7326 = vadd.xlane.f32.xlu0 %v7325
        %v7327 = vpop.xlane.xlu0 %7326
        %v7328 = vsel %vm1262, %v7290, 0.0
        %7329 = vadd.xlane.f32.xlu0 %v7328
        %v7330 = vpop.xlane.xlu0 %7329
        %v7331 = vsel %vm1262, %v7292, 0.0
        %7332 = vadd.xlane.f32.xlu0 %v7331
        %v7333 = vpop.xlane.xlu0 %7332
        %v7334 = vsel %vm1262, %v7294, 0.0
        %7335 = vadd.xlane.f32.xlu0 %v7334
        %v7336 = vpop.xlane.xlu0 %7335
        %v7337 = vsel %vm1262, %v7296, 0.0
        %7338 = vadd.xlane.f32.xlu0 %v7337
        %v7339 = vpop.xlane.xlu0 %7338
        %v7340 = vsel %vm1262, %v7298, 0.0
        %7341 = vadd.xlane.f32.xlu0 %v7340
        %v7342 = vpop.xlane.xlu0 %7341
        %v7343 = vsel %vm1262, %v7300, 0.0
        %7344 = vadd.xlane.f32.xlu0 %v7343
        %v7345 = vpop.xlane.xlu0 %7344
        %v7346 = vsel %vm1262, %v7302, 0.0
        %7347 = vadd.xlane.f32.xlu0 %v7346
        %v7348 = vpop.xlane.xlu0 %7347
        %v7349 = vsel %vm1262, %v7304, 0.0
        %7350 = vadd.xlane.f32.xlu0 %v7349
        %v7351 = vpop.xlane.xlu0 %7350
        %v7352 = vsel %vm1262, %v7306, 0.0
        %7353 = vadd.xlane.f32.xlu0 %v7352
        %v7354 = vpop.xlane.xlu0 %7353
        %v7355 = vrcp.pop %v7309
        %v7356 = vrcp.pop %v7312
        %v7357 = vrcp.pop %v7315
        %v7358 = vrcp.pop %v7318
        %v7359 = vrcp.pop %v7321
        %v7360 = vrcp.pop %v7324
        %v7361 = vrcp.pop %v7327
        %v7362 = vrcp.pop %v7330
        %v7363 = vrcp.pop %v7333
        %v7364 = vrcp.pop %v7336
        %v7365 = vrcp.pop %v7339
        %v7366 = vrcp.pop %v7342
        %v7367 = vrcp.pop %v7345
        %v7368 = vrcp.pop %v7348
        %v7369 = vrcp.pop %v7351
        %v7370 = vrcp.pop %v7354
        %v7371 = vmul.f32 %v7276, %v7355
        %v7372 = vmul.f32 %v7278, %v7356
        %v7373 = vmul.f32 %v7280, %v7357
        %v7374 = vmul.f32 %v7282, %v7358
        %v7375 = vmul.f32 %v7284, %v7359
        %v7376 = vmul.f32 %v7286, %v7360
        %v7377 = vmul.f32 %v7288, %v7361
        %v7378 = vmul.f32 %v7290, %v7362
        %v7379 = vmul.f32 %v7292, %v7363
        %v7380 = vmul.f32 %v7294, %v7364
        %v7381 = vmul.f32 %v7296, %v7365
        %v7382 = vmul.f32 %v7298, %v7366
        %v7383 = vmul.f32 %v7300, %v7367
        %v7384 = vmul.f32 %v7302, %v7368
        %v7385 = vmul.f32 %v7304, %v7369
        %v7386 = vmul.f32 %v7306, %v7370
        %v7387 = vpack.c.bf16 %v7371, %v7371
        %v7388 = vpack.c.bf16 %v7372, %v7372
        %v7389 = vpack.c.bf16 %v7373, %v7373
        %v7390 = vpack.c.bf16 %v7374, %v7374
        %v7391 = vpack.c.bf16 %v7375, %v7375
        %v7392 = vpack.c.bf16 %v7376, %v7376
        %v7393 = vpack.c.bf16 %v7377, %v7377
        %v7394 = vpack.c.bf16 %v7378, %v7378
        %v7395 = vpack.c.bf16 %v7379, %v7379
        %v7396 = vpack.c.bf16 %v7380, %v7380
        %v7397 = vpack.c.bf16 %v7381, %v7381
        %v7398 = vpack.c.bf16 %v7382, %v7382
        %v7399 = vpack.c.bf16 %v7383, %v7383
        %v7400 = vpack.c.bf16 %v7384, %v7384
        %v7401 = vpack.c.bf16 %v7385, %v7385
        %v7402 = vpack.c.bf16 %v7386, %v7386
        %v7411 = vunpack.c.l.b16 %v7387
        %v7412 = vunpack.c.l.b16 %v7388
        %v7413 = vunpack.c.l.b16 %v7389
        %v7414 = vunpack.c.l.b16 %v7390
        %v7415 = vunpack.c.l.b16 %v7391
        %v7416 = vunpack.c.l.b16 %v7392
        %v7417 = vunpack.c.l.b16 %v7393
        %v7418 = vunpack.c.l.b16 %v7394
        %v7419 = vpack.c.b16 %v7412, %v7411
        %v7420 = vpack.c.b16 %v7414, %v7413
        %v7421 = vpack.c.b16 %v7416, %v7415
        %v7422 = vpack.c.b16 %v7418, %v7417
        %7423 = vrot.lane.b32.xlu0 %v5644, 32
        %v7424 = vpop.permute.xlu0 %7423
        %7425 = vrot.lane.b32.xlu0 %v5645, 32
        %v7426 = vpop.permute.xlu0 %7425
        %7427 = vrot.lane.b32.xlu0 %v5646, 32
        %v7428 = vpop.permute.xlu0 %7427
        %7429 = vrot.lane.b32.xlu0 %v5647, 32
        %v7430 = vpop.permute.xlu0 %7429
        %v7436 = vsel %vm1262, %v7419, 0
        %v7439 = vsel %vm1262, %v7420, 0
        %v7442 = vsel %vm1262, %v7421, 0
        %v7445 = vsel %vm1262, %v7422, 0
        %7447 = vmatpush.bf16.msra.mxu0 0
        %7448 = vmatpush.bf16.msra.mxu0 0
        %7449 = vmatpush.bf16.msra.mxu0 0
        %7450 = vmatpush.bf16.msra.mxu0 0
        %7451 = vmatpush.bf16.msra.mxu0 %v7430
        %7452 = vmatpush.bf16.msra.mxu0 %v7428
        %7453 = vmatpush.bf16.msra.mxu0 %v7426
        %7454 = vmatpush.bf16.msra.mxu0 %v7424
        %7455 = vmatmul.bf16.gmra.mxu0 %v7436
        %v7456 = vpop.f32.mrf.mxu0
        %v7457 = vadd.f32 0.0, %v7456
        %v7458 = vpop.f32.mrf.mxu0
        %v7459 = vadd.f32 0.0, %v7458
        %7460 = vmatmul.bf16.gmra.mxu0 %v7439
        %v7461 = vpop.f32.mrf.mxu0
        %v7462 = vadd.f32 0.0, %v7461
        %v7463 = vpop.f32.mrf.mxu0
        %v7464 = vadd.f32 0.0, %v7463
        %7465 = vmatmul.bf16.gmra.mxu0 %v7442
        %v7466 = vpop.f32.mrf.mxu0
        %v7467 = vadd.f32 0.0, %v7466
        %v7468 = vpop.f32.mrf.mxu0
        %v7469 = vadd.f32 0.0, %v7468
        %7470 = vmatmul.bf16.gmra.mxu0 %v7445
        %v7471 = vpop.f32.mrf.mxu0
        %v7472 = vadd.f32 0.0, %v7471
        %v7473 = vpop.f32.mrf.mxu0
        %v7474 = vadd.f32 0.0, %v7473
        %7475 = vdwg.mxu0
        %v7484 = vunpack.c.l.b16 %v7395
        %v7485 = vunpack.c.l.b16 %v7396
        %v7486 = vunpack.c.l.b16 %v7397
        %v7487 = vunpack.c.l.b16 %v7398
        %v7488 = vunpack.c.l.b16 %v7399
        %v7489 = vunpack.c.l.b16 %v7400
        %v7490 = vunpack.c.l.b16 %v7401
        %v7491 = vunpack.c.l.b16 %v7402
        %v7492 = vpack.c.b16 %v7485, %v7484
        %v7493 = vpack.c.b16 %v7487, %v7486
        %v7494 = vpack.c.b16 %v7489, %v7488
        %v7495 = vpack.c.b16 %v7491, %v7490
        %7496 = vrot.lane.b32.xlu0 %v5729, 32
        %v7497 = vpop.permute.xlu0 %7496
        %7498 = vrot.lane.b32.xlu0 %v5730, 32
        %v7499 = vpop.permute.xlu0 %7498
        %7500 = vrot.lane.b32.xlu0 %v5731, 32
        %v7501 = vpop.permute.xlu0 %7500
        %7502 = vrot.lane.b32.xlu0 %v5732, 32
        %v7503 = vpop.permute.xlu0 %7502
        %v7509 = vsel %vm1262, %v7492, 0
        %v7512 = vsel %vm1262, %v7493, 0
        %v7515 = vsel %vm1262, %v7494, 0
        %v7518 = vsel %vm1262, %v7495, 0
        %7520 = vmatpush.bf16.msra.mxu0 0
        %7521 = vmatpush.bf16.msra.mxu0 0
        %7522 = vmatpush.bf16.msra.mxu0 0
        %7523 = vmatpush.bf16.msra.mxu0 0
        %7524 = vmatpush.bf16.msra.mxu0 %v7503
        %7525 = vmatpush.bf16.msra.mxu0 %v7501
        %7526 = vmatpush.bf16.msra.mxu0 %v7499
        %7527 = vmatpush.bf16.msra.mxu0 %v7497
        %7528 = vmatmul.bf16.gmra.mxu0 %v7509
        %v7529 = vpop.f32.mrf.mxu0
        %v7530 = vadd.f32 0.0, %v7529
        %v7531 = vpop.f32.mrf.mxu0
        %v7532 = vadd.f32 0.0, %v7531
        %7533 = vmatmul.bf16.gmra.mxu0 %v7512
        %v7534 = vpop.f32.mrf.mxu0
        %v7535 = vadd.f32 0.0, %v7534
        %v7536 = vpop.f32.mrf.mxu0
        %v7537 = vadd.f32 0.0, %v7536
        %7538 = vmatmul.bf16.gmra.mxu0 %v7515
        %v7539 = vpop.f32.mrf.mxu0
        %v7540 = vadd.f32 0.0, %v7539
        %v7541 = vpop.f32.mrf.mxu0
        %v7542 = vadd.f32 0.0, %v7541
        %7543 = vmatmul.bf16.gmra.mxu0 %v7518
        %v7544 = vpop.f32.mrf.mxu0
        %v7545 = vadd.f32 0.0, %v7544
        %v7546 = vpop.f32.mrf.mxu0
        %v7547 = vadd.f32 0.0, %v7546
        %7548 = vdwg.mxu0
        %v7549 = vpack.c.bf16 %v7459, %v7457
        %v7550 = vpack.c.bf16 %v7464, %v7462
        %v7551 = vpack.c.bf16 %v7469, %v7467
        %v7552 = vpack.c.bf16 %v7474, %v7472
        %v7553 = vpack.c.bf16 %v7532, %v7530
        %v7554 = vpack.c.bf16 %v7537, %v7535
        %v7555 = vpack.c.bf16 %v7542, %v7540
        %v7556 = vpack.c.bf16 %v7547, %v7545
        %v7561 = vunpack.c.l.b16 %v4621
        %v7562 = vunpack.c.l.b16 %v4622
        %v7563 = vunpack.c.l.b16 %v4623
        %v7564 = vunpack.c.l.b16 %v4624
        %v7565 = vpack.c.b16 %v7562, %v7561
        %v7566 = vpack.c.b16 %v7564, %v7563
        %v7570 = vsel %vm1083, %v7549, 0
        %v7573 = vsel %vm1083, %v7550, 0
        %v7576 = vsel %vm1083, %v7551, 0
        %v7579 = vsel %vm1083, %v7552, 0
        %v7582 = vsel %vm1083, %v7553, 0
        %v7585 = vsel %vm1083, %v7554, 0
        %v7588 = vsel %vm1083, %v7555, 0
        %v7591 = vsel %vm1083, %v7556, 0
        %7593 = vmatpush.bf16.msra.mxu0 0
        %7594 = vmatpush.bf16.msra.mxu0 0
        %7595 = vmatpush.bf16.msra.mxu0 0
        %7596 = vmatpush.bf16.msra.mxu0 0
        %7597 = vmatpush.bf16.msra.mxu0 0
        %7598 = vmatpush.bf16.msra.mxu0 0
        %7599 = vmatpush.bf16.msra.mxu0 %v7566
        %7600 = vmatpush.bf16.msra.mxu0 %v7565
        %7601 = vmatmul.bf16.gmra.mxu0 %v7570
        %v7602 = vpop.f32.mrf.mxu0
        %v7603 = vadd.f32 0.0, %v7602
        %v7604 = vpop.f32.mrf.mxu0
        %v7605 = vadd.f32 0.0, %v7604
        %7606 = vmatmul.bf16.gmra.mxu0 %v7573
        %v7607 = vpop.f32.mrf.mxu0
        %v7608 = vadd.f32 0.0, %v7607
        %v7609 = vpop.f32.mrf.mxu0
        %v7610 = vadd.f32 0.0, %v7609
        %7611 = vmatmul.bf16.gmra.mxu0 %v7576
        %v7612 = vpop.f32.mrf.mxu0
        %v7613 = vadd.f32 0.0, %v7612
        %v7614 = vpop.f32.mrf.mxu0
        %v7615 = vadd.f32 0.0, %v7614
        %7616 = vmatmul.bf16.gmra.mxu0 %v7579
        %v7617 = vpop.f32.mrf.mxu0
        %v7618 = vadd.f32 0.0, %v7617
        %v7619 = vpop.f32.mrf.mxu0
        %v7620 = vadd.f32 0.0, %v7619
        %7621 = vmatmul.bf16.gmra.mxu0 %v7582
        %v7622 = vpop.f32.mrf.mxu0
        %v7623 = vadd.f32 0.0, %v7622
        %v7624 = vpop.f32.mrf.mxu0
        %v7625 = vadd.f32 0.0, %v7624
        %7626 = vmatmul.bf16.gmra.mxu0 %v7585
        %v7627 = vpop.f32.mrf.mxu0
        %v7628 = vadd.f32 0.0, %v7627
        %v7629 = vpop.f32.mrf.mxu0
        %v7630 = vadd.f32 0.0, %v7629
        %7631 = vmatmul.bf16.gmra.mxu0 %v7588
        %v7632 = vpop.f32.mrf.mxu0
        %v7633 = vadd.f32 0.0, %v7632
        %v7634 = vpop.f32.mrf.mxu0
        %v7635 = vadd.f32 0.0, %v7634
        %7636 = vmatmul.bf16.gmra.mxu0 %v7591
        %v7637 = vpop.f32.mrf.mxu0
        %v7638 = vadd.f32 0.0, %v7637
        %v7639 = vpop.f32.mrf.mxu0
        %v7640 = vadd.f32 0.0, %v7639
        %7641 = vdwg.mxu0
        %v7642 = vadd.f32 %v7041, %v7603
        %v7643 = vadd.f32 %v7042, %v7605
        %v7644 = vadd.f32 %v7043, %v7608
        %v7645 = vadd.f32 %v7044, %v7610
        %v7646 = vadd.f32 %v7045, %v7613
        %v7647 = vadd.f32 %v7046, %v7615
        %v7648 = vadd.f32 %v7047, %v7618
        %v7649 = vadd.f32 %v7048, %v7620
        %v7650 = vadd.f32 %v7049, %v7623
        %v7651 = vadd.f32 %v7050, %v7625
        %v7652 = vadd.f32 %v7051, %v7628
        %v7653 = vadd.f32 %v7052, %v7630
        %v7654 = vadd.f32 %v7053, %v7633
        %v7655 = vadd.f32 %v7054, %v7635
        %v7656 = vadd.f32 %v7055, %v7638
        %v7657 = vadd.f32 %v7056, %v7640
        %v7658 = vperm.slane %v4574, 4
        %v7659 = vadd.f32 %v7642, %v7658
        %v7660 = vadd.f32 %v7643, %v7658
        %v7661 = vadd.f32 %v7644, %v7658
        %v7662 = vadd.f32 %v7645, %v7658
        %v7663 = vadd.f32 %v7646, %v7658
        %v7664 = vadd.f32 %v7647, %v7658
        %v7665 = vadd.f32 %v7648, %v7658
        %v7666 = vadd.f32 %v7649, %v7658
        %v7667 = vadd.f32 %v7650, %v7658
        %v7668 = vadd.f32 %v7651, %v7658
        %v7669 = vadd.f32 %v7652, %v7658
        %v7670 = vadd.f32 %v7653, %v7658
        %v7671 = vadd.f32 %v7654, %v7658
        %v7672 = vadd.f32 %v7655, %v7658
        %v7673 = vadd.f32 %v7656, %v7658
        %v7674 = vadd.f32 %v7657, %v7658
        %v7675 = vadd.f32 %v4557, %v7659
        %v7676 = vadd.f32 %v4558, %v7660
        %v7677 = vadd.f32 %v4559, %v7661
        %v7678 = vadd.f32 %v4560, %v7662
        %v7679 = vadd.f32 %v4561, %v7663
        %v7680 = vadd.f32 %v4562, %v7664
        %v7681 = vadd.f32 %v4563, %v7665
        %v7682 = vadd.f32 %v4564, %v7666
        %v7683 = vadd.f32 %v4565, %v7667
        %v7684 = vadd.f32 %v4566, %v7668
        %v7685 = vadd.f32 %v4567, %v7669
        %v7686 = vadd.f32 %v4568, %v7670
        %v7687 = vadd.f32 %v4569, %v7671
        %v7688 = vadd.f32 %v4570, %v7672
        %v7689 = vadd.f32 %v4571, %v7673
        %v7690 = vadd.f32 %v4572, %v7674
        %v7691 = vadd.f32 %v7675, %v7676
        %v7692 = vadd.f32 %v7691, %v7677
        %v7693 = vadd.f32 %v7692, %v7678
        %v7694 = vadd.f32 %v7693, %v7679
        %v7695 = vadd.f32 %v7694, %v7680
        %v7696 = vadd.f32 %v7695, %v7681
        %v7697 = vadd.f32 %v7696, %v7682
        %v7698 = vrot.slane %v7697, 4
        %v7699 = vadd.f32 %v7697, %v7698
        %v7700 = vrot.slane %v7699, 2
        %v7701 = vadd.f32 %v7699, %v7700
        %v7702 = vrot.slane %v7701, 1
        %v7703 = vadd.f32 %v7701, %v7702
        %v7704 = vadd.f32 %v7683, %v7684
        %v7705 = vadd.f32 %v7704, %v7685
        %v7706 = vadd.f32 %v7705, %v7686
        %v7707 = vadd.f32 %v7706, %v7687
        %v7708 = vadd.f32 %v7707, %v7688
        %v7709 = vadd.f32 %v7708, %v7689
        %v7710 = vadd.f32 %v7709, %v7690
        %v7711 = vrot.slane %v7710, 4
        %v7712 = vadd.f32 %v7710, %v7711
        %v7713 = vrot.slane %v7712, 2
        %v7714 = vadd.f32 %v7712, %v7713
        %v7715 = vrot.slane %v7714, 1
        %v7716 = vadd.f32 %v7714, %v7715
        %v7717 = vmul.f32 %v7703, %v577
        %v7718 = vmul.f32 %v7716, %v577
        %v7719 = vsub.f32 %v7675, %v7717
        %v7720 = vsub.f32 %v7676, %v7717
        %v7721 = vsub.f32 %v7677, %v7717
        %v7722 = vsub.f32 %v7678, %v7717
        %v7723 = vsub.f32 %v7679, %v7717
        %v7724 = vsub.f32 %v7680, %v7717
        %v7725 = vsub.f32 %v7681, %v7717
        %v7726 = vsub.f32 %v7682, %v7717
        %v7727 = vsub.f32 %v7683, %v7718
        %v7728 = vsub.f32 %v7684, %v7718
        %v7729 = vsub.f32 %v7685, %v7718
        %v7730 = vsub.f32 %v7686, %v7718
        %v7731 = vsub.f32 %v7687, %v7718
        %v7732 = vsub.f32 %v7688, %v7718
        %v7733 = vsub.f32 %v7689, %v7718
        %v7734 = vsub.f32 %v7690, %v7718
        %v7735 = vmul.f32 %v7719, %v7719
        %v7736 = vmul.f32 %v7720, %v7720
        %v7737 = vmul.f32 %v7721, %v7721
        %v7738 = vmul.f32 %v7722, %v7722
        %v7739 = vmul.f32 %v7723, %v7723
        %v7740 = vmul.f32 %v7724, %v7724
        %v7741 = vmul.f32 %v7725, %v7725
        %v7742 = vmul.f32 %v7726, %v7726
        %v7743 = vmul.f32 %v7727, %v7727
        %v7744 = vmul.f32 %v7728, %v7728
        %v7745 = vmul.f32 %v7729, %v7729
        %v7746 = vmul.f32 %v7730, %v7730
        %v7747 = vmul.f32 %v7731, %v7731
        %v7748 = vmul.f32 %v7732, %v7732
        %v7749 = vmul.f32 %v7733, %v7733
        %v7750 = vmul.f32 %v7734, %v7734
        %v7751 = vadd.f32 %v7735, %v7736
        %v7752 = vadd.f32 %v7751, %v7737
        %v7753 = vadd.f32 %v7752, %v7738
        %v7754 = vadd.f32 %v7753, %v7739
        %v7755 = vadd.f32 %v7754, %v7740
        %v7756 = vadd.f32 %v7755, %v7741
        %v7757 = vadd.f32 %v7756, %v7742
        %v7758 = vrot.slane %v7757, 4
        %v7759 = vadd.f32 %v7757, %v7758
        %v7760 = vrot.slane %v7759, 2
        %v7761 = vadd.f32 %v7759, %v7760
        %v7762 = vrot.slane %v7761, 1
        %v7763 = vadd.f32 %v7761, %v7762
        %v7764 = vadd.f32 %v7743, %v7744
        %v7765 = vadd.f32 %v7764, %v7745
        %v7766 = vadd.f32 %v7765, %v7746
        %v7767 = vadd.f32 %v7766, %v7747
        %v7768 = vadd.f32 %v7767, %v7748
        %v7769 = vadd.f32 %v7768, %v7749
        %v7770 = vadd.f32 %v7769, %v7750
        %v7771 = vrot.slane %v7770, 4
        %v7772 = vadd.f32 %v7770, %v7771
        %v7773 = vrot.slane %v7772, 2
        %v7774 = vadd.f32 %v7772, %v7773
        %v7775 = vrot.slane %v7774, 1
        %v7776 = vadd.f32 %v7774, %v7775
        %v7777 = vmul.f32 %v7763, 0.015873017
        %v7778 = vmul.f32 %v7776, 0.015873017
        %v7779 = vadd.f32 %v7777, 1e-05
        %v7780 = vadd.f32 %v7778, 1e-05
        %v7781 = vrsqrt.pop %v7779
        %v7782 = vmul.f32 %v7781, %v7779
        %v7783 = vmul.f32 %v7782, %v7781
        %v7784 = vmul.f32 0.5, %v7783
        %v7785 = vsub.f32 1.5, %v7784
        %v7786 = vmul.f32 %v7781, %v7785
        %vm7787 = vweird.f32 %v7779
        %vm7788 = vweird.f32 %v7781
        %vm7789 = vmor %vm7787, %vm7788
        %v7790 = vsel %vm7789, %v7781, %v7786
        %v7791 = vrsqrt.pop %v7780
        %v7792 = vmul.f32 %v7791, %v7780
        %v7793 = vmul.f32 %v7792, %v7791
        %v7794 = vmul.f32 0.5, %v7793
        %v7795 = vsub.f32 1.5, %v7794
        %v7796 = vmul.f32 %v7791, %v7795
        %vm7797 = vweird.f32 %v7780
        %vm7798 = vweird.f32 %v7791
        %vm7799 = vmor %vm7797, %vm7798
        %v7800 = vsel %vm7799, %v7791, %v7796
        %v7801 = vmul.f32 %v7719, %v7790
        %v7802 = vmul.f32 %v7720, %v7790
        %v7803 = vmul.f32 %v7721, %v7790
        %v7804 = vmul.f32 %v7722, %v7790
        %v7805 = vmul.f32 %v7723, %v7790
        %v7806 = vmul.f32 %v7724, %v7790
        %v7807 = vmul.f32 %v7725, %v7790
        %v7808 = vmul.f32 %v7726, %v7790
        %v7809 = vmul.f32 %v7727, %v7800
        %v7810 = vmul.f32 %v7728, %v7800
        %v7811 = vmul.f32 %v7729, %v7800
        %v7812 = vmul.f32 %v7730, %v7800
        %v7813 = vmul.f32 %v7731, %v7800
        %v7814 = vmul.f32 %v7732, %v7800
        %v7815 = vmul.f32 %v7733, %v7800
        %v7816 = vmul.f32 %v7734, %v7800
        %v7817 = vperm.slane %v4574, 2
        %v7818 = vmul.f32 %v7817, %v7801
        %v7819 = vmul.f32 %v7817, %v7802
        %v7820 = vmul.f32 %v7817, %v7803
        %v7821 = vmul.f32 %v7817, %v7804
        %v7822 = vmul.f32 %v7817, %v7805
        %v7823 = vmul.f32 %v7817, %v7806
        %v7824 = vmul.f32 %v7817, %v7807
        %v7825 = vmul.f32 %v7817, %v7808
        %v7826 = vmul.f32 %v7817, %v7809
        %v7827 = vmul.f32 %v7817, %v7810
        %v7828 = vmul.f32 %v7817, %v7811
        %v7829 = vmul.f32 %v7817, %v7812
        %v7830 = vmul.f32 %v7817, %v7813
        %v7831 = vmul.f32 %v7817, %v7814
        %v7832 = vmul.f32 %v7817, %v7815
        %v7833 = vmul.f32 %v7817, %v7816
        %v7834 = vperm.slane %v4574, 3
        %v7835 = vadd.f32 %v7818, %v7834
        %v7836 = vadd.f32 %v7819, %v7834
        %v7837 = vadd.f32 %v7820, %v7834
        %v7838 = vadd.f32 %v7821, %v7834
        %v7839 = vadd.f32 %v7822, %v7834
        %v7840 = vadd.f32 %v7823, %v7834
        %v7841 = vadd.f32 %v7824, %v7834
        %v7842 = vadd.f32 %v7825, %v7834
        %v7843 = vadd.f32 %v7826, %v7834
        %v7844 = vadd.f32 %v7827, %v7834
        %v7845 = vadd.f32 %v7828, %v7834
        %v7846 = vadd.f32 %v7829, %v7834
        %v7847 = vadd.f32 %v7830, %v7834
        %v7848 = vadd.f32 %v7831, %v7834
        %v7849 = vadd.f32 %v7832, %v7834
        %v7850 = vadd.f32 %v7833, %v7834
        %v7851 = vpack.c.bf16 %v7836, %v7835
        %v7852 = vpack.c.bf16 %v7838, %v7837
        %v7853 = vpack.c.bf16 %v7840, %v7839
        %v7854 = vpack.c.bf16 %v7842, %v7841
        %v7855 = vpack.c.bf16 %v7844, %v7843
        %v7856 = vpack.c.bf16 %v7846, %v7845
        %v7857 = vpack.c.bf16 %v7848, %v7847
        %v7858 = vpack.c.bf16 %v7850, %v7849
        %s7859 = scalar_lea.vmem %s2, 4
        %v7860 = vld [vmem:[%s7859] sm:$0xf]
        %v7862 = vperm.slane %v7860, 0
        %v7863 = vperm.slane %v7860, 1
        %v7864 = vperm.slane %v7860, 2
        %v7865 = vperm.slane %v7860, 3
        %v7902 = vunpack.c.l.b16 %v4626
        %v7903 = vunpack.c.h.b16 %v4626
        %v7904 = vunpack.c.l.b16 %v4627
        %v7905 = vunpack.c.h.b16 %v4627
        %v7906 = vunpack.c.l.b16 %v4628
        %v7907 = vunpack.c.h.b16 %v4628
        %v7908 = vunpack.c.l.b16 %v4629
        %v7909 = vunpack.c.h.b16 %v4629
        %v7910 = vunpack.c.l.b16 %v4630
        %v7911 = vunpack.c.h.b16 %v4630
        %v7912 = vunpack.c.l.b16 %v4631
        %v7913 = vunpack.c.h.b16 %v4631
        %v7914 = vunpack.c.l.b16 %v4632
        %v7915 = vunpack.c.h.b16 %v4632
        %v7916 = vunpack.c.l.b16 %v4633
        %v7917 = vunpack.c.h.b16 %v4633
        %v7918 = vunpack.c.l.b16 %v4634
        %v7919 = vunpack.c.h.b16 %v4634
        %v7920 = vunpack.c.l.b16 %v4635
        %v7921 = vunpack.c.h.b16 %v4635
        %v7922 = vunpack.c.l.b16 %v4636
        %v7923 = vunpack.c.h.b16 %v4636
        %v7924 = vunpack.c.l.b16 %v4637
        %v7925 = vunpack.c.h.b16 %v4637
        %v7926 = vunpack.c.l.b16 %v4638
        %v7927 = vunpack.c.h.b16 %v4638
        %v7928 = vunpack.c.l.b16 %v4639
        %v7929 = vunpack.c.h.b16 %v4639
        %v7930 = vunpack.c.l.b16 %v4640
        %v7931 = vunpack.c.h.b16 %v4640
        %v7932 = vunpack.c.l.b16 %v4641
        %v7933 = vunpack.c.h.b16 %v4641
        %v7934 = vunpack.c.l.b16 %v4642
        %v7935 = vunpack.c.h.b16 %v4642
        %v7936 = vunpack.c.l.b16 %v4643
        %v7937 = vunpack.c.h.b16 %v4643
        %v7938 = vunpack.c.l.b16 %v4644
        %v7939 = vunpack.c.h.b16 %v4644
        %v7940 = vunpack.c.l.b16 %v4645
        %v7941 = vunpack.c.h.b16 %v4645
        %v7942 = vunpack.c.l.b16 %v4646
        %v7943 = vunpack.c.h.b16 %v4646
        %v7944 = vunpack.c.l.b16 %v4647
        %v7945 = vunpack.c.h.b16 %v4647
        %v7946 = vunpack.c.l.b16 %v4648
        %v7947 = vunpack.c.h.b16 %v4648
        %v7948 = vunpack.c.l.b16 %v4649
        %v7949 = vunpack.c.h.b16 %v4649
        %v7950 = vunpack.c.l.b16 %v4650
        %v7951 = vunpack.c.h.b16 %v4650
        %v7952 = vunpack.c.l.b16 %v4651
        %v7953 = vunpack.c.h.b16 %v4651
        %v7954 = vunpack.c.l.b16 %v4652
        %v7955 = vunpack.c.h.b16 %v4652
        %v7956 = vunpack.c.l.b16 %v4653
        %v7957 = vunpack.c.h.b16 %v4653
        %v7958 = vunpack.c.l.b16 %v4654
        %v7959 = vunpack.c.h.b16 %v4654
        %v7960 = vunpack.c.l.b16 %v4655
        %v7961 = vunpack.c.h.b16 %v4655
        %v7962 = vunpack.c.l.b16 %v4656
        %v7963 = vunpack.c.h.b16 %v4656
        %v7964 = vunpack.c.l.b16 %v4657
        %v7965 = vunpack.c.h.b16 %v4657
        %v7966 = vpack.c.b16 %v7906, %v7902
        %v7967 = vpack.c.b16 %v7907, %v7903
        %v7968 = vpack.c.b16 %v7908, %v7904
        %v7969 = vpack.c.b16 %v7909, %v7905
        %v7970 = vpack.c.b16 %v7914, %v7910
        %v7971 = vpack.c.b16 %v7915, %v7911
        %v7972 = vpack.c.b16 %v7916, %v7912
        %v7973 = vpack.c.b16 %v7917, %v7913
        %v7974 = vpack.c.b16 %v7922, %v7918
        %v7975 = vpack.c.b16 %v7923, %v7919
        %v7976 = vpack.c.b16 %v7924, %v7920
        %v7977 = vpack.c.b16 %v7925, %v7921
        %v7978 = vpack.c.b16 %v7930, %v7926
        %v7979 = vpack.c.b16 %v7931, %v7927
        %v7980 = vpack.c.b16 %v7932, %v7928
        %v7981 = vpack.c.b16 %v7933, %v7929
        %v7982 = vpack.c.b16 %v7938, %v7934
        %v7983 = vpack.c.b16 %v7939, %v7935
        %v7984 = vpack.c.b16 %v7940, %v7936
        %v7985 = vpack.c.b16 %v7941, %v7937
        %v7986 = vpack.c.b16 %v7946, %v7942
        %v7987 = vpack.c.b16 %v7947, %v7943
        %v7988 = vpack.c.b16 %v7948, %v7944
        %v7989 = vpack.c.b16 %v7949, %v7945
        %v7990 = vpack.c.b16 %v7954, %v7950
        %v7991 = vpack.c.b16 %v7955, %v7951
        %v7992 = vpack.c.b16 %v7956, %v7952
        %v7993 = vpack.c.b16 %v7957, %v7953
        %v7994 = vpack.c.b16 %v7962, %v7958
        %v7995 = vpack.c.b16 %v7963, %v7959
        %v7996 = vpack.c.b16 %v7964, %v7960
        %v7997 = vpack.c.b16 %v7965, %v7961
        %8030 = vmatpush.bf16.msra.mxu0 %v7994
        %8031 = vmatpush.bf16.msra.mxu0 %v7990
        %8032 = vmatpush.bf16.msra.mxu0 %v7986
        %8033 = vmatpush.bf16.msra.mxu0 %v7982
        %8034 = vmatpush.bf16.msra.mxu0 %v7978
        %8035 = vmatpush.bf16.msra.mxu0 %v7974
        %8036 = vmatpush.bf16.msra.mxu0 %v7970
        %8037 = vmatpush.bf16.msra.mxu0 %v7966
        %8038 = vmatmul.bf16.gmra.mxu0 %v7851
        %v8039 = vpop.f32.mrf.mxu0
        %v8040 = vadd.f32 %v7862, %v8039
        %v8041 = vpop.f32.mrf.mxu0
        %v8042 = vadd.f32 %v7862, %v8041
        %8043 = vmatmul.bf16.gmra.mxu0 %v7852
        %v8044 = vpop.f32.mrf.mxu0
        %v8045 = vadd.f32 %v7862, %v8044
        %v8046 = vpop.f32.mrf.mxu0
        %v8047 = vadd.f32 %v7862, %v8046
        %8048 = vmatmul.bf16.gmra.mxu0 %v7853
        %v8049 = vpop.f32.mrf.mxu0
        %v8050 = vadd.f32 %v7862, %v8049
        %v8051 = vpop.f32.mrf.mxu0
        %v8052 = vadd.f32 %v7862, %v8051
        %8053 = vmatmul.bf16.gmra.mxu0 %v7854
        %v8054 = vpop.f32.mrf.mxu0
        %v8055 = vadd.f32 %v7862, %v8054
        %v8056 = vpop.f32.mrf.mxu0
        %v8057 = vadd.f32 %v7862, %v8056
        %8058 = vmatmul.bf16.gmra.mxu0 %v7855
        %v8059 = vpop.f32.mrf.mxu0
        %v8060 = vadd.f32 %v7862, %v8059
        %v8061 = vpop.f32.mrf.mxu0
        %v8062 = vadd.f32 %v7862, %v8061
        %8063 = vmatmul.bf16.gmra.mxu0 %v7856
        %v8064 = vpop.f32.mrf.mxu0
        %v8065 = vadd.f32 %v7862, %v8064
        %v8066 = vpop.f32.mrf.mxu0
        %v8067 = vadd.f32 %v7862, %v8066
        %8068 = vmatmul.bf16.gmra.mxu0 %v7857
        %v8069 = vpop.f32.mrf.mxu0
        %v8070 = vadd.f32 %v7862, %v8069
        %v8071 = vpop.f32.mrf.mxu0
        %v8072 = vadd.f32 %v7862, %v8071
        %8073 = vmatmul.bf16.gmra.mxu0 %v7858
        %v8074 = vpop.f32.mrf.mxu0
        %v8075 = vadd.f32 %v7862, %v8074
        %v8076 = vpop.f32.mrf.mxu0
        %v8077 = vadd.f32 %v7862, %v8076
        %8078 = vdwg.mxu0
        %8079 = vmatpush.bf16.msra.mxu0 %v7995
        %8080 = vmatpush.bf16.msra.mxu0 %v7991
        %8081 = vmatpush.bf16.msra.mxu0 %v7987
        %8082 = vmatpush.bf16.msra.mxu0 %v7983
        %8083 = vmatpush.bf16.msra.mxu0 %v7979
        %8084 = vmatpush.bf16.msra.mxu0 %v7975
        %8085 = vmatpush.bf16.msra.mxu0 %v7971
        %8086 = vmatpush.bf16.msra.mxu0 %v7967
        %8087 = vmatmul.bf16.gmra.mxu0 %v7851
        %v8088 = vpop.f32.mrf.mxu0
        %v8089 = vadd.f32 %v7863, %v8088
        %v8090 = vpop.f32.mrf.mxu0
        %v8091 = vadd.f32 %v7863, %v8090
        %8092 = vmatmul.bf16.gmra.mxu0 %v7852
        %v8093 = vpop.f32.mrf.mxu0
        %v8094 = vadd.f32 %v7863, %v8093
        %v8095 = vpop.f32.mrf.mxu0
        %v8096 = vadd.f32 %v7863, %v8095
        %8097 = vmatmul.bf16.gmra.mxu0 %v7853
        %v8098 = vpop.f32.mrf.mxu0
        %v8099 = vadd.f32 %v7863, %v8098
        %v8100 = vpop.f32.mrf.mxu0
        %v8101 = vadd.f32 %v7863, %v8100
        %8102 = vmatmul.bf16.gmra.mxu0 %v7854
        %v8103 = vpop.f32.mrf.mxu0
        %v8104 = vadd.f32 %v7863, %v8103
        %v8105 = vpop.f32.mrf.mxu0
        %v8106 = vadd.f32 %v7863, %v8105
        %8107 = vmatmul.bf16.gmra.mxu0 %v7855
        %v8108 = vpop.f32.mrf.mxu0
        %v8109 = vadd.f32 %v7863, %v8108
        %v8110 = vpop.f32.mrf.mxu0
        %v8111 = vadd.f32 %v7863, %v8110
        %8112 = vmatmul.bf16.gmra.mxu0 %v7856
        %v8113 = vpop.f32.mrf.mxu0
        %v8114 = vadd.f32 %v7863, %v8113
        %v8115 = vpop.f32.mrf.mxu0
        %v8116 = vadd.f32 %v7863, %v8115
        %8117 = vmatmul.bf16.gmra.mxu0 %v7857
        %v8118 = vpop.f32.mrf.mxu0
        %v8119 = vadd.f32 %v7863, %v8118
        %v8120 = vpop.f32.mrf.mxu0
        %v8121 = vadd.f32 %v7863, %v8120
        %8122 = vmatmul.bf16.gmra.mxu0 %v7858
        %v8123 = vpop.f32.mrf.mxu0
        %v8124 = vadd.f32 %v7863, %v8123
        %v8125 = vpop.f32.mrf.mxu0
        %v8126 = vadd.f32 %v7863, %v8125
        %8127 = vdwg.mxu0
        %8128 = vmatpush.bf16.msra.mxu0 %v7996
        %8129 = vmatpush.bf16.msra.mxu0 %v7992
        %8130 = vmatpush.bf16.msra.mxu0 %v7988
        %8131 = vmatpush.bf16.msra.mxu0 %v7984
        %8132 = vmatpush.bf16.msra.mxu0 %v7980
        %8133 = vmatpush.bf16.msra.mxu0 %v7976
        %8134 = vmatpush.bf16.msra.mxu0 %v7972
        %8135 = vmatpush.bf16.msra.mxu0 %v7968
        %8136 = vmatmul.bf16.gmra.mxu0 %v7851
        %v8137 = vpop.f32.mrf.mxu0
        %v8138 = vadd.f32 %v7864, %v8137
        %v8139 = vpop.f32.mrf.mxu0
        %v8140 = vadd.f32 %v7864, %v8139
        %8141 = vmatmul.bf16.gmra.mxu0 %v7852
        %v8142 = vpop.f32.mrf.mxu0
        %v8143 = vadd.f32 %v7864, %v8142
        %v8144 = vpop.f32.mrf.mxu0
        %v8145 = vadd.f32 %v7864, %v8144
        %8146 = vmatmul.bf16.gmra.mxu0 %v7853
        %v8147 = vpop.f32.mrf.mxu0
        %v8148 = vadd.f32 %v7864, %v8147
        %v8149 = vpop.f32.mrf.mxu0
        %v8150 = vadd.f32 %v7864, %v8149
        %8151 = vmatmul.bf16.gmra.mxu0 %v7854
        %v8152 = vpop.f32.mrf.mxu0
        %v8153 = vadd.f32 %v7864, %v8152
        %v8154 = vpop.f32.mrf.mxu0
        %v8155 = vadd.f32 %v7864, %v8154
        %8156 = vmatmul.bf16.gmra.mxu0 %v7855
        %v8157 = vpop.f32.mrf.mxu0
        %v8158 = vadd.f32 %v7864, %v8157
        %v8159 = vpop.f32.mrf.mxu0
        %v8160 = vadd.f32 %v7864, %v8159
        %8161 = vmatmul.bf16.gmra.mxu0 %v7856
        %v8162 = vpop.f32.mrf.mxu0
        %v8163 = vadd.f32 %v7864, %v8162
        %v8164 = vpop.f32.mrf.mxu0
        %v8165 = vadd.f32 %v7864, %v8164
        %8166 = vmatmul.bf16.gmra.mxu0 %v7857
        %v8167 = vpop.f32.mrf.mxu0
        %v8168 = vadd.f32 %v7864, %v8167
        %v8169 = vpop.f32.mrf.mxu0
        %v8170 = vadd.f32 %v7864, %v8169
        %8171 = vmatmul.bf16.gmra.mxu0 %v7858
        %v8172 = vpop.f32.mrf.mxu0
        %v8173 = vadd.f32 %v7864, %v8172
        %v8174 = vpop.f32.mrf.mxu0
        %v8175 = vadd.f32 %v7864, %v8174
        %8176 = vdwg.mxu0
        %8177 = vmatpush.bf16.msra.mxu0 %v7997
        %8178 = vmatpush.bf16.msra.mxu0 %v7993
        %8179 = vmatpush.bf16.msra.mxu0 %v7989
        %8180 = vmatpush.bf16.msra.mxu0 %v7985
        %8181 = vmatpush.bf16.msra.mxu0 %v7981
        %8182 = vmatpush.bf16.msra.mxu0 %v7977
        %8183 = vmatpush.bf16.msra.mxu0 %v7973
        %8184 = vmatpush.bf16.msra.mxu0 %v7969
        %8185 = vmatmul.bf16.gmra.mxu0 %v7851
        %v8186 = vpop.f32.mrf.mxu0
        %v8187 = vadd.f32 %v7865, %v8186
        %v8188 = vpop.f32.mrf.mxu0
        %v8189 = vadd.f32 %v7865, %v8188
        %8190 = vmatmul.bf16.gmra.mxu0 %v7852
        %v8191 = vpop.f32.mrf.mxu0
        %v8192 = vadd.f32 %v7865, %v8191
        %v8193 = vpop.f32.mrf.mxu0
        %v8194 = vadd.f32 %v7865, %v8193
        %8195 = vmatmul.bf16.gmra.mxu0 %v7853
        %v8196 = vpop.f32.mrf.mxu0
        %v8197 = vadd.f32 %v7865, %v8196
        %v8198 = vpop.f32.mrf.mxu0
        %v8199 = vadd.f32 %v7865, %v8198
        %8200 = vmatmul.bf16.gmra.mxu0 %v7854
        %v8201 = vpop.f32.mrf.mxu0
        %v8202 = vadd.f32 %v7865, %v8201
        %v8203 = vpop.f32.mrf.mxu0
        %v8204 = vadd.f32 %v7865, %v8203
        %8205 = vmatmul.bf16.gmra.mxu0 %v7855
        %v8206 = vpop.f32.mrf.mxu0
        %v8207 = vadd.f32 %v7865, %v8206
        %v8208 = vpop.f32.mrf.mxu0
        %v8209 = vadd.f32 %v7865, %v8208
        %8210 = vmatmul.bf16.gmra.mxu0 %v7856
        %v8211 = vpop.f32.mrf.mxu0
        %v8212 = vadd.f32 %v7865, %v8211
        %v8213 = vpop.f32.mrf.mxu0
        %v8214 = vadd.f32 %v7865, %v8213
        %8215 = vmatmul.bf16.gmra.mxu0 %v7857
        %v8216 = vpop.f32.mrf.mxu0
        %v8217 = vadd.f32 %v7865, %v8216
        %v8218 = vpop.f32.mrf.mxu0
        %v8219 = vadd.f32 %v7865, %v8218
        %8220 = vmatmul.bf16.gmra.mxu0 %v7858
        %v8221 = vpop.f32.mrf.mxu0
        %v8222 = vadd.f32 %v7865, %v8221
        %v8223 = vpop.f32.mrf.mxu0
        %v8224 = vadd.f32 %v7865, %v8223
        %8225 = vdwg.mxu0
        %v8226 = vmax.f32 %v8040, 0.0
        %v8227 = vmax.f32 %v8089, 0.0
        %v8228 = vmax.f32 %v8138, 0.0
        %v8229 = vmax.f32 %v8187, 0.0
        %v8230 = vmax.f32 %v8042, 0.0
        %v8231 = vmax.f32 %v8091, 0.0
        %v8232 = vmax.f32 %v8140, 0.0
        %v8233 = vmax.f32 %v8189, 0.0
        %v8234 = vmax.f32 %v8045, 0.0
        %v8235 = vmax.f32 %v8094, 0.0
        %v8236 = vmax.f32 %v8143, 0.0
        %v8237 = vmax.f32 %v8192, 0.0
        %v8238 = vmax.f32 %v8047, 0.0
        %v8239 = vmax.f32 %v8096, 0.0
        %v8240 = vmax.f32 %v8145, 0.0
        %v8241 = vmax.f32 %v8194, 0.0
        %v8242 = vmax.f32 %v8050, 0.0
        %v8243 = vmax.f32 %v8099, 0.0
        %v8244 = vmax.f32 %v8148, 0.0
        %v8245 = vmax.f32 %v8197, 0.0
        %v8246 = vmax.f32 %v8052, 0.0
        %v8247 = vmax.f32 %v8101, 0.0
        %v8248 = vmax.f32 %v8150, 0.0
        %v8249 = vmax.f32 %v8199, 0.0
        %v8250 = vmax.f32 %v8055, 0.0
        %v8251 = vmax.f32 %v8104, 0.0
        %v8252 = vmax.f32 %v8153, 0.0
        %v8253 = vmax.f32 %v8202, 0.0
        %v8254 = vmax.f32 %v8057, 0.0
        %v8255 = vmax.f32 %v8106, 0.0
        %v8256 = vmax.f32 %v8155, 0.0
        %v8257 = vmax.f32 %v8204, 0.0
        %v8258 = vmax.f32 %v8060, 0.0
        %v8259 = vmax.f32 %v8109, 0.0
        %v8260 = vmax.f32 %v8158, 0.0
        %v8261 = vmax.f32 %v8207, 0.0
        %v8262 = vmax.f32 %v8062, 0.0
        %v8263 = vmax.f32 %v8111, 0.0
        %v8264 = vmax.f32 %v8160, 0.0
        %v8265 = vmax.f32 %v8209, 0.0
        %v8266 = vmax.f32 %v8065, 0.0
        %v8267 = vmax.f32 %v8114, 0.0
        %v8268 = vmax.f32 %v8163, 0.0
        %v8269 = vmax.f32 %v8212, 0.0
        %v8270 = vmax.f32 %v8067, 0.0
        %v8271 = vmax.f32 %v8116, 0.0
        %v8272 = vmax.f32 %v8165, 0.0
        %v8273 = vmax.f32 %v8214, 0.0
        %v8274 = vmax.f32 %v8070, 0.0
        %v8275 = vmax.f32 %v8119, 0.0
        %v8276 = vmax.f32 %v8168, 0.0
        %v8277 = vmax.f32 %v8217, 0.0
        %v8278 = vmax.f32 %v8072, 0.0
        %v8279 = vmax.f32 %v8121, 0.0
        %v8280 = vmax.f32 %v8170, 0.0
        %v8281 = vmax.f32 %v8219, 0.0
        %v8282 = vmax.f32 %v8075, 0.0
        %v8283 = vmax.f32 %v8124, 0.0
        %v8284 = vmax.f32 %v8173, 0.0
        %v8285 = vmax.f32 %v8222, 0.0
        %v8286 = vmax.f32 %v8077, 0.0
        %v8287 = vmax.f32 %v8126, 0.0
        %v8288 = vmax.f32 %v8175, 0.0
        %v8289 = vmax.f32 %v8224, 0.0
        %v8290 = vpack.c.bf16 %v8230, %v8226
        %v8291 = vpack.c.bf16 %v8231, %v8227
        %v8292 = vpack.c.bf16 %v8232, %v8228
        %v8293 = vpack.c.bf16 %v8233, %v8229
        %v8294 = vpack.c.bf16 %v8238, %v8234
        %v8295 = vpack.c.bf16 %v8239, %v8235
        %v8296 = vpack.c.bf16 %v8240, %v8236
        %v8297 = vpack.c.bf16 %v8241, %v8237
        %v8298 = vpack.c.bf16 %v8246, %v8242
        %v8299 = vpack.c.bf16 %v8247, %v8243
        %v8300 = vpack.c.bf16 %v8248, %v8244
        %v8301 = vpack.c.bf16 %v8249, %v8245
        %v8302 = vpack.c.bf16 %v8254, %v8250
        %v8303 = vpack.c.bf16 %v8255, %v8251
        %v8304 = vpack.c.bf16 %v8256, %v8252
        %v8305 = vpack.c.bf16 %v8257, %v8253
        %v8306 = vpack.c.bf16 %v8262, %v8258
        %v8307 = vpack.c.bf16 %v8263, %v8259
        %v8308 = vpack.c.bf16 %v8264, %v8260
        %v8309 = vpack.c.bf16 %v8265, %v8261
        %v8310 = vpack.c.bf16 %v8270, %v8266
        %v8311 = vpack.c.bf16 %v8271, %v8267
        %v8312 = vpack.c.bf16 %v8272, %v8268
        %v8313 = vpack.c.bf16 %v8273, %v8269
        %v8314 = vpack.c.bf16 %v8278, %v8274
        %v8315 = vpack.c.bf16 %v8279, %v8275
        %v8316 = vpack.c.bf16 %v8280, %v8276
        %v8317 = vpack.c.bf16 %v8281, %v8277
        %v8318 = vpack.c.bf16 %v8286, %v8282
        %v8319 = vpack.c.bf16 %v8287, %v8283
        %v8320 = vpack.c.bf16 %v8288, %v8284
        %v8321 = vpack.c.bf16 %v8289, %v8285
        %v8322 = vperm.slane %v4574, 5
        %v8387 = vunpack.c.l.b16 %v4659
        %v8388 = vunpack.c.l.b16 %v4660
        %v8389 = vunpack.c.l.b16 %v4661
        %v8390 = vunpack.c.l.b16 %v4662
        %v8391 = vunpack.c.l.b16 %v4663
        %v8392 = vunpack.c.l.b16 %v4664
        %v8393 = vunpack.c.l.b16 %v4665
        %v8394 = vunpack.c.l.b16 %v4666
        %v8395 = vunpack.c.l.b16 %v4667
        %v8396 = vunpack.c.l.b16 %v4668
        %v8397 = vunpack.c.l.b16 %v4669
        %v8398 = vunpack.c.l.b16 %v4670
        %v8399 = vunpack.c.l.b16 %v4671
        %v8400 = vunpack.c.l.b16 %v4672
        %v8401 = vunpack.c.l.b16 %v4673
        %v8402 = vunpack.c.l.b16 %v4674
        %v8403 = vunpack.c.l.b16 %v4675
        %v8404 = vunpack.c.l.b16 %v4676
        %v8405 = vunpack.c.l.b16 %v4677
        %v8406 = vunpack.c.l.b16 %v4678
        %v8407 = vunpack.c.l.b16 %v4679
        %v8408 = vunpack.c.l.b16 %v4680
        %v8409 = vunpack.c.l.b16 %v4681
        %v8410 = vunpack.c.l.b16 %v4682
        %v8411 = vunpack.c.l.b16 %v4683
        %v8412 = vunpack.c.l.b16 %v4684
        %v8413 = vunpack.c.l.b16 %v4685
        %v8414 = vunpack.c.l.b16 %v4686
        %v8415 = vunpack.c.l.b16 %v4687
        %v8416 = vunpack.c.l.b16 %v4688
        %v8417 = vunpack.c.l.b16 %v4689
        %v8418 = vunpack.c.l.b16 %v4690
        %v8419 = vunpack.c.l.b16 %v4691
        %v8420 = vunpack.c.l.b16 %v4692
        %v8421 = vunpack.c.l.b16 %v4693
        %v8422 = vunpack.c.l.b16 %v4694
        %v8423 = vunpack.c.l.b16 %v4695
        %v8424 = vunpack.c.l.b16 %v4696
        %v8425 = vunpack.c.l.b16 %v4697
        %v8426 = vunpack.c.l.b16 %v4698
        %v8427 = vunpack.c.l.b16 %v4699
        %v8428 = vunpack.c.l.b16 %v4700
        %v8429 = vunpack.c.l.b16 %v4701
        %v8430 = vunpack.c.l.b16 %v4702
        %v8431 = vunpack.c.l.b16 %v4703
        %v8432 = vunpack.c.l.b16 %v4704
        %v8433 = vunpack.c.l.b16 %v4705
        %v8434 = vunpack.c.l.b16 %v4706
        %v8435 = vunpack.c.l.b16 %v4707
        %v8436 = vunpack.c.l.b16 %v4708
        %v8437 = vunpack.c.l.b16 %v4709
        %v8438 = vunpack.c.l.b16 %v4710
        %v8439 = vunpack.c.l.b16 %v4711
        %v8440 = vunpack.c.l.b16 %v4712
        %v8441 = vunpack.c.l.b16 %v4713
        %v8442 = vunpack.c.l.b16 %v4714
        %v8443 = vunpack.c.l.b16 %v4715
        %v8444 = vunpack.c.l.b16 %v4716
        %v8445 = vunpack.c.l.b16 %v4717
        %v8446 = vunpack.c.l.b16 %v4718
        %v8447 = vunpack.c.l.b16 %v4719
        %v8448 = vunpack.c.l.b16 %v4720
        %v8449 = vunpack.c.l.b16 %v4721
        %v8450 = vunpack.c.l.b16 %v4722
        %v8451 = vpack.c.b16 %v8388, %v8387
        %v8452 = vpack.c.b16 %v8390, %v8389
        %v8453 = vpack.c.b16 %v8392, %v8391
        %v8454 = vpack.c.b16 %v8394, %v8393
        %v8455 = vpack.c.b16 %v8396, %v8395
        %v8456 = vpack.c.b16 %v8398, %v8397
        %v8457 = vpack.c.b16 %v8400, %v8399
        %v8458 = vpack.c.b16 %v8402, %v8401
        %v8459 = vpack.c.b16 %v8404, %v8403
        %v8460 = vpack.c.b16 %v8406, %v8405
        %v8461 = vpack.c.b16 %v8408, %v8407
        %v8462 = vpack.c.b16 %v8410, %v8409
        %v8463 = vpack.c.b16 %v8412, %v8411
        %v8464 = vpack.c.b16 %v8414, %v8413
        %v8465 = vpack.c.b16 %v8416, %v8415
        %v8466 = vpack.c.b16 %v8418, %v8417
        %v8467 = vpack.c.b16 %v8420, %v8419
        %v8468 = vpack.c.b16 %v8422, %v8421
        %v8469 = vpack.c.b16 %v8424, %v8423
        %v8470 = vpack.c.b16 %v8426, %v8425
        %v8471 = vpack.c.b16 %v8428, %v8427
        %v8472 = vpack.c.b16 %v8430, %v8429
        %v8473 = vpack.c.b16 %v8432, %v8431
        %v8474 = vpack.c.b16 %v8434, %v8433
        %v8475 = vpack.c.b16 %v8436, %v8435
        %v8476 = vpack.c.b16 %v8438, %v8437
        %v8477 = vpack.c.b16 %v8440, %v8439
        %v8478 = vpack.c.b16 %v8442, %v8441
        %v8479 = vpack.c.b16 %v8444, %v8443
        %v8480 = vpack.c.b16 %v8446, %v8445
        %v8481 = vpack.c.b16 %v8448, %v8447
        %v8482 = vpack.c.b16 %v8450, %v8449
        %8515 = vmatpush.bf16.msra.mxu0 %v8458
        %8516 = vmatpush.bf16.msra.mxu0 %v8457
        %8517 = vmatpush.bf16.msra.mxu0 %v8456
        %8518 = vmatpush.bf16.msra.mxu0 %v8455
        %8519 = vmatpush.bf16.msra.mxu0 %v8454
        %8520 = vmatpush.bf16.msra.mxu0 %v8453
        %8521 = vmatpush.bf16.msra.mxu0 %v8452
        %8522 = vmatpush.bf16.msra.mxu0 %v8451
        %8523 = vmatmul.bf16.gmra.mxu0 %v8290
        %v8524 = vpop.f32.mrf.mxu0
        %v8525 = vadd.f32 %v8322, %v8524
        %v8526 = vpop.f32.mrf.mxu0
        %v8527 = vadd.f32 %v8322, %v8526
        %8528 = vmatmul.bf16.gmra.mxu0 %v8294
        %v8529 = vpop.f32.mrf.mxu0
        %v8530 = vadd.f32 %v8322, %v8529
        %v8531 = vpop.f32.mrf.mxu0
        %v8532 = vadd.f32 %v8322, %v8531
        %8533 = vmatmul.bf16.gmra.mxu0 %v8298
        %v8534 = vpop.f32.mrf.mxu0
        %v8535 = vadd.f32 %v8322, %v8534
        %v8536 = vpop.f32.mrf.mxu0
        %v8537 = vadd.f32 %v8322, %v8536
        %8538 = vmatmul.bf16.gmra.mxu0 %v8302
        %v8539 = vpop.f32.mrf.mxu0
        %v8540 = vadd.f32 %v8322, %v8539
        %v8541 = vpop.f32.mrf.mxu0
        %v8542 = vadd.f32 %v8322, %v8541
        %8543 = vmatmul.bf16.gmra.mxu0 %v8306
        %v8544 = vpop.f32.mrf.mxu0
        %v8545 = vadd.f32 %v8322, %v8544
        %v8546 = vpop.f32.mrf.mxu0
        %v8547 = vadd.f32 %v8322, %v8546
        %8548 = vmatmul.bf16.gmra.mxu0 %v8310
        %v8549 = vpop.f32.mrf.mxu0
        %v8550 = vadd.f32 %v8322, %v8549
        %v8551 = vpop.f32.mrf.mxu0
        %v8552 = vadd.f32 %v8322, %v8551
        %8553 = vmatmul.bf16.gmra.mxu0 %v8314
        %v8554 = vpop.f32.mrf.mxu0
        %v8555 = vadd.f32 %v8322, %v8554
        %v8556 = vpop.f32.mrf.mxu0
        %v8557 = vadd.f32 %v8322, %v8556
        %8558 = vmatmul.bf16.gmra.mxu0 %v8318
        %v8559 = vpop.f32.mrf.mxu0
        %v8560 = vadd.f32 %v8322, %v8559
        %v8561 = vpop.f32.mrf.mxu0
        %v8562 = vadd.f32 %v8322, %v8561
        %8563 = vdwg.mxu0
        %8564 = vmatpush.bf16.msra.mxu0 %v8466
        %8565 = vmatpush.bf16.msra.mxu0 %v8465
        %8566 = vmatpush.bf16.msra.mxu0 %v8464
        %8567 = vmatpush.bf16.msra.mxu0 %v8463
        %8568 = vmatpush.bf16.msra.mxu0 %v8462
        %8569 = vmatpush.bf16.msra.mxu0 %v8461
        %8570 = vmatpush.bf16.msra.mxu0 %v8460
        %8571 = vmatpush.bf16.msra.mxu0 %v8459
        %8572 = vmatmul.bf16.gmra.mxu0 %v8291
        %v8573 = vpop.f32.mrf.mxu0
        %v8574 = vadd.f32 %v8525, %v8573
        %v8575 = vpop.f32.mrf.mxu0
        %v8576 = vadd.f32 %v8527, %v8575
        %8577 = vmatmul.bf16.gmra.mxu0 %v8295
        %v8578 = vpop.f32.mrf.mxu0
        %v8579 = vadd.f32 %v8530, %v8578
        %v8580 = vpop.f32.mrf.mxu0
        %v8581 = vadd.f32 %v8532, %v8580
        %8582 = vmatmul.bf16.gmra.mxu0 %v8299
        %v8583 = vpop.f32.mrf.mxu0
        %v8584 = vadd.f32 %v8535, %v8583
        %v8585 = vpop.f32.mrf.mxu0
        %v8586 = vadd.f32 %v8537, %v8585
        %8587 = vmatmul.bf16.gmra.mxu0 %v8303
        %v8588 = vpop.f32.mrf.mxu0
        %v8589 = vadd.f32 %v8540, %v8588
        %v8590 = vpop.f32.mrf.mxu0
        %v8591 = vadd.f32 %v8542, %v8590
        %8592 = vmatmul.bf16.gmra.mxu0 %v8307
        %v8593 = vpop.f32.mrf.mxu0
        %v8594 = vadd.f32 %v8545, %v8593
        %v8595 = vpop.f32.mrf.mxu0
        %v8596 = vadd.f32 %v8547, %v8595
        %8597 = vmatmul.bf16.gmra.mxu0 %v8311
        %v8598 = vpop.f32.mrf.mxu0
        %v8599 = vadd.f32 %v8550, %v8598
        %v8600 = vpop.f32.mrf.mxu0
        %v8601 = vadd.f32 %v8552, %v8600
        %8602 = vmatmul.bf16.gmra.mxu0 %v8315
        %v8603 = vpop.f32.mrf.mxu0
        %v8604 = vadd.f32 %v8555, %v8603
        %v8605 = vpop.f32.mrf.mxu0
        %v8606 = vadd.f32 %v8557, %v8605
        %8607 = vmatmul.bf16.gmra.mxu0 %v8319
        %v8608 = vpop.f32.mrf.mxu0
        %v8609 = vadd.f32 %v8560, %v8608
        %v8610 = vpop.f32.mrf.mxu0
        %v8611 = vadd.f32 %v8562, %v8610
        %8612 = vdwg.mxu0
        %8613 = vmatpush.bf16.msra.mxu0 %v8474
        %8614 = vmatpush.bf16.msra.mxu0 %v8473
        %8615 = vmatpush.bf16.msra.mxu0 %v8472
        %8616 = vmatpush.bf16.msra.mxu0 %v8471
        %8617 = vmatpush.bf16.msra.mxu0 %v8470
        %8618 = vmatpush.bf16.msra.mxu0 %v8469
        %8619 = vmatpush.bf16.msra.mxu0 %v8468
        %8620 = vmatpush.bf16.msra.mxu0 %v8467
        %8621 = vmatmul.bf16.gmra.mxu0 %v8292
        %v8622 = vpop.f32.mrf.mxu0
        %v8623 = vadd.f32 %v8574, %v8622
        %v8624 = vpop.f32.mrf.mxu0
        %v8625 = vadd.f32 %v8576, %v8624
        %8626 = vmatmul.bf16.gmra.mxu0 %v8296
        %v8627 = vpop.f32.mrf.mxu0
        %v8628 = vadd.f32 %v8579, %v8627
        %v8629 = vpop.f32.mrf.mxu0
        %v8630 = vadd.f32 %v8581, %v8629
        %8631 = vmatmul.bf16.gmra.mxu0 %v8300
        %v8632 = vpop.f32.mrf.mxu0
        %v8633 = vadd.f32 %v8584, %v8632
        %v8634 = vpop.f32.mrf.mxu0
        %v8635 = vadd.f32 %v8586, %v8634
        %8636 = vmatmul.bf16.gmra.mxu0 %v8304
        %v8637 = vpop.f32.mrf.mxu0
        %v8638 = vadd.f32 %v8589, %v8637
        %v8639 = vpop.f32.mrf.mxu0
        %v8640 = vadd.f32 %v8591, %v8639
        %8641 = vmatmul.bf16.gmra.mxu0 %v8308
        %v8642 = vpop.f32.mrf.mxu0
        %v8643 = vadd.f32 %v8594, %v8642
        %v8644 = vpop.f32.mrf.mxu0
        %v8645 = vadd.f32 %v8596, %v8644
        %8646 = vmatmul.bf16.gmra.mxu0 %v8312
        %v8647 = vpop.f32.mrf.mxu0
        %v8648 = vadd.f32 %v8599, %v8647
        %v8649 = vpop.f32.mrf.mxu0
        %v8650 = vadd.f32 %v8601, %v8649
        %8651 = vmatmul.bf16.gmra.mxu0 %v8316
        %v8652 = vpop.f32.mrf.mxu0
        %v8653 = vadd.f32 %v8604, %v8652
        %v8654 = vpop.f32.mrf.mxu0
        %v8655 = vadd.f32 %v8606, %v8654
        %8656 = vmatmul.bf16.gmra.mxu0 %v8320
        %v8657 = vpop.f32.mrf.mxu0
        %v8658 = vadd.f32 %v8609, %v8657
        %v8659 = vpop.f32.mrf.mxu0
        %v8660 = vadd.f32 %v8611, %v8659
        %8661 = vdwg.mxu0
        %8662 = vmatpush.bf16.msra.mxu0 %v8482
        %8663 = vmatpush.bf16.msra.mxu0 %v8481
        %8664 = vmatpush.bf16.msra.mxu0 %v8480
        %8665 = vmatpush.bf16.msra.mxu0 %v8479
        %8666 = vmatpush.bf16.msra.mxu0 %v8478
        %8667 = vmatpush.bf16.msra.mxu0 %v8477
        %8668 = vmatpush.bf16.msra.mxu0 %v8476
        %8669 = vmatpush.bf16.msra.mxu0 %v8475
        %8670 = vmatmul.bf16.gmra.mxu0 %v8293
        %v8671 = vpop.f32.mrf.mxu0
        %v8672 = vadd.f32 %v8623, %v8671
        %v8673 = vpop.f32.mrf.mxu0
        %v8674 = vadd.f32 %v8625, %v8673
        %8675 = vmatmul.bf16.gmra.mxu0 %v8297
        %v8676 = vpop.f32.mrf.mxu0
        %v8677 = vadd.f32 %v8628, %v8676
        %v8678 = vpop.f32.mrf.mxu0
        %v8679 = vadd.f32 %v8630, %v8678
        %8680 = vmatmul.bf16.gmra.mxu0 %v8301
        %v8681 = vpop.f32.mrf.mxu0
        %v8682 = vadd.f32 %v8633, %v8681
        %v8683 = vpop.f32.mrf.mxu0
        %v8684 = vadd.f32 %v8635, %v8683
        %8685 = vmatmul.bf16.gmra.mxu0 %v8305
        %v8686 = vpop.f32.mrf.mxu0
        %v8687 = vadd.f32 %v8638, %v8686
        %v8688 = vpop.f32.mrf.mxu0
        %v8689 = vadd.f32 %v8640, %v8688
        %8690 = vmatmul.bf16.gmra.mxu0 %v8309
        %v8691 = vpop.f32.mrf.mxu0
        %v8692 = vadd.f32 %v8643, %v8691
        %v8693 = vpop.f32.mrf.mxu0
        %v8694 = vadd.f32 %v8645, %v8693
        %8695 = vmatmul.bf16.gmra.mxu0 %v8313
        %v8696 = vpop.f32.mrf.mxu0
        %v8697 = vadd.f32 %v8648, %v8696
        %v8698 = vpop.f32.mrf.mxu0
        %v8699 = vadd.f32 %v8650, %v8698
        %8700 = vmatmul.bf16.gmra.mxu0 %v8317
        %v8701 = vpop.f32.mrf.mxu0
        %v8702 = vadd.f32 %v8653, %v8701
        %v8703 = vpop.f32.mrf.mxu0
        %v8704 = vadd.f32 %v8655, %v8703
        %8705 = vmatmul.bf16.gmra.mxu0 %v8321
        %v8706 = vpop.f32.mrf.mxu0
        %v8707 = vadd.f32 %v8658, %v8706
        %v8708 = vpop.f32.mrf.mxu0
        %v8709 = vadd.f32 %v8660, %v8708
        %8710 = vdwg.mxu0
        %v8711 = vadd.f32 %v7675, %v8672
        %v8712 = vadd.f32 %v7676, %v8674
        %v8713 = vadd.f32 %v7677, %v8677
        %v8714 = vadd.f32 %v7678, %v8679
        %v8715 = vadd.f32 %v7679, %v8682
        %v8716 = vadd.f32 %v7680, %v8684
        %v8717 = vadd.f32 %v7681, %v8687
        %v8718 = vadd.f32 %v7682, %v8689
        %v8719 = vadd.f32 %v7683, %v8692
        %v8720 = vadd.f32 %v7684, %v8694
        %v8721 = vadd.f32 %v7685, %v8697
        %v8722 = vadd.f32 %v7686, %v8699
        %v8723 = vadd.f32 %v7687, %v8702
        %v8724 = vadd.f32 %v7688, %v8704
        %v8725 = vadd.f32 %v7689, %v8707
        %v8726 = vadd.f32 %v7690, %v8709
        %v8727 = vld [vmem:[%s7] sm:$0xff]
        %v8728 = vadd.f32 %v8711, %v8712
        %v8729 = vadd.f32 %v8728, %v8713
        %v8730 = vadd.f32 %v8729, %v8714
        %v8731 = vadd.f32 %v8730, %v8715
        %v8732 = vadd.f32 %v8731, %v8716
        %v8733 = vadd.f32 %v8732, %v8717
        %v8734 = vadd.f32 %v8733, %v8718
        %v8735 = vrot.slane %v8734, 4
        %v8736 = vadd.f32 %v8734, %v8735
        %v8737 = vrot.slane %v8736, 2
        %v8738 = vadd.f32 %v8736, %v8737
        %v8739 = vrot.slane %v8738, 1
        %v8740 = vadd.f32 %v8738, %v8739
        %v8741 = vadd.f32 %v8719, %v8720
        %v8742 = vadd.f32 %v8741, %v8721
        %v8743 = vadd.f32 %v8742, %v8722
        %v8744 = vadd.f32 %v8743, %v8723
        %v8745 = vadd.f32 %v8744, %v8724
        %v8746 = vadd.f32 %v8745, %v8725
        %v8747 = vadd.f32 %v8746, %v8726
        %v8748 = vrot.slane %v8747, 4
        %v8749 = vadd.f32 %v8747, %v8748
        %v8750 = vrot.slane %v8749, 2
        %v8751 = vadd.f32 %v8749, %v8750
        %v8752 = vrot.slane %v8751, 1
        %v8753 = vadd.f32 %v8751, %v8752
        %v8754 = vmul.f32 %v8740, %v577
        %v8755 = vmul.f32 %v8753, %v577
        %v8756 = vsub.f32 %v8711, %v8754
        %v8757 = vsub.f32 %v8712, %v8754
        %v8758 = vsub.f32 %v8713, %v8754
        %v8759 = vsub.f32 %v8714, %v8754
        %v8760 = vsub.f32 %v8715, %v8754
        %v8761 = vsub.f32 %v8716, %v8754
        %v8762 = vsub.f32 %v8717, %v8754
        %v8763 = vsub.f32 %v8718, %v8754
        %v8764 = vsub.f32 %v8719, %v8755
        %v8765 = vsub.f32 %v8720, %v8755
        %v8766 = vsub.f32 %v8721, %v8755
        %v8767 = vsub.f32 %v8722, %v8755
        %v8768 = vsub.f32 %v8723, %v8755
        %v8769 = vsub.f32 %v8724, %v8755
        %v8770 = vsub.f32 %v8725, %v8755
        %v8771 = vsub.f32 %v8726, %v8755
        %v8772 = vmul.f32 %v8756, %v8756
        %v8773 = vmul.f32 %v8757, %v8757
        %v8774 = vmul.f32 %v8758, %v8758
        %v8775 = vmul.f32 %v8759, %v8759
        %v8776 = vmul.f32 %v8760, %v8760
        %v8777 = vmul.f32 %v8761, %v8761
        %v8778 = vmul.f32 %v8762, %v8762
        %v8779 = vmul.f32 %v8763, %v8763
        %v8780 = vmul.f32 %v8764, %v8764
        %v8781 = vmul.f32 %v8765, %v8765
        %v8782 = vmul.f32 %v8766, %v8766
        %v8783 = vmul.f32 %v8767, %v8767
        %v8784 = vmul.f32 %v8768, %v8768
        %v8785 = vmul.f32 %v8769, %v8769
        %v8786 = vmul.f32 %v8770, %v8770
        %v8787 = vmul.f32 %v8771, %v8771
        %v8788 = vadd.f32 %v8772, %v8773
        %v8789 = vadd.f32 %v8788, %v8774
        %v8790 = vadd.f32 %v8789, %v8775
        %v8791 = vadd.f32 %v8790, %v8776
        %v8792 = vadd.f32 %v8791, %v8777
        %v8793 = vadd.f32 %v8792, %v8778
        %v8794 = vadd.f32 %v8793, %v8779
        %v8795 = vrot.slane %v8794, 4
        %v8796 = vadd.f32 %v8794, %v8795
        %v8797 = vrot.slane %v8796, 2
        %v8798 = vadd.f32 %v8796, %v8797
        %v8799 = vrot.slane %v8798, 1
        %v8800 = vadd.f32 %v8798, %v8799
        %v8801 = vadd.f32 %v8780, %v8781
        %v8802 = vadd.f32 %v8801, %v8782
        %v8803 = vadd.f32 %v8802, %v8783
        %v8804 = vadd.f32 %v8803, %v8784
        %v8805 = vadd.f32 %v8804, %v8785
        %v8806 = vadd.f32 %v8805, %v8786
        %v8807 = vadd.f32 %v8806, %v8787
        %v8808 = vrot.slane %v8807, 4
        %v8809 = vadd.f32 %v8807, %v8808
        %v8810 = vrot.slane %v8809, 2
        %v8811 = vadd.f32 %v8809, %v8810
        %v8812 = vrot.slane %v8811, 1
        %v8813 = vadd.f32 %v8811, %v8812
        %v8814 = vmul.f32 %v8800, 0.015873017
        %v8815 = vmul.f32 %v8813, 0.015873017
        %v8816 = vadd.f32 %v8814, 1e-05
        %v8817 = vadd.f32 %v8815, 1e-05
        %v8818 = vrsqrt.pop %v8816
        %v8819 = vmul.f32 %v8818, %v8816
        %v8820 = vmul.f32 %v8819, %v8818
        %v8821 = vmul.f32 0.5, %v8820
        %v8822 = vsub.f32 1.5, %v8821
        %v8823 = vmul.f32 %v8818, %v8822
        %vm8824 = vweird.f32 %v8816
        %vm8825 = vweird.f32 %v8818
        %vm8826 = vmor %vm8824, %vm8825
        %v8827 = vsel %vm8826, %v8818, %v8823
        %v8828 = vrsqrt.pop %v8817
        %v8829 = vmul.f32 %v8828, %v8817
        %v8830 = vmul.f32 %v8829, %v8828
        %v8831 = vmul.f32 0.5, %v8830
        %v8832 = vsub.f32 1.5, %v8831
        %v8833 = vmul.f32 %v8828, %v8832
        %vm8834 = vweird.f32 %v8817
        %vm8835 = vweird.f32 %v8828
        %vm8836 = vmor %vm8834, %vm8835
        %v8837 = vsel %vm8836, %v8828, %v8833
        %v8838 = vmul.f32 %v8756, %v8827
        %v8839 = vmul.f32 %v8757, %v8827
        %v8840 = vmul.f32 %v8758, %v8827
        %v8841 = vmul.f32 %v8759, %v8827
        %v8842 = vmul.f32 %v8760, %v8827
        %v8843 = vmul.f32 %v8761, %v8827
        %v8844 = vmul.f32 %v8762, %v8827
        %v8845 = vmul.f32 %v8763, %v8827
        %v8846 = vmul.f32 %v8764, %v8837
        %v8847 = vmul.f32 %v8765, %v8837
        %v8848 = vmul.f32 %v8766, %v8837
        %v8849 = vmul.f32 %v8767, %v8837
        %v8850 = vmul.f32 %v8768, %v8837
        %v8851 = vmul.f32 %v8769, %v8837
        %v8852 = vmul.f32 %v8770, %v8837
        %v8853 = vmul.f32 %v8771, %v8837
        %v8854 = vperm.slane %v8727, 0
        %v8855 = vmul.f32 %v8854, %v8838
        %v8856 = vmul.f32 %v8854, %v8839
        %v8857 = vmul.f32 %v8854, %v8840
        %v8858 = vmul.f32 %v8854, %v8841
        %v8859 = vmul.f32 %v8854, %v8842
        %v8860 = vmul.f32 %v8854, %v8843
        %v8861 = vmul.f32 %v8854, %v8844
        %v8862 = vmul.f32 %v8854, %v8845
        %v8863 = vmul.f32 %v8854, %v8846
        %v8864 = vmul.f32 %v8854, %v8847
        %v8865 = vmul.f32 %v8854, %v8848
        %v8866 = vmul.f32 %v8854, %v8849
        %v8867 = vmul.f32 %v8854, %v8850
        %v8868 = vmul.f32 %v8854, %v8851
        %v8869 = vmul.f32 %v8854, %v8852
        %v8870 = vmul.f32 %v8854, %v8853
        %v8871 = vperm.slane %v8727, 1
        %v8872 = vadd.f32 %v8855, %v8871
        %v8873 = vadd.f32 %v8856, %v8871
        %v8874 = vadd.f32 %v8857, %v8871
        %v8875 = vadd.f32 %v8858, %v8871
        %v8876 = vadd.f32 %v8859, %v8871
        %v8877 = vadd.f32 %v8860, %v8871
        %v8878 = vadd.f32 %v8861, %v8871
        %v8879 = vadd.f32 %v8862, %v8871
        %v8880 = vadd.f32 %v8863, %v8871
        %v8881 = vadd.f32 %v8864, %v8871
        %v8882 = vadd.f32 %v8865, %v8871
        %v8883 = vadd.f32 %v8866, %v8871
        %v8884 = vadd.f32 %v8867, %v8871
        %v8885 = vadd.f32 %v8868, %v8871
        %v8886 = vadd.f32 %v8869, %v8871
        %v8887 = vadd.f32 %v8870, %v8871
        %v8888 = vpack.c.bf16 %v8873, %v8872
        %v8889 = vpack.c.bf16 %v8875, %v8874
        %v8890 = vpack.c.bf16 %v8877, %v8876
        %v8891 = vpack.c.bf16 %v8879, %v8878
        %v8892 = vpack.c.bf16 %v8881, %v8880
        %v8893 = vpack.c.bf16 %v8883, %v8882
        %v8894 = vpack.c.bf16 %v8885, %v8884
        %v8895 = vpack.c.bf16 %v8887, %v8886
        %v8896 = vld [vmem:[%s8] sm:$0xf]
        %v8897 = vld [vmem:[%s8 + $0x4] sm:$0xf]
        %v8898 = vld [vmem:[%s8 + $0x8] sm:$0xf]
        %v8899 = vld [vmem:[%s8 + $0xc] sm:$0xf]
        %v8900 = vld [vmem:[%s8 + $0x10] sm:$0xf]
        %v8901 = vld [vmem:[%s8 + $0x14] sm:$0xf]
        %v8902 = vld [vmem:[%s8 + $0x18] sm:$0xf]
        %v8903 = vld [vmem:[%s8 + $0x1c] sm:$0xf]
        %v8904 = vld [vmem:[%s8 + $0x20] sm:$0xf]
        %v8905 = vld [vmem:[%s8 + $0x24] sm:$0xf]
        %v8906 = vld [vmem:[%s8 + $0x28] sm:$0xf]
        %v8907 = vld [vmem:[%s8 + $0x2c] sm:$0xf]
        %v8908 = vld [vmem:[%s8 + $0x30] sm:$0xf]
        %v8909 = vld [vmem:[%s8 + $0x34] sm:$0xf]
        %v8910 = vld [vmem:[%s8 + $0x38] sm:$0xf]
        %v8911 = vld [vmem:[%s8 + $0x3c] sm:$0xf]
        %v8912 = vld [vmem:[%s9] sm:$0x1]
        %v8914 = vperm.slane %v8912, 0
        %v8932 = vunpack.c.l.b16 %v8896
        %v8933 = vunpack.c.l.b16 %v8897
        %v8934 = vunpack.c.l.b16 %v8898
        %v8935 = vunpack.c.l.b16 %v8899
        %v8936 = vunpack.c.l.b16 %v8900
        %v8937 = vunpack.c.l.b16 %v8901
        %v8938 = vunpack.c.l.b16 %v8902
        %v8939 = vunpack.c.l.b16 %v8903
        %v8940 = vunpack.c.l.b16 %v8904
        %v8941 = vunpack.c.l.b16 %v8905
        %v8942 = vunpack.c.l.b16 %v8906
        %v8943 = vunpack.c.l.b16 %v8907
        %v8944 = vunpack.c.l.b16 %v8908
        %v8945 = vunpack.c.l.b16 %v8909
        %v8946 = vunpack.c.l.b16 %v8910
        %v8947 = vunpack.c.l.b16 %v8911
        %v8948 = vpack.c.b16 %v8933, %v8932
        %v8949 = vpack.c.b16 %v8935, %v8934
        %v8950 = vpack.c.b16 %v8937, %v8936
        %v8951 = vpack.c.b16 %v8939, %v8938
        %v8952 = vpack.c.b16 %v8941, %v8940
        %v8953 = vpack.c.b16 %v8943, %v8942
        %v8954 = vpack.c.b16 %v8945, %v8944
        %v8955 = vpack.c.b16 %v8947, %v8946
        %8964 = vmatpush.bf16.msra.mxu0 %v8955
        %8965 = vmatpush.bf16.msra.mxu0 %v8954
        %8966 = vmatpush.bf16.msra.mxu0 %v8953
        %8967 = vmatpush.bf16.msra.mxu0 %v8952
        %8968 = vmatpush.bf16.msra.mxu0 %v8951
        %8969 = vmatpush.bf16.msra.mxu0 %v8950
        %8970 = vmatpush.bf16.msra.mxu0 %v8949
        %8971 = vmatpush.bf16.msra.mxu0 %v8948
        %8972 = vmatmul.bf16.gmra.mxu0 %v8888
        %v8973 = vpop.f32.mrf.mxu0
        %v8974 = vadd.f32 %v8914, %v8973
        %v8975 = vpop.f32.mrf.mxu0
        %v8976 = vadd.f32 %v8914, %v8975
        %8977 = vmatmul.bf16.gmra.mxu0 %v8889
        %v8978 = vpop.f32.mrf.mxu0
        %v8979 = vadd.f32 %v8914, %v8978
        %v8980 = vpop.f32.mrf.mxu0
        %v8981 = vadd.f32 %v8914, %v8980
        %8982 = vmatmul.bf16.gmra.mxu0 %v8890
        %v8983 = vpop.f32.mrf.mxu0
        %v8984 = vadd.f32 %v8914, %v8983
        %v8985 = vpop.f32.mrf.mxu0
        %v8986 = vadd.f32 %v8914, %v8985
        %8987 = vmatmul.bf16.gmra.mxu0 %v8891
        %v8988 = vpop.f32.mrf.mxu0
        %v8989 = vadd.f32 %v8914, %v8988
        %v8990 = vpop.f32.mrf.mxu0
        %v8991 = vadd.f32 %v8914, %v8990
        %8992 = vmatmul.bf16.gmra.mxu0 %v8892
        %v8993 = vpop.f32.mrf.mxu0
        %v8994 = vadd.f32 %v8914, %v8993
        %v8995 = vpop.f32.mrf.mxu0
        %v8996 = vadd.f32 %v8914, %v8995
        %8997 = vmatmul.bf16.gmra.mxu0 %v8893
        %v8998 = vpop.f32.mrf.mxu0
        %v8999 = vadd.f32 %v8914, %v8998
        %v9000 = vpop.f32.mrf.mxu0
        %v9001 = vadd.f32 %v8914, %v9000
        %9002 = vmatmul.bf16.gmra.mxu0 %v8894
        %v9003 = vpop.f32.mrf.mxu0
        %v9004 = vadd.f32 %v8914, %v9003
        %v9005 = vpop.f32.mrf.mxu0
        %v9006 = vadd.f32 %v8914, %v9005
        %9007 = vmatmul.bf16.gmra.mxu0 %v8895
        %v9008 = vpop.f32.mrf.mxu0
        %v9009 = vadd.f32 %v8914, %v9008
        %v9010 = vpop.f32.mrf.mxu0
        %v9011 = vadd.f32 %v8914, %v9010
        %9012 = vdwg.mxu0
        %9013 = vst [vmem:[%s355] sm:$0xff] %v8974
        %9014 = vst [vmem:[%s355 + $0x8] sm:$0xff] %v8976
        %9015 = vst [vmem:[%s355 + $0x10] sm:$0xff] %v8979
        %9016 = vst [vmem:[%s355 + $0x18] sm:$0xff] %v8981
        %9017 = vst [vmem:[%s355 + $0x20] sm:$0xff] %v8984
        %9018 = vst [vmem:[%s355 + $0x28] sm:$0xff] %v8986
        %9019 = vst [vmem:[%s355 + $0x30] sm:$0xff] %v8989
        %9020 = vst [vmem:[%s355 + $0x38] sm:$0xff] %v8991
        %9021 = vst [vmem:[%s355 + $0x40] sm:$0xff] %v8994
        %9022 = vst [vmem:[%s355 + $0x48] sm:$0xff] %v8996
        %9023 = vst [vmem:[%s355 + $0x50] sm:$0xff] %v8999
        %9024 = vst [vmem:[%s355 + $0x58] sm:$0xff] %v9001
        %9025 = vst [vmem:[%s355 + $0x60] sm:$0xff] %v9004
        %9026 = vst [vmem:[%s355 + $0x68] sm:$0xff] %v9006
        %9027 = vst [vmem:[%s355 + $0x70] sm:$0xff] %v9009
        %9028 = vst [vmem:[%s355 + $0x78] sm:$0xff] %v9011
        %s9029 = sand.u32 %s247, 1
        %s9030 = scalar_lea.sflag [#allocation3], %s9029
        %s9031 = sand.u32 %s247, 1
        %s9032 = smul.addr %s9031, 128
        %s9033 = scalar_lea.vmem [#allocation2], %s9032
        // Predicated region
        $region61: #{gpt2_forward.1} parent=59 // pred_check
          %p9034 = pneg %p257
        $region62: #{gpt2_forward.1} parent=59 // pred_check_branch
          %9036 = sbr.rel (%p9034) target = $region64
        $region63: #{gpt2_forward.1} parent=59 // pred_region
          %s9037 = smul.u32 2, %s24
          %9039 = vsyncadd %s9030, 0
          %s9040 = smul.addr %s9037, 8
          %s9041 = smul.addr %s9040, 8
          %s9042 = scalar_lea.hbm %s10, %s9041
          %s9043 = sshll.u32 %s9033, 4
          %s9044 = int_to_ptr.vmem [resolvable:$true] %s9043
          %s9045 = sshll.u32 %s9042, 4
          %s9046 = int_to_ptr.hbm [resolvable:$true] %s9045
          %9051 = dma.vmem_to_hbm [thread:$0]  %s9044, 2048, %s9046, %s9030, 128, 128, 8
        $region64: #{gpt2_forward.1} parent=59 // pred_fallthru
          _
      $region60: #{gpt2_forward.1} parent=5 // pred_fallthru
        _
      %p9052 = scmp.le.s32.totalorder 2, %s19
      // Predicated region
      $region65: #{gpt2_forward.1} parent=5 // pred_check
        %p9053 = pneg %p9052
      $region66: #{gpt2_forward.1} parent=5 // pred_check_branch
        %9055 = sbr.rel (%p9053) target = $region68
      $region67: #{gpt2_forward.1} parent=5 // pred_region
        %s9056 = ssub.s32 %s19, 2
        // Predicated region
        $region69: #{gpt2_forward.1} parent=67 // pred_check
          %p9057 = pneg %p263
        $region70: #{gpt2_forward.1} parent=67 // pred_check_branch
          %9059 = sbr.rel (%p9057) target = $region72
        $region71: #{gpt2_forward.1} parent=67 // pred_region
          %s9060 = sand.u32 %s248, 1
          %s9061 = scalar_lea.sflag [#allocation3], %s9060
          %s9062 = sand.u32 %s248, 1
          %s9063 = smul.addr %s9062, 128
          %s9064 = scalar_lea.vmem [#allocation2], %s9063
          %9066 = dma.done %s9061, 2048
        $region72: #{gpt2_forward.1} parent=67 // pred_fallthru
          _
      $region68: #{gpt2_forward.1} parent=5 // pred_fallthru
        _
    $region6: #{gpt2_forward.1} parent=1 // loop_footer
      %s23 = sadd.s32 1, %s19
    $region7: #{gpt2_forward.1} parent=1 // loop_footer_branch
      %18 = sbr.rel target = $region3
    $region8: #{gpt2_forward.1} parent=1 // loop_exit
      _
    %9067 = vsyncpa [#allocation3], 1
    %s9068 = scalar_lea.sflag [#allocation3], 1
    %9069 = vsyncpa %s9068, 1

</llo_original>
